<compile_context>
chip_gen: v6e
topology: v6e:2x2x1
jax: 0.10.0
libtpu: 0.0.40
codegen_flags: <defaults>
</compile_context>

<pallas_src>
import functools

import jax
import jax.numpy as jnp
from jax.experimental import pallas as pl
from jax.experimental.pallas import tpu as pltpu

IN_FEATURES = 34 * 34 * 2          # 2312, fixed by the module
# Real module uses channels = 8192 * 2 = 16384; demo keeps it small.  Semantics
# are identical for any channels with 2*channels % TILE_N == 0.
CHANNELS = 2048
TILE_N = 1024
SCALE = 100.0
STREAM_DTYPE = jnp.bfloat16        # storage/streaming dtype for x and fused weights


def _aux_fused_kernel(x_ref, w_ref, b_ref, out_ref):
    """One grid step computes a (B, tile_n) slab of the fused [head1 | head2] output."""
    j = pl.program_id(0)
    # (B, K) bf16 @ (K, tile_n) bf16 -> f32 accumulate on the MXU.
    acc = jnp.dot(x_ref[...], w_ref[...], preferred_element_type=jnp.float32)
    bias = b_ref[pl.ds(j, 1), :]                     # (1, tile_n) slice of resident bias
    out_ref[...] = jax.nn.sigmoid((acc + bias) * SCALE).astype(out_ref.dtype)


@functools.partial(jax.jit, static_argnames=("tile_n",))
def _fused_forward(x, w_fused, b_fused, *, tile_n):
    B, K = x.shape
    Kw, N2 = w_fused.shape
    assert K == Kw
    assert N2 % tile_n == 0, "fused output width must be a multiple of tile_n"
    steps = N2 // tile_n

    # Bias kept fully resident in VMEM, laid out (steps, tile_n) so the kernel
    # can index it with a dynamic sublane offset.
    b_tiled = b_fused.reshape(steps, tile_n).astype(jnp.float32)

    x_spec = pl.BlockSpec((B, K), lambda j: (0, 0))          # resident: whole x
    w_spec = pl.BlockSpec((K, tile_n), lambda j: (0, j))     # streamed column slab
    b_spec = pl.BlockSpec((steps, tile_n), lambda j: (0, 0)) # resident: whole bias
    o_spec = pl.BlockSpec((B, tile_n), lambda j: (0, j))

    return pl.pallas_call(
        _aux_fused_kernel,
        out_shape=jax.ShapeDtypeStruct((B, N2), jnp.float32),
        grid_spec=pltpu.PrefetchScalarGridSpec(
            num_scalar_prefetch=0,
            grid=(steps,),
            in_specs=[x_spec, w_spec, b_spec],
            out_specs=o_spec,
        ),
        compiler_params=pltpu.CompilerParams(
            dimension_semantics=("parallel",),   # load-bearing on v7x (2 TCs)
            vmem_limit_bytes=32 << 20,           # headroom on v5e's 16 MiB default
        ),
    )(x, w_fused, b_tiled)


def prepare_params(w3, b3, w4, b4, stream_dtype=STREAM_DTYPE):
    """One-time prep: fuse the two heads along N and cast weights to the streaming dtype.

    Weights are stored transposed as (K, N) relative to PyTorch's (N, K).
    """
    w_fused = jnp.concatenate([w3, w4], axis=1).astype(stream_dtype)   # (K, 2N)
    b_fused = jnp.concatenate([b3, b4], axis=0).astype(jnp.float32)    # (2N,)
    return w_fused, b_fused


def aux_net_forward(x, w_fused, b_fused, *, tile_n=TILE_N):
    """Returns (head1, head2), each (B, N), matching the PyTorch module forward."""
    n2 = w_fused.shape[1]
    n = n2 // 2
    out = _fused_forward(x.astype(w_fused.dtype), w_fused, b_fused, tile_n=tile_n)
    return out[:, :n], out[:, n:]


def _init_params(key, in_features, channels):
    """Deterministic init mimicking nn.Linear's U(-1/sqrt(fan_in), 1/sqrt(fan_in))."""
    k1, k2, k3, k4 = jax.random.split(key, 4)
    bound = 1.0 / jnp.sqrt(jnp.float32(in_features))
    # Stored as (in, out) == transpose of PyTorch's (out, in) weight.
    w3 = jax.random.uniform(k1, (in_features, channels), jnp.float32, -bound, bound)
    b3 = jax.random.uniform(k2, (channels,), jnp.float32, -bound, bound)
    w4 = jax.random.uniform(k3, (in_features, channels), jnp.float32, -bound, bound)
    b4 = jax.random.uniform(k4, (channels,), jnp.float32, -bound, bound)
    return w3, b3, w4, b4


def _reference_bf16(x, w3, b3, w4, b4):
    """Reference with the same streaming precision as the kernel (bf16 in, f32 accum)."""
    xb = x.astype(STREAM_DTYPE)
    l1 = jnp.dot(xb, w3.astype(STREAM_DTYPE), preferred_element_type=jnp.float32) + b3
    l2 = jnp.dot(xb, w4.astype(STREAM_DTYPE), preferred_element_type=jnp.float32) + b4
    return jax.nn.sigmoid(l1 * SCALE), jax.nn.sigmoid(l2 * SCALE)


def _reference_f32(x, w3, b3, w4, b4):
    h1 = jax.nn.sigmoid((x @ w3 + b3) * SCALE)
    h2 = jax.nn.sigmoid((x @ w4 + b4) * SCALE)
    return h1, h2


if __name__ == "__main__":
    key = jax.random.PRNGKey(0)
    kx, kp = jax.random.split(key)

    B = 2
    x = jax.random.normal(kx, (B, IN_FEATURES), jnp.float32)
    w3, b3, w4, b4 = _init_params(kp, IN_FEATURES, CHANNELS)

    w_fused, b_fused = prepare_params(w3, b3, w4, b4)
    head1, head2 = aux_net_forward(x, w_fused, b_fused)
    head1 = jax.block_until_ready(head1)
    head2 = jax.block_until_ready(head2)

    assert head1.shape == (B, CHANNELS) and head2.shape == (B, CHANNELS)

    # Tight check against a reference using the same bf16 streaming numerics.
    r1, r2 = _reference_bf16(x, w3, b3, w4, b4)
    assert jnp.allclose(head1, r1, atol=1e-3, rtol=1e-3)
    assert jnp.allclose(head2, r2, atol=1e-3, rtol=1e-3)

    # Loose sanity check against the full-f32 reference: sigmoid(100*z) saturates,
    # so bf16 streaming only perturbs outputs near the transition region.
    f1, f2 = _reference_f32(x, w3, b3, w4, b4)
    assert float(jnp.max(jnp.abs(head1 - f1))) < 0.5
    assert float(jnp.max(jnp.abs(head2 - f2))) < 0.5

    print("KERNEL_OK")
</pallas_src>

<mosaic_0001>
module attributes {stable_mosaic.version = 11 : i64} {
  func.func @_aux_fused_kernel(%arg0: i32, %arg1: memref<2x2312xbf16, #tpu.memory_space<vmem>>, %arg2: memref<2312x1024xbf16, #tpu.memory_space<vmem>>, %arg3: memref<4x1024xf32, #tpu.memory_space<vmem>>, %arg4: memref<2x1024xf32, #tpu.memory_space<vmem>>) attributes {dimension_semantics = [#tpu.dimension_semantics<parallel>], iteration_bounds = array<i64: 4>, scalar_prefetch = 0 : i64, scratch_operands = 0 : i64, tpu.core_type = #tpu.core_type<tc>, window_params = [{pipeline_mode = #tpu.pipeline_mode<synchronous>, transform_indices = @transform_0, window_bounds = array<i64: 2, 2312>}, {transform_indices = @transform_1, window_bounds = array<i64: 2312, 1024>}, {pipeline_mode = #tpu.pipeline_mode<synchronous>, transform_indices = @transform_2, window_bounds = array<i64: 4, 1024>}, {transform_indices = @transform_3, window_bounds = array<i64: 2, 1024>}]} {
    %c0 = arith.constant 0 : index
    %c0_0 = arith.constant 0 : index
    %0 = vector.load %arg1[%c0, %c0_0] : memref<2x2312xbf16, #tpu.memory_space<vmem>>, vector<2x2312xbf16>
    %c0_1 = arith.constant 0 : index
    %c0_2 = arith.constant 0 : index
    %1 = vector.load %arg2[%c0_1, %c0_2] : memref<2312x1024xbf16, #tpu.memory_space<vmem>>, vector<2312x1024xbf16>
    %cst = arith.constant dense<0.000000e+00> : vector<2x1024xf32>
    %2 = tpu.matmul %0, %1, %cst {dimension_numbers = #tpu.dot_dimension_numbers<[1], [0], [0], [1], [0, 0, 1, 1], [], []>} : vector<2x2312xbf16>, vector<2312x1024xbf16>, vector<2x1024xf32> -> vector<2x1024xf32>
    %3 = arith.index_cast %arg0 : i32 to index
    %c0_3 = arith.constant 0 : index
    %4 = vector.load %arg3[%3, %c0_3] : memref<4x1024xf32, #tpu.memory_space<vmem>>, vector<1x1024xf32>
    %5 = vector.broadcast %4 : vector<1x1024xf32> to vector<2x1024xf32>
    %6 = arith.addf %2, %5 : vector<2x1024xf32>
    %cst_4 = arith.constant 1.000000e+02 : f32
    %7 = vector.broadcast %cst_4 : f32 to vector<2x1024xf32>
    %8 = arith.mulf %6, %7 : vector<2x1024xf32>
    %9 = arith.negf %8 : vector<2x1024xf32>
    %10 = math.exp %9 : vector<2x1024xf32>
    %cst_5 = arith.constant 1.000000e+00 : f32
    %11 = vector.broadcast %cst_5 : f32 to vector<2x1024xf32>
    %12 = arith.addf %11, %10 : vector<2x1024xf32>
    %13 = arith.divf %11, %12 : vector<2x1024xf32>
    %c0_6 = arith.constant 0 : index
    %c0_7 = arith.constant 0 : index
    %14 = vector.load %arg4[%c0_6, %c0_7] : memref<2x1024xf32, #tpu.memory_space<vmem>>, vector<2x1024xf32>
    tpu.vector_store %arg4[%c0_6, %c0_7], %13 {strides = array<i32>} : memref<2x1024xf32, #tpu.memory_space<vmem>>, vector<2x1024xf32>,
    return
  }
  func.func @transform_0(%arg0: i32) -> (i32, i32) {
    %c0_i32 = arith.constant 0 : i32
    %c0_i32_0 = arith.constant 0 : i32
    %c0_i32_1 = arith.constant 0 : i32
    return %c0_i32, %c0_i32_0 : i32, i32
  }
  func.func @transform_1(%arg0: i32) -> (i32, i32) {
    %c0_i32 = arith.constant 0 : i32
    %c0_i32_0 = arith.constant 0 : i32
    return %c0_i32, %arg0 : i32, i32
  }
  func.func @transform_2(%arg0: i32) -> (i32, i32) {
    %c0_i32 = arith.constant 0 : i32
    %c0_i32_0 = arith.constant 0 : i32
    %c0_i32_1 = arith.constant 0 : i32
    return %c0_i32, %c0_i32_0 : i32, i32
  }
  func.func @transform_3(%arg0: i32) -> (i32, i32) {
    %c0_i32 = arith.constant 0 : i32
    %c0_i32_0 = arith.constant 0 : i32
    return %c0_i32, %arg0 : i32, i32
  }
}

</mosaic_0001>

<llo_original>
// kernel: _fused_forward.1
$region0: #{_fused_forward.1}
  #allocation0 [shape = 'u32[]', space=smem, size = 0x4, offset = 0x4, fixed_abs, tag = 'smem constant byte address 0x4 - core index']
  #allocation1 [shape = 'u32[144,128]{1,0:T(1,128)}', space=vmem, size = 0x12000, scoped, tag = 'internal scratch']
  %s0 = inlined_call_operand.hbm [shape: bf16[2,2312], index: 0, kind: input, shape index: {}]
  %s1 = inlined_call_operand.hbm [shape: bf16[2312,4096], index: 1, kind: input, shape index: {}]
  %s2 = inlined_call_operand.vmem [shape: f32[4,1024], index: 2, kind: input, shape index: {}]
  %s3 = inlined_call_operand.hbm [shape: f32[2,4096], index: 3, kind: output, shape index: {}]
  %s4 = sld [smem:[#allocation0]]
  $region53: #{_fused_forward.1} parent=0
    _
  %s6 = ssub.s32 1, %s4
  %s7 = scalar_select 0, %s6, %s4
  $region1: #{_fused_forward.1} parent=0
    #allocation2 [shape = 'u8[9728]{0}', space=vmem, size = 0x2800, scoped, tag = 'input window, operand 0, single buffered']
    #allocation3 [shape = 's32[2]{0}', space=sflag, size = 0x8, scoped, tag = 'scoped memory for _fused_forward.1']
    #allocation4 [shape = 's32[2]{0}', space=sflag, size = 0x8, scoped, tag = 'scoped memory for _fused_forward.1']
    #allocation5 [shape = 'u8[9469952]{0}', space=vmem, size = 0x908000, scoped, tag = 'input window, operand 1']
    #allocation6 [shape = 's32[2]{0}', space=sflag, size = 0x8, scoped, tag = 'scoped memory for _fused_forward.1']
    #allocation7 [shape = 'u8[16384]{0}', space=vmem, size = 0x4000, scoped, tag = 'output window, operand 0']
    %8 = vsyncpa [#allocation3], 0
    %9 = vsyncpa [#allocation6], 0
    %s10 = scalar_lea.sflag [#allocation6], 1
    %11 = vsyncpa %s10, 0
    %12 = vsyncpa [#allocation4], 0
    %s13 = scalar_lea.sflag [#allocation4], 1
    %14 = vsyncpa %s13, 0
    loop: start=0, step=1, limit=6
    $region2: #{_fused_forward.1} parent=1 // loop_pre_header
      _
    $region3: #{_fused_forward.1} parent=1 // loop_header
      %s16 = sphi 0, %s20
      %p17 = scmp.ge.s32.totalorder %s16, 6
      %s24 = sphi 0, %s24
      %s26 = sphi 0, %s24
      %s27 = sphi 0, %s26
      %s41 = sphi 0, %s27
      %s47 = sphi 0, %s49
      %s50 = sphi 0, %s47
      %s51 = sphi 0, %s50
      %s67 = sphi 0, %s51
      %s71 = sphi 0, %s71
      %s73 = sphi 0, %s71
      %s74 = sphi 0, %s73
      %s88 = sphi 0, %s74
      %s94 = sphi 0, %s96
      %s97 = sphi 0, %s94
      %s98 = sphi 0, %s97
      %s114 = sphi 0, %s98
    $region4: #{_fused_forward.1} parent=1 // loop_header_branch
      %19 = sbr.rel (%p17) target = $region8
    $region5: #{_fused_forward.1} parent=1 // loop_body
      %s21 = ssub.s32 %s16, 1
      %s22 = ssub.s32 %s16, 2
      %s23 = sadd.s32 %s16, 1
      %s25 = sadd.s32 %s24, 1
      %p28 = scmp.eq.s32.totalorder %s16, 3
      %p29 = scmp.ne.s32.totalorder %s24, %s26
      %p30 = scmp.eq.s32.totalorder %s16, 0
      %p31 = por %p29, %p30
      %p32 = scmp.ne.s32.totalorder %s24, %s26
      %p33 = scmp.eq.s32.totalorder %s21, 3
      %p34 = por %p32, %p33
      %p35 = scmp.ne.s32.totalorder %s26, %s27
      %p36 = scmp.eq.s32.totalorder %s21, 0
      %p37 = por %p35, %p36
      %p38 = scmp.ne.s32.totalorder %s26, %s27
      %p39 = scmp.eq.s32.totalorder %s22, 3
      %p40 = por %p38, %p39
      %p42 = scmp.ne.s32.totalorder %s27, %s41
      %p43 = scmp.eq.s32.totalorder %s22, 0
      %p44 = por %p42, %p43
      %s45 = ssub.s32 %s16, %s23
      %p46 = scmp.eq.s32.totalorder %s45, 0
      %s48 = sadd.s32 %s47, 1
      %s49 = scalar_select %p46, %s47, %s48
      %p52 = pneg %p46
      %p53 = scmp.eq.s32.totalorder %s16, 3
      %p54 = por %p52, %p53
      %p55 = scmp.ne.s32.totalorder %s47, %s50
      %p56 = scmp.eq.s32.totalorder %s16, 0
      %p57 = por %p55, %p56
      %p58 = scmp.ne.s32.totalorder %s47, %s50
      %p59 = scmp.eq.s32.totalorder %s21, 3
      %p60 = por %p58, %p59
      %p61 = scmp.ne.s32.totalorder %s50, %s51
      %p62 = scmp.eq.s32.totalorder %s21, 0
      %p63 = por %p61, %p62
      %p64 = scmp.ne.s32.totalorder %s50, %s51
      %p65 = scmp.eq.s32.totalorder %s22, 3
      %p66 = por %p64, %p65
      %p68 = scmp.ne.s32.totalorder %s51, %s67
      %p69 = scmp.eq.s32.totalorder %s22, 0
      %p70 = por %p68, %p69
      %s72 = sadd.s32 %s71, 1
      %p75 = scmp.eq.s32.totalorder %s16, 3
      %p76 = scmp.ne.s32.totalorder %s71, %s73
      %p77 = scmp.eq.s32.totalorder %s16, 0
      %p78 = por %p76, %p77
      %p79 = scmp.ne.s32.totalorder %s71, %s73
      %p80 = scmp.eq.s32.totalorder %s21, 3
      %p81 = por %p79, %p80
      %p82 = scmp.ne.s32.totalorder %s73, %s74
      %p83 = scmp.eq.s32.totalorder %s21, 0
      %p84 = por %p82, %p83
      %p85 = scmp.ne.s32.totalorder %s73, %s74
      %p86 = scmp.eq.s32.totalorder %s22, 3
      %p87 = por %p85, %p86
      %p89 = scmp.ne.s32.totalorder %s74, %s88
      %p90 = scmp.eq.s32.totalorder %s22, 0
      %p91 = por %p89, %p90
      %s92 = ssub.s32 %s16, %s23
      %p93 = scmp.eq.s32.totalorder %s92, 0
      %s95 = sadd.s32 %s94, 1
      %s96 = scalar_select %p93, %s94, %s95
      %p99 = pneg %p93
      %p100 = scmp.eq.s32.totalorder %s16, 3
      %p101 = por %p99, %p100
      %p102 = scmp.ne.s32.totalorder %s94, %s97
      %p103 = scmp.eq.s32.totalorder %s16, 0
      %p104 = por %p102, %p103
      %p105 = scmp.ne.s32.totalorder %s94, %s97
      %p106 = scmp.eq.s32.totalorder %s21, 3
      %p107 = por %p105, %p106
      %p108 = scmp.ne.s32.totalorder %s97, %s98
      %p109 = scmp.eq.s32.totalorder %s21, 0
      %p110 = por %p108, %p109
      %p111 = scmp.ne.s32.totalorder %s97, %s98
      %p112 = scmp.eq.s32.totalorder %s22, 3
      %p113 = por %p111, %p112
      %p115 = scmp.ne.s32.totalorder %s98, %s114
      %p116 = scmp.eq.s32.totalorder %s22, 0
      %p117 = por %p115, %p116
      %p118 = scmp.le.s32.totalorder 1, %s16
      %p119 = scmp.lt.s32.totalorder %s16, 5
      %p120 = pnand %p118, %p119
      %p121 = pneg %p120
      // Predicated region
      $region9: #{_fused_forward.1} parent=5 // pred_check
        _
      $region10: #{_fused_forward.1} parent=5 // pred_check_branch
        %123 = sbr.rel (%p120) target = $region12
      $region11: #{_fused_forward.1} parent=5 // pred_region
        %s124 = ssub.s32 %s16, 1
        // Predicated region
        $region13: #{_fused_forward.1} parent=11 // pred_check
          %p125 = pneg %p37
        $region14: #{_fused_forward.1} parent=11 // pred_check_branch
          %127 = sbr.rel (%p125) target = $region16
        $region15: #{_fused_forward.1} parent=11 // pred_region
          %s129 = ssub.s32 304, 304
          %130 = vsyncadd [#allocation3], %s129
          %s132 = sshll.u32 [#allocation2], 4
          %s133 = int_to_ptr.vmem [resolvable:$true] %s132
          %135 = dma.hbm_to_vmem [thread:$0]  %s0, 304, %s133, [#allocation3]
        $region16: #{_fused_forward.1} parent=11 // pred_fallthru
          _
        // Predicated region
        $region17: #{_fused_forward.1} parent=11 // pred_check
          %p136 = pneg %p84
        $region18: #{_fused_forward.1} parent=11 // pred_check_branch
          %138 = sbr.rel (%p136) target = $region20
        $region19: #{_fused_forward.1} parent=11 // pred_region
          _
        $region20: #{_fused_forward.1} parent=11 // pred_fallthru
          _
      $region12: #{_fused_forward.1} parent=5 // pred_fallthru
        _
      %p139 = scmp.lt.s32.totalorder %s16, 4
      // Predicated region
      $region21: #{_fused_forward.1} parent=5 // pred_check
        %p140 = pneg %p139
      $region22: #{_fused_forward.1} parent=5 // pred_check_branch
        %142 = sbr.rel (%p140) target = $region24
      $region23: #{_fused_forward.1} parent=5 // pred_region
        // Predicated region
        $region25: #{_fused_forward.1} parent=23 // pred_check
          %p143 = pneg %p57
        $region26: #{_fused_forward.1} parent=23 // pred_check_branch
          %145 = sbr.rel (%p143) target = $region28
        $region27: #{_fused_forward.1} parent=23 // pred_region
          %s146 = sand.u32 %s47, 1
          %s147 = scalar_lea.sflag [#allocation6], %s146
          %s148 = sand.u32 %s47, 1
          %s149 = smul.addr %s148, 9248
          %s150 = scalar_lea.vmem [#allocation5], %s149
          %s151 = smul.u32 8, %s16
          %s153 = ssub.s32 147968, 147968
          %154 = vsyncadd %s147, %s153
          %s155 = smul.addr %s151, 64
          %s156 = scalar_lea.hbm %s1, %s155
          %s157 = sshll.u32 %s150, 4
          %s158 = int_to_ptr.vmem [resolvable:$true] %s157
          %163 = dma.hbm_to_vmem [thread:$0]  %s156, 147968, %s158, %s147, 2048, 512, 32
        $region28: #{_fused_forward.1} parent=23 // pred_fallthru
          _
      $region24: #{_fused_forward.1} parent=5 // pred_fallthru
        _
      %p164 = scmp.le.s32.totalorder 1, %s16
      %p165 = scmp.lt.s32.totalorder %s16, 5
      %p166 = pnand %p164, %p165
      %p167 = pneg %p166
      // Predicated region
      $region29: #{_fused_forward.1} parent=5 // pred_check
        _
      $region30: #{_fused_forward.1} parent=5 // pred_check_branch
        %169 = sbr.rel (%p166) target = $region32
      $region31: #{_fused_forward.1} parent=5 // pred_region
        %s170 = ssub.s32 %s16, 1
        // Predicated region
        $region33: #{_fused_forward.1} parent=31 // pred_check
          %p171 = pneg %p37
        $region34: #{_fused_forward.1} parent=31 // pred_check_branch
          %173 = sbr.rel (%p171) target = $region36
        $region35: #{_fused_forward.1} parent=31 // pred_region
          %174 = dma.done [#allocation3], 304
        $region36: #{_fused_forward.1} parent=31 // pred_fallthru
          _
        %s175 = sand.u32 %s50, 1
        %s176 = scalar_lea.sflag [#allocation6], %s175
        %s177 = sand.u32 %s50, 1
        %s178 = smul.addr %s177, 9248
        %s179 = scalar_lea.vmem [#allocation5], %s178
        // Predicated region
        $region37: #{_fused_forward.1} parent=31 // pred_check
          %p180 = pneg %p63
        $region38: #{_fused_forward.1} parent=31 // pred_check_branch
          %182 = sbr.rel (%p180) target = $region40
        $region39: #{_fused_forward.1} parent=31 // pred_region
          %183 = dma.done %s176, 147968
        $region40: #{_fused_forward.1} parent=31 // pred_fallthru
          _
        %p184 = pneg %p37
        %p185 = pneg %p34
        %s186 = sand.u32 %s50, 1
        %s187 = scalar_lea.sflag [#allocation6], %s186
        %s188 = sand.u32 %s50, 1
        %s189 = smul.addr %s188, 9248
        %s190 = scalar_lea.vmem [#allocation5], %s189
        %p191 = pneg %p63
        %p192 = pneg %p60
        %p193 = pneg %p84
        %p194 = pneg %p81
        %p195 = pneg %p110
        %p196 = pneg %p107
        %s197 = sand.u32 %s97, 1
        %s198 = scalar_lea.sflag [#allocation4], %s197
        %s199 = sand.u32 %s97, 1
        %s200 = smul.addr %s199, 16
        %s201 = scalar_lea.vmem [#allocation7], %s200
        %s202 = smul.u32 8, %s21
        %s203 = smul.u32 8, %s21
        %v205 = vld [vmem:[#allocation2] sm:$0xff]
        %v206 = vld [vmem:[#allocation2 + $0x8] sm:$0xff]
        %v207 = vld [vmem:[#allocation2 + $0x10] sm:$0x7]
        %v208 = vld [vmem:[%s179] sm:$0xff]
        %v209 = vld [vmem:[%s179 + $0x8] sm:$0xff]
        %v210 = vld [vmem:[%s179 + $0x10] sm:$0xff]
        %v211 = vld [vmem:[%s179 + $0x18] sm:$0xff]
        %v212 = vld [vmem:[%s179 + $0x20] sm:$0xff]
        %v213 = vld [vmem:[%s179 + $0x28] sm:$0xff]
        %v214 = vld [vmem:[%s179 + $0x30] sm:$0xff]
        %v215 = vld [vmem:[%s179 + $0x38] sm:$0xff]
        %v216 = vld [vmem:[%s179 + $0x40] sm:$0xff]
        %v217 = vld [vmem:[%s179 + $0x48] sm:$0xff]
        %v218 = vld [vmem:[%s179 + $0x50] sm:$0xff]
        %v219 = vld [vmem:[%s179 + $0x58] sm:$0xff]
        %v220 = vld [vmem:[%s179 + $0x60] sm:$0xff]
        %v221 = vld [vmem:[%s179 + $0x68] sm:$0xff]
        %v222 = vld [vmem:[%s179 + $0x70] sm:$0xff]
        %v223 = vld [vmem:[%s179 + $0x78] sm:$0xff]
        %v224 = vld [vmem:[%s179 + $0x80] sm:$0xff]
        %v225 = vld [vmem:[%s179 + $0x88] sm:$0xff]
        %v226 = vld [vmem:[%s179 + $0x90] sm:$0xff]
        %v227 = vld [vmem:[%s179 + $0x98] sm:$0xff]
        %v228 = vld [vmem:[%s179 + $0xa0] sm:$0xff]
        %v229 = vld [vmem:[%s179 + $0xa8] sm:$0xff]
        %v230 = vld [vmem:[%s179 + $0xb0] sm:$0xff]
        %v231 = vld [vmem:[%s179 + $0xb8] sm:$0xff]
        %v232 = vld [vmem:[%s179 + $0xc0] sm:$0xff]
        %v233 = vld [vmem:[%s179 + $0xc8] sm:$0xff]
        %v234 = vld [vmem:[%s179 + $0xd0] sm:$0xff]
        %v235 = vld [vmem:[%s179 + $0xd8] sm:$0xff]
        %v236 = vld [vmem:[%s179 + $0xe0] sm:$0xff]
        %v237 = vld [vmem:[%s179 + $0xe8] sm:$0xff]
        %v238 = vld [vmem:[%s179 + $0xf0] sm:$0xff]
        %v239 = vld [vmem:[%s179 + $0xf8] sm:$0xff]
        %v240 = vld [vmem:[%s179 + $0x100] sm:$0xff]
        %v241 = vld [vmem:[%s179 + $0x108] sm:$0xff]
        %v242 = vld [vmem:[%s179 + $0x110] sm:$0xff]
        %v243 = vld [vmem:[%s179 + $0x118] sm:$0xff]
        %v244 = vld [vmem:[%s179 + $0x120] sm:$0xff]
        %v245 = vld [vmem:[%s179 + $0x128] sm:$0xff]
        %v246 = vld [vmem:[%s179 + $0x130] sm:$0xff]
        %v247 = vld [vmem:[%s179 + $0x138] sm:$0xff]
        %v248 = vld [vmem:[%s179 + $0x140] sm:$0xff]
        %v249 = vld [vmem:[%s179 + $0x148] sm:$0xff]
        %v250 = vld [vmem:[%s179 + $0x150] sm:$0xff]
        %v251 = vld [vmem:[%s179 + $0x158] sm:$0xff]
        %v252 = vld [vmem:[%s179 + $0x160] sm:$0xff]
        %v253 = vld [vmem:[%s179 + $0x168] sm:$0xff]
        %v254 = vld [vmem:[%s179 + $0x170] sm:$0xff]
        %v255 = vld [vmem:[%s179 + $0x178] sm:$0xff]
        %v256 = vld [vmem:[%s179 + $0x180] sm:$0xff]
        %v257 = vld [vmem:[%s179 + $0x188] sm:$0xff]
        %v258 = vld [vmem:[%s179 + $0x190] sm:$0xff]
        %v259 = vld [vmem:[%s179 + $0x198] sm:$0xff]
        %v260 = vld [vmem:[%s179 + $0x1a0] sm:$0xff]
        %v261 = vld [vmem:[%s179 + $0x1a8] sm:$0xff]
        %v262 = vld [vmem:[%s179 + $0x1b0] sm:$0xff]
        %v263 = vld [vmem:[%s179 + $0x1b8] sm:$0xff]
        %v264 = vld [vmem:[%s179 + $0x1c0] sm:$0xff]
        %v265 = vld [vmem:[%s179 + $0x1c8] sm:$0xff]
        %v266 = vld [vmem:[%s179 + $0x1d0] sm:$0xff]
        %v267 = vld [vmem:[%s179 + $0x1d8] sm:$0xff]
        %v268 = vld [vmem:[%s179 + $0x1e0] sm:$0xff]
        %v269 = vld [vmem:[%s179 + $0x1e8] sm:$0xff]
        %v270 = vld [vmem:[%s179 + $0x1f0] sm:$0xff]
        %v271 = vld [vmem:[%s179 + $0x1f8] sm:$0xff]
        %v272 = vld [vmem:[%s179 + $0x200] sm:$0xff]
        %v273 = vld [vmem:[%s179 + $0x208] sm:$0xff]
        %v274 = vld [vmem:[%s179 + $0x210] sm:$0xff]
        %v275 = vld [vmem:[%s179 + $0x218] sm:$0xff]
        %v276 = vld [vmem:[%s179 + $0x220] sm:$0xff]
        %v277 = vld [vmem:[%s179 + $0x228] sm:$0xff]
        %v278 = vld [vmem:[%s179 + $0x230] sm:$0xff]
        %v279 = vld [vmem:[%s179 + $0x238] sm:$0xff]
        %v280 = vld [vmem:[%s179 + $0x240] sm:$0xff]
        %v281 = vld [vmem:[%s179 + $0x248] sm:$0xff]
        %v282 = vld [vmem:[%s179 + $0x250] sm:$0xff]
        %v283 = vld [vmem:[%s179 + $0x258] sm:$0xff]
        %v284 = vld [vmem:[%s179 + $0x260] sm:$0xff]
        %v285 = vld [vmem:[%s179 + $0x268] sm:$0xff]
        %v286 = vld [vmem:[%s179 + $0x270] sm:$0xff]
        %v287 = vld [vmem:[%s179 + $0x278] sm:$0xff]
        %v288 = vld [vmem:[%s179 + $0x280] sm:$0xff]
        %v289 = vld [vmem:[%s179 + $0x288] sm:$0xff]
        %v290 = vld [vmem:[%s179 + $0x290] sm:$0xff]
        %v291 = vld [vmem:[%s179 + $0x298] sm:$0xff]
        %v292 = vld [vmem:[%s179 + $0x2a0] sm:$0xff]
        %v293 = vld [vmem:[%s179 + $0x2a8] sm:$0xff]
        %v294 = vld [vmem:[%s179 + $0x2b0] sm:$0xff]
        %v295 = vld [vmem:[%s179 + $0x2b8] sm:$0xff]
        %v296 = vld [vmem:[%s179 + $0x2c0] sm:$0xff]
        %v297 = vld [vmem:[%s179 + $0x2c8] sm:$0xff]
        %v298 = vld [vmem:[%s179 + $0x2d0] sm:$0xff]
        %v299 = vld [vmem:[%s179 + $0x2d8] sm:$0xff]
        %v300 = vld [vmem:[%s179 + $0x2e0] sm:$0xff]
        %v301 = vld [vmem:[%s179 + $0x2e8] sm:$0xff]
        %v302 = vld [vmem:[%s179 + $0x2f0] sm:$0xff]
        %v303 = vld [vmem:[%s179 + $0x2f8] sm:$0xff]
        %v304 = vld [vmem:[%s179 + $0x300] sm:$0xff]
        %v305 = vld [vmem:[%s179 + $0x308] sm:$0xff]
        %v306 = vld [vmem:[%s179 + $0x310] sm:$0xff]
        %v307 = vld [vmem:[%s179 + $0x318] sm:$0xff]
        %v308 = vld [vmem:[%s179 + $0x320] sm:$0xff]
        %v309 = vld [vmem:[%s179 + $0x328] sm:$0xff]
        %v310 = vld [vmem:[%s179 + $0x330] sm:$0xff]
        %v311 = vld [vmem:[%s179 + $0x338] sm:$0xff]
        %v312 = vld [vmem:[%s179 + $0x340] sm:$0xff]
        %v313 = vld [vmem:[%s179 + $0x348] sm:$0xff]
        %v314 = vld [vmem:[%s179 + $0x350] sm:$0xff]
        %v315 = vld [vmem:[%s179 + $0x358] sm:$0xff]
        %v316 = vld [vmem:[%s179 + $0x360] sm:$0xff]
        %v317 = vld [vmem:[%s179 + $0x368] sm:$0xff]
        %v318 = vld [vmem:[%s179 + $0x370] sm:$0xff]
        %v319 = vld [vmem:[%s179 + $0x378] sm:$0xff]
        %v320 = vld [vmem:[%s179 + $0x380] sm:$0xff]
        %v321 = vld [vmem:[%s179 + $0x388] sm:$0xff]
        %v322 = vld [vmem:[%s179 + $0x390] sm:$0xff]
        %v323 = vld [vmem:[%s179 + $0x398] sm:$0xff]
        %v324 = vld [vmem:[%s179 + $0x3a0] sm:$0xff]
        %v325 = vld [vmem:[%s179 + $0x3a8] sm:$0xff]
        %v326 = vld [vmem:[%s179 + $0x3b0] sm:$0xff]
        %v327 = vld [vmem:[%s179 + $0x3b8] sm:$0xff]
        %v328 = vld [vmem:[%s179 + $0x3c0] sm:$0xff]
        %v329 = vld [vmem:[%s179 + $0x3c8] sm:$0xff]
        %v330 = vld [vmem:[%s179 + $0x3d0] sm:$0xff]
        %v331 = vld [vmem:[%s179 + $0x3d8] sm:$0xff]
        %v332 = vld [vmem:[%s179 + $0x3e0] sm:$0xff]
        %v333 = vld [vmem:[%s179 + $0x3e8] sm:$0xff]
        %v334 = vld [vmem:[%s179 + $0x3f0] sm:$0xff]
        %v335 = vld [vmem:[%s179 + $0x3f8] sm:$0xff]
        %v336 = vld [vmem:[%s179 + $0x400] sm:$0xff]
        %v337 = vld [vmem:[%s179 + $0x408] sm:$0xff]
        %v338 = vld [vmem:[%s179 + $0x410] sm:$0xff]
        %v339 = vld [vmem:[%s179 + $0x418] sm:$0xff]
        %v340 = vld [vmem:[%s179 + $0x420] sm:$0xff]
        %v341 = vld [vmem:[%s179 + $0x428] sm:$0xff]
        %v342 = vld [vmem:[%s179 + $0x430] sm:$0xff]
        %v343 = vld [vmem:[%s179 + $0x438] sm:$0xff]
        %v344 = vld [vmem:[%s179 + $0x440] sm:$0xff]
        %v345 = vld [vmem:[%s179 + $0x448] sm:$0xff]
        %v346 = vld [vmem:[%s179 + $0x450] sm:$0xff]
        %v347 = vld [vmem:[%s179 + $0x458] sm:$0xff]
        %v348 = vld [vmem:[%s179 + $0x460] sm:$0xff]
        %v349 = vld [vmem:[%s179 + $0x468] sm:$0xff]
        %v350 = vld [vmem:[%s179 + $0x470] sm:$0xff]
        %v351 = vld [vmem:[%s179 + $0x478] sm:$0xff]
        %v352 = vld [vmem:[%s179 + $0x480] sm:$0xff]
        %v353 = vld [vmem:[%s179 + $0x488] sm:$0xff]
        %v354 = vld [vmem:[%s179 + $0x490] sm:$0xff]
        %v355 = vld [vmem:[%s179 + $0x498] sm:$0xff]
        %v356 = vld [vmem:[%s179 + $0x4a0] sm:$0xff]
        %v357 = vld [vmem:[%s179 + $0x4a8] sm:$0xff]
        %v358 = vld [vmem:[%s179 + $0x4b0] sm:$0xff]
        %v359 = vld [vmem:[%s179 + $0x4b8] sm:$0xff]
        %v360 = vld [vmem:[%s179 + $0x4c0] sm:$0xff]
        %v361 = vld [vmem:[%s179 + $0x4c8] sm:$0xff]
        %v362 = vld [vmem:[%s179 + $0x4d0] sm:$0xff]
        %v363 = vld [vmem:[%s179 + $0x4d8] sm:$0xff]
        %v364 = vld [vmem:[%s179 + $0x4e0] sm:$0xff]
        %v365 = vld [vmem:[%s179 + $0x4e8] sm:$0xff]
        %v366 = vld [vmem:[%s179 + $0x4f0] sm:$0xff]
        %v367 = vld [vmem:[%s179 + $0x4f8] sm:$0xff]
        %v368 = vld [vmem:[%s179 + $0x500] sm:$0xff]
        %v369 = vld [vmem:[%s179 + $0x508] sm:$0xff]
        %v370 = vld [vmem:[%s179 + $0x510] sm:$0xff]
        %v371 = vld [vmem:[%s179 + $0x518] sm:$0xff]
        %v372 = vld [vmem:[%s179 + $0x520] sm:$0xff]
        %v373 = vld [vmem:[%s179 + $0x528] sm:$0xff]
        %v374 = vld [vmem:[%s179 + $0x530] sm:$0xff]
        %v375 = vld [vmem:[%s179 + $0x538] sm:$0xff]
        %v376 = vld [vmem:[%s179 + $0x540] sm:$0xff]
        %v377 = vld [vmem:[%s179 + $0x548] sm:$0xff]
        %v378 = vld [vmem:[%s179 + $0x550] sm:$0xff]
        %v379 = vld [vmem:[%s179 + $0x558] sm:$0xff]
        %v380 = vld [vmem:[%s179 + $0x560] sm:$0xff]
        %v381 = vld [vmem:[%s179 + $0x568] sm:$0xff]
        %v382 = vld [vmem:[%s179 + $0x570] sm:$0xff]
        %v383 = vld [vmem:[%s179 + $0x578] sm:$0xff]
        %v384 = vld [vmem:[%s179 + $0x580] sm:$0xff]
        %v385 = vld [vmem:[%s179 + $0x588] sm:$0xff]
        %v386 = vld [vmem:[%s179 + $0x590] sm:$0xff]
        %v387 = vld [vmem:[%s179 + $0x598] sm:$0xff]
        %v388 = vld [vmem:[%s179 + $0x5a0] sm:$0xff]
        %v389 = vld [vmem:[%s179 + $0x5a8] sm:$0xff]
        %v390 = vld [vmem:[%s179 + $0x5b0] sm:$0xff]
        %v391 = vld [vmem:[%s179 + $0x5b8] sm:$0xff]
        %v392 = vld [vmem:[%s179 + $0x5c0] sm:$0xff]
        %v393 = vld [vmem:[%s179 + $0x5c8] sm:$0xff]
        %v394 = vld [vmem:[%s179 + $0x5d0] sm:$0xff]
        %v395 = vld [vmem:[%s179 + $0x5d8] sm:$0xff]
        %v396 = vld [vmem:[%s179 + $0x5e0] sm:$0xff]
        %v397 = vld [vmem:[%s179 + $0x5e8] sm:$0xff]
        %v398 = vld [vmem:[%s179 + $0x5f0] sm:$0xff]
        %v399 = vld [vmem:[%s179 + $0x5f8] sm:$0xff]
        %v400 = vld [vmem:[%s179 + $0x600] sm:$0xff]
        %v401 = vld [vmem:[%s179 + $0x608] sm:$0xff]
        %v402 = vld [vmem:[%s179 + $0x610] sm:$0xff]
        %v403 = vld [vmem:[%s179 + $0x618] sm:$0xff]
        %v404 = vld [vmem:[%s179 + $0x620] sm:$0xff]
        %v405 = vld [vmem:[%s179 + $0x628] sm:$0xff]
        %v406 = vld [vmem:[%s179 + $0x630] sm:$0xff]
        %v407 = vld [vmem:[%s179 + $0x638] sm:$0xff]
        %v408 = vld [vmem:[%s179 + $0x640] sm:$0xff]
        %v409 = vld [vmem:[%s179 + $0x648] sm:$0xff]
        %v410 = vld [vmem:[%s179 + $0x650] sm:$0xff]
        %v411 = vld [vmem:[%s179 + $0x658] sm:$0xff]
        %v412 = vld [vmem:[%s179 + $0x660] sm:$0xff]
        %v413 = vld [vmem:[%s179 + $0x668] sm:$0xff]
        %v414 = vld [vmem:[%s179 + $0x670] sm:$0xff]
        %v415 = vld [vmem:[%s179 + $0x678] sm:$0xff]
        %v416 = vld [vmem:[%s179 + $0x680] sm:$0xff]
        %v417 = vld [vmem:[%s179 + $0x688] sm:$0xff]
        %v418 = vld [vmem:[%s179 + $0x690] sm:$0xff]
        %v419 = vld [vmem:[%s179 + $0x698] sm:$0xff]
        %v420 = vld [vmem:[%s179 + $0x6a0] sm:$0xff]
        %v421 = vld [vmem:[%s179 + $0x6a8] sm:$0xff]
        %v422 = vld [vmem:[%s179 + $0x6b0] sm:$0xff]
        %v423 = vld [vmem:[%s179 + $0x6b8] sm:$0xff]
        %v424 = vld [vmem:[%s179 + $0x6c0] sm:$0xff]
        %v425 = vld [vmem:[%s179 + $0x6c8] sm:$0xff]
        %v426 = vld [vmem:[%s179 + $0x6d0] sm:$0xff]
        %v427 = vld [vmem:[%s179 + $0x6d8] sm:$0xff]
        %v428 = vld [vmem:[%s179 + $0x6e0] sm:$0xff]
        %v429 = vld [vmem:[%s179 + $0x6e8] sm:$0xff]
        %v430 = vld [vmem:[%s179 + $0x6f0] sm:$0xff]
        %v431 = vld [vmem:[%s179 + $0x6f8] sm:$0xff]
        %v432 = vld [vmem:[%s179 + $0x700] sm:$0xff]
        %v433 = vld [vmem:[%s179 + $0x708] sm:$0xff]
        %v434 = vld [vmem:[%s179 + $0x710] sm:$0xff]
        %v435 = vld [vmem:[%s179 + $0x718] sm:$0xff]
        %v436 = vld [vmem:[%s179 + $0x720] sm:$0xff]
        %v437 = vld [vmem:[%s179 + $0x728] sm:$0xff]
        %v438 = vld [vmem:[%s179 + $0x730] sm:$0xff]
        %v439 = vld [vmem:[%s179 + $0x738] sm:$0xff]
        %v440 = vld [vmem:[%s179 + $0x740] sm:$0xff]
        %v441 = vld [vmem:[%s179 + $0x748] sm:$0xff]
        %v442 = vld [vmem:[%s179 + $0x750] sm:$0xff]
        %v443 = vld [vmem:[%s179 + $0x758] sm:$0xff]
        %v444 = vld [vmem:[%s179 + $0x760] sm:$0xff]
        %v445 = vld [vmem:[%s179 + $0x768] sm:$0xff]
        %v446 = vld [vmem:[%s179 + $0x770] sm:$0xff]
        %v447 = vld [vmem:[%s179 + $0x778] sm:$0xff]
        %v448 = vld [vmem:[%s179 + $0x780] sm:$0xff]
        %v449 = vld [vmem:[%s179 + $0x788] sm:$0xff]
        %v450 = vld [vmem:[%s179 + $0x790] sm:$0xff]
        %v451 = vld [vmem:[%s179 + $0x798] sm:$0xff]
        %v452 = vld [vmem:[%s179 + $0x7a0] sm:$0xff]
        %v453 = vld [vmem:[%s179 + $0x7a8] sm:$0xff]
        %v454 = vld [vmem:[%s179 + $0x7b0] sm:$0xff]
        %v455 = vld [vmem:[%s179 + $0x7b8] sm:$0xff]
        %v456 = vld [vmem:[%s179 + $0x7c0] sm:$0xff]
        %v457 = vld [vmem:[%s179 + $0x7c8] sm:$0xff]
        %v458 = vld [vmem:[%s179 + $0x7d0] sm:$0xff]
        %v459 = vld [vmem:[%s179 + $0x7d8] sm:$0xff]
        %v460 = vld [vmem:[%s179 + $0x7e0] sm:$0xff]
        %v461 = vld [vmem:[%s179 + $0x7e8] sm:$0xff]
        %v462 = vld [vmem:[%s179 + $0x7f0] sm:$0xff]
        %v463 = vld [vmem:[%s179 + $0x7f8] sm:$0xff]
        %v464 = vld [vmem:[%s179 + $0x800] sm:$0xff]
        %v465 = vld [vmem:[%s179 + $0x808] sm:$0xff]
        %v466 = vld [vmem:[%s179 + $0x810] sm:$0xff]
        %v467 = vld [vmem:[%s179 + $0x818] sm:$0xff]
        %v468 = vld [vmem:[%s179 + $0x820] sm:$0xff]
        %v469 = vld [vmem:[%s179 + $0x828] sm:$0xff]
        %v470 = vld [vmem:[%s179 + $0x830] sm:$0xff]
        %v471 = vld [vmem:[%s179 + $0x838] sm:$0xff]
        %v472 = vld [vmem:[%s179 + $0x840] sm:$0xff]
        %v473 = vld [vmem:[%s179 + $0x848] sm:$0xff]
        %v474 = vld [vmem:[%s179 + $0x850] sm:$0xff]
        %v475 = vld [vmem:[%s179 + $0x858] sm:$0xff]
        %v476 = vld [vmem:[%s179 + $0x860] sm:$0xff]
        %v477 = vld [vmem:[%s179 + $0x868] sm:$0xff]
        %v478 = vld [vmem:[%s179 + $0x870] sm:$0xff]
        %v479 = vld [vmem:[%s179 + $0x878] sm:$0xff]
        %v480 = vld [vmem:[%s179 + $0x880] sm:$0xff]
        %v481 = vld [vmem:[%s179 + $0x888] sm:$0xff]
        %v482 = vld [vmem:[%s179 + $0x890] sm:$0xff]
        %v483 = vld [vmem:[%s179 + $0x898] sm:$0xff]
        %v484 = vld [vmem:[%s179 + $0x8a0] sm:$0xff]
        %v485 = vld [vmem:[%s179 + $0x8a8] sm:$0xff]
        %v486 = vld [vmem:[%s179 + $0x8b0] sm:$0xff]
        %v487 = vld [vmem:[%s179 + $0x8b8] sm:$0xff]
        %v488 = vld [vmem:[%s179 + $0x8c0] sm:$0xff]
        %v489 = vld [vmem:[%s179 + $0x8c8] sm:$0xff]
        %v490 = vld [vmem:[%s179 + $0x8d0] sm:$0xff]
        %v491 = vld [vmem:[%s179 + $0x8d8] sm:$0xff]
        %v492 = vld [vmem:[%s179 + $0x8e0] sm:$0xff]
        %v493 = vld [vmem:[%s179 + $0x8e8] sm:$0xff]
        %v494 = vld [vmem:[%s179 + $0x8f0] sm:$0xff]
        %v495 = vld [vmem:[%s179 + $0x8f8] sm:$0xff]
        %v496 = vld [vmem:[%s179 + $0x900] sm:$0xff]
        %v497 = vld [vmem:[%s179 + $0x908] sm:$0xff]
        %v498 = vld [vmem:[%s179 + $0x910] sm:$0xff]
        %v499 = vld [vmem:[%s179 + $0x918] sm:$0xff]
        %v500 = vld [vmem:[%s179 + $0x920] sm:$0xff]
        %v501 = vld [vmem:[%s179 + $0x928] sm:$0xff]
        %v502 = vld [vmem:[%s179 + $0x930] sm:$0xff]
        %v503 = vld [vmem:[%s179 + $0x938] sm:$0xff]
        %v504 = vld [vmem:[%s179 + $0x940] sm:$0xff]
        %v505 = vld [vmem:[%s179 + $0x948] sm:$0xff]
        %v506 = vld [vmem:[%s179 + $0x950] sm:$0xff]
        %v507 = vld [vmem:[%s179 + $0x958] sm:$0xff]
        %v508 = vld [vmem:[%s179 + $0x960] sm:$0xff]
        %v509 = vld [vmem:[%s179 + $0x968] sm:$0xff]
        %v510 = vld [vmem:[%s179 + $0x970] sm:$0xff]
        %v511 = vld [vmem:[%s179 + $0x978] sm:$0xff]
        %v512 = vld [vmem:[%s179 + $0x980] sm:$0xff]
        %v513 = vld [vmem:[%s179 + $0x988] sm:$0xff]
        %v514 = vld [vmem:[%s179 + $0x990] sm:$0xff]
        %v515 = vld [vmem:[%s179 + $0x998] sm:$0xff]
        %v516 = vld [vmem:[%s179 + $0x9a0] sm:$0xff]
        %v517 = vld [vmem:[%s179 + $0x9a8] sm:$0xff]
        %v518 = vld [vmem:[%s179 + $0x9b0] sm:$0xff]
        %v519 = vld [vmem:[%s179 + $0x9b8] sm:$0xff]
        %v520 = vld [vmem:[%s179 + $0x9c0] sm:$0xff]
        %v521 = vld [vmem:[%s179 + $0x9c8] sm:$0xff]
        %v522 = vld [vmem:[%s179 + $0x9d0] sm:$0xff]
        %v523 = vld [vmem:[%s179 + $0x9d8] sm:$0xff]
        %v524 = vld [vmem:[%s179 + $0x9e0] sm:$0xff]
        %v525 = vld [vmem:[%s179 + $0x9e8] sm:$0xff]
        %v526 = vld [vmem:[%s179 + $0x9f0] sm:$0xff]
        %v527 = vld [vmem:[%s179 + $0x9f8] sm:$0xff]
        %v528 = vld [vmem:[%s179 + $0xa00] sm:$0xff]
        %v529 = vld [vmem:[%s179 + $0xa08] sm:$0xff]
        %v530 = vld [vmem:[%s179 + $0xa10] sm:$0xff]
        %v531 = vld [vmem:[%s179 + $0xa18] sm:$0xff]
        %v532 = vld [vmem:[%s179 + $0xa20] sm:$0xff]
        %v533 = vld [vmem:[%s179 + $0xa28] sm:$0xff]
        %v534 = vld [vmem:[%s179 + $0xa30] sm:$0xff]
        %v535 = vld [vmem:[%s179 + $0xa38] sm:$0xff]
        %v536 = vld [vmem:[%s179 + $0xa40] sm:$0xff]
        %v537 = vld [vmem:[%s179 + $0xa48] sm:$0xff]
        %v538 = vld [vmem:[%s179 + $0xa50] sm:$0xff]
        %v539 = vld [vmem:[%s179 + $0xa58] sm:$0xff]
        %v540 = vld [vmem:[%s179 + $0xa60] sm:$0xff]
        %v541 = vld [vmem:[%s179 + $0xa68] sm:$0xff]
        %v542 = vld [vmem:[%s179 + $0xa70] sm:$0xff]
        %v543 = vld [vmem:[%s179 + $0xa78] sm:$0xff]
        %v544 = vld [vmem:[%s179 + $0xa80] sm:$0xff]
        %v545 = vld [vmem:[%s179 + $0xa88] sm:$0xff]
        %v546 = vld [vmem:[%s179 + $0xa90] sm:$0xff]
        %v547 = vld [vmem:[%s179 + $0xa98] sm:$0xff]
        %v548 = vld [vmem:[%s179 + $0xaa0] sm:$0xff]
        %v549 = vld [vmem:[%s179 + $0xaa8] sm:$0xff]
        %v550 = vld [vmem:[%s179 + $0xab0] sm:$0xff]
        %v551 = vld [vmem:[%s179 + $0xab8] sm:$0xff]
        %v552 = vld [vmem:[%s179 + $0xac0] sm:$0xff]
        %v553 = vld [vmem:[%s179 + $0xac8] sm:$0xff]
        %v554 = vld [vmem:[%s179 + $0xad0] sm:$0xff]
        %v555 = vld [vmem:[%s179 + $0xad8] sm:$0xff]
        %v556 = vld [vmem:[%s179 + $0xae0] sm:$0xff]
        %v557 = vld [vmem:[%s179 + $0xae8] sm:$0xff]
        %v558 = vld [vmem:[%s179 + $0xaf0] sm:$0xff]
        %v559 = vld [vmem:[%s179 + $0xaf8] sm:$0xff]
        %v560 = vld [vmem:[%s179 + $0xb00] sm:$0xff]
        %v561 = vld [vmem:[%s179 + $0xb08] sm:$0xff]
        %v562 = vld [vmem:[%s179 + $0xb10] sm:$0xff]
        %v563 = vld [vmem:[%s179 + $0xb18] sm:$0xff]
        %v564 = vld [vmem:[%s179 + $0xb20] sm:$0xff]
        %v565 = vld [vmem:[%s179 + $0xb28] sm:$0xff]
        %v566 = vld [vmem:[%s179 + $0xb30] sm:$0xff]
        %v567 = vld [vmem:[%s179 + $0xb38] sm:$0xff]
        %v568 = vld [vmem:[%s179 + $0xb40] sm:$0xff]
        %v569 = vld [vmem:[%s179 + $0xb48] sm:$0xff]
        %v570 = vld [vmem:[%s179 + $0xb50] sm:$0xff]
        %v571 = vld [vmem:[%s179 + $0xb58] sm:$0xff]
        %v572 = vld [vmem:[%s179 + $0xb60] sm:$0xff]
        %v573 = vld [vmem:[%s179 + $0xb68] sm:$0xff]
        %v574 = vld [vmem:[%s179 + $0xb70] sm:$0xff]
        %v575 = vld [vmem:[%s179 + $0xb78] sm:$0xff]
        %v576 = vld [vmem:[%s179 + $0xb80] sm:$0xff]
        %v577 = vld [vmem:[%s179 + $0xb88] sm:$0xff]
        %v578 = vld [vmem:[%s179 + $0xb90] sm:$0xff]
        %v579 = vld [vmem:[%s179 + $0xb98] sm:$0xff]
        %v580 = vld [vmem:[%s179 + $0xba0] sm:$0xff]
        %v581 = vld [vmem:[%s179 + $0xba8] sm:$0xff]
        %v582 = vld [vmem:[%s179 + $0xbb0] sm:$0xff]
        %v583 = vld [vmem:[%s179 + $0xbb8] sm:$0xff]
        %v584 = vld [vmem:[%s179 + $0xbc0] sm:$0xff]
        %v585 = vld [vmem:[%s179 + $0xbc8] sm:$0xff]
        %v586 = vld [vmem:[%s179 + $0xbd0] sm:$0xff]
        %v587 = vld [vmem:[%s179 + $0xbd8] sm:$0xff]
        %v588 = vld [vmem:[%s179 + $0xbe0] sm:$0xff]
        %v589 = vld [vmem:[%s179 + $0xbe8] sm:$0xff]
        %v590 = vld [vmem:[%s179 + $0xbf0] sm:$0xff]
        %v591 = vld [vmem:[%s179 + $0xbf8] sm:$0xff]
        %v592 = vld [vmem:[%s179 + $0xc00] sm:$0xff]
        %v593 = vld [vmem:[%s179 + $0xc08] sm:$0xff]
        %v594 = vld [vmem:[%s179 + $0xc10] sm:$0xff]
        %v595 = vld [vmem:[%s179 + $0xc18] sm:$0xff]
        %v596 = vld [vmem:[%s179 + $0xc20] sm:$0xff]
        %v597 = vld [vmem:[%s179 + $0xc28] sm:$0xff]
        %v598 = vld [vmem:[%s179 + $0xc30] sm:$0xff]
        %v599 = vld [vmem:[%s179 + $0xc38] sm:$0xff]
        %v600 = vld [vmem:[%s179 + $0xc40] sm:$0xff]
        %v601 = vld [vmem:[%s179 + $0xc48] sm:$0xff]
        %v602 = vld [vmem:[%s179 + $0xc50] sm:$0xff]
        %v603 = vld [vmem:[%s179 + $0xc58] sm:$0xff]
        %v604 = vld [vmem:[%s179 + $0xc60] sm:$0xff]
        %v605 = vld [vmem:[%s179 + $0xc68] sm:$0xff]
        %v606 = vld [vmem:[%s179 + $0xc70] sm:$0xff]
        %v607 = vld [vmem:[%s179 + $0xc78] sm:$0xff]
        %v608 = vld [vmem:[%s179 + $0xc80] sm:$0xff]
        %v609 = vld [vmem:[%s179 + $0xc88] sm:$0xff]
        %v610 = vld [vmem:[%s179 + $0xc90] sm:$0xff]
        %v611 = vld [vmem:[%s179 + $0xc98] sm:$0xff]
        %v612 = vld [vmem:[%s179 + $0xca0] sm:$0xff]
        %v613 = vld [vmem:[%s179 + $0xca8] sm:$0xff]
        %v614 = vld [vmem:[%s179 + $0xcb0] sm:$0xff]
        %v615 = vld [vmem:[%s179 + $0xcb8] sm:$0xff]
        %v616 = vld [vmem:[%s179 + $0xcc0] sm:$0xff]
        %v617 = vld [vmem:[%s179 + $0xcc8] sm:$0xff]
        %v618 = vld [vmem:[%s179 + $0xcd0] sm:$0xff]
        %v619 = vld [vmem:[%s179 + $0xcd8] sm:$0xff]
        %v620 = vld [vmem:[%s179 + $0xce0] sm:$0xff]
        %v621 = vld [vmem:[%s179 + $0xce8] sm:$0xff]
        %v622 = vld [vmem:[%s179 + $0xcf0] sm:$0xff]
        %v623 = vld [vmem:[%s179 + $0xcf8] sm:$0xff]
        %v624 = vld [vmem:[%s179 + $0xd00] sm:$0xff]
        %v625 = vld [vmem:[%s179 + $0xd08] sm:$0xff]
        %v626 = vld [vmem:[%s179 + $0xd10] sm:$0xff]
        %v627 = vld [vmem:[%s179 + $0xd18] sm:$0xff]
        %v628 = vld [vmem:[%s179 + $0xd20] sm:$0xff]
        %v629 = vld [vmem:[%s179 + $0xd28] sm:$0xff]
        %v630 = vld [vmem:[%s179 + $0xd30] sm:$0xff]
        %v631 = vld [vmem:[%s179 + $0xd38] sm:$0xff]
        %v632 = vld [vmem:[%s179 + $0xd40] sm:$0xff]
        %v633 = vld [vmem:[%s179 + $0xd48] sm:$0xff]
        %v634 = vld [vmem:[%s179 + $0xd50] sm:$0xff]
        %v635 = vld [vmem:[%s179 + $0xd58] sm:$0xff]
        %v636 = vld [vmem:[%s179 + $0xd60] sm:$0xff]
        %v637 = vld [vmem:[%s179 + $0xd68] sm:$0xff]
        %v638 = vld [vmem:[%s179 + $0xd70] sm:$0xff]
        %v639 = vld [vmem:[%s179 + $0xd78] sm:$0xff]
        %v640 = vld [vmem:[%s179 + $0xd80] sm:$0xff]
        %v641 = vld [vmem:[%s179 + $0xd88] sm:$0xff]
        %v642 = vld [vmem:[%s179 + $0xd90] sm:$0xff]
        %v643 = vld [vmem:[%s179 + $0xd98] sm:$0xff]
        %v644 = vld [vmem:[%s179 + $0xda0] sm:$0xff]
        %v645 = vld [vmem:[%s179 + $0xda8] sm:$0xff]
        %v646 = vld [vmem:[%s179 + $0xdb0] sm:$0xff]
        %v647 = vld [vmem:[%s179 + $0xdb8] sm:$0xff]
        %v648 = vld [vmem:[%s179 + $0xdc0] sm:$0xff]
        %v649 = vld [vmem:[%s179 + $0xdc8] sm:$0xff]
        %v650 = vld [vmem:[%s179 + $0xdd0] sm:$0xff]
        %v651 = vld [vmem:[%s179 + $0xdd8] sm:$0xff]
        %v652 = vld [vmem:[%s179 + $0xde0] sm:$0xff]
        %v653 = vld [vmem:[%s179 + $0xde8] sm:$0xff]
        %v654 = vld [vmem:[%s179 + $0xdf0] sm:$0xff]
        %v655 = vld [vmem:[%s179 + $0xdf8] sm:$0xff]
        %v656 = vld [vmem:[%s179 + $0xe00] sm:$0xff]
        %v657 = vld [vmem:[%s179 + $0xe08] sm:$0xff]
        %v658 = vld [vmem:[%s179 + $0xe10] sm:$0xff]
        %v659 = vld [vmem:[%s179 + $0xe18] sm:$0xff]
        %v660 = vld [vmem:[%s179 + $0xe20] sm:$0xff]
        %v661 = vld [vmem:[%s179 + $0xe28] sm:$0xff]
        %v662 = vld [vmem:[%s179 + $0xe30] sm:$0xff]
        %v663 = vld [vmem:[%s179 + $0xe38] sm:$0xff]
        %v664 = vld [vmem:[%s179 + $0xe40] sm:$0xff]
        %v665 = vld [vmem:[%s179 + $0xe48] sm:$0xff]
        %v666 = vld [vmem:[%s179 + $0xe50] sm:$0xff]
        %v667 = vld [vmem:[%s179 + $0xe58] sm:$0xff]
        %v668 = vld [vmem:[%s179 + $0xe60] sm:$0xff]
        %v669 = vld [vmem:[%s179 + $0xe68] sm:$0xff]
        %v670 = vld [vmem:[%s179 + $0xe70] sm:$0xff]
        %v671 = vld [vmem:[%s179 + $0xe78] sm:$0xff]
        %v672 = vld [vmem:[%s179 + $0xe80] sm:$0xff]
        %v673 = vld [vmem:[%s179 + $0xe88] sm:$0xff]
        %v674 = vld [vmem:[%s179 + $0xe90] sm:$0xff]
        %v675 = vld [vmem:[%s179 + $0xe98] sm:$0xff]
        %v676 = vld [vmem:[%s179 + $0xea0] sm:$0xff]
        %v677 = vld [vmem:[%s179 + $0xea8] sm:$0xff]
        %v678 = vld [vmem:[%s179 + $0xeb0] sm:$0xff]
        %v679 = vld [vmem:[%s179 + $0xeb8] sm:$0xff]
        %v680 = vld [vmem:[%s179 + $0xec0] sm:$0xff]
        %v681 = vld [vmem:[%s179 + $0xec8] sm:$0xff]
        %v682 = vld [vmem:[%s179 + $0xed0] sm:$0xff]
        %v683 = vld [vmem:[%s179 + $0xed8] sm:$0xff]
        %v684 = vld [vmem:[%s179 + $0xee0] sm:$0xff]
        %v685 = vld [vmem:[%s179 + $0xee8] sm:$0xff]
        %v686 = vld [vmem:[%s179 + $0xef0] sm:$0xff]
        %v687 = vld [vmem:[%s179 + $0xef8] sm:$0xff]
        %v688 = vld [vmem:[%s179 + $0xf00] sm:$0xff]
        %v689 = vld [vmem:[%s179 + $0xf08] sm:$0xff]
        %v690 = vld [vmem:[%s179 + $0xf10] sm:$0xff]
        %v691 = vld [vmem:[%s179 + $0xf18] sm:$0xff]
        %v692 = vld [vmem:[%s179 + $0xf20] sm:$0xff]
        %v693 = vld [vmem:[%s179 + $0xf28] sm:$0xff]
        %v694 = vld [vmem:[%s179 + $0xf30] sm:$0xff]
        %v695 = vld [vmem:[%s179 + $0xf38] sm:$0xff]
        %v696 = vld [vmem:[%s179 + $0xf40] sm:$0xff]
        %v697 = vld [vmem:[%s179 + $0xf48] sm:$0xff]
        %v698 = vld [vmem:[%s179 + $0xf50] sm:$0xff]
        %v699 = vld [vmem:[%s179 + $0xf58] sm:$0xff]
        %v700 = vld [vmem:[%s179 + $0xf60] sm:$0xff]
        %v701 = vld [vmem:[%s179 + $0xf68] sm:$0xff]
        %v702 = vld [vmem:[%s179 + $0xf70] sm:$0xff]
        %v703 = vld [vmem:[%s179 + $0xf78] sm:$0xff]
        %v704 = vld [vmem:[%s179 + $0xf80] sm:$0xff]
        %v705 = vld [vmem:[%s179 + $0xf88] sm:$0xff]
        %v706 = vld [vmem:[%s179 + $0xf90] sm:$0xff]
        %v707 = vld [vmem:[%s179 + $0xf98] sm:$0xff]
        %v708 = vld [vmem:[%s179 + $0xfa0] sm:$0xff]
        %v709 = vld [vmem:[%s179 + $0xfa8] sm:$0xff]
        %v710 = vld [vmem:[%s179 + $0xfb0] sm:$0xff]
        %v711 = vld [vmem:[%s179 + $0xfb8] sm:$0xff]
        %v712 = vld [vmem:[%s179 + $0xfc0] sm:$0xff]
        %v713 = vld [vmem:[%s179 + $0xfc8] sm:$0xff]
        %v714 = vld [vmem:[%s179 + $0xfd0] sm:$0xff]
        %v715 = vld [vmem:[%s179 + $0xfd8] sm:$0xff]
        %v716 = vld [vmem:[%s179 + $0xfe0] sm:$0xff]
        %v717 = vld [vmem:[%s179 + $0xfe8] sm:$0xff]
        %v718 = vld [vmem:[%s179 + $0xff0] sm:$0xff]
        %v719 = vld [vmem:[%s179 + $0xff8] sm:$0xff]
        %v720 = vld [vmem:[%s179 + $0x1000] sm:$0xff]
        %v721 = vld [vmem:[%s179 + $0x1008] sm:$0xff]
        %v722 = vld [vmem:[%s179 + $0x1010] sm:$0xff]
        %v723 = vld [vmem:[%s179 + $0x1018] sm:$0xff]
        %v724 = vld [vmem:[%s179 + $0x1020] sm:$0xff]
        %v725 = vld [vmem:[%s179 + $0x1028] sm:$0xff]
        %v726 = vld [vmem:[%s179 + $0x1030] sm:$0xff]
        %v727 = vld [vmem:[%s179 + $0x1038] sm:$0xff]
        %v728 = vld [vmem:[%s179 + $0x1040] sm:$0xff]
        %v729 = vld [vmem:[%s179 + $0x1048] sm:$0xff]
        %v730 = vld [vmem:[%s179 + $0x1050] sm:$0xff]
        %v731 = vld [vmem:[%s179 + $0x1058] sm:$0xff]
        %v732 = vld [vmem:[%s179 + $0x1060] sm:$0xff]
        %v733 = vld [vmem:[%s179 + $0x1068] sm:$0xff]
        %v734 = vld [vmem:[%s179 + $0x1070] sm:$0xff]
        %v735 = vld [vmem:[%s179 + $0x1078] sm:$0xff]
        %v736 = vld [vmem:[%s179 + $0x1080] sm:$0xff]
        %v737 = vld [vmem:[%s179 + $0x1088] sm:$0xff]
        %v738 = vld [vmem:[%s179 + $0x1090] sm:$0xff]
        %v739 = vld [vmem:[%s179 + $0x1098] sm:$0xff]
        %v740 = vld [vmem:[%s179 + $0x10a0] sm:$0xff]
        %v741 = vld [vmem:[%s179 + $0x10a8] sm:$0xff]
        %v742 = vld [vmem:[%s179 + $0x10b0] sm:$0xff]
        %v743 = vld [vmem:[%s179 + $0x10b8] sm:$0xff]
        %v744 = vld [vmem:[%s179 + $0x10c0] sm:$0xff]
        %v745 = vld [vmem:[%s179 + $0x10c8] sm:$0xff]
        %v746 = vld [vmem:[%s179 + $0x10d0] sm:$0xff]
        %v747 = vld [vmem:[%s179 + $0x10d8] sm:$0xff]
        %v748 = vld [vmem:[%s179 + $0x10e0] sm:$0xff]
        %v749 = vld [vmem:[%s179 + $0x10e8] sm:$0xff]
        %v750 = vld [vmem:[%s179 + $0x10f0] sm:$0xff]
        %v751 = vld [vmem:[%s179 + $0x10f8] sm:$0xff]
        %v752 = vld [vmem:[%s179 + $0x1100] sm:$0xff]
        %v753 = vld [vmem:[%s179 + $0x1108] sm:$0xff]
        %v754 = vld [vmem:[%s179 + $0x1110] sm:$0xff]
        %v755 = vld [vmem:[%s179 + $0x1118] sm:$0xff]
        %v756 = vld [vmem:[%s179 + $0x1120] sm:$0xff]
        %v757 = vld [vmem:[%s179 + $0x1128] sm:$0xff]
        %v758 = vld [vmem:[%s179 + $0x1130] sm:$0xff]
        %v759 = vld [vmem:[%s179 + $0x1138] sm:$0xff]
        %v760 = vld [vmem:[%s179 + $0x1140] sm:$0xff]
        %v761 = vld [vmem:[%s179 + $0x1148] sm:$0xff]
        %v762 = vld [vmem:[%s179 + $0x1150] sm:$0xff]
        %v763 = vld [vmem:[%s179 + $0x1158] sm:$0xff]
        %v764 = vld [vmem:[%s179 + $0x1160] sm:$0xff]
        %v765 = vld [vmem:[%s179 + $0x1168] sm:$0xff]
        %v766 = vld [vmem:[%s179 + $0x1170] sm:$0xff]
        %v767 = vld [vmem:[%s179 + $0x1178] sm:$0xff]
        %v768 = vld [vmem:[%s179 + $0x1180] sm:$0xff]
        %v769 = vld [vmem:[%s179 + $0x1188] sm:$0xff]
        %v770 = vld [vmem:[%s179 + $0x1190] sm:$0xff]
        %v771 = vld [vmem:[%s179 + $0x1198] sm:$0xff]
        %v772 = vld [vmem:[%s179 + $0x11a0] sm:$0xff]
        %v773 = vld [vmem:[%s179 + $0x11a8] sm:$0xff]
        %v774 = vld [vmem:[%s179 + $0x11b0] sm:$0xff]
        %v775 = vld [vmem:[%s179 + $0x11b8] sm:$0xff]
        %v776 = vld [vmem:[%s179 + $0x11c0] sm:$0xff]
        %v777 = vld [vmem:[%s179 + $0x11c8] sm:$0xff]
        %v778 = vld [vmem:[%s179 + $0x11d0] sm:$0xff]
        %v779 = vld [vmem:[%s179 + $0x11d8] sm:$0xff]
        %v780 = vld [vmem:[%s179 + $0x11e0] sm:$0xff]
        %v781 = vld [vmem:[%s179 + $0x11e8] sm:$0xff]
        %v782 = vld [vmem:[%s179 + $0x11f0] sm:$0xff]
        %v783 = vld [vmem:[%s179 + $0x11f8] sm:$0xff]
        %v784 = vld [vmem:[%s179 + $0x1200] sm:$0xff]
        %v785 = vld [vmem:[%s179 + $0x1208] sm:$0xff]
        %v786 = vld [vmem:[%s179 + $0x1210] sm:$0xff]
        %v787 = vld [vmem:[%s179 + $0x1218] sm:$0xff]
        %v788 = vld [vmem:[%s179 + $0x1220] sm:$0xff]
        %v789 = vld [vmem:[%s179 + $0x1228] sm:$0xff]
        %v790 = vld [vmem:[%s179 + $0x1230] sm:$0xff]
        %v791 = vld [vmem:[%s179 + $0x1238] sm:$0xff]
        %v792 = vld [vmem:[%s179 + $0x1240] sm:$0xff]
        %v793 = vld [vmem:[%s179 + $0x1248] sm:$0xff]
        %v794 = vld [vmem:[%s179 + $0x1250] sm:$0xff]
        %v795 = vld [vmem:[%s179 + $0x1258] sm:$0xff]
        %v796 = vld [vmem:[%s179 + $0x1260] sm:$0xff]
        %v797 = vld [vmem:[%s179 + $0x1268] sm:$0xff]
        %v798 = vld [vmem:[%s179 + $0x1270] sm:$0xff]
        %v799 = vld [vmem:[%s179 + $0x1278] sm:$0xff]
        %v800 = vld [vmem:[%s179 + $0x1280] sm:$0xff]
        %v801 = vld [vmem:[%s179 + $0x1288] sm:$0xff]
        %v802 = vld [vmem:[%s179 + $0x1290] sm:$0xff]
        %v803 = vld [vmem:[%s179 + $0x1298] sm:$0xff]
        %v804 = vld [vmem:[%s179 + $0x12a0] sm:$0xff]
        %v805 = vld [vmem:[%s179 + $0x12a8] sm:$0xff]
        %v806 = vld [vmem:[%s179 + $0x12b0] sm:$0xff]
        %v807 = vld [vmem:[%s179 + $0x12b8] sm:$0xff]
        %v808 = vld [vmem:[%s179 + $0x12c0] sm:$0xff]
        %v809 = vld [vmem:[%s179 + $0x12c8] sm:$0xff]
        %v810 = vld [vmem:[%s179 + $0x12d0] sm:$0xff]
        %v811 = vld [vmem:[%s179 + $0x12d8] sm:$0xff]
        %v812 = vld [vmem:[%s179 + $0x12e0] sm:$0xff]
        %v813 = vld [vmem:[%s179 + $0x12e8] sm:$0xff]
        %v814 = vld [vmem:[%s179 + $0x12f0] sm:$0xff]
        %v815 = vld [vmem:[%s179 + $0x12f8] sm:$0xff]
        %v816 = vld [vmem:[%s179 + $0x1300] sm:$0xff]
        %v817 = vld [vmem:[%s179 + $0x1308] sm:$0xff]
        %v818 = vld [vmem:[%s179 + $0x1310] sm:$0xff]
        %v819 = vld [vmem:[%s179 + $0x1318] sm:$0xff]
        %v820 = vld [vmem:[%s179 + $0x1320] sm:$0xff]
        %v821 = vld [vmem:[%s179 + $0x1328] sm:$0xff]
        %v822 = vld [vmem:[%s179 + $0x1330] sm:$0xff]
        %v823 = vld [vmem:[%s179 + $0x1338] sm:$0xff]
        %v824 = vld [vmem:[%s179 + $0x1340] sm:$0xff]
        %v825 = vld [vmem:[%s179 + $0x1348] sm:$0xff]
        %v826 = vld [vmem:[%s179 + $0x1350] sm:$0xff]
        %v827 = vld [vmem:[%s179 + $0x1358] sm:$0xff]
        %v828 = vld [vmem:[%s179 + $0x1360] sm:$0xff]
        %v829 = vld [vmem:[%s179 + $0x1368] sm:$0xff]
        %v830 = vld [vmem:[%s179 + $0x1370] sm:$0xff]
        %v831 = vld [vmem:[%s179 + $0x1378] sm:$0xff]
        %v832 = vld [vmem:[%s179 + $0x1380] sm:$0xff]
        %v833 = vld [vmem:[%s179 + $0x1388] sm:$0xff]
        %v834 = vld [vmem:[%s179 + $0x1390] sm:$0xff]
        %v835 = vld [vmem:[%s179 + $0x1398] sm:$0xff]
        %v836 = vld [vmem:[%s179 + $0x13a0] sm:$0xff]
        %v837 = vld [vmem:[%s179 + $0x13a8] sm:$0xff]
        %v838 = vld [vmem:[%s179 + $0x13b0] sm:$0xff]
        %v839 = vld [vmem:[%s179 + $0x13b8] sm:$0xff]
        %v840 = vld [vmem:[%s179 + $0x13c0] sm:$0xff]
        %v841 = vld [vmem:[%s179 + $0x13c8] sm:$0xff]
        %v842 = vld [vmem:[%s179 + $0x13d0] sm:$0xff]
        %v843 = vld [vmem:[%s179 + $0x13d8] sm:$0xff]
        %v844 = vld [vmem:[%s179 + $0x13e0] sm:$0xff]
        %v845 = vld [vmem:[%s179 + $0x13e8] sm:$0xff]
        %v846 = vld [vmem:[%s179 + $0x13f0] sm:$0xff]
        %v847 = vld [vmem:[%s179 + $0x13f8] sm:$0xff]
        %v848 = vld [vmem:[%s179 + $0x1400] sm:$0xff]
        %v849 = vld [vmem:[%s179 + $0x1408] sm:$0xff]
        %v850 = vld [vmem:[%s179 + $0x1410] sm:$0xff]
        %v851 = vld [vmem:[%s179 + $0x1418] sm:$0xff]
        %v852 = vld [vmem:[%s179 + $0x1420] sm:$0xff]
        %v853 = vld [vmem:[%s179 + $0x1428] sm:$0xff]
        %v854 = vld [vmem:[%s179 + $0x1430] sm:$0xff]
        %v855 = vld [vmem:[%s179 + $0x1438] sm:$0xff]
        %v856 = vld [vmem:[%s179 + $0x1440] sm:$0xff]
        %v857 = vld [vmem:[%s179 + $0x1448] sm:$0xff]
        %v858 = vld [vmem:[%s179 + $0x1450] sm:$0xff]
        %v859 = vld [vmem:[%s179 + $0x1458] sm:$0xff]
        %v860 = vld [vmem:[%s179 + $0x1460] sm:$0xff]
        %v861 = vld [vmem:[%s179 + $0x1468] sm:$0xff]
        %v862 = vld [vmem:[%s179 + $0x1470] sm:$0xff]
        %v863 = vld [vmem:[%s179 + $0x1478] sm:$0xff]
        %v864 = vld [vmem:[%s179 + $0x1480] sm:$0xff]
        %v865 = vld [vmem:[%s179 + $0x1488] sm:$0xff]
        %v866 = vld [vmem:[%s179 + $0x1490] sm:$0xff]
        %v867 = vld [vmem:[%s179 + $0x1498] sm:$0xff]
        %v868 = vld [vmem:[%s179 + $0x14a0] sm:$0xff]
        %v869 = vld [vmem:[%s179 + $0x14a8] sm:$0xff]
        %v870 = vld [vmem:[%s179 + $0x14b0] sm:$0xff]
        %v871 = vld [vmem:[%s179 + $0x14b8] sm:$0xff]
        %v872 = vld [vmem:[%s179 + $0x14c0] sm:$0xff]
        %v873 = vld [vmem:[%s179 + $0x14c8] sm:$0xff]
        %v874 = vld [vmem:[%s179 + $0x14d0] sm:$0xff]
        %v875 = vld [vmem:[%s179 + $0x14d8] sm:$0xff]
        %v876 = vld [vmem:[%s179 + $0x14e0] sm:$0xff]
        %v877 = vld [vmem:[%s179 + $0x14e8] sm:$0xff]
        %v878 = vld [vmem:[%s179 + $0x14f0] sm:$0xff]
        %v879 = vld [vmem:[%s179 + $0x14f8] sm:$0xff]
        %v880 = vld [vmem:[%s179 + $0x1500] sm:$0xff]
        %v881 = vld [vmem:[%s179 + $0x1508] sm:$0xff]
        %v882 = vld [vmem:[%s179 + $0x1510] sm:$0xff]
        %v883 = vld [vmem:[%s179 + $0x1518] sm:$0xff]
        %v884 = vld [vmem:[%s179 + $0x1520] sm:$0xff]
        %v885 = vld [vmem:[%s179 + $0x1528] sm:$0xff]
        %v886 = vld [vmem:[%s179 + $0x1530] sm:$0xff]
        %v887 = vld [vmem:[%s179 + $0x1538] sm:$0xff]
        %v888 = vld [vmem:[%s179 + $0x1540] sm:$0xff]
        %v889 = vld [vmem:[%s179 + $0x1548] sm:$0xff]
        %v890 = vld [vmem:[%s179 + $0x1550] sm:$0xff]
        %v891 = vld [vmem:[%s179 + $0x1558] sm:$0xff]
        %v892 = vld [vmem:[%s179 + $0x1560] sm:$0xff]
        %v893 = vld [vmem:[%s179 + $0x1568] sm:$0xff]
        %v894 = vld [vmem:[%s179 + $0x1570] sm:$0xff]
        %v895 = vld [vmem:[%s179 + $0x1578] sm:$0xff]
        %v896 = vld [vmem:[%s179 + $0x1580] sm:$0xff]
        %v897 = vld [vmem:[%s179 + $0x1588] sm:$0xff]
        %v898 = vld [vmem:[%s179 + $0x1590] sm:$0xff]
        %v899 = vld [vmem:[%s179 + $0x1598] sm:$0xff]
        %v900 = vld [vmem:[%s179 + $0x15a0] sm:$0xff]
        %v901 = vld [vmem:[%s179 + $0x15a8] sm:$0xff]
        %v902 = vld [vmem:[%s179 + $0x15b0] sm:$0xff]
        %v903 = vld [vmem:[%s179 + $0x15b8] sm:$0xff]
        %v904 = vld [vmem:[%s179 + $0x15c0] sm:$0xff]
        %v905 = vld [vmem:[%s179 + $0x15c8] sm:$0xff]
        %v906 = vld [vmem:[%s179 + $0x15d0] sm:$0xff]
        %v907 = vld [vmem:[%s179 + $0x15d8] sm:$0xff]
        %v908 = vld [vmem:[%s179 + $0x15e0] sm:$0xff]
        %v909 = vld [vmem:[%s179 + $0x15e8] sm:$0xff]
        %v910 = vld [vmem:[%s179 + $0x15f0] sm:$0xff]
        %v911 = vld [vmem:[%s179 + $0x15f8] sm:$0xff]
        %v912 = vld [vmem:[%s179 + $0x1600] sm:$0xff]
        %v913 = vld [vmem:[%s179 + $0x1608] sm:$0xff]
        %v914 = vld [vmem:[%s179 + $0x1610] sm:$0xff]
        %v915 = vld [vmem:[%s179 + $0x1618] sm:$0xff]
        %v916 = vld [vmem:[%s179 + $0x1620] sm:$0xff]
        %v917 = vld [vmem:[%s179 + $0x1628] sm:$0xff]
        %v918 = vld [vmem:[%s179 + $0x1630] sm:$0xff]
        %v919 = vld [vmem:[%s179 + $0x1638] sm:$0xff]
        %v920 = vld [vmem:[%s179 + $0x1640] sm:$0xff]
        %v921 = vld [vmem:[%s179 + $0x1648] sm:$0xff]
        %v922 = vld [vmem:[%s179 + $0x1650] sm:$0xff]
        %v923 = vld [vmem:[%s179 + $0x1658] sm:$0xff]
        %v924 = vld [vmem:[%s179 + $0x1660] sm:$0xff]
        %v925 = vld [vmem:[%s179 + $0x1668] sm:$0xff]
        %v926 = vld [vmem:[%s179 + $0x1670] sm:$0xff]
        %v927 = vld [vmem:[%s179 + $0x1678] sm:$0xff]
        %v928 = vld [vmem:[%s179 + $0x1680] sm:$0xff]
        %v929 = vld [vmem:[%s179 + $0x1688] sm:$0xff]
        %v930 = vld [vmem:[%s179 + $0x1690] sm:$0xff]
        %v931 = vld [vmem:[%s179 + $0x1698] sm:$0xff]
        %v932 = vld [vmem:[%s179 + $0x16a0] sm:$0xff]
        %v933 = vld [vmem:[%s179 + $0x16a8] sm:$0xff]
        %v934 = vld [vmem:[%s179 + $0x16b0] sm:$0xff]
        %v935 = vld [vmem:[%s179 + $0x16b8] sm:$0xff]
        %v936 = vld [vmem:[%s179 + $0x16c0] sm:$0xff]
        %v937 = vld [vmem:[%s179 + $0x16c8] sm:$0xff]
        %v938 = vld [vmem:[%s179 + $0x16d0] sm:$0xff]
        %v939 = vld [vmem:[%s179 + $0x16d8] sm:$0xff]
        %v940 = vld [vmem:[%s179 + $0x16e0] sm:$0xff]
        %v941 = vld [vmem:[%s179 + $0x16e8] sm:$0xff]
        %v942 = vld [vmem:[%s179 + $0x16f0] sm:$0xff]
        %v943 = vld [vmem:[%s179 + $0x16f8] sm:$0xff]
        %v944 = vld [vmem:[%s179 + $0x1700] sm:$0xff]
        %v945 = vld [vmem:[%s179 + $0x1708] sm:$0xff]
        %v946 = vld [vmem:[%s179 + $0x1710] sm:$0xff]
        %v947 = vld [vmem:[%s179 + $0x1718] sm:$0xff]
        %v948 = vld [vmem:[%s179 + $0x1720] sm:$0xff]
        %v949 = vld [vmem:[%s179 + $0x1728] sm:$0xff]
        %v950 = vld [vmem:[%s179 + $0x1730] sm:$0xff]
        %v951 = vld [vmem:[%s179 + $0x1738] sm:$0xff]
        %v952 = vld [vmem:[%s179 + $0x1740] sm:$0xff]
        %v953 = vld [vmem:[%s179 + $0x1748] sm:$0xff]
        %v954 = vld [vmem:[%s179 + $0x1750] sm:$0xff]
        %v955 = vld [vmem:[%s179 + $0x1758] sm:$0xff]
        %v956 = vld [vmem:[%s179 + $0x1760] sm:$0xff]
        %v957 = vld [vmem:[%s179 + $0x1768] sm:$0xff]
        %v958 = vld [vmem:[%s179 + $0x1770] sm:$0xff]
        %v959 = vld [vmem:[%s179 + $0x1778] sm:$0xff]
        %v960 = vld [vmem:[%s179 + $0x1780] sm:$0xff]
        %v961 = vld [vmem:[%s179 + $0x1788] sm:$0xff]
        %v962 = vld [vmem:[%s179 + $0x1790] sm:$0xff]
        %v963 = vld [vmem:[%s179 + $0x1798] sm:$0xff]
        %v964 = vld [vmem:[%s179 + $0x17a0] sm:$0xff]
        %v965 = vld [vmem:[%s179 + $0x17a8] sm:$0xff]
        %v966 = vld [vmem:[%s179 + $0x17b0] sm:$0xff]
        %v967 = vld [vmem:[%s179 + $0x17b8] sm:$0xff]
        %v968 = vld [vmem:[%s179 + $0x17c0] sm:$0xff]
        %v969 = vld [vmem:[%s179 + $0x17c8] sm:$0xff]
        %v970 = vld [vmem:[%s179 + $0x17d0] sm:$0xff]
        %v971 = vld [vmem:[%s179 + $0x17d8] sm:$0xff]
        %v972 = vld [vmem:[%s179 + $0x17e0] sm:$0xff]
        %v973 = vld [vmem:[%s179 + $0x17e8] sm:$0xff]
        %v974 = vld [vmem:[%s179 + $0x17f0] sm:$0xff]
        %v975 = vld [vmem:[%s179 + $0x17f8] sm:$0xff]
        %v976 = vld [vmem:[%s179 + $0x1800] sm:$0xff]
        %v977 = vld [vmem:[%s179 + $0x1808] sm:$0xff]
        %v978 = vld [vmem:[%s179 + $0x1810] sm:$0xff]
        %v979 = vld [vmem:[%s179 + $0x1818] sm:$0xff]
        %v980 = vld [vmem:[%s179 + $0x1820] sm:$0xff]
        %v981 = vld [vmem:[%s179 + $0x1828] sm:$0xff]
        %v982 = vld [vmem:[%s179 + $0x1830] sm:$0xff]
        %v983 = vld [vmem:[%s179 + $0x1838] sm:$0xff]
        %v984 = vld [vmem:[%s179 + $0x1840] sm:$0xff]
        %v985 = vld [vmem:[%s179 + $0x1848] sm:$0xff]
        %v986 = vld [vmem:[%s179 + $0x1850] sm:$0xff]
        %v987 = vld [vmem:[%s179 + $0x1858] sm:$0xff]
        %v988 = vld [vmem:[%s179 + $0x1860] sm:$0xff]
        %v989 = vld [vmem:[%s179 + $0x1868] sm:$0xff]
        %v990 = vld [vmem:[%s179 + $0x1870] sm:$0xff]
        %v991 = vld [vmem:[%s179 + $0x1878] sm:$0xff]
        %v992 = vld [vmem:[%s179 + $0x1880] sm:$0xff]
        %v993 = vld [vmem:[%s179 + $0x1888] sm:$0xff]
        %v994 = vld [vmem:[%s179 + $0x1890] sm:$0xff]
        %v995 = vld [vmem:[%s179 + $0x1898] sm:$0xff]
        %v996 = vld [vmem:[%s179 + $0x18a0] sm:$0xff]
        %v997 = vld [vmem:[%s179 + $0x18a8] sm:$0xff]
        %v998 = vld [vmem:[%s179 + $0x18b0] sm:$0xff]
        %v999 = vld [vmem:[%s179 + $0x18b8] sm:$0xff]
        %v1000 = vld [vmem:[%s179 + $0x18c0] sm:$0xff]
        %v1001 = vld [vmem:[%s179 + $0x18c8] sm:$0xff]
        %v1002 = vld [vmem:[%s179 + $0x18d0] sm:$0xff]
        %v1003 = vld [vmem:[%s179 + $0x18d8] sm:$0xff]
        %v1004 = vld [vmem:[%s179 + $0x18e0] sm:$0xff]
        %v1005 = vld [vmem:[%s179 + $0x18e8] sm:$0xff]
        %v1006 = vld [vmem:[%s179 + $0x18f0] sm:$0xff]
        %v1007 = vld [vmem:[%s179 + $0x18f8] sm:$0xff]
        %v1008 = vld [vmem:[%s179 + $0x1900] sm:$0xff]
        %v1009 = vld [vmem:[%s179 + $0x1908] sm:$0xff]
        %v1010 = vld [vmem:[%s179 + $0x1910] sm:$0xff]
        %v1011 = vld [vmem:[%s179 + $0x1918] sm:$0xff]
        %v1012 = vld [vmem:[%s179 + $0x1920] sm:$0xff]
        %v1013 = vld [vmem:[%s179 + $0x1928] sm:$0xff]
        %v1014 = vld [vmem:[%s179 + $0x1930] sm:$0xff]
        %v1015 = vld [vmem:[%s179 + $0x1938] sm:$0xff]
        %v1016 = vld [vmem:[%s179 + $0x1940] sm:$0xff]
        %v1017 = vld [vmem:[%s179 + $0x1948] sm:$0xff]
        %v1018 = vld [vmem:[%s179 + $0x1950] sm:$0xff]
        %v1019 = vld [vmem:[%s179 + $0x1958] sm:$0xff]
        %v1020 = vld [vmem:[%s179 + $0x1960] sm:$0xff]
        %v1021 = vld [vmem:[%s179 + $0x1968] sm:$0xff]
        %v1022 = vld [vmem:[%s179 + $0x1970] sm:$0xff]
        %v1023 = vld [vmem:[%s179 + $0x1978] sm:$0xff]
        %v1024 = vld [vmem:[%s179 + $0x1980] sm:$0xff]
        %v1025 = vld [vmem:[%s179 + $0x1988] sm:$0xff]
        %v1026 = vld [vmem:[%s179 + $0x1990] sm:$0xff]
        %v1027 = vld [vmem:[%s179 + $0x1998] sm:$0xff]
        %v1028 = vld [vmem:[%s179 + $0x19a0] sm:$0xff]
        %v1029 = vld [vmem:[%s179 + $0x19a8] sm:$0xff]
        %v1030 = vld [vmem:[%s179 + $0x19b0] sm:$0xff]
        %v1031 = vld [vmem:[%s179 + $0x19b8] sm:$0xff]
        %v1032 = vld [vmem:[%s179 + $0x19c0] sm:$0xff]
        %v1033 = vld [vmem:[%s179 + $0x19c8] sm:$0xff]
        %v1034 = vld [vmem:[%s179 + $0x19d0] sm:$0xff]
        %v1035 = vld [vmem:[%s179 + $0x19d8] sm:$0xff]
        %v1036 = vld [vmem:[%s179 + $0x19e0] sm:$0xff]
        %v1037 = vld [vmem:[%s179 + $0x19e8] sm:$0xff]
        %v1038 = vld [vmem:[%s179 + $0x19f0] sm:$0xff]
        %v1039 = vld [vmem:[%s179 + $0x19f8] sm:$0xff]
        %v1040 = vld [vmem:[%s179 + $0x1a00] sm:$0xff]
        %v1041 = vld [vmem:[%s179 + $0x1a08] sm:$0xff]
        %v1042 = vld [vmem:[%s179 + $0x1a10] sm:$0xff]
        %v1043 = vld [vmem:[%s179 + $0x1a18] sm:$0xff]
        %v1044 = vld [vmem:[%s179 + $0x1a20] sm:$0xff]
        %v1045 = vld [vmem:[%s179 + $0x1a28] sm:$0xff]
        %v1046 = vld [vmem:[%s179 + $0x1a30] sm:$0xff]
        %v1047 = vld [vmem:[%s179 + $0x1a38] sm:$0xff]
        %v1048 = vld [vmem:[%s179 + $0x1a40] sm:$0xff]
        %v1049 = vld [vmem:[%s179 + $0x1a48] sm:$0xff]
        %v1050 = vld [vmem:[%s179 + $0x1a50] sm:$0xff]
        %v1051 = vld [vmem:[%s179 + $0x1a58] sm:$0xff]
        %v1052 = vld [vmem:[%s179 + $0x1a60] sm:$0xff]
        %v1053 = vld [vmem:[%s179 + $0x1a68] sm:$0xff]
        %v1054 = vld [vmem:[%s179 + $0x1a70] sm:$0xff]
        %v1055 = vld [vmem:[%s179 + $0x1a78] sm:$0xff]
        %v1056 = vld [vmem:[%s179 + $0x1a80] sm:$0xff]
        %v1057 = vld [vmem:[%s179 + $0x1a88] sm:$0xff]
        %v1058 = vld [vmem:[%s179 + $0x1a90] sm:$0xff]
        %v1059 = vld [vmem:[%s179 + $0x1a98] sm:$0xff]
        %v1060 = vld [vmem:[%s179 + $0x1aa0] sm:$0xff]
        %v1061 = vld [vmem:[%s179 + $0x1aa8] sm:$0xff]
        %v1062 = vld [vmem:[%s179 + $0x1ab0] sm:$0xff]
        %v1063 = vld [vmem:[%s179 + $0x1ab8] sm:$0xff]
        %v1064 = vld [vmem:[%s179 + $0x1ac0] sm:$0xff]
        %v1065 = vld [vmem:[%s179 + $0x1ac8] sm:$0xff]
        %v1066 = vld [vmem:[%s179 + $0x1ad0] sm:$0xff]
        %v1067 = vld [vmem:[%s179 + $0x1ad8] sm:$0xff]
        %v1068 = vld [vmem:[%s179 + $0x1ae0] sm:$0xff]
        %v1069 = vld [vmem:[%s179 + $0x1ae8] sm:$0xff]
        %v1070 = vld [vmem:[%s179 + $0x1af0] sm:$0xff]
        %v1071 = vld [vmem:[%s179 + $0x1af8] sm:$0xff]
        %v1072 = vld [vmem:[%s179 + $0x1b00] sm:$0xff]
        %v1073 = vld [vmem:[%s179 + $0x1b08] sm:$0xff]
        %v1074 = vld [vmem:[%s179 + $0x1b10] sm:$0xff]
        %v1075 = vld [vmem:[%s179 + $0x1b18] sm:$0xff]
        %v1076 = vld [vmem:[%s179 + $0x1b20] sm:$0xff]
        %v1077 = vld [vmem:[%s179 + $0x1b28] sm:$0xff]
        %v1078 = vld [vmem:[%s179 + $0x1b30] sm:$0xff]
        %v1079 = vld [vmem:[%s179 + $0x1b38] sm:$0xff]
        %v1080 = vld [vmem:[%s179 + $0x1b40] sm:$0xff]
        %v1081 = vld [vmem:[%s179 + $0x1b48] sm:$0xff]
        %v1082 = vld [vmem:[%s179 + $0x1b50] sm:$0xff]
        %v1083 = vld [vmem:[%s179 + $0x1b58] sm:$0xff]
        %v1084 = vld [vmem:[%s179 + $0x1b60] sm:$0xff]
        %v1085 = vld [vmem:[%s179 + $0x1b68] sm:$0xff]
        %v1086 = vld [vmem:[%s179 + $0x1b70] sm:$0xff]
        %v1087 = vld [vmem:[%s179 + $0x1b78] sm:$0xff]
        %v1088 = vld [vmem:[%s179 + $0x1b80] sm:$0xff]
        %v1089 = vld [vmem:[%s179 + $0x1b88] sm:$0xff]
        %v1090 = vld [vmem:[%s179 + $0x1b90] sm:$0xff]
        %v1091 = vld [vmem:[%s179 + $0x1b98] sm:$0xff]
        %v1092 = vld [vmem:[%s179 + $0x1ba0] sm:$0xff]
        %v1093 = vld [vmem:[%s179 + $0x1ba8] sm:$0xff]
        %v1094 = vld [vmem:[%s179 + $0x1bb0] sm:$0xff]
        %v1095 = vld [vmem:[%s179 + $0x1bb8] sm:$0xff]
        %v1096 = vld [vmem:[%s179 + $0x1bc0] sm:$0xff]
        %v1097 = vld [vmem:[%s179 + $0x1bc8] sm:$0xff]
        %v1098 = vld [vmem:[%s179 + $0x1bd0] sm:$0xff]
        %v1099 = vld [vmem:[%s179 + $0x1bd8] sm:$0xff]
        %v1100 = vld [vmem:[%s179 + $0x1be0] sm:$0xff]
        %v1101 = vld [vmem:[%s179 + $0x1be8] sm:$0xff]
        %v1102 = vld [vmem:[%s179 + $0x1bf0] sm:$0xff]
        %v1103 = vld [vmem:[%s179 + $0x1bf8] sm:$0xff]
        %v1104 = vld [vmem:[%s179 + $0x1c00] sm:$0xff]
        %v1105 = vld [vmem:[%s179 + $0x1c08] sm:$0xff]
        %v1106 = vld [vmem:[%s179 + $0x1c10] sm:$0xff]
        %v1107 = vld [vmem:[%s179 + $0x1c18] sm:$0xff]
        %v1108 = vld [vmem:[%s179 + $0x1c20] sm:$0xff]
        %v1109 = vld [vmem:[%s179 + $0x1c28] sm:$0xff]
        %v1110 = vld [vmem:[%s179 + $0x1c30] sm:$0xff]
        %v1111 = vld [vmem:[%s179 + $0x1c38] sm:$0xff]
        %v1112 = vld [vmem:[%s179 + $0x1c40] sm:$0xff]
        %v1113 = vld [vmem:[%s179 + $0x1c48] sm:$0xff]
        %v1114 = vld [vmem:[%s179 + $0x1c50] sm:$0xff]
        %v1115 = vld [vmem:[%s179 + $0x1c58] sm:$0xff]
        %v1116 = vld [vmem:[%s179 + $0x1c60] sm:$0xff]
        %v1117 = vld [vmem:[%s179 + $0x1c68] sm:$0xff]
        %v1118 = vld [vmem:[%s179 + $0x1c70] sm:$0xff]
        %v1119 = vld [vmem:[%s179 + $0x1c78] sm:$0xff]
        %v1120 = vld [vmem:[%s179 + $0x1c80] sm:$0xff]
        %v1121 = vld [vmem:[%s179 + $0x1c88] sm:$0xff]
        %v1122 = vld [vmem:[%s179 + $0x1c90] sm:$0xff]
        %v1123 = vld [vmem:[%s179 + $0x1c98] sm:$0xff]
        %v1124 = vld [vmem:[%s179 + $0x1ca0] sm:$0xff]
        %v1125 = vld [vmem:[%s179 + $0x1ca8] sm:$0xff]
        %v1126 = vld [vmem:[%s179 + $0x1cb0] sm:$0xff]
        %v1127 = vld [vmem:[%s179 + $0x1cb8] sm:$0xff]
        %v1128 = vld [vmem:[%s179 + $0x1cc0] sm:$0xff]
        %v1129 = vld [vmem:[%s179 + $0x1cc8] sm:$0xff]
        %v1130 = vld [vmem:[%s179 + $0x1cd0] sm:$0xff]
        %v1131 = vld [vmem:[%s179 + $0x1cd8] sm:$0xff]
        %v1132 = vld [vmem:[%s179 + $0x1ce0] sm:$0xff]
        %v1133 = vld [vmem:[%s179 + $0x1ce8] sm:$0xff]
        %v1134 = vld [vmem:[%s179 + $0x1cf0] sm:$0xff]
        %v1135 = vld [vmem:[%s179 + $0x1cf8] sm:$0xff]
        %v1136 = vld [vmem:[%s179 + $0x1d00] sm:$0xff]
        %v1137 = vld [vmem:[%s179 + $0x1d08] sm:$0xff]
        %v1138 = vld [vmem:[%s179 + $0x1d10] sm:$0xff]
        %v1139 = vld [vmem:[%s179 + $0x1d18] sm:$0xff]
        %v1140 = vld [vmem:[%s179 + $0x1d20] sm:$0xff]
        %v1141 = vld [vmem:[%s179 + $0x1d28] sm:$0xff]
        %v1142 = vld [vmem:[%s179 + $0x1d30] sm:$0xff]
        %v1143 = vld [vmem:[%s179 + $0x1d38] sm:$0xff]
        %v1144 = vld [vmem:[%s179 + $0x1d40] sm:$0xff]
        %v1145 = vld [vmem:[%s179 + $0x1d48] sm:$0xff]
        %v1146 = vld [vmem:[%s179 + $0x1d50] sm:$0xff]
        %v1147 = vld [vmem:[%s179 + $0x1d58] sm:$0xff]
        %v1148 = vld [vmem:[%s179 + $0x1d60] sm:$0xff]
        %v1149 = vld [vmem:[%s179 + $0x1d68] sm:$0xff]
        %v1150 = vld [vmem:[%s179 + $0x1d70] sm:$0xff]
        %v1151 = vld [vmem:[%s179 + $0x1d78] sm:$0xff]
        %v1152 = vld [vmem:[%s179 + $0x1d80] sm:$0xff]
        %v1153 = vld [vmem:[%s179 + $0x1d88] sm:$0xff]
        %v1154 = vld [vmem:[%s179 + $0x1d90] sm:$0xff]
        %v1155 = vld [vmem:[%s179 + $0x1d98] sm:$0xff]
        %v1156 = vld [vmem:[%s179 + $0x1da0] sm:$0xff]
        %v1157 = vld [vmem:[%s179 + $0x1da8] sm:$0xff]
        %v1158 = vld [vmem:[%s179 + $0x1db0] sm:$0xff]
        %v1159 = vld [vmem:[%s179 + $0x1db8] sm:$0xff]
        %v1160 = vld [vmem:[%s179 + $0x1dc0] sm:$0xff]
        %v1161 = vld [vmem:[%s179 + $0x1dc8] sm:$0xff]
        %v1162 = vld [vmem:[%s179 + $0x1dd0] sm:$0xff]
        %v1163 = vld [vmem:[%s179 + $0x1dd8] sm:$0xff]
        %v1164 = vld [vmem:[%s179 + $0x1de0] sm:$0xff]
        %v1165 = vld [vmem:[%s179 + $0x1de8] sm:$0xff]
        %v1166 = vld [vmem:[%s179 + $0x1df0] sm:$0xff]
        %v1167 = vld [vmem:[%s179 + $0x1df8] sm:$0xff]
        %v1168 = vld [vmem:[%s179 + $0x1e00] sm:$0xff]
        %v1169 = vld [vmem:[%s179 + $0x1e08] sm:$0xff]
        %v1170 = vld [vmem:[%s179 + $0x1e10] sm:$0xff]
        %v1171 = vld [vmem:[%s179 + $0x1e18] sm:$0xff]
        %v1172 = vld [vmem:[%s179 + $0x1e20] sm:$0xff]
        %v1173 = vld [vmem:[%s179 + $0x1e28] sm:$0xff]
        %v1174 = vld [vmem:[%s179 + $0x1e30] sm:$0xff]
        %v1175 = vld [vmem:[%s179 + $0x1e38] sm:$0xff]
        %v1176 = vld [vmem:[%s179 + $0x1e40] sm:$0xff]
        %v1177 = vld [vmem:[%s179 + $0x1e48] sm:$0xff]
        %v1178 = vld [vmem:[%s179 + $0x1e50] sm:$0xff]
        %v1179 = vld [vmem:[%s179 + $0x1e58] sm:$0xff]
        %v1180 = vld [vmem:[%s179 + $0x1e60] sm:$0xff]
        %v1181 = vld [vmem:[%s179 + $0x1e68] sm:$0xff]
        %v1182 = vld [vmem:[%s179 + $0x1e70] sm:$0xff]
        %v1183 = vld [vmem:[%s179 + $0x1e78] sm:$0xff]
        %v1184 = vld [vmem:[%s179 + $0x1e80] sm:$0xff]
        %v1185 = vld [vmem:[%s179 + $0x1e88] sm:$0xff]
        %v1186 = vld [vmem:[%s179 + $0x1e90] sm:$0xff]
        %v1187 = vld [vmem:[%s179 + $0x1e98] sm:$0xff]
        %v1188 = vld [vmem:[%s179 + $0x1ea0] sm:$0xff]
        %v1189 = vld [vmem:[%s179 + $0x1ea8] sm:$0xff]
        %v1190 = vld [vmem:[%s179 + $0x1eb0] sm:$0xff]
        %v1191 = vld [vmem:[%s179 + $0x1eb8] sm:$0xff]
        %v1192 = vld [vmem:[%s179 + $0x1ec0] sm:$0xff]
        %v1193 = vld [vmem:[%s179 + $0x1ec8] sm:$0xff]
        %v1194 = vld [vmem:[%s179 + $0x1ed0] sm:$0xff]
        %v1195 = vld [vmem:[%s179 + $0x1ed8] sm:$0xff]
        %v1196 = vld [vmem:[%s179 + $0x1ee0] sm:$0xff]
        %v1197 = vld [vmem:[%s179 + $0x1ee8] sm:$0xff]
        %v1198 = vld [vmem:[%s179 + $0x1ef0] sm:$0xff]
        %v1199 = vld [vmem:[%s179 + $0x1ef8] sm:$0xff]
        %v1200 = vld [vmem:[%s179 + $0x1f00] sm:$0xff]
        %v1201 = vld [vmem:[%s179 + $0x1f08] sm:$0xff]
        %v1202 = vld [vmem:[%s179 + $0x1f10] sm:$0xff]
        %v1203 = vld [vmem:[%s179 + $0x1f18] sm:$0xff]
        %v1204 = vld [vmem:[%s179 + $0x1f20] sm:$0xff]
        %v1205 = vld [vmem:[%s179 + $0x1f28] sm:$0xff]
        %v1206 = vld [vmem:[%s179 + $0x1f30] sm:$0xff]
        %v1207 = vld [vmem:[%s179 + $0x1f38] sm:$0xff]
        %v1208 = vld [vmem:[%s179 + $0x1f40] sm:$0xff]
        %v1209 = vld [vmem:[%s179 + $0x1f48] sm:$0xff]
        %v1210 = vld [vmem:[%s179 + $0x1f50] sm:$0xff]
        %v1211 = vld [vmem:[%s179 + $0x1f58] sm:$0xff]
        %v1212 = vld [vmem:[%s179 + $0x1f60] sm:$0xff]
        %v1213 = vld [vmem:[%s179 + $0x1f68] sm:$0xff]
        %v1214 = vld [vmem:[%s179 + $0x1f70] sm:$0xff]
        %v1215 = vld [vmem:[%s179 + $0x1f78] sm:$0xff]
        %v1216 = vld [vmem:[%s179 + $0x1f80] sm:$0xff]
        %v1217 = vld [vmem:[%s179 + $0x1f88] sm:$0xff]
        %v1218 = vld [vmem:[%s179 + $0x1f90] sm:$0xff]
        %v1219 = vld [vmem:[%s179 + $0x1f98] sm:$0xff]
        %v1220 = vld [vmem:[%s179 + $0x1fa0] sm:$0xff]
        %v1221 = vld [vmem:[%s179 + $0x1fa8] sm:$0xff]
        %v1222 = vld [vmem:[%s179 + $0x1fb0] sm:$0xff]
        %v1223 = vld [vmem:[%s179 + $0x1fb8] sm:$0xff]
        %v1224 = vld [vmem:[%s179 + $0x1fc0] sm:$0xff]
        %v1225 = vld [vmem:[%s179 + $0x1fc8] sm:$0xff]
        %v1226 = vld [vmem:[%s179 + $0x1fd0] sm:$0xff]
        %v1227 = vld [vmem:[%s179 + $0x1fd8] sm:$0xff]
        %v1228 = vld [vmem:[%s179 + $0x1fe0] sm:$0xff]
        %v1229 = vld [vmem:[%s179 + $0x1fe8] sm:$0xff]
        %v1230 = vld [vmem:[%s179 + $0x1ff0] sm:$0xff]
        %v1231 = vld [vmem:[%s179 + $0x1ff8] sm:$0xff]
        %v1232 = vld [vmem:[%s179 + $0x2000] sm:$0xff]
        %v1233 = vld [vmem:[%s179 + $0x2008] sm:$0xff]
        %v1234 = vld [vmem:[%s179 + $0x2010] sm:$0xff]
        %v1235 = vld [vmem:[%s179 + $0x2018] sm:$0xff]
        %v1236 = vld [vmem:[%s179 + $0x2020] sm:$0xff]
        %v1237 = vld [vmem:[%s179 + $0x2028] sm:$0xff]
        %v1238 = vld [vmem:[%s179 + $0x2030] sm:$0xff]
        %v1239 = vld [vmem:[%s179 + $0x2038] sm:$0xff]
        %v1240 = vld [vmem:[%s179 + $0x2040] sm:$0xff]
        %v1241 = vld [vmem:[%s179 + $0x2048] sm:$0xff]
        %v1242 = vld [vmem:[%s179 + $0x2050] sm:$0xff]
        %v1243 = vld [vmem:[%s179 + $0x2058] sm:$0xff]
        %v1244 = vld [vmem:[%s179 + $0x2060] sm:$0xff]
        %v1245 = vld [vmem:[%s179 + $0x2068] sm:$0xff]
        %v1246 = vld [vmem:[%s179 + $0x2070] sm:$0xff]
        %v1247 = vld [vmem:[%s179 + $0x2078] sm:$0xff]
        %v1248 = vld [vmem:[%s179 + $0x2080] sm:$0xff]
        %v1249 = vld [vmem:[%s179 + $0x2088] sm:$0xff]
        %v1250 = vld [vmem:[%s179 + $0x2090] sm:$0xff]
        %v1251 = vld [vmem:[%s179 + $0x2098] sm:$0xff]
        %v1252 = vld [vmem:[%s179 + $0x20a0] sm:$0xff]
        %v1253 = vld [vmem:[%s179 + $0x20a8] sm:$0xff]
        %v1254 = vld [vmem:[%s179 + $0x20b0] sm:$0xff]
        %v1255 = vld [vmem:[%s179 + $0x20b8] sm:$0xff]
        %v1256 = vld [vmem:[%s179 + $0x20c0] sm:$0xff]
        %v1257 = vld [vmem:[%s179 + $0x20c8] sm:$0xff]
        %v1258 = vld [vmem:[%s179 + $0x20d0] sm:$0xff]
        %v1259 = vld [vmem:[%s179 + $0x20d8] sm:$0xff]
        %v1260 = vld [vmem:[%s179 + $0x20e0] sm:$0xff]
        %v1261 = vld [vmem:[%s179 + $0x20e8] sm:$0xff]
        %v1262 = vld [vmem:[%s179 + $0x20f0] sm:$0xff]
        %v1263 = vld [vmem:[%s179 + $0x20f8] sm:$0xff]
        %v1264 = vld [vmem:[%s179 + $0x2100] sm:$0xff]
        %v1265 = vld [vmem:[%s179 + $0x2108] sm:$0xff]
        %v1266 = vld [vmem:[%s179 + $0x2110] sm:$0xff]
        %v1267 = vld [vmem:[%s179 + $0x2118] sm:$0xff]
        %v1268 = vld [vmem:[%s179 + $0x2120] sm:$0xff]
        %v1269 = vld [vmem:[%s179 + $0x2128] sm:$0xff]
        %v1270 = vld [vmem:[%s179 + $0x2130] sm:$0xff]
        %v1271 = vld [vmem:[%s179 + $0x2138] sm:$0xff]
        %v1272 = vld [vmem:[%s179 + $0x2140] sm:$0xff]
        %v1273 = vld [vmem:[%s179 + $0x2148] sm:$0xff]
        %v1274 = vld [vmem:[%s179 + $0x2150] sm:$0xff]
        %v1275 = vld [vmem:[%s179 + $0x2158] sm:$0xff]
        %v1276 = vld [vmem:[%s179 + $0x2160] sm:$0xff]
        %v1277 = vld [vmem:[%s179 + $0x2168] sm:$0xff]
        %v1278 = vld [vmem:[%s179 + $0x2170] sm:$0xff]
        %v1279 = vld [vmem:[%s179 + $0x2178] sm:$0xff]
        %v1280 = vld [vmem:[%s179 + $0x2180] sm:$0xff]
        %v1281 = vld [vmem:[%s179 + $0x2188] sm:$0xff]
        %v1282 = vld [vmem:[%s179 + $0x2190] sm:$0xff]
        %v1283 = vld [vmem:[%s179 + $0x2198] sm:$0xff]
        %v1284 = vld [vmem:[%s179 + $0x21a0] sm:$0xff]
        %v1285 = vld [vmem:[%s179 + $0x21a8] sm:$0xff]
        %v1286 = vld [vmem:[%s179 + $0x21b0] sm:$0xff]
        %v1287 = vld [vmem:[%s179 + $0x21b8] sm:$0xff]
        %v1288 = vld [vmem:[%s179 + $0x21c0] sm:$0xff]
        %v1289 = vld [vmem:[%s179 + $0x21c8] sm:$0xff]
        %v1290 = vld [vmem:[%s179 + $0x21d0] sm:$0xff]
        %v1291 = vld [vmem:[%s179 + $0x21d8] sm:$0xff]
        %v1292 = vld [vmem:[%s179 + $0x21e0] sm:$0xff]
        %v1293 = vld [vmem:[%s179 + $0x21e8] sm:$0xff]
        %v1294 = vld [vmem:[%s179 + $0x21f0] sm:$0xff]
        %v1295 = vld [vmem:[%s179 + $0x21f8] sm:$0xff]
        %v1296 = vld [vmem:[%s179 + $0x2200] sm:$0xff]
        %v1297 = vld [vmem:[%s179 + $0x2208] sm:$0xff]
        %v1298 = vld [vmem:[%s179 + $0x2210] sm:$0xff]
        %v1299 = vld [vmem:[%s179 + $0x2218] sm:$0xff]
        %v1300 = vld [vmem:[%s179 + $0x2220] sm:$0xff]
        %v1301 = vld [vmem:[%s179 + $0x2228] sm:$0xff]
        %v1302 = vld [vmem:[%s179 + $0x2230] sm:$0xff]
        %v1303 = vld [vmem:[%s179 + $0x2238] sm:$0xff]
        %v1304 = vld [vmem:[%s179 + $0x2240] sm:$0xff]
        %v1305 = vld [vmem:[%s179 + $0x2248] sm:$0xff]
        %v1306 = vld [vmem:[%s179 + $0x2250] sm:$0xff]
        %v1307 = vld [vmem:[%s179 + $0x2258] sm:$0xff]
        %v1308 = vld [vmem:[%s179 + $0x2260] sm:$0xff]
        %v1309 = vld [vmem:[%s179 + $0x2268] sm:$0xff]
        %v1310 = vld [vmem:[%s179 + $0x2270] sm:$0xff]
        %v1311 = vld [vmem:[%s179 + $0x2278] sm:$0xff]
        %v1312 = vld [vmem:[%s179 + $0x2280] sm:$0xff]
        %v1313 = vld [vmem:[%s179 + $0x2288] sm:$0xff]
        %v1314 = vld [vmem:[%s179 + $0x2290] sm:$0xff]
        %v1315 = vld [vmem:[%s179 + $0x2298] sm:$0xff]
        %v1316 = vld [vmem:[%s179 + $0x22a0] sm:$0xff]
        %v1317 = vld [vmem:[%s179 + $0x22a8] sm:$0xff]
        %v1318 = vld [vmem:[%s179 + $0x22b0] sm:$0xff]
        %v1319 = vld [vmem:[%s179 + $0x22b8] sm:$0xff]
        %v1320 = vld [vmem:[%s179 + $0x22c0] sm:$0xff]
        %v1321 = vld [vmem:[%s179 + $0x22c8] sm:$0xff]
        %v1322 = vld [vmem:[%s179 + $0x22d0] sm:$0xff]
        %v1323 = vld [vmem:[%s179 + $0x22d8] sm:$0xff]
        %v1324 = vld [vmem:[%s179 + $0x22e0] sm:$0xff]
        %v1325 = vld [vmem:[%s179 + $0x22e8] sm:$0xff]
        %v1326 = vld [vmem:[%s179 + $0x22f0] sm:$0xff]
        %v1327 = vld [vmem:[%s179 + $0x22f8] sm:$0xff]
        %v1328 = vld [vmem:[%s179 + $0x2300] sm:$0xff]
        %v1329 = vld [vmem:[%s179 + $0x2308] sm:$0xff]
        %v1330 = vld [vmem:[%s179 + $0x2310] sm:$0xff]
        %v1331 = vld [vmem:[%s179 + $0x2318] sm:$0xff]
        %v1332 = vld [vmem:[%s179 + $0x2320] sm:$0xff]
        %v1333 = vld [vmem:[%s179 + $0x2328] sm:$0xff]
        %v1334 = vld [vmem:[%s179 + $0x2330] sm:$0xff]
        %v1335 = vld [vmem:[%s179 + $0x2338] sm:$0xff]
        %v1336 = vld [vmem:[%s179 + $0x2340] sm:$0xff]
        %v1337 = vld [vmem:[%s179 + $0x2348] sm:$0xff]
        %v1338 = vld [vmem:[%s179 + $0x2350] sm:$0xff]
        %v1339 = vld [vmem:[%s179 + $0x2358] sm:$0xff]
        %v1340 = vld [vmem:[%s179 + $0x2360] sm:$0xff]
        %v1341 = vld [vmem:[%s179 + $0x2368] sm:$0xff]
        %v1342 = vld [vmem:[%s179 + $0x2370] sm:$0xff]
        %v1343 = vld [vmem:[%s179 + $0x2378] sm:$0xff]
        %v1344 = vld [vmem:[%s179 + $0x2380] sm:$0xff]
        %v1345 = vld [vmem:[%s179 + $0x2388] sm:$0xff]
        %v1346 = vld [vmem:[%s179 + $0x2390] sm:$0xff]
        %v1347 = vld [vmem:[%s179 + $0x2398] sm:$0xff]
        %v1348 = vld [vmem:[%s179 + $0x23a0] sm:$0xff]
        %v1349 = vld [vmem:[%s179 + $0x23a8] sm:$0xff]
        %v1350 = vld [vmem:[%s179 + $0x23b0] sm:$0xff]
        %v1351 = vld [vmem:[%s179 + $0x23b8] sm:$0xff]
        %v1352 = vld [vmem:[%s179 + $0x23c0] sm:$0xff]
        %v1353 = vld [vmem:[%s179 + $0x23c8] sm:$0xff]
        %v1354 = vld [vmem:[%s179 + $0x23d0] sm:$0xff]
        %v1355 = vld [vmem:[%s179 + $0x23d8] sm:$0xff]
        %v1356 = vld [vmem:[%s179 + $0x23e0] sm:$0xff]
        %v1357 = vld [vmem:[%s179 + $0x23e8] sm:$0xff]
        %v1358 = vld [vmem:[%s179 + $0x23f0] sm:$0xff]
        %v1359 = vld [vmem:[%s179 + $0x23f8] sm:$0xff]
        %v1360 = vld [vmem:[%s179 + $0x2400] sm:$0xff]
        %v1361 = vld [vmem:[%s179 + $0x2408] sm:$0xff]
        %v1362 = vld [vmem:[%s179 + $0x2410] sm:$0xff]
        %v1363 = vld [vmem:[%s179 + $0x2418] sm:$0xff]
        %s1364 = sshra.s32 %s21, 2
        %s1365 = sand.u32 %s21, 3
        %s1366 = sshra.s32 %s21, 2
        %s1367 = sand.u32 %s21, 3
        %s1368 = smul.u32 %s1364, 8
        %s1369 = smul.u32 %s1368, 4
        %s1370 = sadd.s32 %s1369, %s1367
        %s1371 = scalar_lea.vmem %s2, %s1370
        %v1372 = vld [vmem:[%s1371] ss:$4 sm:$0xff]
        %v1374 = vlaneseq
        %v1375 = vshrl.u32 %v1374, 7
        %v1376 = vsub.s32 0, %v1375
        %v1377 = vrot.slane %v1372, %v1376
        %v1378 = vlaneseq
        %v1379 = vshrl.u32 %v1378, 7
        %v1380 = vsub.s32 1, %v1379
        %v1381 = vrot.slane %v1372, %v1380
        %v1382 = vlaneseq
        %v1383 = vshrl.u32 %v1382, 7
        %v1384 = vsub.s32 2, %v1383
        %v1385 = vrot.slane %v1372, %v1384
        %v1386 = vlaneseq
        %v1387 = vshrl.u32 %v1386, 7
        %v1388 = vsub.s32 3, %v1387
        %v1389 = vrot.slane %v1372, %v1388
        %v1390 = vlaneseq
        %v1391 = vshrl.u32 %v1390, 7
        %v1392 = vsub.s32 4, %v1391
        %v1393 = vrot.slane %v1372, %v1392
        %v1394 = vlaneseq
        %v1395 = vshrl.u32 %v1394, 7
        %v1396 = vsub.s32 5, %v1395
        %v1397 = vrot.slane %v1372, %v1396
        %v1398 = vlaneseq
        %v1399 = vshrl.u32 %v1398, 7
        %v1400 = vsub.s32 6, %v1399
        %v1401 = vrot.slane %v1372, %v1400
        %v1402 = vlaneseq
        %v1403 = vshrl.u32 %v1402, 7
        %v1404 = vsub.s32 7, %v1403
        %v1405 = vrot.slane %v1372, %v1404
        %v1417 = vcombine.high %v205, %v205
        %v1419 = vunpack.c.l.s4 1966171168
        %v1420 = vunpack.c.0.s8 %v1419
        %v1421 = vlaneseq
        %v1422 = vshrl.u32 %v1421, 7
        %v1423 = vsub.s32 %v1420, %v1422
        %v1424 = vrot.slane %v205, %v1423
        %v1426 = vunpack.c.l.s4 1966171168
        %v1427 = vunpack.c.0.s8 %v1426
        %v1428 = vlaneseq
        %v1429 = vshrl.u32 %v1428, 7
        %v1430 = vsub.s32 %v1427, %v1429
        %v1431 = vrot.slane %v1417, %v1430
        %v1432 = vcombine.high %v1424, %v1424
        %v1433 = vcombine.high %v1431, %v1431
        %v1435 = vunpack.c.l.s4 1966171168
        %v1436 = vunpack.c.0.s8 %v1435
        %v1437 = vlaneseq
        %v1438 = vshrl.u32 %v1437, 7
        %v1439 = vsub.s32 %v1436, %v1438
        %v1440 = vrot.slane %v1424, %v1439
        %v1442 = vunpack.c.l.s4 1966171168
        %v1443 = vunpack.c.0.s8 %v1442
        %v1444 = vlaneseq
        %v1445 = vshrl.u32 %v1444, 7
        %v1446 = vsub.s32 %v1443, %v1445
        %v1447 = vrot.slane %v1431, %v1446
        %v1449 = vunpack.c.l.s4 1966171168
        %v1450 = vunpack.c.0.s8 %v1449
        %v1451 = vlaneseq
        %v1452 = vshrl.u32 %v1451, 7
        %v1453 = vsub.s32 %v1450, %v1452
        %v1454 = vrot.slane %v1432, %v1453
        %v1456 = vunpack.c.l.s4 1966171168
        %v1457 = vunpack.c.0.s8 %v1456
        %v1458 = vlaneseq
        %v1459 = vshrl.u32 %v1458, 7
        %v1460 = vsub.s32 %v1457, %v1459
        %v1461 = vrot.slane %v1433, %v1460
        %v1462 = vcombine.high %v1440, %v1440
        %v1463 = vcombine.high %v1447, %v1447
        %v1464 = vcombine.high %v1454, %v1454
        %v1465 = vcombine.high %v1461, %v1461
        %v1466 = vcombine.high %v206, %v206
        %v1468 = vunpack.c.l.s4 1966171168
        %v1469 = vunpack.c.0.s8 %v1468
        %v1470 = vlaneseq
        %v1471 = vshrl.u32 %v1470, 7
        %v1472 = vsub.s32 %v1469, %v1471
        %v1473 = vrot.slane %v206, %v1472
        %v1475 = vunpack.c.l.s4 1966171168
        %v1476 = vunpack.c.0.s8 %v1475
        %v1477 = vlaneseq
        %v1478 = vshrl.u32 %v1477, 7
        %v1479 = vsub.s32 %v1476, %v1478
        %v1480 = vrot.slane %v1466, %v1479
        %v1481 = vcombine.high %v1473, %v1473
        %v1482 = vcombine.high %v1480, %v1480
        %v1484 = vunpack.c.l.s4 1966171168
        %v1485 = vunpack.c.0.s8 %v1484
        %v1486 = vlaneseq
        %v1487 = vshrl.u32 %v1486, 7
        %v1488 = vsub.s32 %v1485, %v1487
        %v1489 = vrot.slane %v1473, %v1488
        %v1491 = vunpack.c.l.s4 1966171168
        %v1492 = vunpack.c.0.s8 %v1491
        %v1493 = vlaneseq
        %v1494 = vshrl.u32 %v1493, 7
        %v1495 = vsub.s32 %v1492, %v1494
        %v1496 = vrot.slane %v1480, %v1495
        %v1498 = vunpack.c.l.s4 1966171168
        %v1499 = vunpack.c.0.s8 %v1498
        %v1500 = vlaneseq
        %v1501 = vshrl.u32 %v1500, 7
        %v1502 = vsub.s32 %v1499, %v1501
        %v1503 = vrot.slane %v1481, %v1502
        %v1505 = vunpack.c.l.s4 1966171168
        %v1506 = vunpack.c.0.s8 %v1505
        %v1507 = vlaneseq
        %v1508 = vshrl.u32 %v1507, 7
        %v1509 = vsub.s32 %v1506, %v1508
        %v1510 = vrot.slane %v1482, %v1509
        %v1511 = vcombine.high %v1489, %v1489
        %v1512 = vcombine.high %v1496, %v1496
        %v1513 = vcombine.high %v1503, %v1503
        %v1514 = vcombine.high %v1510, %v1510
        %v1516 = vunpack.c.l.s4 1966171168
        %v1517 = vunpack.c.0.s8 %v1516
        %v1518 = vlaneseq
        %v1519 = vshrl.u32 %v1518, 7
        %v1520 = vsub.s32 %v1517, %v1519
        %v1521 = vrot.slane %v207, %v1520
        %v1522 = vcombine.high %v1521, %v1521
        %v1524 = vunpack.c.l.s4 1966171168
        %v1525 = vunpack.c.0.s8 %v1524
        %v1526 = vlaneseq
        %v1527 = vshrl.u32 %v1526, 7
        %v1528 = vsub.s32 %v1525, %v1527
        %v1529 = vrot.slane %v1521, %v1528
        %v1531 = vunpack.c.l.s4 1966171168
        %v1532 = vunpack.c.0.s8 %v1531
        %v1533 = vlaneseq
        %v1534 = vshrl.u32 %v1533, 7
        %v1535 = vsub.s32 %v1532, %v1534
        %v1536 = vrot.slane %v1522, %v1535
        %v1537 = vcombine.high %v1529, %v1529
        %v2712 = vunpack.c.l.b16 %v208
        %v2713 = vunpack.c.h.b16 %v208
        %v2714 = vunpack.c.l.b16 %v209
        %v2715 = vunpack.c.h.b16 %v209
        %v2716 = vunpack.c.l.b16 %v210
        %v2717 = vunpack.c.h.b16 %v210
        %v2718 = vunpack.c.l.b16 %v211
        %v2719 = vunpack.c.h.b16 %v211
        %v2720 = vunpack.c.l.b16 %v212
        %v2721 = vunpack.c.h.b16 %v212
        %v2722 = vunpack.c.l.b16 %v213
        %v2723 = vunpack.c.h.b16 %v213
        %v2724 = vunpack.c.l.b16 %v214
        %v2725 = vunpack.c.h.b16 %v214
        %v2726 = vunpack.c.l.b16 %v215
        %v2727 = vunpack.c.h.b16 %v215
        %v2728 = vunpack.c.l.b16 %v216
        %v2729 = vunpack.c.h.b16 %v216
        %v2730 = vunpack.c.l.b16 %v217
        %v2731 = vunpack.c.h.b16 %v217
        %v2732 = vunpack.c.l.b16 %v218
        %v2733 = vunpack.c.h.b16 %v218
        %v2734 = vunpack.c.l.b16 %v219
        %v2735 = vunpack.c.h.b16 %v219
        %v2736 = vunpack.c.l.b16 %v220
        %v2737 = vunpack.c.h.b16 %v220
        %v2738 = vunpack.c.l.b16 %v221
        %v2739 = vunpack.c.h.b16 %v221
        %v2740 = vunpack.c.l.b16 %v222
        %v2741 = vunpack.c.h.b16 %v222
        %v2742 = vunpack.c.l.b16 %v223
        %v2743 = vunpack.c.h.b16 %v223
        %v2744 = vunpack.c.l.b16 %v224
        %v2745 = vunpack.c.h.b16 %v224
        %v2746 = vunpack.c.l.b16 %v225
        %v2747 = vunpack.c.h.b16 %v225
        %v2748 = vunpack.c.l.b16 %v226
        %v2749 = vunpack.c.h.b16 %v226
        %v2750 = vunpack.c.l.b16 %v227
        %v2751 = vunpack.c.h.b16 %v227
        %v2752 = vunpack.c.l.b16 %v228
        %v2753 = vunpack.c.h.b16 %v228
        %v2754 = vunpack.c.l.b16 %v229
        %v2755 = vunpack.c.h.b16 %v229
        %v2756 = vunpack.c.l.b16 %v230
        %v2757 = vunpack.c.h.b16 %v230
        %v2758 = vunpack.c.l.b16 %v231
        %v2759 = vunpack.c.h.b16 %v231
        %v2760 = vunpack.c.l.b16 %v232
        %v2761 = vunpack.c.h.b16 %v232
        %v2762 = vunpack.c.l.b16 %v233
        %v2763 = vunpack.c.h.b16 %v233
        %v2764 = vunpack.c.l.b16 %v234
        %v2765 = vunpack.c.h.b16 %v234
        %v2766 = vunpack.c.l.b16 %v235
        %v2767 = vunpack.c.h.b16 %v235
        %v2768 = vunpack.c.l.b16 %v236
        %v2769 = vunpack.c.h.b16 %v236
        %v2770 = vunpack.c.l.b16 %v237
        %v2771 = vunpack.c.h.b16 %v237
        %v2772 = vunpack.c.l.b16 %v238
        %v2773 = vunpack.c.h.b16 %v238
        %v2774 = vunpack.c.l.b16 %v239
        %v2775 = vunpack.c.h.b16 %v239
        %v2776 = vunpack.c.l.b16 %v240
        %v2777 = vunpack.c.h.b16 %v240
        %v2778 = vunpack.c.l.b16 %v241
        %v2779 = vunpack.c.h.b16 %v241
        %v2780 = vunpack.c.l.b16 %v242
        %v2781 = vunpack.c.h.b16 %v242
        %v2782 = vunpack.c.l.b16 %v243
        %v2783 = vunpack.c.h.b16 %v243
        %v2784 = vunpack.c.l.b16 %v244
        %v2785 = vunpack.c.h.b16 %v244
        %v2786 = vunpack.c.l.b16 %v245
        %v2787 = vunpack.c.h.b16 %v245
        %v2788 = vunpack.c.l.b16 %v246
        %v2789 = vunpack.c.h.b16 %v246
        %v2790 = vunpack.c.l.b16 %v247
        %v2791 = vunpack.c.h.b16 %v247
        %v2792 = vunpack.c.l.b16 %v248
        %v2793 = vunpack.c.h.b16 %v248
        %v2794 = vunpack.c.l.b16 %v249
        %v2795 = vunpack.c.h.b16 %v249
        %v2796 = vunpack.c.l.b16 %v250
        %v2797 = vunpack.c.h.b16 %v250
        %v2798 = vunpack.c.l.b16 %v251
        %v2799 = vunpack.c.h.b16 %v251
        %v2800 = vunpack.c.l.b16 %v252
        %v2801 = vunpack.c.h.b16 %v252
        %v2802 = vunpack.c.l.b16 %v253
        %v2803 = vunpack.c.h.b16 %v253
        %v2804 = vunpack.c.l.b16 %v254
        %v2805 = vunpack.c.h.b16 %v254
        %v2806 = vunpack.c.l.b16 %v255
        %v2807 = vunpack.c.h.b16 %v255
        %v2808 = vunpack.c.l.b16 %v256
        %v2809 = vunpack.c.h.b16 %v256
        %v2810 = vunpack.c.l.b16 %v257
        %v2811 = vunpack.c.h.b16 %v257
        %v2812 = vunpack.c.l.b16 %v258
        %v2813 = vunpack.c.h.b16 %v258
        %v2814 = vunpack.c.l.b16 %v259
        %v2815 = vunpack.c.h.b16 %v259
        %v2816 = vunpack.c.l.b16 %v260
        %v2817 = vunpack.c.h.b16 %v260
        %v2818 = vunpack.c.l.b16 %v261
        %v2819 = vunpack.c.h.b16 %v261
        %v2820 = vunpack.c.l.b16 %v262
        %v2821 = vunpack.c.h.b16 %v262
        %v2822 = vunpack.c.l.b16 %v263
        %v2823 = vunpack.c.h.b16 %v263
        %v2824 = vunpack.c.l.b16 %v264
        %v2825 = vunpack.c.h.b16 %v264
        %v2826 = vunpack.c.l.b16 %v265
        %v2827 = vunpack.c.h.b16 %v265
        %v2828 = vunpack.c.l.b16 %v266
        %v2829 = vunpack.c.h.b16 %v266
        %v2830 = vunpack.c.l.b16 %v267
        %v2831 = vunpack.c.h.b16 %v267
        %v2832 = vunpack.c.l.b16 %v268
        %v2833 = vunpack.c.h.b16 %v268
        %v2834 = vunpack.c.l.b16 %v269
        %v2835 = vunpack.c.h.b16 %v269
        %v2836 = vunpack.c.l.b16 %v270
        %v2837 = vunpack.c.h.b16 %v270
        %v2838 = vunpack.c.l.b16 %v271
        %v2839 = vunpack.c.h.b16 %v271
        %v2840 = vunpack.c.l.b16 %v272
        %v2841 = vunpack.c.h.b16 %v272
        %v2842 = vunpack.c.l.b16 %v273
        %v2843 = vunpack.c.h.b16 %v273
        %v2844 = vunpack.c.l.b16 %v274
        %v2845 = vunpack.c.h.b16 %v274
        %v2846 = vunpack.c.l.b16 %v275
        %v2847 = vunpack.c.h.b16 %v275
        %v2848 = vunpack.c.l.b16 %v276
        %v2849 = vunpack.c.h.b16 %v276
        %v2850 = vunpack.c.l.b16 %v277
        %v2851 = vunpack.c.h.b16 %v277
        %v2852 = vunpack.c.l.b16 %v278
        %v2853 = vunpack.c.h.b16 %v278
        %v2854 = vunpack.c.l.b16 %v279
        %v2855 = vunpack.c.h.b16 %v279
        %v2856 = vunpack.c.l.b16 %v280
        %v2857 = vunpack.c.h.b16 %v280
        %v2858 = vunpack.c.l.b16 %v281
        %v2859 = vunpack.c.h.b16 %v281
        %v2860 = vunpack.c.l.b16 %v282
        %v2861 = vunpack.c.h.b16 %v282
        %v2862 = vunpack.c.l.b16 %v283
        %v2863 = vunpack.c.h.b16 %v283
        %v2864 = vunpack.c.l.b16 %v284
        %v2865 = vunpack.c.h.b16 %v284
        %v2866 = vunpack.c.l.b16 %v285
        %v2867 = vunpack.c.h.b16 %v285
        %v2868 = vunpack.c.l.b16 %v286
        %v2869 = vunpack.c.h.b16 %v286
        %v2870 = vunpack.c.l.b16 %v287
        %v2871 = vunpack.c.h.b16 %v287
        %v2872 = vunpack.c.l.b16 %v288
        %v2873 = vunpack.c.h.b16 %v288
        %v2874 = vunpack.c.l.b16 %v289
        %v2875 = vunpack.c.h.b16 %v289
        %v2876 = vunpack.c.l.b16 %v290
        %v2877 = vunpack.c.h.b16 %v290
        %v2878 = vunpack.c.l.b16 %v291
        %v2879 = vunpack.c.h.b16 %v291
        %v2880 = vunpack.c.l.b16 %v292
        %v2881 = vunpack.c.h.b16 %v292
        %v2882 = vunpack.c.l.b16 %v293
        %v2883 = vunpack.c.h.b16 %v293
        %v2884 = vunpack.c.l.b16 %v294
        %v2885 = vunpack.c.h.b16 %v294
        %v2886 = vunpack.c.l.b16 %v295
        %v2887 = vunpack.c.h.b16 %v295
        %v2888 = vunpack.c.l.b16 %v296
        %v2889 = vunpack.c.h.b16 %v296
        %v2890 = vunpack.c.l.b16 %v297
        %v2891 = vunpack.c.h.b16 %v297
        %v2892 = vunpack.c.l.b16 %v298
        %v2893 = vunpack.c.h.b16 %v298
        %v2894 = vunpack.c.l.b16 %v299
        %v2895 = vunpack.c.h.b16 %v299
        %v2896 = vunpack.c.l.b16 %v300
        %v2897 = vunpack.c.h.b16 %v300
        %v2898 = vunpack.c.l.b16 %v301
        %v2899 = vunpack.c.h.b16 %v301
        %v2900 = vunpack.c.l.b16 %v302
        %v2901 = vunpack.c.h.b16 %v302
        %v2902 = vunpack.c.l.b16 %v303
        %v2903 = vunpack.c.h.b16 %v303
        %v2904 = vunpack.c.l.b16 %v304
        %v2905 = vunpack.c.h.b16 %v304
        %v2906 = vunpack.c.l.b16 %v305
        %v2907 = vunpack.c.h.b16 %v305
        %v2908 = vunpack.c.l.b16 %v306
        %v2909 = vunpack.c.h.b16 %v306
        %v2910 = vunpack.c.l.b16 %v307
        %v2911 = vunpack.c.h.b16 %v307
        %v2912 = vunpack.c.l.b16 %v308
        %v2913 = vunpack.c.h.b16 %v308
        %v2914 = vunpack.c.l.b16 %v309
        %v2915 = vunpack.c.h.b16 %v309
        %v2916 = vunpack.c.l.b16 %v310
        %v2917 = vunpack.c.h.b16 %v310
        %v2918 = vunpack.c.l.b16 %v311
        %v2919 = vunpack.c.h.b16 %v311
        %v2920 = vunpack.c.l.b16 %v312
        %v2921 = vunpack.c.h.b16 %v312
        %v2922 = vunpack.c.l.b16 %v313
        %v2923 = vunpack.c.h.b16 %v313
        %v2924 = vunpack.c.l.b16 %v314
        %v2925 = vunpack.c.h.b16 %v314
        %v2926 = vunpack.c.l.b16 %v315
        %v2927 = vunpack.c.h.b16 %v315
        %v2928 = vunpack.c.l.b16 %v316
        %v2929 = vunpack.c.h.b16 %v316
        %v2930 = vunpack.c.l.b16 %v317
        %v2931 = vunpack.c.h.b16 %v317
        %v2932 = vunpack.c.l.b16 %v318
        %v2933 = vunpack.c.h.b16 %v318
        %v2934 = vunpack.c.l.b16 %v319
        %v2935 = vunpack.c.h.b16 %v319
        %v2936 = vunpack.c.l.b16 %v320
        %v2937 = vunpack.c.h.b16 %v320
        %v2938 = vunpack.c.l.b16 %v321
        %v2939 = vunpack.c.h.b16 %v321
        %v2940 = vunpack.c.l.b16 %v322
        %v2941 = vunpack.c.h.b16 %v322
        %v2942 = vunpack.c.l.b16 %v323
        %v2943 = vunpack.c.h.b16 %v323
        %v2944 = vunpack.c.l.b16 %v324
        %v2945 = vunpack.c.h.b16 %v324
        %v2946 = vunpack.c.l.b16 %v325
        %v2947 = vunpack.c.h.b16 %v325
        %v2948 = vunpack.c.l.b16 %v326
        %v2949 = vunpack.c.h.b16 %v326
        %v2950 = vunpack.c.l.b16 %v327
        %v2951 = vunpack.c.h.b16 %v327
        %v2952 = vunpack.c.l.b16 %v328
        %v2953 = vunpack.c.h.b16 %v328
        %v2954 = vunpack.c.l.b16 %v329
        %v2955 = vunpack.c.h.b16 %v329
        %v2956 = vunpack.c.l.b16 %v330
        %v2957 = vunpack.c.h.b16 %v330
        %v2958 = vunpack.c.l.b16 %v331
        %v2959 = vunpack.c.h.b16 %v331
        %v2960 = vunpack.c.l.b16 %v332
        %v2961 = vunpack.c.h.b16 %v332
        %v2962 = vunpack.c.l.b16 %v333
        %v2963 = vunpack.c.h.b16 %v333
        %v2964 = vunpack.c.l.b16 %v334
        %v2965 = vunpack.c.h.b16 %v334
        %v2966 = vunpack.c.l.b16 %v335
        %v2967 = vunpack.c.h.b16 %v335
        %v2968 = vunpack.c.l.b16 %v336
        %v2969 = vunpack.c.h.b16 %v336
        %v2970 = vunpack.c.l.b16 %v337
        %v2971 = vunpack.c.h.b16 %v337
        %v2972 = vunpack.c.l.b16 %v338
        %v2973 = vunpack.c.h.b16 %v338
        %v2974 = vunpack.c.l.b16 %v339
        %v2975 = vunpack.c.h.b16 %v339
        %v2976 = vunpack.c.l.b16 %v340
        %v2977 = vunpack.c.h.b16 %v340
        %v2978 = vunpack.c.l.b16 %v341
        %v2979 = vunpack.c.h.b16 %v341
        %v2980 = vunpack.c.l.b16 %v342
        %v2981 = vunpack.c.h.b16 %v342
        %v2982 = vunpack.c.l.b16 %v343
        %v2983 = vunpack.c.h.b16 %v343
        %v2984 = vunpack.c.l.b16 %v344
        %v2985 = vunpack.c.h.b16 %v344
        %v2986 = vunpack.c.l.b16 %v345
        %v2987 = vunpack.c.h.b16 %v345
        %v2988 = vunpack.c.l.b16 %v346
        %v2989 = vunpack.c.h.b16 %v346
        %v2990 = vunpack.c.l.b16 %v347
        %v2991 = vunpack.c.h.b16 %v347
        %v2992 = vunpack.c.l.b16 %v348
        %v2993 = vunpack.c.h.b16 %v348
        %v2994 = vunpack.c.l.b16 %v349
        %v2995 = vunpack.c.h.b16 %v349
        %v2996 = vunpack.c.l.b16 %v350
        %v2997 = vunpack.c.h.b16 %v350
        %v2998 = vunpack.c.l.b16 %v351
        %v2999 = vunpack.c.h.b16 %v351
        %v3000 = vunpack.c.l.b16 %v352
        %v3001 = vunpack.c.h.b16 %v352
        %v3002 = vunpack.c.l.b16 %v353
        %v3003 = vunpack.c.h.b16 %v353
        %v3004 = vunpack.c.l.b16 %v354
        %v3005 = vunpack.c.h.b16 %v354
        %v3006 = vunpack.c.l.b16 %v355
        %v3007 = vunpack.c.h.b16 %v355
        %v3008 = vunpack.c.l.b16 %v356
        %v3009 = vunpack.c.h.b16 %v356
        %v3010 = vunpack.c.l.b16 %v357
        %v3011 = vunpack.c.h.b16 %v357
        %v3012 = vunpack.c.l.b16 %v358
        %v3013 = vunpack.c.h.b16 %v358
        %v3014 = vunpack.c.l.b16 %v359
        %v3015 = vunpack.c.h.b16 %v359
        %v3016 = vunpack.c.l.b16 %v360
        %v3017 = vunpack.c.h.b16 %v360
        %v3018 = vunpack.c.l.b16 %v361
        %v3019 = vunpack.c.h.b16 %v361
        %v3020 = vunpack.c.l.b16 %v362
        %v3021 = vunpack.c.h.b16 %v362
        %v3022 = vunpack.c.l.b16 %v363
        %v3023 = vunpack.c.h.b16 %v363
        %v3024 = vunpack.c.l.b16 %v364
        %v3025 = vunpack.c.h.b16 %v364
        %v3026 = vunpack.c.l.b16 %v365
        %v3027 = vunpack.c.h.b16 %v365
        %v3028 = vunpack.c.l.b16 %v366
        %v3029 = vunpack.c.h.b16 %v366
        %v3030 = vunpack.c.l.b16 %v367
        %v3031 = vunpack.c.h.b16 %v367
        %v3032 = vunpack.c.l.b16 %v368
        %v3033 = vunpack.c.h.b16 %v368
        %v3034 = vunpack.c.l.b16 %v369
        %v3035 = vunpack.c.h.b16 %v369
        %v3036 = vunpack.c.l.b16 %v370
        %v3037 = vunpack.c.h.b16 %v370
        %v3038 = vunpack.c.l.b16 %v371
        %v3039 = vunpack.c.h.b16 %v371
        %v3040 = vunpack.c.l.b16 %v372
        %v3041 = vunpack.c.h.b16 %v372
        %v3042 = vunpack.c.l.b16 %v373
        %v3043 = vunpack.c.h.b16 %v373
        %v3044 = vunpack.c.l.b16 %v374
        %v3045 = vunpack.c.h.b16 %v374
        %v3046 = vunpack.c.l.b16 %v375
        %v3047 = vunpack.c.h.b16 %v375
        %v3048 = vunpack.c.l.b16 %v376
        %v3049 = vunpack.c.h.b16 %v376
        %v3050 = vunpack.c.l.b16 %v377
        %v3051 = vunpack.c.h.b16 %v377
        %v3052 = vunpack.c.l.b16 %v378
        %v3053 = vunpack.c.h.b16 %v378
        %v3054 = vunpack.c.l.b16 %v379
        %v3055 = vunpack.c.h.b16 %v379
        %v3056 = vunpack.c.l.b16 %v380
        %v3057 = vunpack.c.h.b16 %v380
        %v3058 = vunpack.c.l.b16 %v381
        %v3059 = vunpack.c.h.b16 %v381
        %v3060 = vunpack.c.l.b16 %v382
        %v3061 = vunpack.c.h.b16 %v382
        %v3062 = vunpack.c.l.b16 %v383
        %v3063 = vunpack.c.h.b16 %v383
        %v3064 = vunpack.c.l.b16 %v384
        %v3065 = vunpack.c.h.b16 %v384
        %v3066 = vunpack.c.l.b16 %v385
        %v3067 = vunpack.c.h.b16 %v385
        %v3068 = vunpack.c.l.b16 %v386
        %v3069 = vunpack.c.h.b16 %v386
        %v3070 = vunpack.c.l.b16 %v387
        %v3071 = vunpack.c.h.b16 %v387
        %v3072 = vunpack.c.l.b16 %v388
        %v3073 = vunpack.c.h.b16 %v388
        %v3074 = vunpack.c.l.b16 %v389
        %v3075 = vunpack.c.h.b16 %v389
        %v3076 = vunpack.c.l.b16 %v390
        %v3077 = vunpack.c.h.b16 %v390
        %v3078 = vunpack.c.l.b16 %v391
        %v3079 = vunpack.c.h.b16 %v391
        %v3080 = vunpack.c.l.b16 %v392
        %v3081 = vunpack.c.h.b16 %v392
        %v3082 = vunpack.c.l.b16 %v393
        %v3083 = vunpack.c.h.b16 %v393
        %v3084 = vunpack.c.l.b16 %v394
        %v3085 = vunpack.c.h.b16 %v394
        %v3086 = vunpack.c.l.b16 %v395
        %v3087 = vunpack.c.h.b16 %v395
        %v3088 = vunpack.c.l.b16 %v396
        %v3089 = vunpack.c.h.b16 %v396
        %v3090 = vunpack.c.l.b16 %v397
        %v3091 = vunpack.c.h.b16 %v397
        %v3092 = vunpack.c.l.b16 %v398
        %v3093 = vunpack.c.h.b16 %v398
        %v3094 = vunpack.c.l.b16 %v399
        %v3095 = vunpack.c.h.b16 %v399
        %v3096 = vunpack.c.l.b16 %v400
        %v3097 = vunpack.c.h.b16 %v400
        %v3098 = vunpack.c.l.b16 %v401
        %v3099 = vunpack.c.h.b16 %v401
        %v3100 = vunpack.c.l.b16 %v402
        %v3101 = vunpack.c.h.b16 %v402
        %v3102 = vunpack.c.l.b16 %v403
        %v3103 = vunpack.c.h.b16 %v403
        %v3104 = vunpack.c.l.b16 %v404
        %v3105 = vunpack.c.h.b16 %v404
        %v3106 = vunpack.c.l.b16 %v405
        %v3107 = vunpack.c.h.b16 %v405
        %v3108 = vunpack.c.l.b16 %v406
        %v3109 = vunpack.c.h.b16 %v406
        %v3110 = vunpack.c.l.b16 %v407
        %v3111 = vunpack.c.h.b16 %v407
        %v3112 = vunpack.c.l.b16 %v408
        %v3113 = vunpack.c.h.b16 %v408
        %v3114 = vunpack.c.l.b16 %v409
        %v3115 = vunpack.c.h.b16 %v409
        %v3116 = vunpack.c.l.b16 %v410
        %v3117 = vunpack.c.h.b16 %v410
        %v3118 = vunpack.c.l.b16 %v411
        %v3119 = vunpack.c.h.b16 %v411
        %v3120 = vunpack.c.l.b16 %v412
        %v3121 = vunpack.c.h.b16 %v412
        %v3122 = vunpack.c.l.b16 %v413
        %v3123 = vunpack.c.h.b16 %v413
        %v3124 = vunpack.c.l.b16 %v414
        %v3125 = vunpack.c.h.b16 %v414
        %v3126 = vunpack.c.l.b16 %v415
        %v3127 = vunpack.c.h.b16 %v415
        %v3128 = vunpack.c.l.b16 %v416
        %v3129 = vunpack.c.h.b16 %v416
        %v3130 = vunpack.c.l.b16 %v417
        %v3131 = vunpack.c.h.b16 %v417
        %v3132 = vunpack.c.l.b16 %v418
        %v3133 = vunpack.c.h.b16 %v418
        %v3134 = vunpack.c.l.b16 %v419
        %v3135 = vunpack.c.h.b16 %v419
        %v3136 = vunpack.c.l.b16 %v420
        %v3137 = vunpack.c.h.b16 %v420
        %v3138 = vunpack.c.l.b16 %v421
        %v3139 = vunpack.c.h.b16 %v421
        %v3140 = vunpack.c.l.b16 %v422
        %v3141 = vunpack.c.h.b16 %v422
        %v3142 = vunpack.c.l.b16 %v423
        %v3143 = vunpack.c.h.b16 %v423
        %v3144 = vunpack.c.l.b16 %v424
        %v3145 = vunpack.c.h.b16 %v424
        %v3146 = vunpack.c.l.b16 %v425
        %v3147 = vunpack.c.h.b16 %v425
        %v3148 = vunpack.c.l.b16 %v426
        %v3149 = vunpack.c.h.b16 %v426
        %v3150 = vunpack.c.l.b16 %v427
        %v3151 = vunpack.c.h.b16 %v427
        %v3152 = vunpack.c.l.b16 %v428
        %v3153 = vunpack.c.h.b16 %v428
        %v3154 = vunpack.c.l.b16 %v429
        %v3155 = vunpack.c.h.b16 %v429
        %v3156 = vunpack.c.l.b16 %v430
        %v3157 = vunpack.c.h.b16 %v430
        %v3158 = vunpack.c.l.b16 %v431
        %v3159 = vunpack.c.h.b16 %v431
        %v3160 = vunpack.c.l.b16 %v432
        %v3161 = vunpack.c.h.b16 %v432
        %v3162 = vunpack.c.l.b16 %v433
        %v3163 = vunpack.c.h.b16 %v433
        %v3164 = vunpack.c.l.b16 %v434
        %v3165 = vunpack.c.h.b16 %v434
        %v3166 = vunpack.c.l.b16 %v435
        %v3167 = vunpack.c.h.b16 %v435
        %v3168 = vunpack.c.l.b16 %v436
        %v3169 = vunpack.c.h.b16 %v436
        %v3170 = vunpack.c.l.b16 %v437
        %v3171 = vunpack.c.h.b16 %v437
        %v3172 = vunpack.c.l.b16 %v438
        %v3173 = vunpack.c.h.b16 %v438
        %v3174 = vunpack.c.l.b16 %v439
        %v3175 = vunpack.c.h.b16 %v439
        %v3176 = vunpack.c.l.b16 %v440
        %v3177 = vunpack.c.h.b16 %v440
        %v3178 = vunpack.c.l.b16 %v441
        %v3179 = vunpack.c.h.b16 %v441
        %v3180 = vunpack.c.l.b16 %v442
        %v3181 = vunpack.c.h.b16 %v442
        %v3182 = vunpack.c.l.b16 %v443
        %v3183 = vunpack.c.h.b16 %v443
        %v3184 = vunpack.c.l.b16 %v444
        %v3185 = vunpack.c.h.b16 %v444
        %v3186 = vunpack.c.l.b16 %v445
        %v3187 = vunpack.c.h.b16 %v445
        %v3188 = vunpack.c.l.b16 %v446
        %v3189 = vunpack.c.h.b16 %v446
        %v3190 = vunpack.c.l.b16 %v447
        %v3191 = vunpack.c.h.b16 %v447
        %v3192 = vunpack.c.l.b16 %v448
        %v3193 = vunpack.c.h.b16 %v448
        %v3194 = vunpack.c.l.b16 %v449
        %v3195 = vunpack.c.h.b16 %v449
        %v3196 = vunpack.c.l.b16 %v450
        %v3197 = vunpack.c.h.b16 %v450
        %v3198 = vunpack.c.l.b16 %v451
        %v3199 = vunpack.c.h.b16 %v451
        %v3200 = vunpack.c.l.b16 %v452
        %v3201 = vunpack.c.h.b16 %v452
        %v3202 = vunpack.c.l.b16 %v453
        %v3203 = vunpack.c.h.b16 %v453
        %v3204 = vunpack.c.l.b16 %v454
        %v3205 = vunpack.c.h.b16 %v454
        %v3206 = vunpack.c.l.b16 %v455
        %v3207 = vunpack.c.h.b16 %v455
        %v3208 = vunpack.c.l.b16 %v456
        %v3209 = vunpack.c.h.b16 %v456
        %v3210 = vunpack.c.l.b16 %v457
        %v3211 = vunpack.c.h.b16 %v457
        %v3212 = vunpack.c.l.b16 %v458
        %v3213 = vunpack.c.h.b16 %v458
        %v3214 = vunpack.c.l.b16 %v459
        %v3215 = vunpack.c.h.b16 %v459
        %v3216 = vunpack.c.l.b16 %v460
        %v3217 = vunpack.c.h.b16 %v460
        %v3218 = vunpack.c.l.b16 %v461
        %v3219 = vunpack.c.h.b16 %v461
        %v3220 = vunpack.c.l.b16 %v462
        %v3221 = vunpack.c.h.b16 %v462
        %v3222 = vunpack.c.l.b16 %v463
        %v3223 = vunpack.c.h.b16 %v463
        %v3224 = vunpack.c.l.b16 %v464
        %v3225 = vunpack.c.h.b16 %v464
        %v3226 = vunpack.c.l.b16 %v465
        %v3227 = vunpack.c.h.b16 %v465
        %v3228 = vunpack.c.l.b16 %v466
        %v3229 = vunpack.c.h.b16 %v466
        %v3230 = vunpack.c.l.b16 %v467
        %v3231 = vunpack.c.h.b16 %v467
        %v3232 = vunpack.c.l.b16 %v468
        %v3233 = vunpack.c.h.b16 %v468
        %v3234 = vunpack.c.l.b16 %v469
        %v3235 = vunpack.c.h.b16 %v469
        %v3236 = vunpack.c.l.b16 %v470
        %v3237 = vunpack.c.h.b16 %v470
        %v3238 = vunpack.c.l.b16 %v471
        %v3239 = vunpack.c.h.b16 %v471
        %v3240 = vunpack.c.l.b16 %v472
        %v3241 = vunpack.c.h.b16 %v472
        %v3242 = vunpack.c.l.b16 %v473
        %v3243 = vunpack.c.h.b16 %v473
        %v3244 = vunpack.c.l.b16 %v474
        %v3245 = vunpack.c.h.b16 %v474
        %v3246 = vunpack.c.l.b16 %v475
        %v3247 = vunpack.c.h.b16 %v475
        %v3248 = vunpack.c.l.b16 %v476
        %v3249 = vunpack.c.h.b16 %v476
        %v3250 = vunpack.c.l.b16 %v477
        %v3251 = vunpack.c.h.b16 %v477
        %v3252 = vunpack.c.l.b16 %v478
        %v3253 = vunpack.c.h.b16 %v478
        %v3254 = vunpack.c.l.b16 %v479
        %v3255 = vunpack.c.h.b16 %v479
        %v3256 = vunpack.c.l.b16 %v480
        %v3257 = vunpack.c.h.b16 %v480
        %v3258 = vunpack.c.l.b16 %v481
        %v3259 = vunpack.c.h.b16 %v481
        %v3260 = vunpack.c.l.b16 %v482
        %v3261 = vunpack.c.h.b16 %v482
        %v3262 = vunpack.c.l.b16 %v483
        %v3263 = vunpack.c.h.b16 %v483
        %v3264 = vunpack.c.l.b16 %v484
        %v3265 = vunpack.c.h.b16 %v484
        %v3266 = vunpack.c.l.b16 %v485
        %v3267 = vunpack.c.h.b16 %v485
        %v3268 = vunpack.c.l.b16 %v486
        %v3269 = vunpack.c.h.b16 %v486
        %v3270 = vunpack.c.l.b16 %v487
        %v3271 = vunpack.c.h.b16 %v487
        %v3272 = vunpack.c.l.b16 %v488
        %v3273 = vunpack.c.h.b16 %v488
        %v3274 = vunpack.c.l.b16 %v489
        %v3275 = vunpack.c.h.b16 %v489
        %v3276 = vunpack.c.l.b16 %v490
        %v3277 = vunpack.c.h.b16 %v490
        %v3278 = vunpack.c.l.b16 %v491
        %v3279 = vunpack.c.h.b16 %v491
        %v3280 = vunpack.c.l.b16 %v492
        %v3281 = vunpack.c.h.b16 %v492
        %v3282 = vunpack.c.l.b16 %v493
        %v3283 = vunpack.c.h.b16 %v493
        %v3284 = vunpack.c.l.b16 %v494
        %v3285 = vunpack.c.h.b16 %v494
        %v3286 = vunpack.c.l.b16 %v495
        %v3287 = vunpack.c.h.b16 %v495
        %v3288 = vunpack.c.l.b16 %v496
        %v3289 = vunpack.c.h.b16 %v496
        %v3290 = vunpack.c.l.b16 %v497
        %v3291 = vunpack.c.h.b16 %v497
        %v3292 = vunpack.c.l.b16 %v498
        %v3293 = vunpack.c.h.b16 %v498
        %v3294 = vunpack.c.l.b16 %v499
        %v3295 = vunpack.c.h.b16 %v499
        %v3296 = vunpack.c.l.b16 %v500
        %v3297 = vunpack.c.h.b16 %v500
        %v3298 = vunpack.c.l.b16 %v501
        %v3299 = vunpack.c.h.b16 %v501
        %v3300 = vunpack.c.l.b16 %v502
        %v3301 = vunpack.c.h.b16 %v502
        %v3302 = vunpack.c.l.b16 %v503
        %v3303 = vunpack.c.h.b16 %v503
        %v3304 = vunpack.c.l.b16 %v504
        %v3305 = vunpack.c.h.b16 %v504
        %v3306 = vunpack.c.l.b16 %v505
        %v3307 = vunpack.c.h.b16 %v505
        %v3308 = vunpack.c.l.b16 %v506
        %v3309 = vunpack.c.h.b16 %v506
        %v3310 = vunpack.c.l.b16 %v507
        %v3311 = vunpack.c.h.b16 %v507
        %v3312 = vunpack.c.l.b16 %v508
        %v3313 = vunpack.c.h.b16 %v508
        %v3314 = vunpack.c.l.b16 %v509
        %v3315 = vunpack.c.h.b16 %v509
        %v3316 = vunpack.c.l.b16 %v510
        %v3317 = vunpack.c.h.b16 %v510
        %v3318 = vunpack.c.l.b16 %v511
        %v3319 = vunpack.c.h.b16 %v511
        %v3320 = vunpack.c.l.b16 %v512
        %v3321 = vunpack.c.h.b16 %v512
        %v3322 = vunpack.c.l.b16 %v513
        %v3323 = vunpack.c.h.b16 %v513
        %v3324 = vunpack.c.l.b16 %v514
        %v3325 = vunpack.c.h.b16 %v514
        %v3326 = vunpack.c.l.b16 %v515
        %v3327 = vunpack.c.h.b16 %v515
        %v3328 = vunpack.c.l.b16 %v516
        %v3329 = vunpack.c.h.b16 %v516
        %v3330 = vunpack.c.l.b16 %v517
        %v3331 = vunpack.c.h.b16 %v517
        %v3332 = vunpack.c.l.b16 %v518
        %v3333 = vunpack.c.h.b16 %v518
        %v3334 = vunpack.c.l.b16 %v519
        %v3335 = vunpack.c.h.b16 %v519
        %v3336 = vunpack.c.l.b16 %v520
        %v3337 = vunpack.c.h.b16 %v520
        %v3338 = vunpack.c.l.b16 %v521
        %v3339 = vunpack.c.h.b16 %v521
        %v3340 = vunpack.c.l.b16 %v522
        %v3341 = vunpack.c.h.b16 %v522
        %v3342 = vunpack.c.l.b16 %v523
        %v3343 = vunpack.c.h.b16 %v523
        %v3344 = vunpack.c.l.b16 %v524
        %v3345 = vunpack.c.h.b16 %v524
        %v3346 = vunpack.c.l.b16 %v525
        %v3347 = vunpack.c.h.b16 %v525
        %v3348 = vunpack.c.l.b16 %v526
        %v3349 = vunpack.c.h.b16 %v526
        %v3350 = vunpack.c.l.b16 %v527
        %v3351 = vunpack.c.h.b16 %v527
        %v3352 = vunpack.c.l.b16 %v528
        %v3353 = vunpack.c.h.b16 %v528
        %v3354 = vunpack.c.l.b16 %v529
        %v3355 = vunpack.c.h.b16 %v529
        %v3356 = vunpack.c.l.b16 %v530
        %v3357 = vunpack.c.h.b16 %v530
        %v3358 = vunpack.c.l.b16 %v531
        %v3359 = vunpack.c.h.b16 %v531
        %v3360 = vunpack.c.l.b16 %v532
        %v3361 = vunpack.c.h.b16 %v532
        %v3362 = vunpack.c.l.b16 %v533
        %v3363 = vunpack.c.h.b16 %v533
        %v3364 = vunpack.c.l.b16 %v534
        %v3365 = vunpack.c.h.b16 %v534
        %v3366 = vunpack.c.l.b16 %v535
        %v3367 = vunpack.c.h.b16 %v535
        %v3368 = vunpack.c.l.b16 %v536
        %v3369 = vunpack.c.h.b16 %v536
        %v3370 = vunpack.c.l.b16 %v537
        %v3371 = vunpack.c.h.b16 %v537
        %v3372 = vunpack.c.l.b16 %v538
        %v3373 = vunpack.c.h.b16 %v538
        %v3374 = vunpack.c.l.b16 %v539
        %v3375 = vunpack.c.h.b16 %v539
        %v3376 = vunpack.c.l.b16 %v540
        %v3377 = vunpack.c.h.b16 %v540
        %v3378 = vunpack.c.l.b16 %v541
        %v3379 = vunpack.c.h.b16 %v541
        %v3380 = vunpack.c.l.b16 %v542
        %v3381 = vunpack.c.h.b16 %v542
        %v3382 = vunpack.c.l.b16 %v543
        %v3383 = vunpack.c.h.b16 %v543
        %v3384 = vunpack.c.l.b16 %v544
        %v3385 = vunpack.c.h.b16 %v544
        %v3386 = vunpack.c.l.b16 %v545
        %v3387 = vunpack.c.h.b16 %v545
        %v3388 = vunpack.c.l.b16 %v546
        %v3389 = vunpack.c.h.b16 %v546
        %v3390 = vunpack.c.l.b16 %v547
        %v3391 = vunpack.c.h.b16 %v547
        %v3392 = vunpack.c.l.b16 %v548
        %v3393 = vunpack.c.h.b16 %v548
        %v3394 = vunpack.c.l.b16 %v549
        %v3395 = vunpack.c.h.b16 %v549
        %v3396 = vunpack.c.l.b16 %v550
        %v3397 = vunpack.c.h.b16 %v550
        %v3398 = vunpack.c.l.b16 %v551
        %v3399 = vunpack.c.h.b16 %v551
        %v3400 = vunpack.c.l.b16 %v552
        %v3401 = vunpack.c.h.b16 %v552
        %v3402 = vunpack.c.l.b16 %v553
        %v3403 = vunpack.c.h.b16 %v553
        %v3404 = vunpack.c.l.b16 %v554
        %v3405 = vunpack.c.h.b16 %v554
        %v3406 = vunpack.c.l.b16 %v555
        %v3407 = vunpack.c.h.b16 %v555
        %v3408 = vunpack.c.l.b16 %v556
        %v3409 = vunpack.c.h.b16 %v556
        %v3410 = vunpack.c.l.b16 %v557
        %v3411 = vunpack.c.h.b16 %v557
        %v3412 = vunpack.c.l.b16 %v558
        %v3413 = vunpack.c.h.b16 %v558
        %v3414 = vunpack.c.l.b16 %v559
        %v3415 = vunpack.c.h.b16 %v559
        %v3416 = vunpack.c.l.b16 %v560
        %v3417 = vunpack.c.h.b16 %v560
        %v3418 = vunpack.c.l.b16 %v561
        %v3419 = vunpack.c.h.b16 %v561
        %v3420 = vunpack.c.l.b16 %v562
        %v3421 = vunpack.c.h.b16 %v562
        %v3422 = vunpack.c.l.b16 %v563
        %v3423 = vunpack.c.h.b16 %v563
        %v3424 = vunpack.c.l.b16 %v564
        %v3425 = vunpack.c.h.b16 %v564
        %v3426 = vunpack.c.l.b16 %v565
        %v3427 = vunpack.c.h.b16 %v565
        %v3428 = vunpack.c.l.b16 %v566
        %v3429 = vunpack.c.h.b16 %v566
        %v3430 = vunpack.c.l.b16 %v567
        %v3431 = vunpack.c.h.b16 %v567
        %v3432 = vunpack.c.l.b16 %v568
        %v3433 = vunpack.c.h.b16 %v568
        %v3434 = vunpack.c.l.b16 %v569
        %v3435 = vunpack.c.h.b16 %v569
        %v3436 = vunpack.c.l.b16 %v570
        %v3437 = vunpack.c.h.b16 %v570
        %v3438 = vunpack.c.l.b16 %v571
        %v3439 = vunpack.c.h.b16 %v571
        %v3440 = vunpack.c.l.b16 %v572
        %v3441 = vunpack.c.h.b16 %v572
        %v3442 = vunpack.c.l.b16 %v573
        %v3443 = vunpack.c.h.b16 %v573
        %v3444 = vunpack.c.l.b16 %v574
        %v3445 = vunpack.c.h.b16 %v574
        %v3446 = vunpack.c.l.b16 %v575
        %v3447 = vunpack.c.h.b16 %v575
        %v3448 = vunpack.c.l.b16 %v576
        %v3449 = vunpack.c.h.b16 %v576
        %v3450 = vunpack.c.l.b16 %v577
        %v3451 = vunpack.c.h.b16 %v577
        %v3452 = vunpack.c.l.b16 %v578
        %v3453 = vunpack.c.h.b16 %v578
        %v3454 = vunpack.c.l.b16 %v579
        %v3455 = vunpack.c.h.b16 %v579
        %v3456 = vunpack.c.l.b16 %v580
        %v3457 = vunpack.c.h.b16 %v580
        %v3458 = vunpack.c.l.b16 %v581
        %v3459 = vunpack.c.h.b16 %v581
        %v3460 = vunpack.c.l.b16 %v582
        %v3461 = vunpack.c.h.b16 %v582
        %v3462 = vunpack.c.l.b16 %v583
        %v3463 = vunpack.c.h.b16 %v583
        %v3464 = vunpack.c.l.b16 %v584
        %v3465 = vunpack.c.h.b16 %v584
        %v3466 = vunpack.c.l.b16 %v585
        %v3467 = vunpack.c.h.b16 %v585
        %v3468 = vunpack.c.l.b16 %v586
        %v3469 = vunpack.c.h.b16 %v586
        %v3470 = vunpack.c.l.b16 %v587
        %v3471 = vunpack.c.h.b16 %v587
        %v3472 = vunpack.c.l.b16 %v588
        %v3473 = vunpack.c.h.b16 %v588
        %v3474 = vunpack.c.l.b16 %v589
        %v3475 = vunpack.c.h.b16 %v589
        %v3476 = vunpack.c.l.b16 %v590
        %v3477 = vunpack.c.h.b16 %v590
        %v3478 = vunpack.c.l.b16 %v591
        %v3479 = vunpack.c.h.b16 %v591
        %v3480 = vunpack.c.l.b16 %v592
        %v3481 = vunpack.c.h.b16 %v592
        %v3482 = vunpack.c.l.b16 %v593
        %v3483 = vunpack.c.h.b16 %v593
        %v3484 = vunpack.c.l.b16 %v594
        %v3485 = vunpack.c.h.b16 %v594
        %v3486 = vunpack.c.l.b16 %v595
        %v3487 = vunpack.c.h.b16 %v595
        %v3488 = vunpack.c.l.b16 %v596
        %v3489 = vunpack.c.h.b16 %v596
        %v3490 = vunpack.c.l.b16 %v597
        %v3491 = vunpack.c.h.b16 %v597
        %v3492 = vunpack.c.l.b16 %v598
        %v3493 = vunpack.c.h.b16 %v598
        %v3494 = vunpack.c.l.b16 %v599
        %v3495 = vunpack.c.h.b16 %v599
        %v3496 = vunpack.c.l.b16 %v600
        %v3497 = vunpack.c.h.b16 %v600
        %v3498 = vunpack.c.l.b16 %v601
        %v3499 = vunpack.c.h.b16 %v601
        %v3500 = vunpack.c.l.b16 %v602
        %v3501 = vunpack.c.h.b16 %v602
        %v3502 = vunpack.c.l.b16 %v603
        %v3503 = vunpack.c.h.b16 %v603
        %v3504 = vunpack.c.l.b16 %v604
        %v3505 = vunpack.c.h.b16 %v604
        %v3506 = vunpack.c.l.b16 %v605
        %v3507 = vunpack.c.h.b16 %v605
        %v3508 = vunpack.c.l.b16 %v606
        %v3509 = vunpack.c.h.b16 %v606
        %v3510 = vunpack.c.l.b16 %v607
        %v3511 = vunpack.c.h.b16 %v607
        %v3512 = vunpack.c.l.b16 %v608
        %v3513 = vunpack.c.h.b16 %v608
        %v3514 = vunpack.c.l.b16 %v609
        %v3515 = vunpack.c.h.b16 %v609
        %v3516 = vunpack.c.l.b16 %v610
        %v3517 = vunpack.c.h.b16 %v610
        %v3518 = vunpack.c.l.b16 %v611
        %v3519 = vunpack.c.h.b16 %v611
        %v3520 = vunpack.c.l.b16 %v612
        %v3521 = vunpack.c.h.b16 %v612
        %v3522 = vunpack.c.l.b16 %v613
        %v3523 = vunpack.c.h.b16 %v613
        %v3524 = vunpack.c.l.b16 %v614
        %v3525 = vunpack.c.h.b16 %v614
        %v3526 = vunpack.c.l.b16 %v615
        %v3527 = vunpack.c.h.b16 %v615
        %v3528 = vunpack.c.l.b16 %v616
        %v3529 = vunpack.c.h.b16 %v616
        %v3530 = vunpack.c.l.b16 %v617
        %v3531 = vunpack.c.h.b16 %v617
        %v3532 = vunpack.c.l.b16 %v618
        %v3533 = vunpack.c.h.b16 %v618
        %v3534 = vunpack.c.l.b16 %v619
        %v3535 = vunpack.c.h.b16 %v619
        %v3536 = vunpack.c.l.b16 %v620
        %v3537 = vunpack.c.h.b16 %v620
        %v3538 = vunpack.c.l.b16 %v621
        %v3539 = vunpack.c.h.b16 %v621
        %v3540 = vunpack.c.l.b16 %v622
        %v3541 = vunpack.c.h.b16 %v622
        %v3542 = vunpack.c.l.b16 %v623
        %v3543 = vunpack.c.h.b16 %v623
        %v3544 = vunpack.c.l.b16 %v624
        %v3545 = vunpack.c.h.b16 %v624
        %v3546 = vunpack.c.l.b16 %v625
        %v3547 = vunpack.c.h.b16 %v625
        %v3548 = vunpack.c.l.b16 %v626
        %v3549 = vunpack.c.h.b16 %v626
        %v3550 = vunpack.c.l.b16 %v627
        %v3551 = vunpack.c.h.b16 %v627
        %v3552 = vunpack.c.l.b16 %v628
        %v3553 = vunpack.c.h.b16 %v628
        %v3554 = vunpack.c.l.b16 %v629
        %v3555 = vunpack.c.h.b16 %v629
        %v3556 = vunpack.c.l.b16 %v630
        %v3557 = vunpack.c.h.b16 %v630
        %v3558 = vunpack.c.l.b16 %v631
        %v3559 = vunpack.c.h.b16 %v631
        %v3560 = vunpack.c.l.b16 %v632
        %v3561 = vunpack.c.h.b16 %v632
        %v3562 = vunpack.c.l.b16 %v633
        %v3563 = vunpack.c.h.b16 %v633
        %v3564 = vunpack.c.l.b16 %v634
        %v3565 = vunpack.c.h.b16 %v634
        %v3566 = vunpack.c.l.b16 %v635
        %v3567 = vunpack.c.h.b16 %v635
        %v3568 = vunpack.c.l.b16 %v636
        %v3569 = vunpack.c.h.b16 %v636
        %v3570 = vunpack.c.l.b16 %v637
        %v3571 = vunpack.c.h.b16 %v637
        %v3572 = vunpack.c.l.b16 %v638
        %v3573 = vunpack.c.h.b16 %v638
        %v3574 = vunpack.c.l.b16 %v639
        %v3575 = vunpack.c.h.b16 %v639
        %v3576 = vunpack.c.l.b16 %v640
        %v3577 = vunpack.c.h.b16 %v640
        %v3578 = vunpack.c.l.b16 %v641
        %v3579 = vunpack.c.h.b16 %v641
        %v3580 = vunpack.c.l.b16 %v642
        %v3581 = vunpack.c.h.b16 %v642
        %v3582 = vunpack.c.l.b16 %v643
        %v3583 = vunpack.c.h.b16 %v643
        %v3584 = vunpack.c.l.b16 %v644
        %v3585 = vunpack.c.h.b16 %v644
        %v3586 = vunpack.c.l.b16 %v645
        %v3587 = vunpack.c.h.b16 %v645
        %v3588 = vunpack.c.l.b16 %v646
        %v3589 = vunpack.c.h.b16 %v646
        %v3590 = vunpack.c.l.b16 %v647
        %v3591 = vunpack.c.h.b16 %v647
        %v3592 = vunpack.c.l.b16 %v648
        %v3593 = vunpack.c.h.b16 %v648
        %v3594 = vunpack.c.l.b16 %v649
        %v3595 = vunpack.c.h.b16 %v649
        %v3596 = vunpack.c.l.b16 %v650
        %v3597 = vunpack.c.h.b16 %v650
        %v3598 = vunpack.c.l.b16 %v651
        %v3599 = vunpack.c.h.b16 %v651
        %v3600 = vunpack.c.l.b16 %v652
        %v3601 = vunpack.c.h.b16 %v652
        %v3602 = vunpack.c.l.b16 %v653
        %v3603 = vunpack.c.h.b16 %v653
        %v3604 = vunpack.c.l.b16 %v654
        %v3605 = vunpack.c.h.b16 %v654
        %v3606 = vunpack.c.l.b16 %v655
        %v3607 = vunpack.c.h.b16 %v655
        %v3608 = vunpack.c.l.b16 %v656
        %v3609 = vunpack.c.h.b16 %v656
        %v3610 = vunpack.c.l.b16 %v657
        %v3611 = vunpack.c.h.b16 %v657
        %v3612 = vunpack.c.l.b16 %v658
        %v3613 = vunpack.c.h.b16 %v658
        %v3614 = vunpack.c.l.b16 %v659
        %v3615 = vunpack.c.h.b16 %v659
        %v3616 = vunpack.c.l.b16 %v660
        %v3617 = vunpack.c.h.b16 %v660
        %v3618 = vunpack.c.l.b16 %v661
        %v3619 = vunpack.c.h.b16 %v661
        %v3620 = vunpack.c.l.b16 %v662
        %v3621 = vunpack.c.h.b16 %v662
        %v3622 = vunpack.c.l.b16 %v663
        %v3623 = vunpack.c.h.b16 %v663
        %v3624 = vunpack.c.l.b16 %v664
        %v3625 = vunpack.c.h.b16 %v664
        %v3626 = vunpack.c.l.b16 %v665
        %v3627 = vunpack.c.h.b16 %v665
        %v3628 = vunpack.c.l.b16 %v666
        %v3629 = vunpack.c.h.b16 %v666
        %v3630 = vunpack.c.l.b16 %v667
        %v3631 = vunpack.c.h.b16 %v667
        %v3632 = vunpack.c.l.b16 %v668
        %v3633 = vunpack.c.h.b16 %v668
        %v3634 = vunpack.c.l.b16 %v669
        %v3635 = vunpack.c.h.b16 %v669
        %v3636 = vunpack.c.l.b16 %v670
        %v3637 = vunpack.c.h.b16 %v670
        %v3638 = vunpack.c.l.b16 %v671
        %v3639 = vunpack.c.h.b16 %v671
        %v3640 = vunpack.c.l.b16 %v672
        %v3641 = vunpack.c.h.b16 %v672
        %v3642 = vunpack.c.l.b16 %v673
        %v3643 = vunpack.c.h.b16 %v673
        %v3644 = vunpack.c.l.b16 %v674
        %v3645 = vunpack.c.h.b16 %v674
        %v3646 = vunpack.c.l.b16 %v675
        %v3647 = vunpack.c.h.b16 %v675
        %v3648 = vunpack.c.l.b16 %v676
        %v3649 = vunpack.c.h.b16 %v676
        %v3650 = vunpack.c.l.b16 %v677
        %v3651 = vunpack.c.h.b16 %v677
        %v3652 = vunpack.c.l.b16 %v678
        %v3653 = vunpack.c.h.b16 %v678
        %v3654 = vunpack.c.l.b16 %v679
        %v3655 = vunpack.c.h.b16 %v679
        %v3656 = vunpack.c.l.b16 %v680
        %v3657 = vunpack.c.h.b16 %v680
        %v3658 = vunpack.c.l.b16 %v681
        %v3659 = vunpack.c.h.b16 %v681
        %v3660 = vunpack.c.l.b16 %v682
        %v3661 = vunpack.c.h.b16 %v682
        %v3662 = vunpack.c.l.b16 %v683
        %v3663 = vunpack.c.h.b16 %v683
        %v3664 = vunpack.c.l.b16 %v684
        %v3665 = vunpack.c.h.b16 %v684
        %v3666 = vunpack.c.l.b16 %v685
        %v3667 = vunpack.c.h.b16 %v685
        %v3668 = vunpack.c.l.b16 %v686
        %v3669 = vunpack.c.h.b16 %v686
        %v3670 = vunpack.c.l.b16 %v687
        %v3671 = vunpack.c.h.b16 %v687
        %v3672 = vunpack.c.l.b16 %v688
        %v3673 = vunpack.c.h.b16 %v688
        %v3674 = vunpack.c.l.b16 %v689
        %v3675 = vunpack.c.h.b16 %v689
        %v3676 = vunpack.c.l.b16 %v690
        %v3677 = vunpack.c.h.b16 %v690
        %v3678 = vunpack.c.l.b16 %v691
        %v3679 = vunpack.c.h.b16 %v691
        %v3680 = vunpack.c.l.b16 %v692
        %v3681 = vunpack.c.h.b16 %v692
        %v3682 = vunpack.c.l.b16 %v693
        %v3683 = vunpack.c.h.b16 %v693
        %v3684 = vunpack.c.l.b16 %v694
        %v3685 = vunpack.c.h.b16 %v694
        %v3686 = vunpack.c.l.b16 %v695
        %v3687 = vunpack.c.h.b16 %v695
        %v3688 = vunpack.c.l.b16 %v696
        %v3689 = vunpack.c.h.b16 %v696
        %v3690 = vunpack.c.l.b16 %v697
        %v3691 = vunpack.c.h.b16 %v697
        %v3692 = vunpack.c.l.b16 %v698
        %v3693 = vunpack.c.h.b16 %v698
        %v3694 = vunpack.c.l.b16 %v699
        %v3695 = vunpack.c.h.b16 %v699
        %v3696 = vunpack.c.l.b16 %v700
        %v3697 = vunpack.c.h.b16 %v700
        %v3698 = vunpack.c.l.b16 %v701
        %v3699 = vunpack.c.h.b16 %v701
        %v3700 = vunpack.c.l.b16 %v702
        %v3701 = vunpack.c.h.b16 %v702
        %v3702 = vunpack.c.l.b16 %v703
        %v3703 = vunpack.c.h.b16 %v703
        %v3704 = vunpack.c.l.b16 %v704
        %v3705 = vunpack.c.h.b16 %v704
        %v3706 = vunpack.c.l.b16 %v705
        %v3707 = vunpack.c.h.b16 %v705
        %v3708 = vunpack.c.l.b16 %v706
        %v3709 = vunpack.c.h.b16 %v706
        %v3710 = vunpack.c.l.b16 %v707
        %v3711 = vunpack.c.h.b16 %v707
        %v3712 = vunpack.c.l.b16 %v708
        %v3713 = vunpack.c.h.b16 %v708
        %v3714 = vunpack.c.l.b16 %v709
        %v3715 = vunpack.c.h.b16 %v709
        %v3716 = vunpack.c.l.b16 %v710
        %v3717 = vunpack.c.h.b16 %v710
        %v3718 = vunpack.c.l.b16 %v711
        %v3719 = vunpack.c.h.b16 %v711
        %v3720 = vunpack.c.l.b16 %v712
        %v3721 = vunpack.c.h.b16 %v712
        %v3722 = vunpack.c.l.b16 %v713
        %v3723 = vunpack.c.h.b16 %v713
        %v3724 = vunpack.c.l.b16 %v714
        %v3725 = vunpack.c.h.b16 %v714
        %v3726 = vunpack.c.l.b16 %v715
        %v3727 = vunpack.c.h.b16 %v715
        %v3728 = vunpack.c.l.b16 %v716
        %v3729 = vunpack.c.h.b16 %v716
        %v3730 = vunpack.c.l.b16 %v717
        %v3731 = vunpack.c.h.b16 %v717
        %v3732 = vunpack.c.l.b16 %v718
        %v3733 = vunpack.c.h.b16 %v718
        %v3734 = vunpack.c.l.b16 %v719
        %v3735 = vunpack.c.h.b16 %v719
        %v3736 = vunpack.c.l.b16 %v720
        %v3737 = vunpack.c.h.b16 %v720
        %v3738 = vunpack.c.l.b16 %v721
        %v3739 = vunpack.c.h.b16 %v721
        %v3740 = vunpack.c.l.b16 %v722
        %v3741 = vunpack.c.h.b16 %v722
        %v3742 = vunpack.c.l.b16 %v723
        %v3743 = vunpack.c.h.b16 %v723
        %v3744 = vunpack.c.l.b16 %v724
        %v3745 = vunpack.c.h.b16 %v724
        %v3746 = vunpack.c.l.b16 %v725
        %v3747 = vunpack.c.h.b16 %v725
        %v3748 = vunpack.c.l.b16 %v726
        %v3749 = vunpack.c.h.b16 %v726
        %v3750 = vunpack.c.l.b16 %v727
        %v3751 = vunpack.c.h.b16 %v727
        %v3752 = vunpack.c.l.b16 %v728
        %v3753 = vunpack.c.h.b16 %v728
        %v3754 = vunpack.c.l.b16 %v729
        %v3755 = vunpack.c.h.b16 %v729
        %v3756 = vunpack.c.l.b16 %v730
        %v3757 = vunpack.c.h.b16 %v730
        %v3758 = vunpack.c.l.b16 %v731
        %v3759 = vunpack.c.h.b16 %v731
        %v3760 = vunpack.c.l.b16 %v732
        %v3761 = vunpack.c.h.b16 %v732
        %v3762 = vunpack.c.l.b16 %v733
        %v3763 = vunpack.c.h.b16 %v733
        %v3764 = vunpack.c.l.b16 %v734
        %v3765 = vunpack.c.h.b16 %v734
        %v3766 = vunpack.c.l.b16 %v735
        %v3767 = vunpack.c.h.b16 %v735
        %v3768 = vunpack.c.l.b16 %v736
        %v3769 = vunpack.c.h.b16 %v736
        %v3770 = vunpack.c.l.b16 %v737
        %v3771 = vunpack.c.h.b16 %v737
        %v3772 = vunpack.c.l.b16 %v738
        %v3773 = vunpack.c.h.b16 %v738
        %v3774 = vunpack.c.l.b16 %v739
        %v3775 = vunpack.c.h.b16 %v739
        %v3776 = vunpack.c.l.b16 %v740
        %v3777 = vunpack.c.h.b16 %v740
        %v3778 = vunpack.c.l.b16 %v741
        %v3779 = vunpack.c.h.b16 %v741
        %v3780 = vunpack.c.l.b16 %v742
        %v3781 = vunpack.c.h.b16 %v742
        %v3782 = vunpack.c.l.b16 %v743
        %v3783 = vunpack.c.h.b16 %v743
        %v3784 = vunpack.c.l.b16 %v744
        %v3785 = vunpack.c.h.b16 %v744
        %v3786 = vunpack.c.l.b16 %v745
        %v3787 = vunpack.c.h.b16 %v745
        %v3788 = vunpack.c.l.b16 %v746
        %v3789 = vunpack.c.h.b16 %v746
        %v3790 = vunpack.c.l.b16 %v747
        %v3791 = vunpack.c.h.b16 %v747
        %v3792 = vunpack.c.l.b16 %v748
        %v3793 = vunpack.c.h.b16 %v748
        %v3794 = vunpack.c.l.b16 %v749
        %v3795 = vunpack.c.h.b16 %v749
        %v3796 = vunpack.c.l.b16 %v750
        %v3797 = vunpack.c.h.b16 %v750
        %v3798 = vunpack.c.l.b16 %v751
        %v3799 = vunpack.c.h.b16 %v751
        %v3800 = vunpack.c.l.b16 %v752
        %v3801 = vunpack.c.h.b16 %v752
        %v3802 = vunpack.c.l.b16 %v753
        %v3803 = vunpack.c.h.b16 %v753
        %v3804 = vunpack.c.l.b16 %v754
        %v3805 = vunpack.c.h.b16 %v754
        %v3806 = vunpack.c.l.b16 %v755
        %v3807 = vunpack.c.h.b16 %v755
        %v3808 = vunpack.c.l.b16 %v756
        %v3809 = vunpack.c.h.b16 %v756
        %v3810 = vunpack.c.l.b16 %v757
        %v3811 = vunpack.c.h.b16 %v757
        %v3812 = vunpack.c.l.b16 %v758
        %v3813 = vunpack.c.h.b16 %v758
        %v3814 = vunpack.c.l.b16 %v759
        %v3815 = vunpack.c.h.b16 %v759
        %v3816 = vunpack.c.l.b16 %v760
        %v3817 = vunpack.c.h.b16 %v760
        %v3818 = vunpack.c.l.b16 %v761
        %v3819 = vunpack.c.h.b16 %v761
        %v3820 = vunpack.c.l.b16 %v762
        %v3821 = vunpack.c.h.b16 %v762
        %v3822 = vunpack.c.l.b16 %v763
        %v3823 = vunpack.c.h.b16 %v763
        %v3824 = vunpack.c.l.b16 %v764
        %v3825 = vunpack.c.h.b16 %v764
        %v3826 = vunpack.c.l.b16 %v765
        %v3827 = vunpack.c.h.b16 %v765
        %v3828 = vunpack.c.l.b16 %v766
        %v3829 = vunpack.c.h.b16 %v766
        %v3830 = vunpack.c.l.b16 %v767
        %v3831 = vunpack.c.h.b16 %v767
        %v3832 = vunpack.c.l.b16 %v768
        %v3833 = vunpack.c.h.b16 %v768
        %v3834 = vunpack.c.l.b16 %v769
        %v3835 = vunpack.c.h.b16 %v769
        %v3836 = vunpack.c.l.b16 %v770
        %v3837 = vunpack.c.h.b16 %v770
        %v3838 = vunpack.c.l.b16 %v771
        %v3839 = vunpack.c.h.b16 %v771
        %v3840 = vunpack.c.l.b16 %v772
        %v3841 = vunpack.c.h.b16 %v772
        %v3842 = vunpack.c.l.b16 %v773
        %v3843 = vunpack.c.h.b16 %v773
        %v3844 = vunpack.c.l.b16 %v774
        %v3845 = vunpack.c.h.b16 %v774
        %v3846 = vunpack.c.l.b16 %v775
        %v3847 = vunpack.c.h.b16 %v775
        %v3848 = vunpack.c.l.b16 %v776
        %v3849 = vunpack.c.h.b16 %v776
        %v3850 = vunpack.c.l.b16 %v777
        %v3851 = vunpack.c.h.b16 %v777
        %v3852 = vunpack.c.l.b16 %v778
        %v3853 = vunpack.c.h.b16 %v778
        %v3854 = vunpack.c.l.b16 %v779
        %v3855 = vunpack.c.h.b16 %v779
        %v3856 = vunpack.c.l.b16 %v780
        %v3857 = vunpack.c.h.b16 %v780
        %v3858 = vunpack.c.l.b16 %v781
        %v3859 = vunpack.c.h.b16 %v781
        %v3860 = vunpack.c.l.b16 %v782
        %v3861 = vunpack.c.h.b16 %v782
        %v3862 = vunpack.c.l.b16 %v783
        %v3863 = vunpack.c.h.b16 %v783
        %v3864 = vunpack.c.l.b16 %v784
        %v3865 = vunpack.c.h.b16 %v784
        %v3866 = vunpack.c.l.b16 %v785
        %v3867 = vunpack.c.h.b16 %v785
        %v3868 = vunpack.c.l.b16 %v786
        %v3869 = vunpack.c.h.b16 %v786
        %v3870 = vunpack.c.l.b16 %v787
        %v3871 = vunpack.c.h.b16 %v787
        %v3872 = vunpack.c.l.b16 %v788
        %v3873 = vunpack.c.h.b16 %v788
        %v3874 = vunpack.c.l.b16 %v789
        %v3875 = vunpack.c.h.b16 %v789
        %v3876 = vunpack.c.l.b16 %v790
        %v3877 = vunpack.c.h.b16 %v790
        %v3878 = vunpack.c.l.b16 %v791
        %v3879 = vunpack.c.h.b16 %v791
        %v3880 = vunpack.c.l.b16 %v792
        %v3881 = vunpack.c.h.b16 %v792
        %v3882 = vunpack.c.l.b16 %v793
        %v3883 = vunpack.c.h.b16 %v793
        %v3884 = vunpack.c.l.b16 %v794
        %v3885 = vunpack.c.h.b16 %v794
        %v3886 = vunpack.c.l.b16 %v795
        %v3887 = vunpack.c.h.b16 %v795
        %v3888 = vunpack.c.l.b16 %v796
        %v3889 = vunpack.c.h.b16 %v796
        %v3890 = vunpack.c.l.b16 %v797
        %v3891 = vunpack.c.h.b16 %v797
        %v3892 = vunpack.c.l.b16 %v798
        %v3893 = vunpack.c.h.b16 %v798
        %v3894 = vunpack.c.l.b16 %v799
        %v3895 = vunpack.c.h.b16 %v799
        %v3896 = vunpack.c.l.b16 %v800
        %v3897 = vunpack.c.h.b16 %v800
        %v3898 = vunpack.c.l.b16 %v801
        %v3899 = vunpack.c.h.b16 %v801
        %v3900 = vunpack.c.l.b16 %v802
        %v3901 = vunpack.c.h.b16 %v802
        %v3902 = vunpack.c.l.b16 %v803
        %v3903 = vunpack.c.h.b16 %v803
        %v3904 = vunpack.c.l.b16 %v804
        %v3905 = vunpack.c.h.b16 %v804
        %v3906 = vunpack.c.l.b16 %v805
        %v3907 = vunpack.c.h.b16 %v805
        %v3908 = vunpack.c.l.b16 %v806
        %v3909 = vunpack.c.h.b16 %v806
        %v3910 = vunpack.c.l.b16 %v807
        %v3911 = vunpack.c.h.b16 %v807
        %v3912 = vunpack.c.l.b16 %v808
        %v3913 = vunpack.c.h.b16 %v808
        %v3914 = vunpack.c.l.b16 %v809
        %v3915 = vunpack.c.h.b16 %v809
        %v3916 = vunpack.c.l.b16 %v810
        %v3917 = vunpack.c.h.b16 %v810
        %v3918 = vunpack.c.l.b16 %v811
        %v3919 = vunpack.c.h.b16 %v811
        %v3920 = vunpack.c.l.b16 %v812
        %v3921 = vunpack.c.h.b16 %v812
        %v3922 = vunpack.c.l.b16 %v813
        %v3923 = vunpack.c.h.b16 %v813
        %v3924 = vunpack.c.l.b16 %v814
        %v3925 = vunpack.c.h.b16 %v814
        %v3926 = vunpack.c.l.b16 %v815
        %v3927 = vunpack.c.h.b16 %v815
        %v3928 = vunpack.c.l.b16 %v816
        %v3929 = vunpack.c.h.b16 %v816
        %v3930 = vunpack.c.l.b16 %v817
        %v3931 = vunpack.c.h.b16 %v817
        %v3932 = vunpack.c.l.b16 %v818
        %v3933 = vunpack.c.h.b16 %v818
        %v3934 = vunpack.c.l.b16 %v819
        %v3935 = vunpack.c.h.b16 %v819
        %v3936 = vunpack.c.l.b16 %v820
        %v3937 = vunpack.c.h.b16 %v820
        %v3938 = vunpack.c.l.b16 %v821
        %v3939 = vunpack.c.h.b16 %v821
        %v3940 = vunpack.c.l.b16 %v822
        %v3941 = vunpack.c.h.b16 %v822
        %v3942 = vunpack.c.l.b16 %v823
        %v3943 = vunpack.c.h.b16 %v823
        %v3944 = vunpack.c.l.b16 %v824
        %v3945 = vunpack.c.h.b16 %v824
        %v3946 = vunpack.c.l.b16 %v825
        %v3947 = vunpack.c.h.b16 %v825
        %v3948 = vunpack.c.l.b16 %v826
        %v3949 = vunpack.c.h.b16 %v826
        %v3950 = vunpack.c.l.b16 %v827
        %v3951 = vunpack.c.h.b16 %v827
        %v3952 = vunpack.c.l.b16 %v828
        %v3953 = vunpack.c.h.b16 %v828
        %v3954 = vunpack.c.l.b16 %v829
        %v3955 = vunpack.c.h.b16 %v829
        %v3956 = vunpack.c.l.b16 %v830
        %v3957 = vunpack.c.h.b16 %v830
        %v3958 = vunpack.c.l.b16 %v831
        %v3959 = vunpack.c.h.b16 %v831
        %v3960 = vunpack.c.l.b16 %v832
        %v3961 = vunpack.c.h.b16 %v832
        %v3962 = vunpack.c.l.b16 %v833
        %v3963 = vunpack.c.h.b16 %v833
        %v3964 = vunpack.c.l.b16 %v834
        %v3965 = vunpack.c.h.b16 %v834
        %v3966 = vunpack.c.l.b16 %v835
        %v3967 = vunpack.c.h.b16 %v835
        %v3968 = vunpack.c.l.b16 %v836
        %v3969 = vunpack.c.h.b16 %v836
        %v3970 = vunpack.c.l.b16 %v837
        %v3971 = vunpack.c.h.b16 %v837
        %v3972 = vunpack.c.l.b16 %v838
        %v3973 = vunpack.c.h.b16 %v838
        %v3974 = vunpack.c.l.b16 %v839
        %v3975 = vunpack.c.h.b16 %v839
        %v3976 = vunpack.c.l.b16 %v840
        %v3977 = vunpack.c.h.b16 %v840
        %v3978 = vunpack.c.l.b16 %v841
        %v3979 = vunpack.c.h.b16 %v841
        %v3980 = vunpack.c.l.b16 %v842
        %v3981 = vunpack.c.h.b16 %v842
        %v3982 = vunpack.c.l.b16 %v843
        %v3983 = vunpack.c.h.b16 %v843
        %v3984 = vunpack.c.l.b16 %v844
        %v3985 = vunpack.c.h.b16 %v844
        %v3986 = vunpack.c.l.b16 %v845
        %v3987 = vunpack.c.h.b16 %v845
        %v3988 = vunpack.c.l.b16 %v846
        %v3989 = vunpack.c.h.b16 %v846
        %v3990 = vunpack.c.l.b16 %v847
        %v3991 = vunpack.c.h.b16 %v847
        %v3992 = vunpack.c.l.b16 %v848
        %v3993 = vunpack.c.h.b16 %v848
        %v3994 = vunpack.c.l.b16 %v849
        %v3995 = vunpack.c.h.b16 %v849
        %v3996 = vunpack.c.l.b16 %v850
        %v3997 = vunpack.c.h.b16 %v850
        %v3998 = vunpack.c.l.b16 %v851
        %v3999 = vunpack.c.h.b16 %v851
        %v4000 = vunpack.c.l.b16 %v852
        %v4001 = vunpack.c.h.b16 %v852
        %v4002 = vunpack.c.l.b16 %v853
        %v4003 = vunpack.c.h.b16 %v853
        %v4004 = vunpack.c.l.b16 %v854
        %v4005 = vunpack.c.h.b16 %v854
        %v4006 = vunpack.c.l.b16 %v855
        %v4007 = vunpack.c.h.b16 %v855
        %v4008 = vunpack.c.l.b16 %v856
        %v4009 = vunpack.c.h.b16 %v856
        %v4010 = vunpack.c.l.b16 %v857
        %v4011 = vunpack.c.h.b16 %v857
        %v4012 = vunpack.c.l.b16 %v858
        %v4013 = vunpack.c.h.b16 %v858
        %v4014 = vunpack.c.l.b16 %v859
        %v4015 = vunpack.c.h.b16 %v859
        %v4016 = vunpack.c.l.b16 %v860
        %v4017 = vunpack.c.h.b16 %v860
        %v4018 = vunpack.c.l.b16 %v861
        %v4019 = vunpack.c.h.b16 %v861
        %v4020 = vunpack.c.l.b16 %v862
        %v4021 = vunpack.c.h.b16 %v862
        %v4022 = vunpack.c.l.b16 %v863
        %v4023 = vunpack.c.h.b16 %v863
        %v4024 = vunpack.c.l.b16 %v864
        %v4025 = vunpack.c.h.b16 %v864
        %v4026 = vunpack.c.l.b16 %v865
        %v4027 = vunpack.c.h.b16 %v865
        %v4028 = vunpack.c.l.b16 %v866
        %v4029 = vunpack.c.h.b16 %v866
        %v4030 = vunpack.c.l.b16 %v867
        %v4031 = vunpack.c.h.b16 %v867
        %v4032 = vunpack.c.l.b16 %v868
        %v4033 = vunpack.c.h.b16 %v868
        %v4034 = vunpack.c.l.b16 %v869
        %v4035 = vunpack.c.h.b16 %v869
        %v4036 = vunpack.c.l.b16 %v870
        %v4037 = vunpack.c.h.b16 %v870
        %v4038 = vunpack.c.l.b16 %v871
        %v4039 = vunpack.c.h.b16 %v871
        %v4040 = vunpack.c.l.b16 %v872
        %v4041 = vunpack.c.h.b16 %v872
        %v4042 = vunpack.c.l.b16 %v873
        %v4043 = vunpack.c.h.b16 %v873
        %v4044 = vunpack.c.l.b16 %v874
        %v4045 = vunpack.c.h.b16 %v874
        %v4046 = vunpack.c.l.b16 %v875
        %v4047 = vunpack.c.h.b16 %v875
        %v4048 = vunpack.c.l.b16 %v876
        %v4049 = vunpack.c.h.b16 %v876
        %v4050 = vunpack.c.l.b16 %v877
        %v4051 = vunpack.c.h.b16 %v877
        %v4052 = vunpack.c.l.b16 %v878
        %v4053 = vunpack.c.h.b16 %v878
        %v4054 = vunpack.c.l.b16 %v879
        %v4055 = vunpack.c.h.b16 %v879
        %v4056 = vunpack.c.l.b16 %v880
        %v4057 = vunpack.c.h.b16 %v880
        %v4058 = vunpack.c.l.b16 %v881
        %v4059 = vunpack.c.h.b16 %v881
        %v4060 = vunpack.c.l.b16 %v882
        %v4061 = vunpack.c.h.b16 %v882
        %v4062 = vunpack.c.l.b16 %v883
        %v4063 = vunpack.c.h.b16 %v883
        %v4064 = vunpack.c.l.b16 %v884
        %v4065 = vunpack.c.h.b16 %v884
        %v4066 = vunpack.c.l.b16 %v885
        %v4067 = vunpack.c.h.b16 %v885
        %v4068 = vunpack.c.l.b16 %v886
        %v4069 = vunpack.c.h.b16 %v886
        %v4070 = vunpack.c.l.b16 %v887
        %v4071 = vunpack.c.h.b16 %v887
        %v4072 = vunpack.c.l.b16 %v888
        %v4073 = vunpack.c.h.b16 %v888
        %v4074 = vunpack.c.l.b16 %v889
        %v4075 = vunpack.c.h.b16 %v889
        %v4076 = vunpack.c.l.b16 %v890
        %v4077 = vunpack.c.h.b16 %v890
        %v4078 = vunpack.c.l.b16 %v891
        %v4079 = vunpack.c.h.b16 %v891
        %v4080 = vunpack.c.l.b16 %v892
        %v4081 = vunpack.c.h.b16 %v892
        %v4082 = vunpack.c.l.b16 %v893
        %v4083 = vunpack.c.h.b16 %v893
        %v4084 = vunpack.c.l.b16 %v894
        %v4085 = vunpack.c.h.b16 %v894
        %v4086 = vunpack.c.l.b16 %v895
        %v4087 = vunpack.c.h.b16 %v895
        %v4088 = vunpack.c.l.b16 %v896
        %v4089 = vunpack.c.h.b16 %v896
        %v4090 = vunpack.c.l.b16 %v897
        %v4091 = vunpack.c.h.b16 %v897
        %v4092 = vunpack.c.l.b16 %v898
        %v4093 = vunpack.c.h.b16 %v898
        %v4094 = vunpack.c.l.b16 %v899
        %v4095 = vunpack.c.h.b16 %v899
        %v4096 = vunpack.c.l.b16 %v900
        %v4097 = vunpack.c.h.b16 %v900
        %v4098 = vunpack.c.l.b16 %v901
        %v4099 = vunpack.c.h.b16 %v901
        %v4100 = vunpack.c.l.b16 %v902
        %v4101 = vunpack.c.h.b16 %v902
        %v4102 = vunpack.c.l.b16 %v903
        %v4103 = vunpack.c.h.b16 %v903
        %v4104 = vunpack.c.l.b16 %v904
        %v4105 = vunpack.c.h.b16 %v904
        %v4106 = vunpack.c.l.b16 %v905
        %v4107 = vunpack.c.h.b16 %v905
        %v4108 = vunpack.c.l.b16 %v906
        %v4109 = vunpack.c.h.b16 %v906
        %v4110 = vunpack.c.l.b16 %v907
        %v4111 = vunpack.c.h.b16 %v907
        %v4112 = vunpack.c.l.b16 %v908
        %v4113 = vunpack.c.h.b16 %v908
        %v4114 = vunpack.c.l.b16 %v909
        %v4115 = vunpack.c.h.b16 %v909
        %v4116 = vunpack.c.l.b16 %v910
        %v4117 = vunpack.c.h.b16 %v910
        %v4118 = vunpack.c.l.b16 %v911
        %v4119 = vunpack.c.h.b16 %v911
        %v4120 = vunpack.c.l.b16 %v912
        %v4121 = vunpack.c.h.b16 %v912
        %v4122 = vunpack.c.l.b16 %v913
        %v4123 = vunpack.c.h.b16 %v913
        %v4124 = vunpack.c.l.b16 %v914
        %v4125 = vunpack.c.h.b16 %v914
        %v4126 = vunpack.c.l.b16 %v915
        %v4127 = vunpack.c.h.b16 %v915
        %v4128 = vunpack.c.l.b16 %v916
        %v4129 = vunpack.c.h.b16 %v916
        %v4130 = vunpack.c.l.b16 %v917
        %v4131 = vunpack.c.h.b16 %v917
        %v4132 = vunpack.c.l.b16 %v918
        %v4133 = vunpack.c.h.b16 %v918
        %v4134 = vunpack.c.l.b16 %v919
        %v4135 = vunpack.c.h.b16 %v919
        %v4136 = vunpack.c.l.b16 %v920
        %v4137 = vunpack.c.h.b16 %v920
        %v4138 = vunpack.c.l.b16 %v921
        %v4139 = vunpack.c.h.b16 %v921
        %v4140 = vunpack.c.l.b16 %v922
        %v4141 = vunpack.c.h.b16 %v922
        %v4142 = vunpack.c.l.b16 %v923
        %v4143 = vunpack.c.h.b16 %v923
        %v4144 = vunpack.c.l.b16 %v924
        %v4145 = vunpack.c.h.b16 %v924
        %v4146 = vunpack.c.l.b16 %v925
        %v4147 = vunpack.c.h.b16 %v925
        %v4148 = vunpack.c.l.b16 %v926
        %v4149 = vunpack.c.h.b16 %v926
        %v4150 = vunpack.c.l.b16 %v927
        %v4151 = vunpack.c.h.b16 %v927
        %v4152 = vunpack.c.l.b16 %v928
        %v4153 = vunpack.c.h.b16 %v928
        %v4154 = vunpack.c.l.b16 %v929
        %v4155 = vunpack.c.h.b16 %v929
        %v4156 = vunpack.c.l.b16 %v930
        %v4157 = vunpack.c.h.b16 %v930
        %v4158 = vunpack.c.l.b16 %v931
        %v4159 = vunpack.c.h.b16 %v931
        %v4160 = vunpack.c.l.b16 %v932
        %v4161 = vunpack.c.h.b16 %v932
        %v4162 = vunpack.c.l.b16 %v933
        %v4163 = vunpack.c.h.b16 %v933
        %v4164 = vunpack.c.l.b16 %v934
        %v4165 = vunpack.c.h.b16 %v934
        %v4166 = vunpack.c.l.b16 %v935
        %v4167 = vunpack.c.h.b16 %v935
        %v4168 = vunpack.c.l.b16 %v936
        %v4169 = vunpack.c.h.b16 %v936
        %v4170 = vunpack.c.l.b16 %v937
        %v4171 = vunpack.c.h.b16 %v937
        %v4172 = vunpack.c.l.b16 %v938
        %v4173 = vunpack.c.h.b16 %v938
        %v4174 = vunpack.c.l.b16 %v939
        %v4175 = vunpack.c.h.b16 %v939
        %v4176 = vunpack.c.l.b16 %v940
        %v4177 = vunpack.c.h.b16 %v940
        %v4178 = vunpack.c.l.b16 %v941
        %v4179 = vunpack.c.h.b16 %v941
        %v4180 = vunpack.c.l.b16 %v942
        %v4181 = vunpack.c.h.b16 %v942
        %v4182 = vunpack.c.l.b16 %v943
        %v4183 = vunpack.c.h.b16 %v943
        %v4184 = vunpack.c.l.b16 %v944
        %v4185 = vunpack.c.h.b16 %v944
        %v4186 = vunpack.c.l.b16 %v945
        %v4187 = vunpack.c.h.b16 %v945
        %v4188 = vunpack.c.l.b16 %v946
        %v4189 = vunpack.c.h.b16 %v946
        %v4190 = vunpack.c.l.b16 %v947
        %v4191 = vunpack.c.h.b16 %v947
        %v4192 = vunpack.c.l.b16 %v948
        %v4193 = vunpack.c.h.b16 %v948
        %v4194 = vunpack.c.l.b16 %v949
        %v4195 = vunpack.c.h.b16 %v949
        %v4196 = vunpack.c.l.b16 %v950
        %v4197 = vunpack.c.h.b16 %v950
        %v4198 = vunpack.c.l.b16 %v951
        %v4199 = vunpack.c.h.b16 %v951
        %v4200 = vunpack.c.l.b16 %v952
        %v4201 = vunpack.c.h.b16 %v952
        %v4202 = vunpack.c.l.b16 %v953
        %v4203 = vunpack.c.h.b16 %v953
        %v4204 = vunpack.c.l.b16 %v954
        %v4205 = vunpack.c.h.b16 %v954
        %v4206 = vunpack.c.l.b16 %v955
        %v4207 = vunpack.c.h.b16 %v955
        %v4208 = vunpack.c.l.b16 %v956
        %v4209 = vunpack.c.h.b16 %v956
        %v4210 = vunpack.c.l.b16 %v957
        %v4211 = vunpack.c.h.b16 %v957
        %v4212 = vunpack.c.l.b16 %v958
        %v4213 = vunpack.c.h.b16 %v958
        %v4214 = vunpack.c.l.b16 %v959
        %v4215 = vunpack.c.h.b16 %v959
        %v4216 = vunpack.c.l.b16 %v960
        %v4217 = vunpack.c.h.b16 %v960
        %v4218 = vunpack.c.l.b16 %v961
        %v4219 = vunpack.c.h.b16 %v961
        %v4220 = vunpack.c.l.b16 %v962
        %v4221 = vunpack.c.h.b16 %v962
        %v4222 = vunpack.c.l.b16 %v963
        %v4223 = vunpack.c.h.b16 %v963
        %v4224 = vunpack.c.l.b16 %v964
        %v4225 = vunpack.c.h.b16 %v964
        %v4226 = vunpack.c.l.b16 %v965
        %v4227 = vunpack.c.h.b16 %v965
        %v4228 = vunpack.c.l.b16 %v966
        %v4229 = vunpack.c.h.b16 %v966
        %v4230 = vunpack.c.l.b16 %v967
        %v4231 = vunpack.c.h.b16 %v967
        %v4232 = vunpack.c.l.b16 %v968
        %v4233 = vunpack.c.h.b16 %v968
        %v4234 = vunpack.c.l.b16 %v969
        %v4235 = vunpack.c.h.b16 %v969
        %v4236 = vunpack.c.l.b16 %v970
        %v4237 = vunpack.c.h.b16 %v970
        %v4238 = vunpack.c.l.b16 %v971
        %v4239 = vunpack.c.h.b16 %v971
        %v4240 = vunpack.c.l.b16 %v972
        %v4241 = vunpack.c.h.b16 %v972
        %v4242 = vunpack.c.l.b16 %v973
        %v4243 = vunpack.c.h.b16 %v973
        %v4244 = vunpack.c.l.b16 %v974
        %v4245 = vunpack.c.h.b16 %v974
        %v4246 = vunpack.c.l.b16 %v975
        %v4247 = vunpack.c.h.b16 %v975
        %v4248 = vunpack.c.l.b16 %v976
        %v4249 = vunpack.c.h.b16 %v976
        %v4250 = vunpack.c.l.b16 %v977
        %v4251 = vunpack.c.h.b16 %v977
        %v4252 = vunpack.c.l.b16 %v978
        %v4253 = vunpack.c.h.b16 %v978
        %v4254 = vunpack.c.l.b16 %v979
        %v4255 = vunpack.c.h.b16 %v979
        %v4256 = vunpack.c.l.b16 %v980
        %v4257 = vunpack.c.h.b16 %v980
        %v4258 = vunpack.c.l.b16 %v981
        %v4259 = vunpack.c.h.b16 %v981
        %v4260 = vunpack.c.l.b16 %v982
        %v4261 = vunpack.c.h.b16 %v982
        %v4262 = vunpack.c.l.b16 %v983
        %v4263 = vunpack.c.h.b16 %v983
        %v4264 = vunpack.c.l.b16 %v984
        %v4265 = vunpack.c.h.b16 %v984
        %v4266 = vunpack.c.l.b16 %v985
        %v4267 = vunpack.c.h.b16 %v985
        %v4268 = vunpack.c.l.b16 %v986
        %v4269 = vunpack.c.h.b16 %v986
        %v4270 = vunpack.c.l.b16 %v987
        %v4271 = vunpack.c.h.b16 %v987
        %v4272 = vunpack.c.l.b16 %v988
        %v4273 = vunpack.c.h.b16 %v988
        %v4274 = vunpack.c.l.b16 %v989
        %v4275 = vunpack.c.h.b16 %v989
        %v4276 = vunpack.c.l.b16 %v990
        %v4277 = vunpack.c.h.b16 %v990
        %v4278 = vunpack.c.l.b16 %v991
        %v4279 = vunpack.c.h.b16 %v991
        %v4280 = vunpack.c.l.b16 %v992
        %v4281 = vunpack.c.h.b16 %v992
        %v4282 = vunpack.c.l.b16 %v993
        %v4283 = vunpack.c.h.b16 %v993
        %v4284 = vunpack.c.l.b16 %v994
        %v4285 = vunpack.c.h.b16 %v994
        %v4286 = vunpack.c.l.b16 %v995
        %v4287 = vunpack.c.h.b16 %v995
        %v4288 = vunpack.c.l.b16 %v996
        %v4289 = vunpack.c.h.b16 %v996
        %v4290 = vunpack.c.l.b16 %v997
        %v4291 = vunpack.c.h.b16 %v997
        %v4292 = vunpack.c.l.b16 %v998
        %v4293 = vunpack.c.h.b16 %v998
        %v4294 = vunpack.c.l.b16 %v999
        %v4295 = vunpack.c.h.b16 %v999
        %v4296 = vunpack.c.l.b16 %v1000
        %v4297 = vunpack.c.h.b16 %v1000
        %v4298 = vunpack.c.l.b16 %v1001
        %v4299 = vunpack.c.h.b16 %v1001
        %v4300 = vunpack.c.l.b16 %v1002
        %v4301 = vunpack.c.h.b16 %v1002
        %v4302 = vunpack.c.l.b16 %v1003
        %v4303 = vunpack.c.h.b16 %v1003
        %v4304 = vunpack.c.l.b16 %v1004
        %v4305 = vunpack.c.h.b16 %v1004
        %v4306 = vunpack.c.l.b16 %v1005
        %v4307 = vunpack.c.h.b16 %v1005
        %v4308 = vunpack.c.l.b16 %v1006
        %v4309 = vunpack.c.h.b16 %v1006
        %v4310 = vunpack.c.l.b16 %v1007
        %v4311 = vunpack.c.h.b16 %v1007
        %v4312 = vunpack.c.l.b16 %v1008
        %v4313 = vunpack.c.h.b16 %v1008
        %v4314 = vunpack.c.l.b16 %v1009
        %v4315 = vunpack.c.h.b16 %v1009
        %v4316 = vunpack.c.l.b16 %v1010
        %v4317 = vunpack.c.h.b16 %v1010
        %v4318 = vunpack.c.l.b16 %v1011
        %v4319 = vunpack.c.h.b16 %v1011
        %v4320 = vunpack.c.l.b16 %v1012
        %v4321 = vunpack.c.h.b16 %v1012
        %v4322 = vunpack.c.l.b16 %v1013
        %v4323 = vunpack.c.h.b16 %v1013
        %v4324 = vunpack.c.l.b16 %v1014
        %v4325 = vunpack.c.h.b16 %v1014
        %v4326 = vunpack.c.l.b16 %v1015
        %v4327 = vunpack.c.h.b16 %v1015
        %v4328 = vunpack.c.l.b16 %v1016
        %v4329 = vunpack.c.h.b16 %v1016
        %v4330 = vunpack.c.l.b16 %v1017
        %v4331 = vunpack.c.h.b16 %v1017
        %v4332 = vunpack.c.l.b16 %v1018
        %v4333 = vunpack.c.h.b16 %v1018
        %v4334 = vunpack.c.l.b16 %v1019
        %v4335 = vunpack.c.h.b16 %v1019
        %v4336 = vunpack.c.l.b16 %v1020
        %v4337 = vunpack.c.h.b16 %v1020
        %v4338 = vunpack.c.l.b16 %v1021
        %v4339 = vunpack.c.h.b16 %v1021
        %v4340 = vunpack.c.l.b16 %v1022
        %v4341 = vunpack.c.h.b16 %v1022
        %v4342 = vunpack.c.l.b16 %v1023
        %v4343 = vunpack.c.h.b16 %v1023
        %v4344 = vunpack.c.l.b16 %v1024
        %v4345 = vunpack.c.h.b16 %v1024
        %v4346 = vunpack.c.l.b16 %v1025
        %v4347 = vunpack.c.h.b16 %v1025
        %v4348 = vunpack.c.l.b16 %v1026
        %v4349 = vunpack.c.h.b16 %v1026
        %v4350 = vunpack.c.l.b16 %v1027
        %v4351 = vunpack.c.h.b16 %v1027
        %v4352 = vunpack.c.l.b16 %v1028
        %v4353 = vunpack.c.h.b16 %v1028
        %v4354 = vunpack.c.l.b16 %v1029
        %v4355 = vunpack.c.h.b16 %v1029
        %v4356 = vunpack.c.l.b16 %v1030
        %v4357 = vunpack.c.h.b16 %v1030
        %v4358 = vunpack.c.l.b16 %v1031
        %v4359 = vunpack.c.h.b16 %v1031
        %v4360 = vunpack.c.l.b16 %v1032
        %v4361 = vunpack.c.h.b16 %v1032
        %v4362 = vunpack.c.l.b16 %v1033
        %v4363 = vunpack.c.h.b16 %v1033
        %v4364 = vunpack.c.l.b16 %v1034
        %v4365 = vunpack.c.h.b16 %v1034
        %v4366 = vunpack.c.l.b16 %v1035
        %v4367 = vunpack.c.h.b16 %v1035
        %v4368 = vunpack.c.l.b16 %v1036
        %v4369 = vunpack.c.h.b16 %v1036
        %v4370 = vunpack.c.l.b16 %v1037
        %v4371 = vunpack.c.h.b16 %v1037
        %v4372 = vunpack.c.l.b16 %v1038
        %v4373 = vunpack.c.h.b16 %v1038
        %v4374 = vunpack.c.l.b16 %v1039
        %v4375 = vunpack.c.h.b16 %v1039
        %v4376 = vunpack.c.l.b16 %v1040
        %v4377 = vunpack.c.h.b16 %v1040
        %v4378 = vunpack.c.l.b16 %v1041
        %v4379 = vunpack.c.h.b16 %v1041
        %v4380 = vunpack.c.l.b16 %v1042
        %v4381 = vunpack.c.h.b16 %v1042
        %v4382 = vunpack.c.l.b16 %v1043
        %v4383 = vunpack.c.h.b16 %v1043
        %v4384 = vunpack.c.l.b16 %v1044
        %v4385 = vunpack.c.h.b16 %v1044
        %v4386 = vunpack.c.l.b16 %v1045
        %v4387 = vunpack.c.h.b16 %v1045
        %v4388 = vunpack.c.l.b16 %v1046
        %v4389 = vunpack.c.h.b16 %v1046
        %v4390 = vunpack.c.l.b16 %v1047
        %v4391 = vunpack.c.h.b16 %v1047
        %v4392 = vunpack.c.l.b16 %v1048
        %v4393 = vunpack.c.h.b16 %v1048
        %v4394 = vunpack.c.l.b16 %v1049
        %v4395 = vunpack.c.h.b16 %v1049
        %v4396 = vunpack.c.l.b16 %v1050
        %v4397 = vunpack.c.h.b16 %v1050
        %v4398 = vunpack.c.l.b16 %v1051
        %v4399 = vunpack.c.h.b16 %v1051
        %v4400 = vunpack.c.l.b16 %v1052
        %v4401 = vunpack.c.h.b16 %v1052
        %v4402 = vunpack.c.l.b16 %v1053
        %v4403 = vunpack.c.h.b16 %v1053
        %v4404 = vunpack.c.l.b16 %v1054
        %v4405 = vunpack.c.h.b16 %v1054
        %v4406 = vunpack.c.l.b16 %v1055
        %v4407 = vunpack.c.h.b16 %v1055
        %v4408 = vunpack.c.l.b16 %v1056
        %v4409 = vunpack.c.h.b16 %v1056
        %v4410 = vunpack.c.l.b16 %v1057
        %v4411 = vunpack.c.h.b16 %v1057
        %v4412 = vunpack.c.l.b16 %v1058
        %v4413 = vunpack.c.h.b16 %v1058
        %v4414 = vunpack.c.l.b16 %v1059
        %v4415 = vunpack.c.h.b16 %v1059
        %v4416 = vunpack.c.l.b16 %v1060
        %v4417 = vunpack.c.h.b16 %v1060
        %v4418 = vunpack.c.l.b16 %v1061
        %v4419 = vunpack.c.h.b16 %v1061
        %v4420 = vunpack.c.l.b16 %v1062
        %v4421 = vunpack.c.h.b16 %v1062
        %v4422 = vunpack.c.l.b16 %v1063
        %v4423 = vunpack.c.h.b16 %v1063
        %v4424 = vunpack.c.l.b16 %v1064
        %v4425 = vunpack.c.h.b16 %v1064
        %v4426 = vunpack.c.l.b16 %v1065
        %v4427 = vunpack.c.h.b16 %v1065
        %v4428 = vunpack.c.l.b16 %v1066
        %v4429 = vunpack.c.h.b16 %v1066
        %v4430 = vunpack.c.l.b16 %v1067
        %v4431 = vunpack.c.h.b16 %v1067
        %v4432 = vunpack.c.l.b16 %v1068
        %v4433 = vunpack.c.h.b16 %v1068
        %v4434 = vunpack.c.l.b16 %v1069
        %v4435 = vunpack.c.h.b16 %v1069
        %v4436 = vunpack.c.l.b16 %v1070
        %v4437 = vunpack.c.h.b16 %v1070
        %v4438 = vunpack.c.l.b16 %v1071
        %v4439 = vunpack.c.h.b16 %v1071
        %v4440 = vunpack.c.l.b16 %v1072
        %v4441 = vunpack.c.h.b16 %v1072
        %v4442 = vunpack.c.l.b16 %v1073
        %v4443 = vunpack.c.h.b16 %v1073
        %v4444 = vunpack.c.l.b16 %v1074
        %v4445 = vunpack.c.h.b16 %v1074
        %v4446 = vunpack.c.l.b16 %v1075
        %v4447 = vunpack.c.h.b16 %v1075
        %v4448 = vunpack.c.l.b16 %v1076
        %v4449 = vunpack.c.h.b16 %v1076
        %v4450 = vunpack.c.l.b16 %v1077
        %v4451 = vunpack.c.h.b16 %v1077
        %v4452 = vunpack.c.l.b16 %v1078
        %v4453 = vunpack.c.h.b16 %v1078
        %v4454 = vunpack.c.l.b16 %v1079
        %v4455 = vunpack.c.h.b16 %v1079
        %v4456 = vunpack.c.l.b16 %v1080
        %v4457 = vunpack.c.h.b16 %v1080
        %v4458 = vunpack.c.l.b16 %v1081
        %v4459 = vunpack.c.h.b16 %v1081
        %v4460 = vunpack.c.l.b16 %v1082
        %v4461 = vunpack.c.h.b16 %v1082
        %v4462 = vunpack.c.l.b16 %v1083
        %v4463 = vunpack.c.h.b16 %v1083
        %v4464 = vunpack.c.l.b16 %v1084
        %v4465 = vunpack.c.h.b16 %v1084
        %v4466 = vunpack.c.l.b16 %v1085
        %v4467 = vunpack.c.h.b16 %v1085
        %v4468 = vunpack.c.l.b16 %v1086
        %v4469 = vunpack.c.h.b16 %v1086
        %v4470 = vunpack.c.l.b16 %v1087
        %v4471 = vunpack.c.h.b16 %v1087
        %v4472 = vunpack.c.l.b16 %v1088
        %v4473 = vunpack.c.h.b16 %v1088
        %v4474 = vunpack.c.l.b16 %v1089
        %v4475 = vunpack.c.h.b16 %v1089
        %v4476 = vunpack.c.l.b16 %v1090
        %v4477 = vunpack.c.h.b16 %v1090
        %v4478 = vunpack.c.l.b16 %v1091
        %v4479 = vunpack.c.h.b16 %v1091
        %v4480 = vunpack.c.l.b16 %v1092
        %v4481 = vunpack.c.h.b16 %v1092
        %v4482 = vunpack.c.l.b16 %v1093
        %v4483 = vunpack.c.h.b16 %v1093
        %v4484 = vunpack.c.l.b16 %v1094
        %v4485 = vunpack.c.h.b16 %v1094
        %v4486 = vunpack.c.l.b16 %v1095
        %v4487 = vunpack.c.h.b16 %v1095
        %v4488 = vunpack.c.l.b16 %v1096
        %v4489 = vunpack.c.h.b16 %v1096
        %v4490 = vunpack.c.l.b16 %v1097
        %v4491 = vunpack.c.h.b16 %v1097
        %v4492 = vunpack.c.l.b16 %v1098
        %v4493 = vunpack.c.h.b16 %v1098
        %v4494 = vunpack.c.l.b16 %v1099
        %v4495 = vunpack.c.h.b16 %v1099
        %v4496 = vunpack.c.l.b16 %v1100
        %v4497 = vunpack.c.h.b16 %v1100
        %v4498 = vunpack.c.l.b16 %v1101
        %v4499 = vunpack.c.h.b16 %v1101
        %v4500 = vunpack.c.l.b16 %v1102
        %v4501 = vunpack.c.h.b16 %v1102
        %v4502 = vunpack.c.l.b16 %v1103
        %v4503 = vunpack.c.h.b16 %v1103
        %v4504 = vunpack.c.l.b16 %v1104
        %v4505 = vunpack.c.h.b16 %v1104
        %v4506 = vunpack.c.l.b16 %v1105
        %v4507 = vunpack.c.h.b16 %v1105
        %v4508 = vunpack.c.l.b16 %v1106
        %v4509 = vunpack.c.h.b16 %v1106
        %v4510 = vunpack.c.l.b16 %v1107
        %v4511 = vunpack.c.h.b16 %v1107
        %v4512 = vunpack.c.l.b16 %v1108
        %v4513 = vunpack.c.h.b16 %v1108
        %v4514 = vunpack.c.l.b16 %v1109
        %v4515 = vunpack.c.h.b16 %v1109
        %v4516 = vunpack.c.l.b16 %v1110
        %v4517 = vunpack.c.h.b16 %v1110
        %v4518 = vunpack.c.l.b16 %v1111
        %v4519 = vunpack.c.h.b16 %v1111
        %v4520 = vunpack.c.l.b16 %v1112
        %v4521 = vunpack.c.h.b16 %v1112
        %v4522 = vunpack.c.l.b16 %v1113
        %v4523 = vunpack.c.h.b16 %v1113
        %v4524 = vunpack.c.l.b16 %v1114
        %v4525 = vunpack.c.h.b16 %v1114
        %v4526 = vunpack.c.l.b16 %v1115
        %v4527 = vunpack.c.h.b16 %v1115
        %v4528 = vunpack.c.l.b16 %v1116
        %v4529 = vunpack.c.h.b16 %v1116
        %v4530 = vunpack.c.l.b16 %v1117
        %v4531 = vunpack.c.h.b16 %v1117
        %v4532 = vunpack.c.l.b16 %v1118
        %v4533 = vunpack.c.h.b16 %v1118
        %v4534 = vunpack.c.l.b16 %v1119
        %v4535 = vunpack.c.h.b16 %v1119
        %v4536 = vunpack.c.l.b16 %v1120
        %v4537 = vunpack.c.h.b16 %v1120
        %v4538 = vunpack.c.l.b16 %v1121
        %v4539 = vunpack.c.h.b16 %v1121
        %v4540 = vunpack.c.l.b16 %v1122
        %v4541 = vunpack.c.h.b16 %v1122
        %v4542 = vunpack.c.l.b16 %v1123
        %v4543 = vunpack.c.h.b16 %v1123
        %v4544 = vunpack.c.l.b16 %v1124
        %v4545 = vunpack.c.h.b16 %v1124
        %v4546 = vunpack.c.l.b16 %v1125
        %v4547 = vunpack.c.h.b16 %v1125
        %v4548 = vunpack.c.l.b16 %v1126
        %v4549 = vunpack.c.h.b16 %v1126
        %v4550 = vunpack.c.l.b16 %v1127
        %v4551 = vunpack.c.h.b16 %v1127
        %v4552 = vunpack.c.l.b16 %v1128
        %v4553 = vunpack.c.h.b16 %v1128
        %v4554 = vunpack.c.l.b16 %v1129
        %v4555 = vunpack.c.h.b16 %v1129
        %v4556 = vunpack.c.l.b16 %v1130
        %v4557 = vunpack.c.h.b16 %v1130
        %v4558 = vunpack.c.l.b16 %v1131
        %v4559 = vunpack.c.h.b16 %v1131
        %v4560 = vunpack.c.l.b16 %v1132
        %v4561 = vunpack.c.h.b16 %v1132
        %v4562 = vunpack.c.l.b16 %v1133
        %v4563 = vunpack.c.h.b16 %v1133
        %v4564 = vunpack.c.l.b16 %v1134
        %v4565 = vunpack.c.h.b16 %v1134
        %v4566 = vunpack.c.l.b16 %v1135
        %v4567 = vunpack.c.h.b16 %v1135
        %v4568 = vunpack.c.l.b16 %v1136
        %v4569 = vunpack.c.h.b16 %v1136
        %v4570 = vunpack.c.l.b16 %v1137
        %v4571 = vunpack.c.h.b16 %v1137
        %v4572 = vunpack.c.l.b16 %v1138
        %v4573 = vunpack.c.h.b16 %v1138
        %v4574 = vunpack.c.l.b16 %v1139
        %v4575 = vunpack.c.h.b16 %v1139
        %v4576 = vunpack.c.l.b16 %v1140
        %v4577 = vunpack.c.h.b16 %v1140
        %v4578 = vunpack.c.l.b16 %v1141
        %v4579 = vunpack.c.h.b16 %v1141
        %v4580 = vunpack.c.l.b16 %v1142
        %v4581 = vunpack.c.h.b16 %v1142
        %v4582 = vunpack.c.l.b16 %v1143
        %v4583 = vunpack.c.h.b16 %v1143
        %v4584 = vunpack.c.l.b16 %v1144
        %v4585 = vunpack.c.h.b16 %v1144
        %v4586 = vunpack.c.l.b16 %v1145
        %v4587 = vunpack.c.h.b16 %v1145
        %v4588 = vunpack.c.l.b16 %v1146
        %v4589 = vunpack.c.h.b16 %v1146
        %v4590 = vunpack.c.l.b16 %v1147
        %v4591 = vunpack.c.h.b16 %v1147
        %v4592 = vunpack.c.l.b16 %v1148
        %v4593 = vunpack.c.h.b16 %v1148
        %v4594 = vunpack.c.l.b16 %v1149
        %v4595 = vunpack.c.h.b16 %v1149
        %v4596 = vunpack.c.l.b16 %v1150
        %v4597 = vunpack.c.h.b16 %v1150
        %v4598 = vunpack.c.l.b16 %v1151
        %v4599 = vunpack.c.h.b16 %v1151
        %v4600 = vunpack.c.l.b16 %v1152
        %v4601 = vunpack.c.h.b16 %v1152
        %v4602 = vunpack.c.l.b16 %v1153
        %v4603 = vunpack.c.h.b16 %v1153
        %v4604 = vunpack.c.l.b16 %v1154
        %v4605 = vunpack.c.h.b16 %v1154
        %v4606 = vunpack.c.l.b16 %v1155
        %v4607 = vunpack.c.h.b16 %v1155
        %v4608 = vunpack.c.l.b16 %v1156
        %v4609 = vunpack.c.h.b16 %v1156
        %v4610 = vunpack.c.l.b16 %v1157
        %v4611 = vunpack.c.h.b16 %v1157
        %v4612 = vunpack.c.l.b16 %v1158
        %v4613 = vunpack.c.h.b16 %v1158
        %v4614 = vunpack.c.l.b16 %v1159
        %v4615 = vunpack.c.h.b16 %v1159
        %v4616 = vunpack.c.l.b16 %v1160
        %v4617 = vunpack.c.h.b16 %v1160
        %v4618 = vunpack.c.l.b16 %v1161
        %v4619 = vunpack.c.h.b16 %v1161
        %v4620 = vunpack.c.l.b16 %v1162
        %v4621 = vunpack.c.h.b16 %v1162
        %v4622 = vunpack.c.l.b16 %v1163
        %v4623 = vunpack.c.h.b16 %v1163
        %v4624 = vunpack.c.l.b16 %v1164
        %v4625 = vunpack.c.h.b16 %v1164
        %v4626 = vunpack.c.l.b16 %v1165
        %v4627 = vunpack.c.h.b16 %v1165
        %v4628 = vunpack.c.l.b16 %v1166
        %v4629 = vunpack.c.h.b16 %v1166
        %v4630 = vunpack.c.l.b16 %v1167
        %v4631 = vunpack.c.h.b16 %v1167
        %v4632 = vunpack.c.l.b16 %v1168
        %v4633 = vunpack.c.h.b16 %v1168
        %v4634 = vunpack.c.l.b16 %v1169
        %v4635 = vunpack.c.h.b16 %v1169
        %v4636 = vunpack.c.l.b16 %v1170
        %v4637 = vunpack.c.h.b16 %v1170
        %v4638 = vunpack.c.l.b16 %v1171
        %v4639 = vunpack.c.h.b16 %v1171
        %v4640 = vunpack.c.l.b16 %v1172
        %v4641 = vunpack.c.h.b16 %v1172
        %v4642 = vunpack.c.l.b16 %v1173
        %v4643 = vunpack.c.h.b16 %v1173
        %v4644 = vunpack.c.l.b16 %v1174
        %v4645 = vunpack.c.h.b16 %v1174
        %v4646 = vunpack.c.l.b16 %v1175
        %v4647 = vunpack.c.h.b16 %v1175
        %v4648 = vunpack.c.l.b16 %v1176
        %v4649 = vunpack.c.h.b16 %v1176
        %v4650 = vunpack.c.l.b16 %v1177
        %v4651 = vunpack.c.h.b16 %v1177
        %v4652 = vunpack.c.l.b16 %v1178
        %v4653 = vunpack.c.h.b16 %v1178
        %v4654 = vunpack.c.l.b16 %v1179
        %v4655 = vunpack.c.h.b16 %v1179
        %v4656 = vunpack.c.l.b16 %v1180
        %v4657 = vunpack.c.h.b16 %v1180
        %v4658 = vunpack.c.l.b16 %v1181
        %v4659 = vunpack.c.h.b16 %v1181
        %v4660 = vunpack.c.l.b16 %v1182
        %v4661 = vunpack.c.h.b16 %v1182
        %v4662 = vunpack.c.l.b16 %v1183
        %v4663 = vunpack.c.h.b16 %v1183
        %v4664 = vunpack.c.l.b16 %v1184
        %v4665 = vunpack.c.h.b16 %v1184
        %v4666 = vunpack.c.l.b16 %v1185
        %v4667 = vunpack.c.h.b16 %v1185
        %v4668 = vunpack.c.l.b16 %v1186
        %v4669 = vunpack.c.h.b16 %v1186
        %v4670 = vunpack.c.l.b16 %v1187
        %v4671 = vunpack.c.h.b16 %v1187
        %v4672 = vunpack.c.l.b16 %v1188
        %v4673 = vunpack.c.h.b16 %v1188
        %v4674 = vunpack.c.l.b16 %v1189
        %v4675 = vunpack.c.h.b16 %v1189
        %v4676 = vunpack.c.l.b16 %v1190
        %v4677 = vunpack.c.h.b16 %v1190
        %v4678 = vunpack.c.l.b16 %v1191
        %v4679 = vunpack.c.h.b16 %v1191
        %v4680 = vunpack.c.l.b16 %v1192
        %v4681 = vunpack.c.h.b16 %v1192
        %v4682 = vunpack.c.l.b16 %v1193
        %v4683 = vunpack.c.h.b16 %v1193
        %v4684 = vunpack.c.l.b16 %v1194
        %v4685 = vunpack.c.h.b16 %v1194
        %v4686 = vunpack.c.l.b16 %v1195
        %v4687 = vunpack.c.h.b16 %v1195
        %v4688 = vunpack.c.l.b16 %v1196
        %v4689 = vunpack.c.h.b16 %v1196
        %v4690 = vunpack.c.l.b16 %v1197
        %v4691 = vunpack.c.h.b16 %v1197
        %v4692 = vunpack.c.l.b16 %v1198
        %v4693 = vunpack.c.h.b16 %v1198
        %v4694 = vunpack.c.l.b16 %v1199
        %v4695 = vunpack.c.h.b16 %v1199
        %v4696 = vunpack.c.l.b16 %v1200
        %v4697 = vunpack.c.h.b16 %v1200
        %v4698 = vunpack.c.l.b16 %v1201
        %v4699 = vunpack.c.h.b16 %v1201
        %v4700 = vunpack.c.l.b16 %v1202
        %v4701 = vunpack.c.h.b16 %v1202
        %v4702 = vunpack.c.l.b16 %v1203
        %v4703 = vunpack.c.h.b16 %v1203
        %v4704 = vunpack.c.l.b16 %v1204
        %v4705 = vunpack.c.h.b16 %v1204
        %v4706 = vunpack.c.l.b16 %v1205
        %v4707 = vunpack.c.h.b16 %v1205
        %v4708 = vunpack.c.l.b16 %v1206
        %v4709 = vunpack.c.h.b16 %v1206
        %v4710 = vunpack.c.l.b16 %v1207
        %v4711 = vunpack.c.h.b16 %v1207
        %v4712 = vunpack.c.l.b16 %v1208
        %v4713 = vunpack.c.h.b16 %v1208
        %v4714 = vunpack.c.l.b16 %v1209
        %v4715 = vunpack.c.h.b16 %v1209
        %v4716 = vunpack.c.l.b16 %v1210
        %v4717 = vunpack.c.h.b16 %v1210
        %v4718 = vunpack.c.l.b16 %v1211
        %v4719 = vunpack.c.h.b16 %v1211
        %v4720 = vunpack.c.l.b16 %v1212
        %v4721 = vunpack.c.h.b16 %v1212
        %v4722 = vunpack.c.l.b16 %v1213
        %v4723 = vunpack.c.h.b16 %v1213
        %v4724 = vunpack.c.l.b16 %v1214
        %v4725 = vunpack.c.h.b16 %v1214
        %v4726 = vunpack.c.l.b16 %v1215
        %v4727 = vunpack.c.h.b16 %v1215
        %v4728 = vunpack.c.l.b16 %v1216
        %v4729 = vunpack.c.h.b16 %v1216
        %v4730 = vunpack.c.l.b16 %v1217
        %v4731 = vunpack.c.h.b16 %v1217
        %v4732 = vunpack.c.l.b16 %v1218
        %v4733 = vunpack.c.h.b16 %v1218
        %v4734 = vunpack.c.l.b16 %v1219
        %v4735 = vunpack.c.h.b16 %v1219
        %v4736 = vunpack.c.l.b16 %v1220
        %v4737 = vunpack.c.h.b16 %v1220
        %v4738 = vunpack.c.l.b16 %v1221
        %v4739 = vunpack.c.h.b16 %v1221
        %v4740 = vunpack.c.l.b16 %v1222
        %v4741 = vunpack.c.h.b16 %v1222
        %v4742 = vunpack.c.l.b16 %v1223
        %v4743 = vunpack.c.h.b16 %v1223
        %v4744 = vunpack.c.l.b16 %v1224
        %v4745 = vunpack.c.h.b16 %v1224
        %v4746 = vunpack.c.l.b16 %v1225
        %v4747 = vunpack.c.h.b16 %v1225
        %v4748 = vunpack.c.l.b16 %v1226
        %v4749 = vunpack.c.h.b16 %v1226
        %v4750 = vunpack.c.l.b16 %v1227
        %v4751 = vunpack.c.h.b16 %v1227
        %v4752 = vunpack.c.l.b16 %v1228
        %v4753 = vunpack.c.h.b16 %v1228
        %v4754 = vunpack.c.l.b16 %v1229
        %v4755 = vunpack.c.h.b16 %v1229
        %v4756 = vunpack.c.l.b16 %v1230
        %v4757 = vunpack.c.h.b16 %v1230
        %v4758 = vunpack.c.l.b16 %v1231
        %v4759 = vunpack.c.h.b16 %v1231
        %v4760 = vunpack.c.l.b16 %v1232
        %v4761 = vunpack.c.h.b16 %v1232
        %v4762 = vunpack.c.l.b16 %v1233
        %v4763 = vunpack.c.h.b16 %v1233
        %v4764 = vunpack.c.l.b16 %v1234
        %v4765 = vunpack.c.h.b16 %v1234
        %v4766 = vunpack.c.l.b16 %v1235
        %v4767 = vunpack.c.h.b16 %v1235
        %v4768 = vunpack.c.l.b16 %v1236
        %v4769 = vunpack.c.h.b16 %v1236
        %v4770 = vunpack.c.l.b16 %v1237
        %v4771 = vunpack.c.h.b16 %v1237
        %v4772 = vunpack.c.l.b16 %v1238
        %v4773 = vunpack.c.h.b16 %v1238
        %v4774 = vunpack.c.l.b16 %v1239
        %v4775 = vunpack.c.h.b16 %v1239
        %v4776 = vunpack.c.l.b16 %v1240
        %v4777 = vunpack.c.h.b16 %v1240
        %v4778 = vunpack.c.l.b16 %v1241
        %v4779 = vunpack.c.h.b16 %v1241
        %v4780 = vunpack.c.l.b16 %v1242
        %v4781 = vunpack.c.h.b16 %v1242
        %v4782 = vunpack.c.l.b16 %v1243
        %v4783 = vunpack.c.h.b16 %v1243
        %v4784 = vunpack.c.l.b16 %v1244
        %v4785 = vunpack.c.h.b16 %v1244
        %v4786 = vunpack.c.l.b16 %v1245
        %v4787 = vunpack.c.h.b16 %v1245
        %v4788 = vunpack.c.l.b16 %v1246
        %v4789 = vunpack.c.h.b16 %v1246
        %v4790 = vunpack.c.l.b16 %v1247
        %v4791 = vunpack.c.h.b16 %v1247
        %v4792 = vunpack.c.l.b16 %v1248
        %v4793 = vunpack.c.h.b16 %v1248
        %v4794 = vunpack.c.l.b16 %v1249
        %v4795 = vunpack.c.h.b16 %v1249
        %v4796 = vunpack.c.l.b16 %v1250
        %v4797 = vunpack.c.h.b16 %v1250
        %v4798 = vunpack.c.l.b16 %v1251
        %v4799 = vunpack.c.h.b16 %v1251
        %v4800 = vunpack.c.l.b16 %v1252
        %v4801 = vunpack.c.h.b16 %v1252
        %v4802 = vunpack.c.l.b16 %v1253
        %v4803 = vunpack.c.h.b16 %v1253
        %v4804 = vunpack.c.l.b16 %v1254
        %v4805 = vunpack.c.h.b16 %v1254
        %v4806 = vunpack.c.l.b16 %v1255
        %v4807 = vunpack.c.h.b16 %v1255
        %v4808 = vunpack.c.l.b16 %v1256
        %v4809 = vunpack.c.h.b16 %v1256
        %v4810 = vunpack.c.l.b16 %v1257
        %v4811 = vunpack.c.h.b16 %v1257
        %v4812 = vunpack.c.l.b16 %v1258
        %v4813 = vunpack.c.h.b16 %v1258
        %v4814 = vunpack.c.l.b16 %v1259
        %v4815 = vunpack.c.h.b16 %v1259
        %v4816 = vunpack.c.l.b16 %v1260
        %v4817 = vunpack.c.h.b16 %v1260
        %v4818 = vunpack.c.l.b16 %v1261
        %v4819 = vunpack.c.h.b16 %v1261
        %v4820 = vunpack.c.l.b16 %v1262
        %v4821 = vunpack.c.h.b16 %v1262
        %v4822 = vunpack.c.l.b16 %v1263
        %v4823 = vunpack.c.h.b16 %v1263
        %v4824 = vunpack.c.l.b16 %v1264
        %v4825 = vunpack.c.h.b16 %v1264
        %v4826 = vunpack.c.l.b16 %v1265
        %v4827 = vunpack.c.h.b16 %v1265
        %v4828 = vunpack.c.l.b16 %v1266
        %v4829 = vunpack.c.h.b16 %v1266
        %v4830 = vunpack.c.l.b16 %v1267
        %v4831 = vunpack.c.h.b16 %v1267
        %v4832 = vunpack.c.l.b16 %v1268
        %v4833 = vunpack.c.h.b16 %v1268
        %v4834 = vunpack.c.l.b16 %v1269
        %v4835 = vunpack.c.h.b16 %v1269
        %v4836 = vunpack.c.l.b16 %v1270
        %v4837 = vunpack.c.h.b16 %v1270
        %v4838 = vunpack.c.l.b16 %v1271
        %v4839 = vunpack.c.h.b16 %v1271
        %v4840 = vunpack.c.l.b16 %v1272
        %v4841 = vunpack.c.h.b16 %v1272
        %v4842 = vunpack.c.l.b16 %v1273
        %v4843 = vunpack.c.h.b16 %v1273
        %v4844 = vunpack.c.l.b16 %v1274
        %v4845 = vunpack.c.h.b16 %v1274
        %v4846 = vunpack.c.l.b16 %v1275
        %v4847 = vunpack.c.h.b16 %v1275
        %v4848 = vunpack.c.l.b16 %v1276
        %v4849 = vunpack.c.h.b16 %v1276
        %v4850 = vunpack.c.l.b16 %v1277
        %v4851 = vunpack.c.h.b16 %v1277
        %v4852 = vunpack.c.l.b16 %v1278
        %v4853 = vunpack.c.h.b16 %v1278
        %v4854 = vunpack.c.l.b16 %v1279
        %v4855 = vunpack.c.h.b16 %v1279
        %v4856 = vunpack.c.l.b16 %v1280
        %v4857 = vunpack.c.h.b16 %v1280
        %v4858 = vunpack.c.l.b16 %v1281
        %v4859 = vunpack.c.h.b16 %v1281
        %v4860 = vunpack.c.l.b16 %v1282
        %v4861 = vunpack.c.h.b16 %v1282
        %v4862 = vunpack.c.l.b16 %v1283
        %v4863 = vunpack.c.h.b16 %v1283
        %v4864 = vunpack.c.l.b16 %v1284
        %v4865 = vunpack.c.h.b16 %v1284
        %v4866 = vunpack.c.l.b16 %v1285
        %v4867 = vunpack.c.h.b16 %v1285
        %v4868 = vunpack.c.l.b16 %v1286
        %v4869 = vunpack.c.h.b16 %v1286
        %v4870 = vunpack.c.l.b16 %v1287
        %v4871 = vunpack.c.h.b16 %v1287
        %v4872 = vunpack.c.l.b16 %v1288
        %v4873 = vunpack.c.h.b16 %v1288
        %v4874 = vunpack.c.l.b16 %v1289
        %v4875 = vunpack.c.h.b16 %v1289
        %v4876 = vunpack.c.l.b16 %v1290
        %v4877 = vunpack.c.h.b16 %v1290
        %v4878 = vunpack.c.l.b16 %v1291
        %v4879 = vunpack.c.h.b16 %v1291
        %v4880 = vunpack.c.l.b16 %v1292
        %v4881 = vunpack.c.h.b16 %v1292
        %v4882 = vunpack.c.l.b16 %v1293
        %v4883 = vunpack.c.h.b16 %v1293
        %v4884 = vunpack.c.l.b16 %v1294
        %v4885 = vunpack.c.h.b16 %v1294
        %v4886 = vunpack.c.l.b16 %v1295
        %v4887 = vunpack.c.h.b16 %v1295
        %v4888 = vunpack.c.l.b16 %v1296
        %v4889 = vunpack.c.h.b16 %v1296
        %v4890 = vunpack.c.l.b16 %v1297
        %v4891 = vunpack.c.h.b16 %v1297
        %v4892 = vunpack.c.l.b16 %v1298
        %v4893 = vunpack.c.h.b16 %v1298
        %v4894 = vunpack.c.l.b16 %v1299
        %v4895 = vunpack.c.h.b16 %v1299
        %v4896 = vunpack.c.l.b16 %v1300
        %v4897 = vunpack.c.h.b16 %v1300
        %v4898 = vunpack.c.l.b16 %v1301
        %v4899 = vunpack.c.h.b16 %v1301
        %v4900 = vunpack.c.l.b16 %v1302
        %v4901 = vunpack.c.h.b16 %v1302
        %v4902 = vunpack.c.l.b16 %v1303
        %v4903 = vunpack.c.h.b16 %v1303
        %v4904 = vunpack.c.l.b16 %v1304
        %v4905 = vunpack.c.h.b16 %v1304
        %v4906 = vunpack.c.l.b16 %v1305
        %v4907 = vunpack.c.h.b16 %v1305
        %v4908 = vunpack.c.l.b16 %v1306
        %v4909 = vunpack.c.h.b16 %v1306
        %v4910 = vunpack.c.l.b16 %v1307
        %v4911 = vunpack.c.h.b16 %v1307
        %v4912 = vunpack.c.l.b16 %v1308
        %v4913 = vunpack.c.h.b16 %v1308
        %v4914 = vunpack.c.l.b16 %v1309
        %v4915 = vunpack.c.h.b16 %v1309
        %v4916 = vunpack.c.l.b16 %v1310
        %v4917 = vunpack.c.h.b16 %v1310
        %v4918 = vunpack.c.l.b16 %v1311
        %v4919 = vunpack.c.h.b16 %v1311
        %v4920 = vunpack.c.l.b16 %v1312
        %v4921 = vunpack.c.h.b16 %v1312
        %v4922 = vunpack.c.l.b16 %v1313
        %v4923 = vunpack.c.h.b16 %v1313
        %v4924 = vunpack.c.l.b16 %v1314
        %v4925 = vunpack.c.h.b16 %v1314
        %v4926 = vunpack.c.l.b16 %v1315
        %v4927 = vunpack.c.h.b16 %v1315
        %v4928 = vunpack.c.l.b16 %v1316
        %v4929 = vunpack.c.h.b16 %v1316
        %v4930 = vunpack.c.l.b16 %v1317
        %v4931 = vunpack.c.h.b16 %v1317
        %v4932 = vunpack.c.l.b16 %v1318
        %v4933 = vunpack.c.h.b16 %v1318
        %v4934 = vunpack.c.l.b16 %v1319
        %v4935 = vunpack.c.h.b16 %v1319
        %v4936 = vunpack.c.l.b16 %v1320
        %v4937 = vunpack.c.h.b16 %v1320
        %v4938 = vunpack.c.l.b16 %v1321
        %v4939 = vunpack.c.h.b16 %v1321
        %v4940 = vunpack.c.l.b16 %v1322
        %v4941 = vunpack.c.h.b16 %v1322
        %v4942 = vunpack.c.l.b16 %v1323
        %v4943 = vunpack.c.h.b16 %v1323
        %v4944 = vunpack.c.l.b16 %v1324
        %v4945 = vunpack.c.h.b16 %v1324
        %v4946 = vunpack.c.l.b16 %v1325
        %v4947 = vunpack.c.h.b16 %v1325
        %v4948 = vunpack.c.l.b16 %v1326
        %v4949 = vunpack.c.h.b16 %v1326
        %v4950 = vunpack.c.l.b16 %v1327
        %v4951 = vunpack.c.h.b16 %v1327
        %v4952 = vunpack.c.l.b16 %v1328
        %v4953 = vunpack.c.h.b16 %v1328
        %v4954 = vunpack.c.l.b16 %v1329
        %v4955 = vunpack.c.h.b16 %v1329
        %v4956 = vunpack.c.l.b16 %v1330
        %v4957 = vunpack.c.h.b16 %v1330
        %v4958 = vunpack.c.l.b16 %v1331
        %v4959 = vunpack.c.h.b16 %v1331
        %v4960 = vunpack.c.l.b16 %v1332
        %v4961 = vunpack.c.h.b16 %v1332
        %v4962 = vunpack.c.l.b16 %v1333
        %v4963 = vunpack.c.h.b16 %v1333
        %v4964 = vunpack.c.l.b16 %v1334
        %v4965 = vunpack.c.h.b16 %v1334
        %v4966 = vunpack.c.l.b16 %v1335
        %v4967 = vunpack.c.h.b16 %v1335
        %v4968 = vunpack.c.l.b16 %v1336
        %v4969 = vunpack.c.h.b16 %v1336
        %v4970 = vunpack.c.l.b16 %v1337
        %v4971 = vunpack.c.h.b16 %v1337
        %v4972 = vunpack.c.l.b16 %v1338
        %v4973 = vunpack.c.h.b16 %v1338
        %v4974 = vunpack.c.l.b16 %v1339
        %v4975 = vunpack.c.h.b16 %v1339
        %v4976 = vunpack.c.l.b16 %v1340
        %v4977 = vunpack.c.h.b16 %v1340
        %v4978 = vunpack.c.l.b16 %v1341
        %v4979 = vunpack.c.h.b16 %v1341
        %v4980 = vunpack.c.l.b16 %v1342
        %v4981 = vunpack.c.h.b16 %v1342
        %v4982 = vunpack.c.l.b16 %v1343
        %v4983 = vunpack.c.h.b16 %v1343
        %v4984 = vunpack.c.l.b16 %v1344
        %v4985 = vunpack.c.h.b16 %v1344
        %v4986 = vunpack.c.l.b16 %v1345
        %v4987 = vunpack.c.h.b16 %v1345
        %v4988 = vunpack.c.l.b16 %v1346
        %v4989 = vunpack.c.h.b16 %v1346
        %v4990 = vunpack.c.l.b16 %v1347
        %v4991 = vunpack.c.h.b16 %v1347
        %v4992 = vunpack.c.l.b16 %v1348
        %v4993 = vunpack.c.h.b16 %v1348
        %v4994 = vunpack.c.l.b16 %v1349
        %v4995 = vunpack.c.h.b16 %v1349
        %v4996 = vunpack.c.l.b16 %v1350
        %v4997 = vunpack.c.h.b16 %v1350
        %v4998 = vunpack.c.l.b16 %v1351
        %v4999 = vunpack.c.h.b16 %v1351
        %v5000 = vunpack.c.l.b16 %v1352
        %v5001 = vunpack.c.h.b16 %v1352
        %v5002 = vunpack.c.l.b16 %v1353
        %v5003 = vunpack.c.h.b16 %v1353
        %v5004 = vunpack.c.l.b16 %v1354
        %v5005 = vunpack.c.h.b16 %v1354
        %v5006 = vunpack.c.l.b16 %v1355
        %v5007 = vunpack.c.h.b16 %v1355
        %v5008 = vunpack.c.l.b16 %v1356
        %v5009 = vunpack.c.h.b16 %v1356
        %v5010 = vunpack.c.l.b16 %v1357
        %v5011 = vunpack.c.h.b16 %v1357
        %v5012 = vunpack.c.l.b16 %v1358
        %v5013 = vunpack.c.h.b16 %v1358
        %v5014 = vunpack.c.l.b16 %v1359
        %v5015 = vunpack.c.h.b16 %v1359
        %v5016 = vunpack.c.l.b16 %v1360
        %v5017 = vunpack.c.h.b16 %v1360
        %v5018 = vunpack.c.l.b16 %v1361
        %v5019 = vunpack.c.h.b16 %v1361
        %v5020 = vunpack.c.l.b16 %v1362
        %v5021 = vunpack.c.h.b16 %v1362
        %v5022 = vunpack.c.l.b16 %v1363
        %v5023 = vunpack.c.h.b16 %v1363
        %v5024 = vpack.c.b16 %v2720, %v2712
        %v5025 = vpack.c.b16 %v2721, %v2713
        %v5026 = vpack.c.b16 %v2722, %v2714
        %v5027 = vpack.c.b16 %v2723, %v2715
        %v5028 = vpack.c.b16 %v2724, %v2716
        %v5029 = vpack.c.b16 %v2725, %v2717
        %v5030 = vpack.c.b16 %v2726, %v2718
        %v5031 = vpack.c.b16 %v2727, %v2719
        %v5032 = vpack.c.b16 %v2736, %v2728
        %v5033 = vpack.c.b16 %v2737, %v2729
        %v5034 = vpack.c.b16 %v2738, %v2730
        %v5035 = vpack.c.b16 %v2739, %v2731
        %v5036 = vpack.c.b16 %v2740, %v2732
        %v5037 = vpack.c.b16 %v2741, %v2733
        %v5038 = vpack.c.b16 %v2742, %v2734
        %v5039 = vpack.c.b16 %v2743, %v2735
        %v5040 = vpack.c.b16 %v2752, %v2744
        %v5041 = vpack.c.b16 %v2753, %v2745
        %v5042 = vpack.c.b16 %v2754, %v2746
        %v5043 = vpack.c.b16 %v2755, %v2747
        %v5044 = vpack.c.b16 %v2756, %v2748
        %v5045 = vpack.c.b16 %v2757, %v2749
        %v5046 = vpack.c.b16 %v2758, %v2750
        %v5047 = vpack.c.b16 %v2759, %v2751
        %v5048 = vpack.c.b16 %v2768, %v2760
        %v5049 = vpack.c.b16 %v2769, %v2761
        %v5050 = vpack.c.b16 %v2770, %v2762
        %v5051 = vpack.c.b16 %v2771, %v2763
        %v5052 = vpack.c.b16 %v2772, %v2764
        %v5053 = vpack.c.b16 %v2773, %v2765
        %v5054 = vpack.c.b16 %v2774, %v2766
        %v5055 = vpack.c.b16 %v2775, %v2767
        %v5056 = vpack.c.b16 %v2784, %v2776
        %v5057 = vpack.c.b16 %v2785, %v2777
        %v5058 = vpack.c.b16 %v2786, %v2778
        %v5059 = vpack.c.b16 %v2787, %v2779
        %v5060 = vpack.c.b16 %v2788, %v2780
        %v5061 = vpack.c.b16 %v2789, %v2781
        %v5062 = vpack.c.b16 %v2790, %v2782
        %v5063 = vpack.c.b16 %v2791, %v2783
        %v5064 = vpack.c.b16 %v2800, %v2792
        %v5065 = vpack.c.b16 %v2801, %v2793
        %v5066 = vpack.c.b16 %v2802, %v2794
        %v5067 = vpack.c.b16 %v2803, %v2795
        %v5068 = vpack.c.b16 %v2804, %v2796
        %v5069 = vpack.c.b16 %v2805, %v2797
        %v5070 = vpack.c.b16 %v2806, %v2798
        %v5071 = vpack.c.b16 %v2807, %v2799
        %v5072 = vpack.c.b16 %v2816, %v2808
        %v5073 = vpack.c.b16 %v2817, %v2809
        %v5074 = vpack.c.b16 %v2818, %v2810
        %v5075 = vpack.c.b16 %v2819, %v2811
        %v5076 = vpack.c.b16 %v2820, %v2812
        %v5077 = vpack.c.b16 %v2821, %v2813
        %v5078 = vpack.c.b16 %v2822, %v2814
        %v5079 = vpack.c.b16 %v2823, %v2815
        %v5080 = vpack.c.b16 %v2832, %v2824
        %v5081 = vpack.c.b16 %v2833, %v2825
        %v5082 = vpack.c.b16 %v2834, %v2826
        %v5083 = vpack.c.b16 %v2835, %v2827
        %v5084 = vpack.c.b16 %v2836, %v2828
        %v5085 = vpack.c.b16 %v2837, %v2829
        %v5086 = vpack.c.b16 %v2838, %v2830
        %v5087 = vpack.c.b16 %v2839, %v2831
        %v5088 = vpack.c.b16 %v2848, %v2840
        %v5089 = vpack.c.b16 %v2849, %v2841
        %v5090 = vpack.c.b16 %v2850, %v2842
        %v5091 = vpack.c.b16 %v2851, %v2843
        %v5092 = vpack.c.b16 %v2852, %v2844
        %v5093 = vpack.c.b16 %v2853, %v2845
        %v5094 = vpack.c.b16 %v2854, %v2846
        %v5095 = vpack.c.b16 %v2855, %v2847
        %v5096 = vpack.c.b16 %v2864, %v2856
        %v5097 = vpack.c.b16 %v2865, %v2857
        %v5098 = vpack.c.b16 %v2866, %v2858
        %v5099 = vpack.c.b16 %v2867, %v2859
        %v5100 = vpack.c.b16 %v2868, %v2860
        %v5101 = vpack.c.b16 %v2869, %v2861
        %v5102 = vpack.c.b16 %v2870, %v2862
        %v5103 = vpack.c.b16 %v2871, %v2863
        %v5104 = vpack.c.b16 %v2880, %v2872
        %v5105 = vpack.c.b16 %v2881, %v2873
        %v5106 = vpack.c.b16 %v2882, %v2874
        %v5107 = vpack.c.b16 %v2883, %v2875
        %v5108 = vpack.c.b16 %v2884, %v2876
        %v5109 = vpack.c.b16 %v2885, %v2877
        %v5110 = vpack.c.b16 %v2886, %v2878
        %v5111 = vpack.c.b16 %v2887, %v2879
        %v5112 = vpack.c.b16 %v2896, %v2888
        %v5113 = vpack.c.b16 %v2897, %v2889
        %v5114 = vpack.c.b16 %v2898, %v2890
        %v5115 = vpack.c.b16 %v2899, %v2891
        %v5116 = vpack.c.b16 %v2900, %v2892
        %v5117 = vpack.c.b16 %v2901, %v2893
        %v5118 = vpack.c.b16 %v2902, %v2894
        %v5119 = vpack.c.b16 %v2903, %v2895
        %v5120 = vpack.c.b16 %v2912, %v2904
        %v5121 = vpack.c.b16 %v2913, %v2905
        %v5122 = vpack.c.b16 %v2914, %v2906
        %v5123 = vpack.c.b16 %v2915, %v2907
        %v5124 = vpack.c.b16 %v2916, %v2908
        %v5125 = vpack.c.b16 %v2917, %v2909
        %v5126 = vpack.c.b16 %v2918, %v2910
        %v5127 = vpack.c.b16 %v2919, %v2911
        %v5128 = vpack.c.b16 %v2928, %v2920
        %v5129 = vpack.c.b16 %v2929, %v2921
        %v5130 = vpack.c.b16 %v2930, %v2922
        %v5131 = vpack.c.b16 %v2931, %v2923
        %v5132 = vpack.c.b16 %v2932, %v2924
        %v5133 = vpack.c.b16 %v2933, %v2925
        %v5134 = vpack.c.b16 %v2934, %v2926
        %v5135 = vpack.c.b16 %v2935, %v2927
        %v5136 = vpack.c.b16 %v2944, %v2936
        %v5137 = vpack.c.b16 %v2945, %v2937
        %v5138 = vpack.c.b16 %v2946, %v2938
        %v5139 = vpack.c.b16 %v2947, %v2939
        %v5140 = vpack.c.b16 %v2948, %v2940
        %v5141 = vpack.c.b16 %v2949, %v2941
        %v5142 = vpack.c.b16 %v2950, %v2942
        %v5143 = vpack.c.b16 %v2951, %v2943
        %v5144 = vpack.c.b16 %v2960, %v2952
        %v5145 = vpack.c.b16 %v2961, %v2953
        %v5146 = vpack.c.b16 %v2962, %v2954
        %v5147 = vpack.c.b16 %v2963, %v2955
        %v5148 = vpack.c.b16 %v2964, %v2956
        %v5149 = vpack.c.b16 %v2965, %v2957
        %v5150 = vpack.c.b16 %v2966, %v2958
        %v5151 = vpack.c.b16 %v2967, %v2959
        %v5152 = vpack.c.b16 %v2976, %v2968
        %v5153 = vpack.c.b16 %v2977, %v2969
        %v5154 = vpack.c.b16 %v2978, %v2970
        %v5155 = vpack.c.b16 %v2979, %v2971
        %v5156 = vpack.c.b16 %v2980, %v2972
        %v5157 = vpack.c.b16 %v2981, %v2973
        %v5158 = vpack.c.b16 %v2982, %v2974
        %v5159 = vpack.c.b16 %v2983, %v2975
        %v5160 = vpack.c.b16 %v2992, %v2984
        %v5161 = vpack.c.b16 %v2993, %v2985
        %v5162 = vpack.c.b16 %v2994, %v2986
        %v5163 = vpack.c.b16 %v2995, %v2987
        %v5164 = vpack.c.b16 %v2996, %v2988
        %v5165 = vpack.c.b16 %v2997, %v2989
        %v5166 = vpack.c.b16 %v2998, %v2990
        %v5167 = vpack.c.b16 %v2999, %v2991
        %v5168 = vpack.c.b16 %v3008, %v3000
        %v5169 = vpack.c.b16 %v3009, %v3001
        %v5170 = vpack.c.b16 %v3010, %v3002
        %v5171 = vpack.c.b16 %v3011, %v3003
        %v5172 = vpack.c.b16 %v3012, %v3004
        %v5173 = vpack.c.b16 %v3013, %v3005
        %v5174 = vpack.c.b16 %v3014, %v3006
        %v5175 = vpack.c.b16 %v3015, %v3007
        %v5176 = vpack.c.b16 %v3024, %v3016
        %v5177 = vpack.c.b16 %v3025, %v3017
        %v5178 = vpack.c.b16 %v3026, %v3018
        %v5179 = vpack.c.b16 %v3027, %v3019
        %v5180 = vpack.c.b16 %v3028, %v3020
        %v5181 = vpack.c.b16 %v3029, %v3021
        %v5182 = vpack.c.b16 %v3030, %v3022
        %v5183 = vpack.c.b16 %v3031, %v3023
        %v5184 = vpack.c.b16 %v3040, %v3032
        %v5185 = vpack.c.b16 %v3041, %v3033
        %v5186 = vpack.c.b16 %v3042, %v3034
        %v5187 = vpack.c.b16 %v3043, %v3035
        %v5188 = vpack.c.b16 %v3044, %v3036
        %v5189 = vpack.c.b16 %v3045, %v3037
        %v5190 = vpack.c.b16 %v3046, %v3038
        %v5191 = vpack.c.b16 %v3047, %v3039
        %v5192 = vpack.c.b16 %v3056, %v3048
        %v5193 = vpack.c.b16 %v3057, %v3049
        %v5194 = vpack.c.b16 %v3058, %v3050
        %v5195 = vpack.c.b16 %v3059, %v3051
        %v5196 = vpack.c.b16 %v3060, %v3052
        %v5197 = vpack.c.b16 %v3061, %v3053
        %v5198 = vpack.c.b16 %v3062, %v3054
        %v5199 = vpack.c.b16 %v3063, %v3055
        %v5200 = vpack.c.b16 %v3072, %v3064
        %v5201 = vpack.c.b16 %v3073, %v3065
        %v5202 = vpack.c.b16 %v3074, %v3066
        %v5203 = vpack.c.b16 %v3075, %v3067
        %v5204 = vpack.c.b16 %v3076, %v3068
        %v5205 = vpack.c.b16 %v3077, %v3069
        %v5206 = vpack.c.b16 %v3078, %v3070
        %v5207 = vpack.c.b16 %v3079, %v3071
        %v5208 = vpack.c.b16 %v3088, %v3080
        %v5209 = vpack.c.b16 %v3089, %v3081
        %v5210 = vpack.c.b16 %v3090, %v3082
        %v5211 = vpack.c.b16 %v3091, %v3083
        %v5212 = vpack.c.b16 %v3092, %v3084
        %v5213 = vpack.c.b16 %v3093, %v3085
        %v5214 = vpack.c.b16 %v3094, %v3086
        %v5215 = vpack.c.b16 %v3095, %v3087
        %v5216 = vpack.c.b16 %v3104, %v3096
        %v5217 = vpack.c.b16 %v3105, %v3097
        %v5218 = vpack.c.b16 %v3106, %v3098
        %v5219 = vpack.c.b16 %v3107, %v3099
        %v5220 = vpack.c.b16 %v3108, %v3100
        %v5221 = vpack.c.b16 %v3109, %v3101
        %v5222 = vpack.c.b16 %v3110, %v3102
        %v5223 = vpack.c.b16 %v3111, %v3103
        %v5224 = vpack.c.b16 %v3120, %v3112
        %v5225 = vpack.c.b16 %v3121, %v3113
        %v5226 = vpack.c.b16 %v3122, %v3114
        %v5227 = vpack.c.b16 %v3123, %v3115
        %v5228 = vpack.c.b16 %v3124, %v3116
        %v5229 = vpack.c.b16 %v3125, %v3117
        %v5230 = vpack.c.b16 %v3126, %v3118
        %v5231 = vpack.c.b16 %v3127, %v3119
        %v5232 = vpack.c.b16 %v3136, %v3128
        %v5233 = vpack.c.b16 %v3137, %v3129
        %v5234 = vpack.c.b16 %v3138, %v3130
        %v5235 = vpack.c.b16 %v3139, %v3131
        %v5236 = vpack.c.b16 %v3140, %v3132
        %v5237 = vpack.c.b16 %v3141, %v3133
        %v5238 = vpack.c.b16 %v3142, %v3134
        %v5239 = vpack.c.b16 %v3143, %v3135
        %v5240 = vpack.c.b16 %v3152, %v3144
        %v5241 = vpack.c.b16 %v3153, %v3145
        %v5242 = vpack.c.b16 %v3154, %v3146
        %v5243 = vpack.c.b16 %v3155, %v3147
        %v5244 = vpack.c.b16 %v3156, %v3148
        %v5245 = vpack.c.b16 %v3157, %v3149
        %v5246 = vpack.c.b16 %v3158, %v3150
        %v5247 = vpack.c.b16 %v3159, %v3151
        %v5248 = vpack.c.b16 %v3168, %v3160
        %v5249 = vpack.c.b16 %v3169, %v3161
        %v5250 = vpack.c.b16 %v3170, %v3162
        %v5251 = vpack.c.b16 %v3171, %v3163
        %v5252 = vpack.c.b16 %v3172, %v3164
        %v5253 = vpack.c.b16 %v3173, %v3165
        %v5254 = vpack.c.b16 %v3174, %v3166
        %v5255 = vpack.c.b16 %v3175, %v3167
        %v5256 = vpack.c.b16 %v3184, %v3176
        %v5257 = vpack.c.b16 %v3185, %v3177
        %v5258 = vpack.c.b16 %v3186, %v3178
        %v5259 = vpack.c.b16 %v3187, %v3179
        %v5260 = vpack.c.b16 %v3188, %v3180
        %v5261 = vpack.c.b16 %v3189, %v3181
        %v5262 = vpack.c.b16 %v3190, %v3182
        %v5263 = vpack.c.b16 %v3191, %v3183
        %v5264 = vpack.c.b16 %v3200, %v3192
        %v5265 = vpack.c.b16 %v3201, %v3193
        %v5266 = vpack.c.b16 %v3202, %v3194
        %v5267 = vpack.c.b16 %v3203, %v3195
        %v5268 = vpack.c.b16 %v3204, %v3196
        %v5269 = vpack.c.b16 %v3205, %v3197
        %v5270 = vpack.c.b16 %v3206, %v3198
        %v5271 = vpack.c.b16 %v3207, %v3199
        %v5272 = vpack.c.b16 %v3216, %v3208
        %v5273 = vpack.c.b16 %v3217, %v3209
        %v5274 = vpack.c.b16 %v3218, %v3210
        %v5275 = vpack.c.b16 %v3219, %v3211
        %v5276 = vpack.c.b16 %v3220, %v3212
        %v5277 = vpack.c.b16 %v3221, %v3213
        %v5278 = vpack.c.b16 %v3222, %v3214
        %v5279 = vpack.c.b16 %v3223, %v3215
        %v5280 = vpack.c.b16 %v3232, %v3224
        %v5281 = vpack.c.b16 %v3233, %v3225
        %v5282 = vpack.c.b16 %v3234, %v3226
        %v5283 = vpack.c.b16 %v3235, %v3227
        %v5284 = vpack.c.b16 %v3236, %v3228
        %v5285 = vpack.c.b16 %v3237, %v3229
        %v5286 = vpack.c.b16 %v3238, %v3230
        %v5287 = vpack.c.b16 %v3239, %v3231
        %v5288 = vpack.c.b16 %v3248, %v3240
        %v5289 = vpack.c.b16 %v3249, %v3241
        %v5290 = vpack.c.b16 %v3250, %v3242
        %v5291 = vpack.c.b16 %v3251, %v3243
        %v5292 = vpack.c.b16 %v3252, %v3244
        %v5293 = vpack.c.b16 %v3253, %v3245
        %v5294 = vpack.c.b16 %v3254, %v3246
        %v5295 = vpack.c.b16 %v3255, %v3247
        %v5296 = vpack.c.b16 %v3264, %v3256
        %v5297 = vpack.c.b16 %v3265, %v3257
        %v5298 = vpack.c.b16 %v3266, %v3258
        %v5299 = vpack.c.b16 %v3267, %v3259
        %v5300 = vpack.c.b16 %v3268, %v3260
        %v5301 = vpack.c.b16 %v3269, %v3261
        %v5302 = vpack.c.b16 %v3270, %v3262
        %v5303 = vpack.c.b16 %v3271, %v3263
        %v5304 = vpack.c.b16 %v3280, %v3272
        %v5305 = vpack.c.b16 %v3281, %v3273
        %v5306 = vpack.c.b16 %v3282, %v3274
        %v5307 = vpack.c.b16 %v3283, %v3275
        %v5308 = vpack.c.b16 %v3284, %v3276
        %v5309 = vpack.c.b16 %v3285, %v3277
        %v5310 = vpack.c.b16 %v3286, %v3278
        %v5311 = vpack.c.b16 %v3287, %v3279
        %v5312 = vpack.c.b16 %v3296, %v3288
        %v5313 = vpack.c.b16 %v3297, %v3289
        %v5314 = vpack.c.b16 %v3298, %v3290
        %v5315 = vpack.c.b16 %v3299, %v3291
        %v5316 = vpack.c.b16 %v3300, %v3292
        %v5317 = vpack.c.b16 %v3301, %v3293
        %v5318 = vpack.c.b16 %v3302, %v3294
        %v5319 = vpack.c.b16 %v3303, %v3295
        %v5320 = vpack.c.b16 %v3312, %v3304
        %v5321 = vpack.c.b16 %v3313, %v3305
        %v5322 = vpack.c.b16 %v3314, %v3306
        %v5323 = vpack.c.b16 %v3315, %v3307
        %v5324 = vpack.c.b16 %v3316, %v3308
        %v5325 = vpack.c.b16 %v3317, %v3309
        %v5326 = vpack.c.b16 %v3318, %v3310
        %v5327 = vpack.c.b16 %v3319, %v3311
        %v5328 = vpack.c.b16 %v3328, %v3320
        %v5329 = vpack.c.b16 %v3329, %v3321
        %v5330 = vpack.c.b16 %v3330, %v3322
        %v5331 = vpack.c.b16 %v3331, %v3323
        %v5332 = vpack.c.b16 %v3332, %v3324
        %v5333 = vpack.c.b16 %v3333, %v3325
        %v5334 = vpack.c.b16 %v3334, %v3326
        %v5335 = vpack.c.b16 %v3335, %v3327
        %v5336 = vpack.c.b16 %v3344, %v3336
        %v5337 = vpack.c.b16 %v3345, %v3337
        %v5338 = vpack.c.b16 %v3346, %v3338
        %v5339 = vpack.c.b16 %v3347, %v3339
        %v5340 = vpack.c.b16 %v3348, %v3340
        %v5341 = vpack.c.b16 %v3349, %v3341
        %v5342 = vpack.c.b16 %v3350, %v3342
        %v5343 = vpack.c.b16 %v3351, %v3343
        %v5344 = vpack.c.b16 %v3360, %v3352
        %v5345 = vpack.c.b16 %v3361, %v3353
        %v5346 = vpack.c.b16 %v3362, %v3354
        %v5347 = vpack.c.b16 %v3363, %v3355
        %v5348 = vpack.c.b16 %v3364, %v3356
        %v5349 = vpack.c.b16 %v3365, %v3357
        %v5350 = vpack.c.b16 %v3366, %v3358
        %v5351 = vpack.c.b16 %v3367, %v3359
        %v5352 = vpack.c.b16 %v3376, %v3368
        %v5353 = vpack.c.b16 %v3377, %v3369
        %v5354 = vpack.c.b16 %v3378, %v3370
        %v5355 = vpack.c.b16 %v3379, %v3371
        %v5356 = vpack.c.b16 %v3380, %v3372
        %v5357 = vpack.c.b16 %v3381, %v3373
        %v5358 = vpack.c.b16 %v3382, %v3374
        %v5359 = vpack.c.b16 %v3383, %v3375
        %v5360 = vpack.c.b16 %v3392, %v3384
        %v5361 = vpack.c.b16 %v3393, %v3385
        %v5362 = vpack.c.b16 %v3394, %v3386
        %v5363 = vpack.c.b16 %v3395, %v3387
        %v5364 = vpack.c.b16 %v3396, %v3388
        %v5365 = vpack.c.b16 %v3397, %v3389
        %v5366 = vpack.c.b16 %v3398, %v3390
        %v5367 = vpack.c.b16 %v3399, %v3391
        %v5368 = vpack.c.b16 %v3408, %v3400
        %v5369 = vpack.c.b16 %v3409, %v3401
        %v5370 = vpack.c.b16 %v3410, %v3402
        %v5371 = vpack.c.b16 %v3411, %v3403
        %v5372 = vpack.c.b16 %v3412, %v3404
        %v5373 = vpack.c.b16 %v3413, %v3405
        %v5374 = vpack.c.b16 %v3414, %v3406
        %v5375 = vpack.c.b16 %v3415, %v3407
        %v5376 = vpack.c.b16 %v3424, %v3416
        %v5377 = vpack.c.b16 %v3425, %v3417
        %v5378 = vpack.c.b16 %v3426, %v3418
        %v5379 = vpack.c.b16 %v3427, %v3419
        %v5380 = vpack.c.b16 %v3428, %v3420
        %v5381 = vpack.c.b16 %v3429, %v3421
        %v5382 = vpack.c.b16 %v3430, %v3422
        %v5383 = vpack.c.b16 %v3431, %v3423
        %v5384 = vpack.c.b16 %v3440, %v3432
        %v5385 = vpack.c.b16 %v3441, %v3433
        %v5386 = vpack.c.b16 %v3442, %v3434
        %v5387 = vpack.c.b16 %v3443, %v3435
        %v5388 = vpack.c.b16 %v3444, %v3436
        %v5389 = vpack.c.b16 %v3445, %v3437
        %v5390 = vpack.c.b16 %v3446, %v3438
        %v5391 = vpack.c.b16 %v3447, %v3439
        %v5392 = vpack.c.b16 %v3456, %v3448
        %v5393 = vpack.c.b16 %v3457, %v3449
        %v5394 = vpack.c.b16 %v3458, %v3450
        %v5395 = vpack.c.b16 %v3459, %v3451
        %v5396 = vpack.c.b16 %v3460, %v3452
        %v5397 = vpack.c.b16 %v3461, %v3453
        %v5398 = vpack.c.b16 %v3462, %v3454
        %v5399 = vpack.c.b16 %v3463, %v3455
        %v5400 = vpack.c.b16 %v3472, %v3464
        %v5401 = vpack.c.b16 %v3473, %v3465
        %v5402 = vpack.c.b16 %v3474, %v3466
        %v5403 = vpack.c.b16 %v3475, %v3467
        %v5404 = vpack.c.b16 %v3476, %v3468
        %v5405 = vpack.c.b16 %v3477, %v3469
        %v5406 = vpack.c.b16 %v3478, %v3470
        %v5407 = vpack.c.b16 %v3479, %v3471
        %v5408 = vpack.c.b16 %v3488, %v3480
        %v5409 = vpack.c.b16 %v3489, %v3481
        %v5410 = vpack.c.b16 %v3490, %v3482
        %v5411 = vpack.c.b16 %v3491, %v3483
        %v5412 = vpack.c.b16 %v3492, %v3484
        %v5413 = vpack.c.b16 %v3493, %v3485
        %v5414 = vpack.c.b16 %v3494, %v3486
        %v5415 = vpack.c.b16 %v3495, %v3487
        %v5416 = vpack.c.b16 %v3504, %v3496
        %v5417 = vpack.c.b16 %v3505, %v3497
        %v5418 = vpack.c.b16 %v3506, %v3498
        %v5419 = vpack.c.b16 %v3507, %v3499
        %v5420 = vpack.c.b16 %v3508, %v3500
        %v5421 = vpack.c.b16 %v3509, %v3501
        %v5422 = vpack.c.b16 %v3510, %v3502
        %v5423 = vpack.c.b16 %v3511, %v3503
        %v5424 = vpack.c.b16 %v3520, %v3512
        %v5425 = vpack.c.b16 %v3521, %v3513
        %v5426 = vpack.c.b16 %v3522, %v3514
        %v5427 = vpack.c.b16 %v3523, %v3515
        %v5428 = vpack.c.b16 %v3524, %v3516
        %v5429 = vpack.c.b16 %v3525, %v3517
        %v5430 = vpack.c.b16 %v3526, %v3518
        %v5431 = vpack.c.b16 %v3527, %v3519
        %v5432 = vpack.c.b16 %v3536, %v3528
        %v5433 = vpack.c.b16 %v3537, %v3529
        %v5434 = vpack.c.b16 %v3538, %v3530
        %v5435 = vpack.c.b16 %v3539, %v3531
        %v5436 = vpack.c.b16 %v3540, %v3532
        %v5437 = vpack.c.b16 %v3541, %v3533
        %v5438 = vpack.c.b16 %v3542, %v3534
        %v5439 = vpack.c.b16 %v3543, %v3535
        %v5440 = vpack.c.b16 %v3552, %v3544
        %v5441 = vpack.c.b16 %v3553, %v3545
        %v5442 = vpack.c.b16 %v3554, %v3546
        %v5443 = vpack.c.b16 %v3555, %v3547
        %v5444 = vpack.c.b16 %v3556, %v3548
        %v5445 = vpack.c.b16 %v3557, %v3549
        %v5446 = vpack.c.b16 %v3558, %v3550
        %v5447 = vpack.c.b16 %v3559, %v3551
        %v5448 = vpack.c.b16 %v3568, %v3560
        %v5449 = vpack.c.b16 %v3569, %v3561
        %v5450 = vpack.c.b16 %v3570, %v3562
        %v5451 = vpack.c.b16 %v3571, %v3563
        %v5452 = vpack.c.b16 %v3572, %v3564
        %v5453 = vpack.c.b16 %v3573, %v3565
        %v5454 = vpack.c.b16 %v3574, %v3566
        %v5455 = vpack.c.b16 %v3575, %v3567
        %v5456 = vpack.c.b16 %v3584, %v3576
        %v5457 = vpack.c.b16 %v3585, %v3577
        %v5458 = vpack.c.b16 %v3586, %v3578
        %v5459 = vpack.c.b16 %v3587, %v3579
        %v5460 = vpack.c.b16 %v3588, %v3580
        %v5461 = vpack.c.b16 %v3589, %v3581
        %v5462 = vpack.c.b16 %v3590, %v3582
        %v5463 = vpack.c.b16 %v3591, %v3583
        %v5464 = vpack.c.b16 %v3600, %v3592
        %v5465 = vpack.c.b16 %v3601, %v3593
        %v5466 = vpack.c.b16 %v3602, %v3594
        %v5467 = vpack.c.b16 %v3603, %v3595
        %v5468 = vpack.c.b16 %v3604, %v3596
        %v5469 = vpack.c.b16 %v3605, %v3597
        %v5470 = vpack.c.b16 %v3606, %v3598
        %v5471 = vpack.c.b16 %v3607, %v3599
        %v5472 = vpack.c.b16 %v3616, %v3608
        %v5473 = vpack.c.b16 %v3617, %v3609
        %v5474 = vpack.c.b16 %v3618, %v3610
        %v5475 = vpack.c.b16 %v3619, %v3611
        %v5476 = vpack.c.b16 %v3620, %v3612
        %v5477 = vpack.c.b16 %v3621, %v3613
        %v5478 = vpack.c.b16 %v3622, %v3614
        %v5479 = vpack.c.b16 %v3623, %v3615
        %v5480 = vpack.c.b16 %v3632, %v3624
        %v5481 = vpack.c.b16 %v3633, %v3625
        %v5482 = vpack.c.b16 %v3634, %v3626
        %v5483 = vpack.c.b16 %v3635, %v3627
        %v5484 = vpack.c.b16 %v3636, %v3628
        %v5485 = vpack.c.b16 %v3637, %v3629
        %v5486 = vpack.c.b16 %v3638, %v3630
        %v5487 = vpack.c.b16 %v3639, %v3631
        %v5488 = vpack.c.b16 %v3648, %v3640
        %v5489 = vpack.c.b16 %v3649, %v3641
        %v5490 = vpack.c.b16 %v3650, %v3642
        %v5491 = vpack.c.b16 %v3651, %v3643
        %v5492 = vpack.c.b16 %v3652, %v3644
        %v5493 = vpack.c.b16 %v3653, %v3645
        %v5494 = vpack.c.b16 %v3654, %v3646
        %v5495 = vpack.c.b16 %v3655, %v3647
        %v5496 = vpack.c.b16 %v3664, %v3656
        %v5497 = vpack.c.b16 %v3665, %v3657
        %v5498 = vpack.c.b16 %v3666, %v3658
        %v5499 = vpack.c.b16 %v3667, %v3659
        %v5500 = vpack.c.b16 %v3668, %v3660
        %v5501 = vpack.c.b16 %v3669, %v3661
        %v5502 = vpack.c.b16 %v3670, %v3662
        %v5503 = vpack.c.b16 %v3671, %v3663
        %v5504 = vpack.c.b16 %v3680, %v3672
        %v5505 = vpack.c.b16 %v3681, %v3673
        %v5506 = vpack.c.b16 %v3682, %v3674
        %v5507 = vpack.c.b16 %v3683, %v3675
        %v5508 = vpack.c.b16 %v3684, %v3676
        %v5509 = vpack.c.b16 %v3685, %v3677
        %v5510 = vpack.c.b16 %v3686, %v3678
        %v5511 = vpack.c.b16 %v3687, %v3679
        %v5512 = vpack.c.b16 %v3696, %v3688
        %v5513 = vpack.c.b16 %v3697, %v3689
        %v5514 = vpack.c.b16 %v3698, %v3690
        %v5515 = vpack.c.b16 %v3699, %v3691
        %v5516 = vpack.c.b16 %v3700, %v3692
        %v5517 = vpack.c.b16 %v3701, %v3693
        %v5518 = vpack.c.b16 %v3702, %v3694
        %v5519 = vpack.c.b16 %v3703, %v3695
        %v5520 = vpack.c.b16 %v3712, %v3704
        %v5521 = vpack.c.b16 %v3713, %v3705
        %v5522 = vpack.c.b16 %v3714, %v3706
        %v5523 = vpack.c.b16 %v3715, %v3707
        %v5524 = vpack.c.b16 %v3716, %v3708
        %v5525 = vpack.c.b16 %v3717, %v3709
        %v5526 = vpack.c.b16 %v3718, %v3710
        %v5527 = vpack.c.b16 %v3719, %v3711
        %v5528 = vpack.c.b16 %v3728, %v3720
        %v5529 = vpack.c.b16 %v3729, %v3721
        %v5530 = vpack.c.b16 %v3730, %v3722
        %v5531 = vpack.c.b16 %v3731, %v3723
        %v5532 = vpack.c.b16 %v3732, %v3724
        %v5533 = vpack.c.b16 %v3733, %v3725
        %v5534 = vpack.c.b16 %v3734, %v3726
        %v5535 = vpack.c.b16 %v3735, %v3727
        %v5536 = vpack.c.b16 %v3744, %v3736
        %v5537 = vpack.c.b16 %v3745, %v3737
        %v5538 = vpack.c.b16 %v3746, %v3738
        %v5539 = vpack.c.b16 %v3747, %v3739
        %v5540 = vpack.c.b16 %v3748, %v3740
        %v5541 = vpack.c.b16 %v3749, %v3741
        %v5542 = vpack.c.b16 %v3750, %v3742
        %v5543 = vpack.c.b16 %v3751, %v3743
        %v5544 = vpack.c.b16 %v3760, %v3752
        %v5545 = vpack.c.b16 %v3761, %v3753
        %v5546 = vpack.c.b16 %v3762, %v3754
        %v5547 = vpack.c.b16 %v3763, %v3755
        %v5548 = vpack.c.b16 %v3764, %v3756
        %v5549 = vpack.c.b16 %v3765, %v3757
        %v5550 = vpack.c.b16 %v3766, %v3758
        %v5551 = vpack.c.b16 %v3767, %v3759
        %v5552 = vpack.c.b16 %v3776, %v3768
        %v5553 = vpack.c.b16 %v3777, %v3769
        %v5554 = vpack.c.b16 %v3778, %v3770
        %v5555 = vpack.c.b16 %v3779, %v3771
        %v5556 = vpack.c.b16 %v3780, %v3772
        %v5557 = vpack.c.b16 %v3781, %v3773
        %v5558 = vpack.c.b16 %v3782, %v3774
        %v5559 = vpack.c.b16 %v3783, %v3775
        %v5560 = vpack.c.b16 %v3792, %v3784
        %v5561 = vpack.c.b16 %v3793, %v3785
        %v5562 = vpack.c.b16 %v3794, %v3786
        %v5563 = vpack.c.b16 %v3795, %v3787
        %v5564 = vpack.c.b16 %v3796, %v3788
        %v5565 = vpack.c.b16 %v3797, %v3789
        %v5566 = vpack.c.b16 %v3798, %v3790
        %v5567 = vpack.c.b16 %v3799, %v3791
        %v5568 = vpack.c.b16 %v3808, %v3800
        %v5569 = vpack.c.b16 %v3809, %v3801
        %v5570 = vpack.c.b16 %v3810, %v3802
        %v5571 = vpack.c.b16 %v3811, %v3803
        %v5572 = vpack.c.b16 %v3812, %v3804
        %v5573 = vpack.c.b16 %v3813, %v3805
        %v5574 = vpack.c.b16 %v3814, %v3806
        %v5575 = vpack.c.b16 %v3815, %v3807
        %v5576 = vpack.c.b16 %v3824, %v3816
        %v5577 = vpack.c.b16 %v3825, %v3817
        %v5578 = vpack.c.b16 %v3826, %v3818
        %v5579 = vpack.c.b16 %v3827, %v3819
        %v5580 = vpack.c.b16 %v3828, %v3820
        %v5581 = vpack.c.b16 %v3829, %v3821
        %v5582 = vpack.c.b16 %v3830, %v3822
        %v5583 = vpack.c.b16 %v3831, %v3823
        %v5584 = vpack.c.b16 %v3840, %v3832
        %v5585 = vpack.c.b16 %v3841, %v3833
        %v5586 = vpack.c.b16 %v3842, %v3834
        %v5587 = vpack.c.b16 %v3843, %v3835
        %v5588 = vpack.c.b16 %v3844, %v3836
        %v5589 = vpack.c.b16 %v3845, %v3837
        %v5590 = vpack.c.b16 %v3846, %v3838
        %v5591 = vpack.c.b16 %v3847, %v3839
        %v5592 = vpack.c.b16 %v3856, %v3848
        %v5593 = vpack.c.b16 %v3857, %v3849
        %v5594 = vpack.c.b16 %v3858, %v3850
        %v5595 = vpack.c.b16 %v3859, %v3851
        %v5596 = vpack.c.b16 %v3860, %v3852
        %v5597 = vpack.c.b16 %v3861, %v3853
        %v5598 = vpack.c.b16 %v3862, %v3854
        %v5599 = vpack.c.b16 %v3863, %v3855
        %v5600 = vpack.c.b16 %v3872, %v3864
        %v5601 = vpack.c.b16 %v3873, %v3865
        %v5602 = vpack.c.b16 %v3874, %v3866
        %v5603 = vpack.c.b16 %v3875, %v3867
        %v5604 = vpack.c.b16 %v3876, %v3868
        %v5605 = vpack.c.b16 %v3877, %v3869
        %v5606 = vpack.c.b16 %v3878, %v3870
        %v5607 = vpack.c.b16 %v3879, %v3871
        %v5608 = vpack.c.b16 %v3888, %v3880
        %v5609 = vpack.c.b16 %v3889, %v3881
        %v5610 = vpack.c.b16 %v3890, %v3882
        %v5611 = vpack.c.b16 %v3891, %v3883
        %v5612 = vpack.c.b16 %v3892, %v3884
        %v5613 = vpack.c.b16 %v3893, %v3885
        %v5614 = vpack.c.b16 %v3894, %v3886
        %v5615 = vpack.c.b16 %v3895, %v3887
        %v5616 = vpack.c.b16 %v3904, %v3896
        %v5617 = vpack.c.b16 %v3905, %v3897
        %v5618 = vpack.c.b16 %v3906, %v3898
        %v5619 = vpack.c.b16 %v3907, %v3899
        %v5620 = vpack.c.b16 %v3908, %v3900
        %v5621 = vpack.c.b16 %v3909, %v3901
        %v5622 = vpack.c.b16 %v3910, %v3902
        %v5623 = vpack.c.b16 %v3911, %v3903
        %v5624 = vpack.c.b16 %v3920, %v3912
        %v5625 = vpack.c.b16 %v3921, %v3913
        %v5626 = vpack.c.b16 %v3922, %v3914
        %v5627 = vpack.c.b16 %v3923, %v3915
        %v5628 = vpack.c.b16 %v3924, %v3916
        %v5629 = vpack.c.b16 %v3925, %v3917
        %v5630 = vpack.c.b16 %v3926, %v3918
        %v5631 = vpack.c.b16 %v3927, %v3919
        %v5632 = vpack.c.b16 %v3936, %v3928
        %v5633 = vpack.c.b16 %v3937, %v3929
        %v5634 = vpack.c.b16 %v3938, %v3930
        %v5635 = vpack.c.b16 %v3939, %v3931
        %v5636 = vpack.c.b16 %v3940, %v3932
        %v5637 = vpack.c.b16 %v3941, %v3933
        %v5638 = vpack.c.b16 %v3942, %v3934
        %v5639 = vpack.c.b16 %v3943, %v3935
        %v5640 = vpack.c.b16 %v3952, %v3944
        %v5641 = vpack.c.b16 %v3953, %v3945
        %v5642 = vpack.c.b16 %v3954, %v3946
        %v5643 = vpack.c.b16 %v3955, %v3947
        %v5644 = vpack.c.b16 %v3956, %v3948
        %v5645 = vpack.c.b16 %v3957, %v3949
        %v5646 = vpack.c.b16 %v3958, %v3950
        %v5647 = vpack.c.b16 %v3959, %v3951
        %v5648 = vpack.c.b16 %v3968, %v3960
        %v5649 = vpack.c.b16 %v3969, %v3961
        %v5650 = vpack.c.b16 %v3970, %v3962
        %v5651 = vpack.c.b16 %v3971, %v3963
        %v5652 = vpack.c.b16 %v3972, %v3964
        %v5653 = vpack.c.b16 %v3973, %v3965
        %v5654 = vpack.c.b16 %v3974, %v3966
        %v5655 = vpack.c.b16 %v3975, %v3967
        %v5656 = vpack.c.b16 %v3984, %v3976
        %v5657 = vpack.c.b16 %v3985, %v3977
        %v5658 = vpack.c.b16 %v3986, %v3978
        %v5659 = vpack.c.b16 %v3987, %v3979
        %v5660 = vpack.c.b16 %v3988, %v3980
        %v5661 = vpack.c.b16 %v3989, %v3981
        %v5662 = vpack.c.b16 %v3990, %v3982
        %v5663 = vpack.c.b16 %v3991, %v3983
        %v5664 = vpack.c.b16 %v4000, %v3992
        %v5665 = vpack.c.b16 %v4001, %v3993
        %v5666 = vpack.c.b16 %v4002, %v3994
        %v5667 = vpack.c.b16 %v4003, %v3995
        %v5668 = vpack.c.b16 %v4004, %v3996
        %v5669 = vpack.c.b16 %v4005, %v3997
        %v5670 = vpack.c.b16 %v4006, %v3998
        %v5671 = vpack.c.b16 %v4007, %v3999
        %v5672 = vpack.c.b16 %v4016, %v4008
        %v5673 = vpack.c.b16 %v4017, %v4009
        %v5674 = vpack.c.b16 %v4018, %v4010
        %v5675 = vpack.c.b16 %v4019, %v4011
        %v5676 = vpack.c.b16 %v4020, %v4012
        %v5677 = vpack.c.b16 %v4021, %v4013
        %v5678 = vpack.c.b16 %v4022, %v4014
        %v5679 = vpack.c.b16 %v4023, %v4015
        %v5680 = vpack.c.b16 %v4032, %v4024
        %v5681 = vpack.c.b16 %v4033, %v4025
        %v5682 = vpack.c.b16 %v4034, %v4026
        %v5683 = vpack.c.b16 %v4035, %v4027
        %v5684 = vpack.c.b16 %v4036, %v4028
        %v5685 = vpack.c.b16 %v4037, %v4029
        %v5686 = vpack.c.b16 %v4038, %v4030
        %v5687 = vpack.c.b16 %v4039, %v4031
        %v5688 = vpack.c.b16 %v4048, %v4040
        %v5689 = vpack.c.b16 %v4049, %v4041
        %v5690 = vpack.c.b16 %v4050, %v4042
        %v5691 = vpack.c.b16 %v4051, %v4043
        %v5692 = vpack.c.b16 %v4052, %v4044
        %v5693 = vpack.c.b16 %v4053, %v4045
        %v5694 = vpack.c.b16 %v4054, %v4046
        %v5695 = vpack.c.b16 %v4055, %v4047
        %v5696 = vpack.c.b16 %v4064, %v4056
        %v5697 = vpack.c.b16 %v4065, %v4057
        %v5698 = vpack.c.b16 %v4066, %v4058
        %v5699 = vpack.c.b16 %v4067, %v4059
        %v5700 = vpack.c.b16 %v4068, %v4060
        %v5701 = vpack.c.b16 %v4069, %v4061
        %v5702 = vpack.c.b16 %v4070, %v4062
        %v5703 = vpack.c.b16 %v4071, %v4063
        %v5704 = vpack.c.b16 %v4080, %v4072
        %v5705 = vpack.c.b16 %v4081, %v4073
        %v5706 = vpack.c.b16 %v4082, %v4074
        %v5707 = vpack.c.b16 %v4083, %v4075
        %v5708 = vpack.c.b16 %v4084, %v4076
        %v5709 = vpack.c.b16 %v4085, %v4077
        %v5710 = vpack.c.b16 %v4086, %v4078
        %v5711 = vpack.c.b16 %v4087, %v4079
        %v5712 = vpack.c.b16 %v4096, %v4088
        %v5713 = vpack.c.b16 %v4097, %v4089
        %v5714 = vpack.c.b16 %v4098, %v4090
        %v5715 = vpack.c.b16 %v4099, %v4091
        %v5716 = vpack.c.b16 %v4100, %v4092
        %v5717 = vpack.c.b16 %v4101, %v4093
        %v5718 = vpack.c.b16 %v4102, %v4094
        %v5719 = vpack.c.b16 %v4103, %v4095
        %v5720 = vpack.c.b16 %v4112, %v4104
        %v5721 = vpack.c.b16 %v4113, %v4105
        %v5722 = vpack.c.b16 %v4114, %v4106
        %v5723 = vpack.c.b16 %v4115, %v4107
        %v5724 = vpack.c.b16 %v4116, %v4108
        %v5725 = vpack.c.b16 %v4117, %v4109
        %v5726 = vpack.c.b16 %v4118, %v4110
        %v5727 = vpack.c.b16 %v4119, %v4111
        %v5728 = vpack.c.b16 %v4128, %v4120
        %v5729 = vpack.c.b16 %v4129, %v4121
        %v5730 = vpack.c.b16 %v4130, %v4122
        %v5731 = vpack.c.b16 %v4131, %v4123
        %v5732 = vpack.c.b16 %v4132, %v4124
        %v5733 = vpack.c.b16 %v4133, %v4125
        %v5734 = vpack.c.b16 %v4134, %v4126
        %v5735 = vpack.c.b16 %v4135, %v4127
        %v5736 = vpack.c.b16 %v4144, %v4136
        %v5737 = vpack.c.b16 %v4145, %v4137
        %v5738 = vpack.c.b16 %v4146, %v4138
        %v5739 = vpack.c.b16 %v4147, %v4139
        %v5740 = vpack.c.b16 %v4148, %v4140
        %v5741 = vpack.c.b16 %v4149, %v4141
        %v5742 = vpack.c.b16 %v4150, %v4142
        %v5743 = vpack.c.b16 %v4151, %v4143
        %v5744 = vpack.c.b16 %v4160, %v4152
        %v5745 = vpack.c.b16 %v4161, %v4153
        %v5746 = vpack.c.b16 %v4162, %v4154
        %v5747 = vpack.c.b16 %v4163, %v4155
        %v5748 = vpack.c.b16 %v4164, %v4156
        %v5749 = vpack.c.b16 %v4165, %v4157
        %v5750 = vpack.c.b16 %v4166, %v4158
        %v5751 = vpack.c.b16 %v4167, %v4159
        %v5752 = vpack.c.b16 %v4176, %v4168
        %v5753 = vpack.c.b16 %v4177, %v4169
        %v5754 = vpack.c.b16 %v4178, %v4170
        %v5755 = vpack.c.b16 %v4179, %v4171
        %v5756 = vpack.c.b16 %v4180, %v4172
        %v5757 = vpack.c.b16 %v4181, %v4173
        %v5758 = vpack.c.b16 %v4182, %v4174
        %v5759 = vpack.c.b16 %v4183, %v4175
        %v5760 = vpack.c.b16 %v4192, %v4184
        %v5761 = vpack.c.b16 %v4193, %v4185
        %v5762 = vpack.c.b16 %v4194, %v4186
        %v5763 = vpack.c.b16 %v4195, %v4187
        %v5764 = vpack.c.b16 %v4196, %v4188
        %v5765 = vpack.c.b16 %v4197, %v4189
        %v5766 = vpack.c.b16 %v4198, %v4190
        %v5767 = vpack.c.b16 %v4199, %v4191
        %v5768 = vpack.c.b16 %v4208, %v4200
        %v5769 = vpack.c.b16 %v4209, %v4201
        %v5770 = vpack.c.b16 %v4210, %v4202
        %v5771 = vpack.c.b16 %v4211, %v4203
        %v5772 = vpack.c.b16 %v4212, %v4204
        %v5773 = vpack.c.b16 %v4213, %v4205
        %v5774 = vpack.c.b16 %v4214, %v4206
        %v5775 = vpack.c.b16 %v4215, %v4207
        %v5776 = vpack.c.b16 %v4224, %v4216
        %v5777 = vpack.c.b16 %v4225, %v4217
        %v5778 = vpack.c.b16 %v4226, %v4218
        %v5779 = vpack.c.b16 %v4227, %v4219
        %v5780 = vpack.c.b16 %v4228, %v4220
        %v5781 = vpack.c.b16 %v4229, %v4221
        %v5782 = vpack.c.b16 %v4230, %v4222
        %v5783 = vpack.c.b16 %v4231, %v4223
        %v5784 = vpack.c.b16 %v4240, %v4232
        %v5785 = vpack.c.b16 %v4241, %v4233
        %v5786 = vpack.c.b16 %v4242, %v4234
        %v5787 = vpack.c.b16 %v4243, %v4235
        %v5788 = vpack.c.b16 %v4244, %v4236
        %v5789 = vpack.c.b16 %v4245, %v4237
        %v5790 = vpack.c.b16 %v4246, %v4238
        %v5791 = vpack.c.b16 %v4247, %v4239
        %v5792 = vpack.c.b16 %v4256, %v4248
        %v5793 = vpack.c.b16 %v4257, %v4249
        %v5794 = vpack.c.b16 %v4258, %v4250
        %v5795 = vpack.c.b16 %v4259, %v4251
        %v5796 = vpack.c.b16 %v4260, %v4252
        %v5797 = vpack.c.b16 %v4261, %v4253
        %v5798 = vpack.c.b16 %v4262, %v4254
        %v5799 = vpack.c.b16 %v4263, %v4255
        %v5800 = vpack.c.b16 %v4272, %v4264
        %v5801 = vpack.c.b16 %v4273, %v4265
        %v5802 = vpack.c.b16 %v4274, %v4266
        %v5803 = vpack.c.b16 %v4275, %v4267
        %v5804 = vpack.c.b16 %v4276, %v4268
        %v5805 = vpack.c.b16 %v4277, %v4269
        %v5806 = vpack.c.b16 %v4278, %v4270
        %v5807 = vpack.c.b16 %v4279, %v4271
        %v5808 = vpack.c.b16 %v4288, %v4280
        %v5809 = vpack.c.b16 %v4289, %v4281
        %v5810 = vpack.c.b16 %v4290, %v4282
        %v5811 = vpack.c.b16 %v4291, %v4283
        %v5812 = vpack.c.b16 %v4292, %v4284
        %v5813 = vpack.c.b16 %v4293, %v4285
        %v5814 = vpack.c.b16 %v4294, %v4286
        %v5815 = vpack.c.b16 %v4295, %v4287
        %v5816 = vpack.c.b16 %v4304, %v4296
        %v5817 = vpack.c.b16 %v4305, %v4297
        %v5818 = vpack.c.b16 %v4306, %v4298
        %v5819 = vpack.c.b16 %v4307, %v4299
        %v5820 = vpack.c.b16 %v4308, %v4300
        %v5821 = vpack.c.b16 %v4309, %v4301
        %v5822 = vpack.c.b16 %v4310, %v4302
        %v5823 = vpack.c.b16 %v4311, %v4303
        %v5824 = vpack.c.b16 %v4320, %v4312
        %v5825 = vpack.c.b16 %v4321, %v4313
        %v5826 = vpack.c.b16 %v4322, %v4314
        %v5827 = vpack.c.b16 %v4323, %v4315
        %v5828 = vpack.c.b16 %v4324, %v4316
        %v5829 = vpack.c.b16 %v4325, %v4317
        %v5830 = vpack.c.b16 %v4326, %v4318
        %v5831 = vpack.c.b16 %v4327, %v4319
        %v5832 = vpack.c.b16 %v4336, %v4328
        %v5833 = vpack.c.b16 %v4337, %v4329
        %v5834 = vpack.c.b16 %v4338, %v4330
        %v5835 = vpack.c.b16 %v4339, %v4331
        %v5836 = vpack.c.b16 %v4340, %v4332
        %v5837 = vpack.c.b16 %v4341, %v4333
        %v5838 = vpack.c.b16 %v4342, %v4334
        %v5839 = vpack.c.b16 %v4343, %v4335
        %v5840 = vpack.c.b16 %v4352, %v4344
        %v5841 = vpack.c.b16 %v4353, %v4345
        %v5842 = vpack.c.b16 %v4354, %v4346
        %v5843 = vpack.c.b16 %v4355, %v4347
        %v5844 = vpack.c.b16 %v4356, %v4348
        %v5845 = vpack.c.b16 %v4357, %v4349
        %v5846 = vpack.c.b16 %v4358, %v4350
        %v5847 = vpack.c.b16 %v4359, %v4351
        %v5848 = vpack.c.b16 %v4368, %v4360
        %v5849 = vpack.c.b16 %v4369, %v4361
        %v5850 = vpack.c.b16 %v4370, %v4362
        %v5851 = vpack.c.b16 %v4371, %v4363
        %v5852 = vpack.c.b16 %v4372, %v4364
        %v5853 = vpack.c.b16 %v4373, %v4365
        %v5854 = vpack.c.b16 %v4374, %v4366
        %v5855 = vpack.c.b16 %v4375, %v4367
        %v5856 = vpack.c.b16 %v4384, %v4376
        %v5857 = vpack.c.b16 %v4385, %v4377
        %v5858 = vpack.c.b16 %v4386, %v4378
        %v5859 = vpack.c.b16 %v4387, %v4379
        %v5860 = vpack.c.b16 %v4388, %v4380
        %v5861 = vpack.c.b16 %v4389, %v4381
        %v5862 = vpack.c.b16 %v4390, %v4382
        %v5863 = vpack.c.b16 %v4391, %v4383
        %v5864 = vpack.c.b16 %v4400, %v4392
        %v5865 = vpack.c.b16 %v4401, %v4393
        %v5866 = vpack.c.b16 %v4402, %v4394
        %v5867 = vpack.c.b16 %v4403, %v4395
        %v5868 = vpack.c.b16 %v4404, %v4396
        %v5869 = vpack.c.b16 %v4405, %v4397
        %v5870 = vpack.c.b16 %v4406, %v4398
        %v5871 = vpack.c.b16 %v4407, %v4399
        %v5872 = vpack.c.b16 %v4416, %v4408
        %v5873 = vpack.c.b16 %v4417, %v4409
        %v5874 = vpack.c.b16 %v4418, %v4410
        %v5875 = vpack.c.b16 %v4419, %v4411
        %v5876 = vpack.c.b16 %v4420, %v4412
        %v5877 = vpack.c.b16 %v4421, %v4413
        %v5878 = vpack.c.b16 %v4422, %v4414
        %v5879 = vpack.c.b16 %v4423, %v4415
        %v5880 = vpack.c.b16 %v4432, %v4424
        %v5881 = vpack.c.b16 %v4433, %v4425
        %v5882 = vpack.c.b16 %v4434, %v4426
        %v5883 = vpack.c.b16 %v4435, %v4427
        %v5884 = vpack.c.b16 %v4436, %v4428
        %v5885 = vpack.c.b16 %v4437, %v4429
        %v5886 = vpack.c.b16 %v4438, %v4430
        %v5887 = vpack.c.b16 %v4439, %v4431
        %v5888 = vpack.c.b16 %v4448, %v4440
        %v5889 = vpack.c.b16 %v4449, %v4441
        %v5890 = vpack.c.b16 %v4450, %v4442
        %v5891 = vpack.c.b16 %v4451, %v4443
        %v5892 = vpack.c.b16 %v4452, %v4444
        %v5893 = vpack.c.b16 %v4453, %v4445
        %v5894 = vpack.c.b16 %v4454, %v4446
        %v5895 = vpack.c.b16 %v4455, %v4447
        %v5896 = vpack.c.b16 %v4464, %v4456
        %v5897 = vpack.c.b16 %v4465, %v4457
        %v5898 = vpack.c.b16 %v4466, %v4458
        %v5899 = vpack.c.b16 %v4467, %v4459
        %v5900 = vpack.c.b16 %v4468, %v4460
        %v5901 = vpack.c.b16 %v4469, %v4461
        %v5902 = vpack.c.b16 %v4470, %v4462
        %v5903 = vpack.c.b16 %v4471, %v4463
        %v5904 = vpack.c.b16 %v4480, %v4472
        %v5905 = vpack.c.b16 %v4481, %v4473
        %v5906 = vpack.c.b16 %v4482, %v4474
        %v5907 = vpack.c.b16 %v4483, %v4475
        %v5908 = vpack.c.b16 %v4484, %v4476
        %v5909 = vpack.c.b16 %v4485, %v4477
        %v5910 = vpack.c.b16 %v4486, %v4478
        %v5911 = vpack.c.b16 %v4487, %v4479
        %v5912 = vpack.c.b16 %v4496, %v4488
        %v5913 = vpack.c.b16 %v4497, %v4489
        %v5914 = vpack.c.b16 %v4498, %v4490
        %v5915 = vpack.c.b16 %v4499, %v4491
        %v5916 = vpack.c.b16 %v4500, %v4492
        %v5917 = vpack.c.b16 %v4501, %v4493
        %v5918 = vpack.c.b16 %v4502, %v4494
        %v5919 = vpack.c.b16 %v4503, %v4495
        %v5920 = vpack.c.b16 %v4512, %v4504
        %v5921 = vpack.c.b16 %v4513, %v4505
        %v5922 = vpack.c.b16 %v4514, %v4506
        %v5923 = vpack.c.b16 %v4515, %v4507
        %v5924 = vpack.c.b16 %v4516, %v4508
        %v5925 = vpack.c.b16 %v4517, %v4509
        %v5926 = vpack.c.b16 %v4518, %v4510
        %v5927 = vpack.c.b16 %v4519, %v4511
        %v5928 = vpack.c.b16 %v4528, %v4520
        %v5929 = vpack.c.b16 %v4529, %v4521
        %v5930 = vpack.c.b16 %v4530, %v4522
        %v5931 = vpack.c.b16 %v4531, %v4523
        %v5932 = vpack.c.b16 %v4532, %v4524
        %v5933 = vpack.c.b16 %v4533, %v4525
        %v5934 = vpack.c.b16 %v4534, %v4526
        %v5935 = vpack.c.b16 %v4535, %v4527
        %v5936 = vpack.c.b16 %v4544, %v4536
        %v5937 = vpack.c.b16 %v4545, %v4537
        %v5938 = vpack.c.b16 %v4546, %v4538
        %v5939 = vpack.c.b16 %v4547, %v4539
        %v5940 = vpack.c.b16 %v4548, %v4540
        %v5941 = vpack.c.b16 %v4549, %v4541
        %v5942 = vpack.c.b16 %v4550, %v4542
        %v5943 = vpack.c.b16 %v4551, %v4543
        %v5944 = vpack.c.b16 %v4560, %v4552
        %v5945 = vpack.c.b16 %v4561, %v4553
        %v5946 = vpack.c.b16 %v4562, %v4554
        %v5947 = vpack.c.b16 %v4563, %v4555
        %v5948 = vpack.c.b16 %v4564, %v4556
        %v5949 = vpack.c.b16 %v4565, %v4557
        %v5950 = vpack.c.b16 %v4566, %v4558
        %v5951 = vpack.c.b16 %v4567, %v4559
        %v5952 = vpack.c.b16 %v4576, %v4568
        %v5953 = vpack.c.b16 %v4577, %v4569
        %v5954 = vpack.c.b16 %v4578, %v4570
        %v5955 = vpack.c.b16 %v4579, %v4571
        %v5956 = vpack.c.b16 %v4580, %v4572
        %v5957 = vpack.c.b16 %v4581, %v4573
        %v5958 = vpack.c.b16 %v4582, %v4574
        %v5959 = vpack.c.b16 %v4583, %v4575
        %v5960 = vpack.c.b16 %v4592, %v4584
        %v5961 = vpack.c.b16 %v4593, %v4585
        %v5962 = vpack.c.b16 %v4594, %v4586
        %v5963 = vpack.c.b16 %v4595, %v4587
        %v5964 = vpack.c.b16 %v4596, %v4588
        %v5965 = vpack.c.b16 %v4597, %v4589
        %v5966 = vpack.c.b16 %v4598, %v4590
        %v5967 = vpack.c.b16 %v4599, %v4591
        %v5968 = vpack.c.b16 %v4608, %v4600
        %v5969 = vpack.c.b16 %v4609, %v4601
        %v5970 = vpack.c.b16 %v4610, %v4602
        %v5971 = vpack.c.b16 %v4611, %v4603
        %v5972 = vpack.c.b16 %v4612, %v4604
        %v5973 = vpack.c.b16 %v4613, %v4605
        %v5974 = vpack.c.b16 %v4614, %v4606
        %v5975 = vpack.c.b16 %v4615, %v4607
        %v5976 = vpack.c.b16 %v4624, %v4616
        %v5977 = vpack.c.b16 %v4625, %v4617
        %v5978 = vpack.c.b16 %v4626, %v4618
        %v5979 = vpack.c.b16 %v4627, %v4619
        %v5980 = vpack.c.b16 %v4628, %v4620
        %v5981 = vpack.c.b16 %v4629, %v4621
        %v5982 = vpack.c.b16 %v4630, %v4622
        %v5983 = vpack.c.b16 %v4631, %v4623
        %v5984 = vpack.c.b16 %v4640, %v4632
        %v5985 = vpack.c.b16 %v4641, %v4633
        %v5986 = vpack.c.b16 %v4642, %v4634
        %v5987 = vpack.c.b16 %v4643, %v4635
        %v5988 = vpack.c.b16 %v4644, %v4636
        %v5989 = vpack.c.b16 %v4645, %v4637
        %v5990 = vpack.c.b16 %v4646, %v4638
        %v5991 = vpack.c.b16 %v4647, %v4639
        %v5992 = vpack.c.b16 %v4656, %v4648
        %v5993 = vpack.c.b16 %v4657, %v4649
        %v5994 = vpack.c.b16 %v4658, %v4650
        %v5995 = vpack.c.b16 %v4659, %v4651
        %v5996 = vpack.c.b16 %v4660, %v4652
        %v5997 = vpack.c.b16 %v4661, %v4653
        %v5998 = vpack.c.b16 %v4662, %v4654
        %v5999 = vpack.c.b16 %v4663, %v4655
        %v6000 = vpack.c.b16 %v4672, %v4664
        %v6001 = vpack.c.b16 %v4673, %v4665
        %v6002 = vpack.c.b16 %v4674, %v4666
        %v6003 = vpack.c.b16 %v4675, %v4667
        %v6004 = vpack.c.b16 %v4676, %v4668
        %v6005 = vpack.c.b16 %v4677, %v4669
        %v6006 = vpack.c.b16 %v4678, %v4670
        %v6007 = vpack.c.b16 %v4679, %v4671
        %v6008 = vpack.c.b16 %v4688, %v4680
        %v6009 = vpack.c.b16 %v4689, %v4681
        %v6010 = vpack.c.b16 %v4690, %v4682
        %v6011 = vpack.c.b16 %v4691, %v4683
        %v6012 = vpack.c.b16 %v4692, %v4684
        %v6013 = vpack.c.b16 %v4693, %v4685
        %v6014 = vpack.c.b16 %v4694, %v4686
        %v6015 = vpack.c.b16 %v4695, %v4687
        %v6016 = vpack.c.b16 %v4704, %v4696
        %v6017 = vpack.c.b16 %v4705, %v4697
        %v6018 = vpack.c.b16 %v4706, %v4698
        %v6019 = vpack.c.b16 %v4707, %v4699
        %v6020 = vpack.c.b16 %v4708, %v4700
        %v6021 = vpack.c.b16 %v4709, %v4701
        %v6022 = vpack.c.b16 %v4710, %v4702
        %v6023 = vpack.c.b16 %v4711, %v4703
        %v6024 = vpack.c.b16 %v4720, %v4712
        %v6025 = vpack.c.b16 %v4721, %v4713
        %v6026 = vpack.c.b16 %v4722, %v4714
        %v6027 = vpack.c.b16 %v4723, %v4715
        %v6028 = vpack.c.b16 %v4724, %v4716
        %v6029 = vpack.c.b16 %v4725, %v4717
        %v6030 = vpack.c.b16 %v4726, %v4718
        %v6031 = vpack.c.b16 %v4727, %v4719
        %v6032 = vpack.c.b16 %v4736, %v4728
        %v6033 = vpack.c.b16 %v4737, %v4729
        %v6034 = vpack.c.b16 %v4738, %v4730
        %v6035 = vpack.c.b16 %v4739, %v4731
        %v6036 = vpack.c.b16 %v4740, %v4732
        %v6037 = vpack.c.b16 %v4741, %v4733
        %v6038 = vpack.c.b16 %v4742, %v4734
        %v6039 = vpack.c.b16 %v4743, %v4735
        %v6040 = vpack.c.b16 %v4752, %v4744
        %v6041 = vpack.c.b16 %v4753, %v4745
        %v6042 = vpack.c.b16 %v4754, %v4746
        %v6043 = vpack.c.b16 %v4755, %v4747
        %v6044 = vpack.c.b16 %v4756, %v4748
        %v6045 = vpack.c.b16 %v4757, %v4749
        %v6046 = vpack.c.b16 %v4758, %v4750
        %v6047 = vpack.c.b16 %v4759, %v4751
        %v6048 = vpack.c.b16 %v4768, %v4760
        %v6049 = vpack.c.b16 %v4769, %v4761
        %v6050 = vpack.c.b16 %v4770, %v4762
        %v6051 = vpack.c.b16 %v4771, %v4763
        %v6052 = vpack.c.b16 %v4772, %v4764
        %v6053 = vpack.c.b16 %v4773, %v4765
        %v6054 = vpack.c.b16 %v4774, %v4766
        %v6055 = vpack.c.b16 %v4775, %v4767
        %v6056 = vpack.c.b16 %v4784, %v4776
        %v6057 = vpack.c.b16 %v4785, %v4777
        %v6058 = vpack.c.b16 %v4786, %v4778
        %v6059 = vpack.c.b16 %v4787, %v4779
        %v6060 = vpack.c.b16 %v4788, %v4780
        %v6061 = vpack.c.b16 %v4789, %v4781
        %v6062 = vpack.c.b16 %v4790, %v4782
        %v6063 = vpack.c.b16 %v4791, %v4783
        %v6064 = vpack.c.b16 %v4800, %v4792
        %v6065 = vpack.c.b16 %v4801, %v4793
        %v6066 = vpack.c.b16 %v4802, %v4794
        %v6067 = vpack.c.b16 %v4803, %v4795
        %v6068 = vpack.c.b16 %v4804, %v4796
        %v6069 = vpack.c.b16 %v4805, %v4797
        %v6070 = vpack.c.b16 %v4806, %v4798
        %v6071 = vpack.c.b16 %v4807, %v4799
        %v6072 = vpack.c.b16 %v4816, %v4808
        %v6073 = vpack.c.b16 %v4817, %v4809
        %v6074 = vpack.c.b16 %v4818, %v4810
        %v6075 = vpack.c.b16 %v4819, %v4811
        %v6076 = vpack.c.b16 %v4820, %v4812
        %v6077 = vpack.c.b16 %v4821, %v4813
        %v6078 = vpack.c.b16 %v4822, %v4814
        %v6079 = vpack.c.b16 %v4823, %v4815
        %v6080 = vpack.c.b16 %v4832, %v4824
        %v6081 = vpack.c.b16 %v4833, %v4825
        %v6082 = vpack.c.b16 %v4834, %v4826
        %v6083 = vpack.c.b16 %v4835, %v4827
        %v6084 = vpack.c.b16 %v4836, %v4828
        %v6085 = vpack.c.b16 %v4837, %v4829
        %v6086 = vpack.c.b16 %v4838, %v4830
        %v6087 = vpack.c.b16 %v4839, %v4831
        %v6088 = vpack.c.b16 %v4848, %v4840
        %v6089 = vpack.c.b16 %v4849, %v4841
        %v6090 = vpack.c.b16 %v4850, %v4842
        %v6091 = vpack.c.b16 %v4851, %v4843
        %v6092 = vpack.c.b16 %v4852, %v4844
        %v6093 = vpack.c.b16 %v4853, %v4845
        %v6094 = vpack.c.b16 %v4854, %v4846
        %v6095 = vpack.c.b16 %v4855, %v4847
        %v6096 = vpack.c.b16 %v4864, %v4856
        %v6097 = vpack.c.b16 %v4865, %v4857
        %v6098 = vpack.c.b16 %v4866, %v4858
        %v6099 = vpack.c.b16 %v4867, %v4859
        %v6100 = vpack.c.b16 %v4868, %v4860
        %v6101 = vpack.c.b16 %v4869, %v4861
        %v6102 = vpack.c.b16 %v4870, %v4862
        %v6103 = vpack.c.b16 %v4871, %v4863
        %v6104 = vpack.c.b16 %v4880, %v4872
        %v6105 = vpack.c.b16 %v4881, %v4873
        %v6106 = vpack.c.b16 %v4882, %v4874
        %v6107 = vpack.c.b16 %v4883, %v4875
        %v6108 = vpack.c.b16 %v4884, %v4876
        %v6109 = vpack.c.b16 %v4885, %v4877
        %v6110 = vpack.c.b16 %v4886, %v4878
        %v6111 = vpack.c.b16 %v4887, %v4879
        %v6112 = vpack.c.b16 %v4896, %v4888
        %v6113 = vpack.c.b16 %v4897, %v4889
        %v6114 = vpack.c.b16 %v4898, %v4890
        %v6115 = vpack.c.b16 %v4899, %v4891
        %v6116 = vpack.c.b16 %v4900, %v4892
        %v6117 = vpack.c.b16 %v4901, %v4893
        %v6118 = vpack.c.b16 %v4902, %v4894
        %v6119 = vpack.c.b16 %v4903, %v4895
        %v6120 = vpack.c.b16 %v4912, %v4904
        %v6121 = vpack.c.b16 %v4913, %v4905
        %v6122 = vpack.c.b16 %v4914, %v4906
        %v6123 = vpack.c.b16 %v4915, %v4907
        %v6124 = vpack.c.b16 %v4916, %v4908
        %v6125 = vpack.c.b16 %v4917, %v4909
        %v6126 = vpack.c.b16 %v4918, %v4910
        %v6127 = vpack.c.b16 %v4919, %v4911
        %v6128 = vpack.c.b16 %v4928, %v4920
        %v6129 = vpack.c.b16 %v4929, %v4921
        %v6130 = vpack.c.b16 %v4930, %v4922
        %v6131 = vpack.c.b16 %v4931, %v4923
        %v6132 = vpack.c.b16 %v4932, %v4924
        %v6133 = vpack.c.b16 %v4933, %v4925
        %v6134 = vpack.c.b16 %v4934, %v4926
        %v6135 = vpack.c.b16 %v4935, %v4927
        %v6136 = vpack.c.b16 %v4944, %v4936
        %v6137 = vpack.c.b16 %v4945, %v4937
        %v6138 = vpack.c.b16 %v4946, %v4938
        %v6139 = vpack.c.b16 %v4947, %v4939
        %v6140 = vpack.c.b16 %v4948, %v4940
        %v6141 = vpack.c.b16 %v4949, %v4941
        %v6142 = vpack.c.b16 %v4950, %v4942
        %v6143 = vpack.c.b16 %v4951, %v4943
        %v6144 = vpack.c.b16 %v4960, %v4952
        %v6145 = vpack.c.b16 %v4961, %v4953
        %v6146 = vpack.c.b16 %v4962, %v4954
        %v6147 = vpack.c.b16 %v4963, %v4955
        %v6148 = vpack.c.b16 %v4964, %v4956
        %v6149 = vpack.c.b16 %v4965, %v4957
        %v6150 = vpack.c.b16 %v4966, %v4958
        %v6151 = vpack.c.b16 %v4967, %v4959
        %v6152 = vpack.c.b16 %v4976, %v4968
        %v6153 = vpack.c.b16 %v4977, %v4969
        %v6154 = vpack.c.b16 %v4978, %v4970
        %v6155 = vpack.c.b16 %v4979, %v4971
        %v6156 = vpack.c.b16 %v4980, %v4972
        %v6157 = vpack.c.b16 %v4981, %v4973
        %v6158 = vpack.c.b16 %v4982, %v4974
        %v6159 = vpack.c.b16 %v4983, %v4975
        %v6160 = vpack.c.b16 %v4992, %v4984
        %v6161 = vpack.c.b16 %v4993, %v4985
        %v6162 = vpack.c.b16 %v4994, %v4986
        %v6163 = vpack.c.b16 %v4995, %v4987
        %v6164 = vpack.c.b16 %v4996, %v4988
        %v6165 = vpack.c.b16 %v4997, %v4989
        %v6166 = vpack.c.b16 %v4998, %v4990
        %v6167 = vpack.c.b16 %v4999, %v4991
        %v6168 = vpack.c.b16 %v5008, %v5000
        %v6169 = vpack.c.b16 %v5009, %v5001
        %v6170 = vpack.c.b16 %v5010, %v5002
        %v6171 = vpack.c.b16 %v5011, %v5003
        %v6172 = vpack.c.b16 %v5012, %v5004
        %v6173 = vpack.c.b16 %v5013, %v5005
        %v6174 = vpack.c.b16 %v5014, %v5006
        %v6175 = vpack.c.b16 %v5015, %v5007
        %v6176 = vpack.c.b16 %v5016, %v5016
        %v6177 = vpack.c.b16 %v5017, %v5017
        %v6178 = vpack.c.b16 %v5018, %v5018
        %v6179 = vpack.c.b16 %v5019, %v5019
        %v6180 = vpack.c.b16 %v5020, %v5020
        %v6181 = vpack.c.b16 %v5021, %v5021
        %v6182 = vpack.c.b16 %v5022, %v5022
        %v6183 = vpack.c.b16 %v5023, %v5023
        %vm7336 = vcmask 64512
        %v7338 = vsel %vm7336, %v1537, 0
        %vm7340 = vcmask 1043456
        %v7342 = vsel %vm7340, %v6176, 0
        %v7345 = vsel %vm7340, %v6177, 0
        %v7348 = vsel %vm7340, %v6178, 0
        %v7351 = vsel %vm7340, %v6179, 0
        %v7354 = vsel %vm7340, %v6180, 0
        %v7357 = vsel %vm7340, %v6181, 0
        %v7360 = vsel %vm7340, %v6182, 0
        %v7363 = vsel %vm7340, %v6183, 0
        %7365 = vmatprep.subr.bf16.mxu0 %v5081
        %7366 = vmatpush1.bf16.msra.mxu0 %v5080
        %7367 = vmatprep.subr.bf16.mxu0 %v5073
        %7368 = vmatpush1.bf16.msra.mxu0 %v5072
        %7369 = vmatprep.subr.bf16.mxu0 %v5065
        %7370 = vmatpush1.bf16.msra.mxu0 %v5064
        %7371 = vmatprep.subr.bf16.mxu0 %v5057
        %7372 = vmatpush1.bf16.msra.mxu0 %v5056
        %7373 = vmatprep.subr.bf16.mxu0 %v5049
        %7374 = vmatpush1.bf16.msra.mxu0 %v5048
        %7375 = vmatprep.subr.bf16.mxu0 %v5041
        %7376 = vmatpush1.bf16.msra.mxu0 %v5040
        %7377 = vmatprep.subr.bf16.mxu0 %v5033
        %7378 = vmatpush1.bf16.msra.mxu0 %v5032
        %7379 = vmatprep.subr.bf16.mxu0 %v5025
        %7380 = vmatpush1.bf16.msra.mxu0 %v5024
        %7381 = vmatprep.subr.bf16.mxu0 %v5145
        %7382 = vmatpush2.bf16.msra.mxu0 %v5144
        %7383 = vmatprep.subr.bf16.mxu0 %v5137
        %7384 = vmatpush2.bf16.msra.mxu0 %v5136
        %7385 = vmatprep.subr.bf16.mxu0 %v5129
        %7386 = vmatpush2.bf16.msra.mxu0 %v5128
        %7387 = vmatprep.subr.bf16.mxu0 %v5121
        %7388 = vmatpush2.bf16.msra.mxu0 %v5120
        %7389 = vmatprep.subr.bf16.mxu0 %v5113
        %7390 = vmatpush2.bf16.msra.mxu0 %v5112
        %7391 = vmatprep.subr.bf16.mxu0 %v5105
        %7392 = vmatpush2.bf16.msra.mxu0 %v5104
        %7393 = vmatprep.subr.bf16.mxu0 %v5097
        %7394 = vmatpush2.bf16.msra.mxu0 %v5096
        %7395 = vmatprep.subr.bf16.mxu0 %v5089
        %7396 = vmatpush2.bf16.msra.mxu0 %v5088
        %7397 = vmatprep.mubr.bf16.mxu0 %v1454
        %7398 = vmatmul.mubr.bf16.gmra.mxu0 %v1440
        %v7399 = vpop.f32.mrf.mxu0
        %v7400 = vadd.f32 %v1377, %v7399
        %v7401 = vpop.f32.mrf.mxu0
        %v7402 = vadd.f32 %v1381, %v7401
        %v7403 = vpop.f32.mrf.mxu0
        %v7404 = vpop.f32.mrf.mxu0
        %7405 = vdwg.mxu0
        %7406 = vmatprep.subr.bf16.mxu0 %v5209
        %7407 = vmatpush1.bf16.msra.mxu0 %v5208
        %7408 = vmatprep.subr.bf16.mxu0 %v5201
        %7409 = vmatpush1.bf16.msra.mxu0 %v5200
        %7410 = vmatprep.subr.bf16.mxu0 %v5193
        %7411 = vmatpush1.bf16.msra.mxu0 %v5192
        %7412 = vmatprep.subr.bf16.mxu0 %v5185
        %7413 = vmatpush1.bf16.msra.mxu0 %v5184
        %7414 = vmatprep.subr.bf16.mxu0 %v5177
        %7415 = vmatpush1.bf16.msra.mxu0 %v5176
        %7416 = vmatprep.subr.bf16.mxu0 %v5169
        %7417 = vmatpush1.bf16.msra.mxu0 %v5168
        %7418 = vmatprep.subr.bf16.mxu0 %v5161
        %7419 = vmatpush1.bf16.msra.mxu0 %v5160
        %7420 = vmatprep.subr.bf16.mxu0 %v5153
        %7421 = vmatpush1.bf16.msra.mxu0 %v5152
        %7422 = vmatprep.subr.bf16.mxu0 %v5273
        %7423 = vmatpush2.bf16.msra.mxu0 %v5272
        %7424 = vmatprep.subr.bf16.mxu0 %v5265
        %7425 = vmatpush2.bf16.msra.mxu0 %v5264
        %7426 = vmatprep.subr.bf16.mxu0 %v5257
        %7427 = vmatpush2.bf16.msra.mxu0 %v5256
        %7428 = vmatprep.subr.bf16.mxu0 %v5249
        %7429 = vmatpush2.bf16.msra.mxu0 %v5248
        %7430 = vmatprep.subr.bf16.mxu0 %v5241
        %7431 = vmatpush2.bf16.msra.mxu0 %v5240
        %7432 = vmatprep.subr.bf16.mxu0 %v5233
        %7433 = vmatpush2.bf16.msra.mxu0 %v5232
        %7434 = vmatprep.subr.bf16.mxu0 %v5225
        %7435 = vmatpush2.bf16.msra.mxu0 %v5224
        %7436 = vmatprep.subr.bf16.mxu0 %v5217
        %7437 = vmatpush2.bf16.msra.mxu0 %v5216
        %7438 = vmatprep.mubr.bf16.mxu0 %v1464
        %7439 = vmatmul.mubr.bf16.gmra.mxu0 %v1462
        %v7440 = vpop.f32.mrf.mxu0
        %v7441 = vadd.f32 %v7400, %v7440
        %v7442 = vpop.f32.mrf.mxu0
        %v7443 = vadd.f32 %v7402, %v7442
        %v7444 = vpop.f32.mrf.mxu0
        %v7445 = vpop.f32.mrf.mxu0
        %7446 = vdwg.mxu0
        %7447 = vmatprep.subr.bf16.mxu0 %v5337
        %7448 = vmatpush1.bf16.msra.mxu0 %v5336
        %7449 = vmatprep.subr.bf16.mxu0 %v5329
        %7450 = vmatpush1.bf16.msra.mxu0 %v5328
        %7451 = vmatprep.subr.bf16.mxu0 %v5321
        %7452 = vmatpush1.bf16.msra.mxu0 %v5320
        %7453 = vmatprep.subr.bf16.mxu0 %v5313
        %7454 = vmatpush1.bf16.msra.mxu0 %v5312
        %7455 = vmatprep.subr.bf16.mxu0 %v5305
        %7456 = vmatpush1.bf16.msra.mxu0 %v5304
        %7457 = vmatprep.subr.bf16.mxu0 %v5297
        %7458 = vmatpush1.bf16.msra.mxu0 %v5296
        %7459 = vmatprep.subr.bf16.mxu0 %v5289
        %7460 = vmatpush1.bf16.msra.mxu0 %v5288
        %7461 = vmatprep.subr.bf16.mxu0 %v5281
        %7462 = vmatpush1.bf16.msra.mxu0 %v5280
        %7463 = vmatprep.subr.bf16.mxu0 %v5401
        %7464 = vmatpush2.bf16.msra.mxu0 %v5400
        %7465 = vmatprep.subr.bf16.mxu0 %v5393
        %7466 = vmatpush2.bf16.msra.mxu0 %v5392
        %7467 = vmatprep.subr.bf16.mxu0 %v5385
        %7468 = vmatpush2.bf16.msra.mxu0 %v5384
        %7469 = vmatprep.subr.bf16.mxu0 %v5377
        %7470 = vmatpush2.bf16.msra.mxu0 %v5376
        %7471 = vmatprep.subr.bf16.mxu0 %v5369
        %7472 = vmatpush2.bf16.msra.mxu0 %v5368
        %7473 = vmatprep.subr.bf16.mxu0 %v5361
        %7474 = vmatpush2.bf16.msra.mxu0 %v5360
        %7475 = vmatprep.subr.bf16.mxu0 %v5353
        %7476 = vmatpush2.bf16.msra.mxu0 %v5352
        %7477 = vmatprep.subr.bf16.mxu0 %v5345
        %7478 = vmatpush2.bf16.msra.mxu0 %v5344
        %7479 = vmatprep.mubr.bf16.mxu0 %v1461
        %7480 = vmatmul.mubr.bf16.gmra.mxu0 %v1447
        %v7481 = vpop.f32.mrf.mxu0
        %v7482 = vadd.f32 %v7441, %v7481
        %v7483 = vpop.f32.mrf.mxu0
        %v7484 = vadd.f32 %v7443, %v7483
        %v7485 = vpop.f32.mrf.mxu0
        %v7486 = vpop.f32.mrf.mxu0
        %7487 = vdwg.mxu0
        %7488 = vmatprep.subr.bf16.mxu0 %v5465
        %7489 = vmatpush1.bf16.msra.mxu0 %v5464
        %7490 = vmatprep.subr.bf16.mxu0 %v5457
        %7491 = vmatpush1.bf16.msra.mxu0 %v5456
        %7492 = vmatprep.subr.bf16.mxu0 %v5449
        %7493 = vmatpush1.bf16.msra.mxu0 %v5448
        %7494 = vmatprep.subr.bf16.mxu0 %v5441
        %7495 = vmatpush1.bf16.msra.mxu0 %v5440
        %7496 = vmatprep.subr.bf16.mxu0 %v5433
        %7497 = vmatpush1.bf16.msra.mxu0 %v5432
        %7498 = vmatprep.subr.bf16.mxu0 %v5425
        %7499 = vmatpush1.bf16.msra.mxu0 %v5424
        %7500 = vmatprep.subr.bf16.mxu0 %v5417
        %7501 = vmatpush1.bf16.msra.mxu0 %v5416
        %7502 = vmatprep.subr.bf16.mxu0 %v5409
        %7503 = vmatpush1.bf16.msra.mxu0 %v5408
        %7504 = vmatprep.subr.bf16.mxu0 %v5529
        %7505 = vmatpush2.bf16.msra.mxu0 %v5528
        %7506 = vmatprep.subr.bf16.mxu0 %v5521
        %7507 = vmatpush2.bf16.msra.mxu0 %v5520
        %7508 = vmatprep.subr.bf16.mxu0 %v5513
        %7509 = vmatpush2.bf16.msra.mxu0 %v5512
        %7510 = vmatprep.subr.bf16.mxu0 %v5505
        %7511 = vmatpush2.bf16.msra.mxu0 %v5504
        %7512 = vmatprep.subr.bf16.mxu0 %v5497
        %7513 = vmatpush2.bf16.msra.mxu0 %v5496
        %7514 = vmatprep.subr.bf16.mxu0 %v5489
        %7515 = vmatpush2.bf16.msra.mxu0 %v5488
        %7516 = vmatprep.subr.bf16.mxu0 %v5481
        %7517 = vmatpush2.bf16.msra.mxu0 %v5480
        %7518 = vmatprep.subr.bf16.mxu0 %v5473
        %7519 = vmatpush2.bf16.msra.mxu0 %v5472
        %7520 = vmatprep.mubr.bf16.mxu0 %v1465
        %7521 = vmatmul.mubr.bf16.gmra.mxu0 %v1463
        %v7522 = vpop.f32.mrf.mxu0
        %v7523 = vadd.f32 %v7482, %v7522
        %v7524 = vpop.f32.mrf.mxu0
        %v7525 = vadd.f32 %v7484, %v7524
        %v7526 = vpop.f32.mrf.mxu0
        %v7527 = vpop.f32.mrf.mxu0
        %7528 = vdwg.mxu0
        %7529 = vmatprep.subr.bf16.mxu0 %v5593
        %7530 = vmatpush1.bf16.msra.mxu0 %v5592
        %7531 = vmatprep.subr.bf16.mxu0 %v5585
        %7532 = vmatpush1.bf16.msra.mxu0 %v5584
        %7533 = vmatprep.subr.bf16.mxu0 %v5577
        %7534 = vmatpush1.bf16.msra.mxu0 %v5576
        %7535 = vmatprep.subr.bf16.mxu0 %v5569
        %7536 = vmatpush1.bf16.msra.mxu0 %v5568
        %7537 = vmatprep.subr.bf16.mxu0 %v5561
        %7538 = vmatpush1.bf16.msra.mxu0 %v5560
        %7539 = vmatprep.subr.bf16.mxu0 %v5553
        %7540 = vmatpush1.bf16.msra.mxu0 %v5552
        %7541 = vmatprep.subr.bf16.mxu0 %v5545
        %7542 = vmatpush1.bf16.msra.mxu0 %v5544
        %7543 = vmatprep.subr.bf16.mxu0 %v5537
        %7544 = vmatpush1.bf16.msra.mxu0 %v5536
        %7545 = vmatprep.subr.bf16.mxu0 %v5657
        %7546 = vmatpush2.bf16.msra.mxu0 %v5656
        %7547 = vmatprep.subr.bf16.mxu0 %v5649
        %7548 = vmatpush2.bf16.msra.mxu0 %v5648
        %7549 = vmatprep.subr.bf16.mxu0 %v5641
        %7550 = vmatpush2.bf16.msra.mxu0 %v5640
        %7551 = vmatprep.subr.bf16.mxu0 %v5633
        %7552 = vmatpush2.bf16.msra.mxu0 %v5632
        %7553 = vmatprep.subr.bf16.mxu0 %v5625
        %7554 = vmatpush2.bf16.msra.mxu0 %v5624
        %7555 = vmatprep.subr.bf16.mxu0 %v5617
        %7556 = vmatpush2.bf16.msra.mxu0 %v5616
        %7557 = vmatprep.subr.bf16.mxu0 %v5609
        %7558 = vmatpush2.bf16.msra.mxu0 %v5608
        %7559 = vmatprep.subr.bf16.mxu0 %v5601
        %7560 = vmatpush2.bf16.msra.mxu0 %v5600
        %7561 = vmatprep.mubr.bf16.mxu0 %v1503
        %7562 = vmatmul.mubr.bf16.gmra.mxu0 %v1489
        %v7563 = vpop.f32.mrf.mxu0
        %v7564 = vadd.f32 %v7523, %v7563
        %v7565 = vpop.f32.mrf.mxu0
        %v7566 = vadd.f32 %v7525, %v7565
        %v7567 = vpop.f32.mrf.mxu0
        %v7568 = vpop.f32.mrf.mxu0
        %7569 = vdwg.mxu0
        %7570 = vmatprep.subr.bf16.mxu0 %v5721
        %7571 = vmatpush1.bf16.msra.mxu0 %v5720
        %7572 = vmatprep.subr.bf16.mxu0 %v5713
        %7573 = vmatpush1.bf16.msra.mxu0 %v5712
        %7574 = vmatprep.subr.bf16.mxu0 %v5705
        %7575 = vmatpush1.bf16.msra.mxu0 %v5704
        %7576 = vmatprep.subr.bf16.mxu0 %v5697
        %7577 = vmatpush1.bf16.msra.mxu0 %v5696
        %7578 = vmatprep.subr.bf16.mxu0 %v5689
        %7579 = vmatpush1.bf16.msra.mxu0 %v5688
        %7580 = vmatprep.subr.bf16.mxu0 %v5681
        %7581 = vmatpush1.bf16.msra.mxu0 %v5680
        %7582 = vmatprep.subr.bf16.mxu0 %v5673
        %7583 = vmatpush1.bf16.msra.mxu0 %v5672
        %7584 = vmatprep.subr.bf16.mxu0 %v5665
        %7585 = vmatpush1.bf16.msra.mxu0 %v5664
        %7586 = vmatprep.subr.bf16.mxu0 %v5785
        %7587 = vmatpush2.bf16.msra.mxu0 %v5784
        %7588 = vmatprep.subr.bf16.mxu0 %v5777
        %7589 = vmatpush2.bf16.msra.mxu0 %v5776
        %7590 = vmatprep.subr.bf16.mxu0 %v5769
        %7591 = vmatpush2.bf16.msra.mxu0 %v5768
        %7592 = vmatprep.subr.bf16.mxu0 %v5761
        %7593 = vmatpush2.bf16.msra.mxu0 %v5760
        %7594 = vmatprep.subr.bf16.mxu0 %v5753
        %7595 = vmatpush2.bf16.msra.mxu0 %v5752
        %7596 = vmatprep.subr.bf16.mxu0 %v5745
        %7597 = vmatpush2.bf16.msra.mxu0 %v5744
        %7598 = vmatprep.subr.bf16.mxu0 %v5737
        %7599 = vmatpush2.bf16.msra.mxu0 %v5736
        %7600 = vmatprep.subr.bf16.mxu0 %v5729
        %7601 = vmatpush2.bf16.msra.mxu0 %v5728
        %7602 = vmatprep.mubr.bf16.mxu0 %v1513
        %7603 = vmatmul.mubr.bf16.gmra.mxu0 %v1511
        %v7604 = vpop.f32.mrf.mxu0
        %v7605 = vadd.f32 %v7564, %v7604
        %v7606 = vpop.f32.mrf.mxu0
        %v7607 = vadd.f32 %v7566, %v7606
        %v7608 = vpop.f32.mrf.mxu0
        %v7609 = vpop.f32.mrf.mxu0
        %7610 = vdwg.mxu0
        %7611 = vmatprep.subr.bf16.mxu0 %v5849
        %7612 = vmatpush1.bf16.msra.mxu0 %v5848
        %7613 = vmatprep.subr.bf16.mxu0 %v5841
        %7614 = vmatpush1.bf16.msra.mxu0 %v5840
        %7615 = vmatprep.subr.bf16.mxu0 %v5833
        %7616 = vmatpush1.bf16.msra.mxu0 %v5832
        %7617 = vmatprep.subr.bf16.mxu0 %v5825
        %7618 = vmatpush1.bf16.msra.mxu0 %v5824
        %7619 = vmatprep.subr.bf16.mxu0 %v5817
        %7620 = vmatpush1.bf16.msra.mxu0 %v5816
        %7621 = vmatprep.subr.bf16.mxu0 %v5809
        %7622 = vmatpush1.bf16.msra.mxu0 %v5808
        %7623 = vmatprep.subr.bf16.mxu0 %v5801
        %7624 = vmatpush1.bf16.msra.mxu0 %v5800
        %7625 = vmatprep.subr.bf16.mxu0 %v5793
        %7626 = vmatpush1.bf16.msra.mxu0 %v5792
        %7627 = vmatprep.subr.bf16.mxu0 %v5913
        %7628 = vmatpush2.bf16.msra.mxu0 %v5912
        %7629 = vmatprep.subr.bf16.mxu0 %v5905
        %7630 = vmatpush2.bf16.msra.mxu0 %v5904
        %7631 = vmatprep.subr.bf16.mxu0 %v5897
        %7632 = vmatpush2.bf16.msra.mxu0 %v5896
        %7633 = vmatprep.subr.bf16.mxu0 %v5889
        %7634 = vmatpush2.bf16.msra.mxu0 %v5888
        %7635 = vmatprep.subr.bf16.mxu0 %v5881
        %7636 = vmatpush2.bf16.msra.mxu0 %v5880
        %7637 = vmatprep.subr.bf16.mxu0 %v5873
        %7638 = vmatpush2.bf16.msra.mxu0 %v5872
        %7639 = vmatprep.subr.bf16.mxu0 %v5865
        %7640 = vmatpush2.bf16.msra.mxu0 %v5864
        %7641 = vmatprep.subr.bf16.mxu0 %v5857
        %7642 = vmatpush2.bf16.msra.mxu0 %v5856
        %7643 = vmatprep.mubr.bf16.mxu0 %v1510
        %7644 = vmatmul.mubr.bf16.gmra.mxu0 %v1496
        %v7645 = vpop.f32.mrf.mxu0
        %v7646 = vadd.f32 %v7605, %v7645
        %v7647 = vpop.f32.mrf.mxu0
        %v7648 = vadd.f32 %v7607, %v7647
        %v7649 = vpop.f32.mrf.mxu0
        %v7650 = vpop.f32.mrf.mxu0
        %7651 = vdwg.mxu0
        %7652 = vmatprep.subr.bf16.mxu0 %v5977
        %7653 = vmatpush1.bf16.msra.mxu0 %v5976
        %7654 = vmatprep.subr.bf16.mxu0 %v5969
        %7655 = vmatpush1.bf16.msra.mxu0 %v5968
        %7656 = vmatprep.subr.bf16.mxu0 %v5961
        %7657 = vmatpush1.bf16.msra.mxu0 %v5960
        %7658 = vmatprep.subr.bf16.mxu0 %v5953
        %7659 = vmatpush1.bf16.msra.mxu0 %v5952
        %7660 = vmatprep.subr.bf16.mxu0 %v5945
        %7661 = vmatpush1.bf16.msra.mxu0 %v5944
        %7662 = vmatprep.subr.bf16.mxu0 %v5937
        %7663 = vmatpush1.bf16.msra.mxu0 %v5936
        %7664 = vmatprep.subr.bf16.mxu0 %v5929
        %7665 = vmatpush1.bf16.msra.mxu0 %v5928
        %7666 = vmatprep.subr.bf16.mxu0 %v5921
        %7667 = vmatpush1.bf16.msra.mxu0 %v5920
        %7668 = vmatprep.subr.bf16.mxu0 %v6041
        %7669 = vmatpush2.bf16.msra.mxu0 %v6040
        %7670 = vmatprep.subr.bf16.mxu0 %v6033
        %7671 = vmatpush2.bf16.msra.mxu0 %v6032
        %7672 = vmatprep.subr.bf16.mxu0 %v6025
        %7673 = vmatpush2.bf16.msra.mxu0 %v6024
        %7674 = vmatprep.subr.bf16.mxu0 %v6017
        %7675 = vmatpush2.bf16.msra.mxu0 %v6016
        %7676 = vmatprep.subr.bf16.mxu0 %v6009
        %7677 = vmatpush2.bf16.msra.mxu0 %v6008
        %7678 = vmatprep.subr.bf16.mxu0 %v6001
        %7679 = vmatpush2.bf16.msra.mxu0 %v6000
        %7680 = vmatprep.subr.bf16.mxu0 %v5993
        %7681 = vmatpush2.bf16.msra.mxu0 %v5992
        %7682 = vmatprep.subr.bf16.mxu0 %v5985
        %7683 = vmatpush2.bf16.msra.mxu0 %v5984
        %7684 = vmatprep.mubr.bf16.mxu0 %v1514
        %7685 = vmatmul.mubr.bf16.gmra.mxu0 %v1512
        %v7686 = vpop.f32.mrf.mxu0
        %v7687 = vadd.f32 %v7646, %v7686
        %v7688 = vpop.f32.mrf.mxu0
        %v7689 = vadd.f32 %v7648, %v7688
        %v7690 = vpop.f32.mrf.mxu0
        %v7691 = vpop.f32.mrf.mxu0
        %7692 = vdwg.mxu0
        %7693 = vmatprep.subr.bf16.mxu0 %v6105
        %7694 = vmatpush1.bf16.msra.mxu0 %v6104
        %7695 = vmatprep.subr.bf16.mxu0 %v6097
        %7696 = vmatpush1.bf16.msra.mxu0 %v6096
        %7697 = vmatprep.subr.bf16.mxu0 %v6089
        %7698 = vmatpush1.bf16.msra.mxu0 %v6088
        %7699 = vmatprep.subr.bf16.mxu0 %v6081
        %7700 = vmatpush1.bf16.msra.mxu0 %v6080
        %7701 = vmatprep.subr.bf16.mxu0 %v6073
        %7702 = vmatpush1.bf16.msra.mxu0 %v6072
        %7703 = vmatprep.subr.bf16.mxu0 %v6065
        %7704 = vmatpush1.bf16.msra.mxu0 %v6064
        %7705 = vmatprep.subr.bf16.mxu0 %v6057
        %7706 = vmatpush1.bf16.msra.mxu0 %v6056
        %7707 = vmatprep.subr.bf16.mxu0 %v6049
        %7708 = vmatpush1.bf16.msra.mxu0 %v6048
        %7709 = vmatprep.subr.bf16.mxu0 %v6169
        %7710 = vmatpush2.bf16.msra.mxu0 %v6168
        %7711 = vmatprep.subr.bf16.mxu0 %v6161
        %7712 = vmatpush2.bf16.msra.mxu0 %v6160
        %7713 = vmatprep.subr.bf16.mxu0 %v6153
        %7714 = vmatpush2.bf16.msra.mxu0 %v6152
        %7715 = vmatprep.subr.bf16.mxu0 %v6145
        %7716 = vmatpush2.bf16.msra.mxu0 %v6144
        %7717 = vmatprep.subr.bf16.mxu0 %v6137
        %7718 = vmatpush2.bf16.msra.mxu0 %v6136
        %7719 = vmatprep.subr.bf16.mxu0 %v6129
        %7720 = vmatpush2.bf16.msra.mxu0 %v6128
        %7721 = vmatprep.subr.bf16.mxu0 %v6121
        %7722 = vmatpush2.bf16.msra.mxu0 %v6120
        %7723 = vmatprep.subr.bf16.mxu0 %v6113
        %7724 = vmatpush2.bf16.msra.mxu0 %v6112
        %7725 = vmatprep.mubr.bf16.mxu0 %v1536
        %7726 = vmatmul.mubr.bf16.gmra.mxu0 %v1529
        %v7727 = vpop.f32.mrf.mxu0
        %v7728 = vadd.f32 %v7687, %v7727
        %v7729 = vpop.f32.mrf.mxu0
        %v7730 = vadd.f32 %v7689, %v7729
        %v7731 = vpop.f32.mrf.mxu0
        %v7732 = vpop.f32.mrf.mxu0
        %7733 = vdwg.mxu0
        %7734 = vmatprep.subr.bf16.mxu0 0
        %7735 = vmatpush1.bf16.msra.mxu0 0
        %7736 = vmatprep.subr.bf16.mxu0 0
        %7737 = vmatpush1.bf16.msra.mxu0 0
        %7738 = vmatprep.subr.bf16.mxu0 0
        %7739 = vmatpush1.bf16.msra.mxu0 0
        %7740 = vmatprep.subr.bf16.mxu0 0
        %7741 = vmatpush1.bf16.msra.mxu0 0
        %7742 = vmatprep.subr.bf16.mxu0 0
        %7743 = vmatpush1.bf16.msra.mxu0 0
        %7744 = vmatprep.subr.bf16.mxu0 0
        %7745 = vmatpush1.bf16.msra.mxu0 0
        %7746 = vmatprep.subr.bf16.mxu0 0
        %7747 = vmatpush1.bf16.msra.mxu0 0
        %7748 = vmatprep.subr.bf16.mxu0 %v7345
        %7749 = vmatpush1.bf16.msra.mxu0 %v7342
        %7750 = vmatprep.subr.bf16.mxu0 0
        %7751 = vmatpush2.bf16.msra.mxu0 0
        %7752 = vmatprep.subr.bf16.mxu0 0
        %7753 = vmatpush2.bf16.msra.mxu0 0
        %7754 = vmatprep.subr.bf16.mxu0 0
        %7755 = vmatpush2.bf16.msra.mxu0 0
        %7756 = vmatprep.subr.bf16.mxu0 0
        %7757 = vmatpush2.bf16.msra.mxu0 0
        %7758 = vmatprep.subr.bf16.mxu0 0
        %7759 = vmatpush2.bf16.msra.mxu0 0
        %7760 = vmatprep.subr.bf16.mxu0 0
        %7761 = vmatpush2.bf16.msra.mxu0 0
        %7762 = vmatprep.subr.bf16.mxu0 0
        %7763 = vmatpush2.bf16.msra.mxu0 0
        %7764 = vmatprep.subr.bf16.mxu0 0
        %7765 = vmatpush2.bf16.msra.mxu0 0
        %7766 = vmatprep.mubr.bf16.mxu0 0
        %7767 = vmatmul.mubr.bf16.gmra.mxu0 %v7338
        %v7768 = vpop.f32.mrf.mxu0
        %v7769 = vadd.f32 %v7728, %v7768
        %v7770 = vpop.f32.mrf.mxu0
        %v7771 = vadd.f32 %v7730, %v7770
        %v7772 = vpop.f32.mrf.mxu0
        %v7773 = vpop.f32.mrf.mxu0
        %7774 = vdwg.mxu0
        %7775 = vmatprep.subr.bf16.mxu0 %v5083
        %7776 = vmatpush1.bf16.msra.mxu0 %v5082
        %7777 = vmatprep.subr.bf16.mxu0 %v5075
        %7778 = vmatpush1.bf16.msra.mxu0 %v5074
        %7779 = vmatprep.subr.bf16.mxu0 %v5067
        %7780 = vmatpush1.bf16.msra.mxu0 %v5066
        %7781 = vmatprep.subr.bf16.mxu0 %v5059
        %7782 = vmatpush1.bf16.msra.mxu0 %v5058
        %7783 = vmatprep.subr.bf16.mxu0 %v5051
        %7784 = vmatpush1.bf16.msra.mxu0 %v5050
        %7785 = vmatprep.subr.bf16.mxu0 %v5043
        %7786 = vmatpush1.bf16.msra.mxu0 %v5042
        %7787 = vmatprep.subr.bf16.mxu0 %v5035
        %7788 = vmatpush1.bf16.msra.mxu0 %v5034
        %7789 = vmatprep.subr.bf16.mxu0 %v5027
        %7790 = vmatpush1.bf16.msra.mxu0 %v5026
        %7791 = vmatprep.subr.bf16.mxu0 %v5147
        %7792 = vmatpush2.bf16.msra.mxu0 %v5146
        %7793 = vmatprep.subr.bf16.mxu0 %v5139
        %7794 = vmatpush2.bf16.msra.mxu0 %v5138
        %7795 = vmatprep.subr.bf16.mxu0 %v5131
        %7796 = vmatpush2.bf16.msra.mxu0 %v5130
        %7797 = vmatprep.subr.bf16.mxu0 %v5123
        %7798 = vmatpush2.bf16.msra.mxu0 %v5122
        %7799 = vmatprep.subr.bf16.mxu0 %v5115
        %7800 = vmatpush2.bf16.msra.mxu0 %v5114
        %7801 = vmatprep.subr.bf16.mxu0 %v5107
        %7802 = vmatpush2.bf16.msra.mxu0 %v5106
        %7803 = vmatprep.subr.bf16.mxu0 %v5099
        %7804 = vmatpush2.bf16.msra.mxu0 %v5098
        %7805 = vmatprep.subr.bf16.mxu0 %v5091
        %7806 = vmatpush2.bf16.msra.mxu0 %v5090
        %7807 = vmatprep.mubr.bf16.mxu0 %v1454
        %7808 = vmatmul.mubr.bf16.gmra.mxu0 %v1440
        %v7809 = vpop.f32.mrf.mxu0
        %v7810 = vadd.f32 %v1385, %v7809
        %v7811 = vpop.f32.mrf.mxu0
        %v7812 = vadd.f32 %v1389, %v7811
        %v7813 = vpop.f32.mrf.mxu0
        %v7814 = vpop.f32.mrf.mxu0
        %7815 = vdwg.mxu0
        %7816 = vmatprep.subr.bf16.mxu0 %v5211
        %7817 = vmatpush1.bf16.msra.mxu0 %v5210
        %7818 = vmatprep.subr.bf16.mxu0 %v5203
        %7819 = vmatpush1.bf16.msra.mxu0 %v5202
        %7820 = vmatprep.subr.bf16.mxu0 %v5195
        %7821 = vmatpush1.bf16.msra.mxu0 %v5194
        %7822 = vmatprep.subr.bf16.mxu0 %v5187
        %7823 = vmatpush1.bf16.msra.mxu0 %v5186
        %7824 = vmatprep.subr.bf16.mxu0 %v5179
        %7825 = vmatpush1.bf16.msra.mxu0 %v5178
        %7826 = vmatprep.subr.bf16.mxu0 %v5171
        %7827 = vmatpush1.bf16.msra.mxu0 %v5170
        %7828 = vmatprep.subr.bf16.mxu0 %v5163
        %7829 = vmatpush1.bf16.msra.mxu0 %v5162
        %7830 = vmatprep.subr.bf16.mxu0 %v5155
        %7831 = vmatpush1.bf16.msra.mxu0 %v5154
        %7832 = vmatprep.subr.bf16.mxu0 %v5275
        %7833 = vmatpush2.bf16.msra.mxu0 %v5274
        %7834 = vmatprep.subr.bf16.mxu0 %v5267
        %7835 = vmatpush2.bf16.msra.mxu0 %v5266
        %7836 = vmatprep.subr.bf16.mxu0 %v5259
        %7837 = vmatpush2.bf16.msra.mxu0 %v5258
        %7838 = vmatprep.subr.bf16.mxu0 %v5251
        %7839 = vmatpush2.bf16.msra.mxu0 %v5250
        %7840 = vmatprep.subr.bf16.mxu0 %v5243
        %7841 = vmatpush2.bf16.msra.mxu0 %v5242
        %7842 = vmatprep.subr.bf16.mxu0 %v5235
        %7843 = vmatpush2.bf16.msra.mxu0 %v5234
        %7844 = vmatprep.subr.bf16.mxu0 %v5227
        %7845 = vmatpush2.bf16.msra.mxu0 %v5226
        %7846 = vmatprep.subr.bf16.mxu0 %v5219
        %7847 = vmatpush2.bf16.msra.mxu0 %v5218
        %7848 = vmatprep.mubr.bf16.mxu0 %v1464
        %7849 = vmatmul.mubr.bf16.gmra.mxu0 %v1462
        %v7850 = vpop.f32.mrf.mxu0
        %v7851 = vadd.f32 %v7810, %v7850
        %v7852 = vpop.f32.mrf.mxu0
        %v7853 = vadd.f32 %v7812, %v7852
        %v7854 = vpop.f32.mrf.mxu0
        %v7855 = vpop.f32.mrf.mxu0
        %7856 = vdwg.mxu0
        %7857 = vmatprep.subr.bf16.mxu0 %v5339
        %7858 = vmatpush1.bf16.msra.mxu0 %v5338
        %7859 = vmatprep.subr.bf16.mxu0 %v5331
        %7860 = vmatpush1.bf16.msra.mxu0 %v5330
        %7861 = vmatprep.subr.bf16.mxu0 %v5323
        %7862 = vmatpush1.bf16.msra.mxu0 %v5322
        %7863 = vmatprep.subr.bf16.mxu0 %v5315
        %7864 = vmatpush1.bf16.msra.mxu0 %v5314
        %7865 = vmatprep.subr.bf16.mxu0 %v5307
        %7866 = vmatpush1.bf16.msra.mxu0 %v5306
        %7867 = vmatprep.subr.bf16.mxu0 %v5299
        %7868 = vmatpush1.bf16.msra.mxu0 %v5298
        %7869 = vmatprep.subr.bf16.mxu0 %v5291
        %7870 = vmatpush1.bf16.msra.mxu0 %v5290
        %7871 = vmatprep.subr.bf16.mxu0 %v5283
        %7872 = vmatpush1.bf16.msra.mxu0 %v5282
        %7873 = vmatprep.subr.bf16.mxu0 %v5403
        %7874 = vmatpush2.bf16.msra.mxu0 %v5402
        %7875 = vmatprep.subr.bf16.mxu0 %v5395
        %7876 = vmatpush2.bf16.msra.mxu0 %v5394
        %7877 = vmatprep.subr.bf16.mxu0 %v5387
        %7878 = vmatpush2.bf16.msra.mxu0 %v5386
        %7879 = vmatprep.subr.bf16.mxu0 %v5379
        %7880 = vmatpush2.bf16.msra.mxu0 %v5378
        %7881 = vmatprep.subr.bf16.mxu0 %v5371
        %7882 = vmatpush2.bf16.msra.mxu0 %v5370
        %7883 = vmatprep.subr.bf16.mxu0 %v5363
        %7884 = vmatpush2.bf16.msra.mxu0 %v5362
        %7885 = vmatprep.subr.bf16.mxu0 %v5355
        %7886 = vmatpush2.bf16.msra.mxu0 %v5354
        %7887 = vmatprep.subr.bf16.mxu0 %v5347
        %7888 = vmatpush2.bf16.msra.mxu0 %v5346
        %7889 = vmatprep.mubr.bf16.mxu0 %v1461
        %7890 = vmatmul.mubr.bf16.gmra.mxu0 %v1447
        %v7891 = vpop.f32.mrf.mxu0
        %v7892 = vadd.f32 %v7851, %v7891
        %v7893 = vpop.f32.mrf.mxu0
        %v7894 = vadd.f32 %v7853, %v7893
        %v7895 = vpop.f32.mrf.mxu0
        %v7896 = vpop.f32.mrf.mxu0
        %7897 = vdwg.mxu0
        %7898 = vmatprep.subr.bf16.mxu0 %v5467
        %7899 = vmatpush1.bf16.msra.mxu0 %v5466
        %7900 = vmatprep.subr.bf16.mxu0 %v5459
        %7901 = vmatpush1.bf16.msra.mxu0 %v5458
        %7902 = vmatprep.subr.bf16.mxu0 %v5451
        %7903 = vmatpush1.bf16.msra.mxu0 %v5450
        %7904 = vmatprep.subr.bf16.mxu0 %v5443
        %7905 = vmatpush1.bf16.msra.mxu0 %v5442
        %7906 = vmatprep.subr.bf16.mxu0 %v5435
        %7907 = vmatpush1.bf16.msra.mxu0 %v5434
        %7908 = vmatprep.subr.bf16.mxu0 %v5427
        %7909 = vmatpush1.bf16.msra.mxu0 %v5426
        %7910 = vmatprep.subr.bf16.mxu0 %v5419
        %7911 = vmatpush1.bf16.msra.mxu0 %v5418
        %7912 = vmatprep.subr.bf16.mxu0 %v5411
        %7913 = vmatpush1.bf16.msra.mxu0 %v5410
        %7914 = vmatprep.subr.bf16.mxu0 %v5531
        %7915 = vmatpush2.bf16.msra.mxu0 %v5530
        %7916 = vmatprep.subr.bf16.mxu0 %v5523
        %7917 = vmatpush2.bf16.msra.mxu0 %v5522
        %7918 = vmatprep.subr.bf16.mxu0 %v5515
        %7919 = vmatpush2.bf16.msra.mxu0 %v5514
        %7920 = vmatprep.subr.bf16.mxu0 %v5507
        %7921 = vmatpush2.bf16.msra.mxu0 %v5506
        %7922 = vmatprep.subr.bf16.mxu0 %v5499
        %7923 = vmatpush2.bf16.msra.mxu0 %v5498
        %7924 = vmatprep.subr.bf16.mxu0 %v5491
        %7925 = vmatpush2.bf16.msra.mxu0 %v5490
        %7926 = vmatprep.subr.bf16.mxu0 %v5483
        %7927 = vmatpush2.bf16.msra.mxu0 %v5482
        %7928 = vmatprep.subr.bf16.mxu0 %v5475
        %7929 = vmatpush2.bf16.msra.mxu0 %v5474
        %7930 = vmatprep.mubr.bf16.mxu0 %v1465
        %7931 = vmatmul.mubr.bf16.gmra.mxu0 %v1463
        %v7932 = vpop.f32.mrf.mxu0
        %v7933 = vadd.f32 %v7892, %v7932
        %v7934 = vpop.f32.mrf.mxu0
        %v7935 = vadd.f32 %v7894, %v7934
        %v7936 = vpop.f32.mrf.mxu0
        %v7937 = vpop.f32.mrf.mxu0
        %7938 = vdwg.mxu0
        %7939 = vmatprep.subr.bf16.mxu0 %v5595
        %7940 = vmatpush1.bf16.msra.mxu0 %v5594
        %7941 = vmatprep.subr.bf16.mxu0 %v5587
        %7942 = vmatpush1.bf16.msra.mxu0 %v5586
        %7943 = vmatprep.subr.bf16.mxu0 %v5579
        %7944 = vmatpush1.bf16.msra.mxu0 %v5578
        %7945 = vmatprep.subr.bf16.mxu0 %v5571
        %7946 = vmatpush1.bf16.msra.mxu0 %v5570
        %7947 = vmatprep.subr.bf16.mxu0 %v5563
        %7948 = vmatpush1.bf16.msra.mxu0 %v5562
        %7949 = vmatprep.subr.bf16.mxu0 %v5555
        %7950 = vmatpush1.bf16.msra.mxu0 %v5554
        %7951 = vmatprep.subr.bf16.mxu0 %v5547
        %7952 = vmatpush1.bf16.msra.mxu0 %v5546
        %7953 = vmatprep.subr.bf16.mxu0 %v5539
        %7954 = vmatpush1.bf16.msra.mxu0 %v5538
        %7955 = vmatprep.subr.bf16.mxu0 %v5659
        %7956 = vmatpush2.bf16.msra.mxu0 %v5658
        %7957 = vmatprep.subr.bf16.mxu0 %v5651
        %7958 = vmatpush2.bf16.msra.mxu0 %v5650
        %7959 = vmatprep.subr.bf16.mxu0 %v5643
        %7960 = vmatpush2.bf16.msra.mxu0 %v5642
        %7961 = vmatprep.subr.bf16.mxu0 %v5635
        %7962 = vmatpush2.bf16.msra.mxu0 %v5634
        %7963 = vmatprep.subr.bf16.mxu0 %v5627
        %7964 = vmatpush2.bf16.msra.mxu0 %v5626
        %7965 = vmatprep.subr.bf16.mxu0 %v5619
        %7966 = vmatpush2.bf16.msra.mxu0 %v5618
        %7967 = vmatprep.subr.bf16.mxu0 %v5611
        %7968 = vmatpush2.bf16.msra.mxu0 %v5610
        %7969 = vmatprep.subr.bf16.mxu0 %v5603
        %7970 = vmatpush2.bf16.msra.mxu0 %v5602
        %7971 = vmatprep.mubr.bf16.mxu0 %v1503
        %7972 = vmatmul.mubr.bf16.gmra.mxu0 %v1489
        %v7973 = vpop.f32.mrf.mxu0
        %v7974 = vadd.f32 %v7933, %v7973
        %v7975 = vpop.f32.mrf.mxu0
        %v7976 = vadd.f32 %v7935, %v7975
        %v7977 = vpop.f32.mrf.mxu0
        %v7978 = vpop.f32.mrf.mxu0
        %7979 = vdwg.mxu0
        %7980 = vmatprep.subr.bf16.mxu0 %v5723
        %7981 = vmatpush1.bf16.msra.mxu0 %v5722
        %7982 = vmatprep.subr.bf16.mxu0 %v5715
        %7983 = vmatpush1.bf16.msra.mxu0 %v5714
        %7984 = vmatprep.subr.bf16.mxu0 %v5707
        %7985 = vmatpush1.bf16.msra.mxu0 %v5706
        %7986 = vmatprep.subr.bf16.mxu0 %v5699
        %7987 = vmatpush1.bf16.msra.mxu0 %v5698
        %7988 = vmatprep.subr.bf16.mxu0 %v5691
        %7989 = vmatpush1.bf16.msra.mxu0 %v5690
        %7990 = vmatprep.subr.bf16.mxu0 %v5683
        %7991 = vmatpush1.bf16.msra.mxu0 %v5682
        %7992 = vmatprep.subr.bf16.mxu0 %v5675
        %7993 = vmatpush1.bf16.msra.mxu0 %v5674
        %7994 = vmatprep.subr.bf16.mxu0 %v5667
        %7995 = vmatpush1.bf16.msra.mxu0 %v5666
        %7996 = vmatprep.subr.bf16.mxu0 %v5787
        %7997 = vmatpush2.bf16.msra.mxu0 %v5786
        %7998 = vmatprep.subr.bf16.mxu0 %v5779
        %7999 = vmatpush2.bf16.msra.mxu0 %v5778
        %8000 = vmatprep.subr.bf16.mxu0 %v5771
        %8001 = vmatpush2.bf16.msra.mxu0 %v5770
        %8002 = vmatprep.subr.bf16.mxu0 %v5763
        %8003 = vmatpush2.bf16.msra.mxu0 %v5762
        %8004 = vmatprep.subr.bf16.mxu0 %v5755
        %8005 = vmatpush2.bf16.msra.mxu0 %v5754
        %8006 = vmatprep.subr.bf16.mxu0 %v5747
        %8007 = vmatpush2.bf16.msra.mxu0 %v5746
        %8008 = vmatprep.subr.bf16.mxu0 %v5739
        %8009 = vmatpush2.bf16.msra.mxu0 %v5738
        %8010 = vmatprep.subr.bf16.mxu0 %v5731
        %8011 = vmatpush2.bf16.msra.mxu0 %v5730
        %8012 = vmatprep.mubr.bf16.mxu0 %v1513
        %8013 = vmatmul.mubr.bf16.gmra.mxu0 %v1511
        %v8014 = vpop.f32.mrf.mxu0
        %v8015 = vadd.f32 %v7974, %v8014
        %v8016 = vpop.f32.mrf.mxu0
        %v8017 = vadd.f32 %v7976, %v8016
        %v8018 = vpop.f32.mrf.mxu0
        %v8019 = vpop.f32.mrf.mxu0
        %8020 = vdwg.mxu0
        %8021 = vmatprep.subr.bf16.mxu0 %v5851
        %8022 = vmatpush1.bf16.msra.mxu0 %v5850
        %8023 = vmatprep.subr.bf16.mxu0 %v5843
        %8024 = vmatpush1.bf16.msra.mxu0 %v5842
        %8025 = vmatprep.subr.bf16.mxu0 %v5835
        %8026 = vmatpush1.bf16.msra.mxu0 %v5834
        %8027 = vmatprep.subr.bf16.mxu0 %v5827
        %8028 = vmatpush1.bf16.msra.mxu0 %v5826
        %8029 = vmatprep.subr.bf16.mxu0 %v5819
        %8030 = vmatpush1.bf16.msra.mxu0 %v5818
        %8031 = vmatprep.subr.bf16.mxu0 %v5811
        %8032 = vmatpush1.bf16.msra.mxu0 %v5810
        %8033 = vmatprep.subr.bf16.mxu0 %v5803
        %8034 = vmatpush1.bf16.msra.mxu0 %v5802
        %8035 = vmatprep.subr.bf16.mxu0 %v5795
        %8036 = vmatpush1.bf16.msra.mxu0 %v5794
        %8037 = vmatprep.subr.bf16.mxu0 %v5915
        %8038 = vmatpush2.bf16.msra.mxu0 %v5914
        %8039 = vmatprep.subr.bf16.mxu0 %v5907
        %8040 = vmatpush2.bf16.msra.mxu0 %v5906
        %8041 = vmatprep.subr.bf16.mxu0 %v5899
        %8042 = vmatpush2.bf16.msra.mxu0 %v5898
        %8043 = vmatprep.subr.bf16.mxu0 %v5891
        %8044 = vmatpush2.bf16.msra.mxu0 %v5890
        %8045 = vmatprep.subr.bf16.mxu0 %v5883
        %8046 = vmatpush2.bf16.msra.mxu0 %v5882
        %8047 = vmatprep.subr.bf16.mxu0 %v5875
        %8048 = vmatpush2.bf16.msra.mxu0 %v5874
        %8049 = vmatprep.subr.bf16.mxu0 %v5867
        %8050 = vmatpush2.bf16.msra.mxu0 %v5866
        %8051 = vmatprep.subr.bf16.mxu0 %v5859
        %8052 = vmatpush2.bf16.msra.mxu0 %v5858
        %8053 = vmatprep.mubr.bf16.mxu0 %v1510
        %8054 = vmatmul.mubr.bf16.gmra.mxu0 %v1496
        %v8055 = vpop.f32.mrf.mxu0
        %v8056 = vadd.f32 %v8015, %v8055
        %v8057 = vpop.f32.mrf.mxu0
        %v8058 = vadd.f32 %v8017, %v8057
        %v8059 = vpop.f32.mrf.mxu0
        %v8060 = vpop.f32.mrf.mxu0
        %8061 = vdwg.mxu0
        %8062 = vmatprep.subr.bf16.mxu0 %v5979
        %8063 = vmatpush1.bf16.msra.mxu0 %v5978
        %8064 = vmatprep.subr.bf16.mxu0 %v5971
        %8065 = vmatpush1.bf16.msra.mxu0 %v5970
        %8066 = vmatprep.subr.bf16.mxu0 %v5963
        %8067 = vmatpush1.bf16.msra.mxu0 %v5962
        %8068 = vmatprep.subr.bf16.mxu0 %v5955
        %8069 = vmatpush1.bf16.msra.mxu0 %v5954
        %8070 = vmatprep.subr.bf16.mxu0 %v5947
        %8071 = vmatpush1.bf16.msra.mxu0 %v5946
        %8072 = vmatprep.subr.bf16.mxu0 %v5939
        %8073 = vmatpush1.bf16.msra.mxu0 %v5938
        %8074 = vmatprep.subr.bf16.mxu0 %v5931
        %8075 = vmatpush1.bf16.msra.mxu0 %v5930
        %8076 = vmatprep.subr.bf16.mxu0 %v5923
        %8077 = vmatpush1.bf16.msra.mxu0 %v5922
        %8078 = vmatprep.subr.bf16.mxu0 %v6043
        %8079 = vmatpush2.bf16.msra.mxu0 %v6042
        %8080 = vmatprep.subr.bf16.mxu0 %v6035
        %8081 = vmatpush2.bf16.msra.mxu0 %v6034
        %8082 = vmatprep.subr.bf16.mxu0 %v6027
        %8083 = vmatpush2.bf16.msra.mxu0 %v6026
        %8084 = vmatprep.subr.bf16.mxu0 %v6019
        %8085 = vmatpush2.bf16.msra.mxu0 %v6018
        %8086 = vmatprep.subr.bf16.mxu0 %v6011
        %8087 = vmatpush2.bf16.msra.mxu0 %v6010
        %8088 = vmatprep.subr.bf16.mxu0 %v6003
        %8089 = vmatpush2.bf16.msra.mxu0 %v6002
        %8090 = vmatprep.subr.bf16.mxu0 %v5995
        %8091 = vmatpush2.bf16.msra.mxu0 %v5994
        %8092 = vmatprep.subr.bf16.mxu0 %v5987
        %8093 = vmatpush2.bf16.msra.mxu0 %v5986
        %8094 = vmatprep.mubr.bf16.mxu0 %v1514
        %8095 = vmatmul.mubr.bf16.gmra.mxu0 %v1512
        %v8096 = vpop.f32.mrf.mxu0
        %v8097 = vadd.f32 %v8056, %v8096
        %v8098 = vpop.f32.mrf.mxu0
        %v8099 = vadd.f32 %v8058, %v8098
        %v8100 = vpop.f32.mrf.mxu0
        %v8101 = vpop.f32.mrf.mxu0
        %8102 = vdwg.mxu0
        %8103 = vmatprep.subr.bf16.mxu0 %v6107
        %8104 = vmatpush1.bf16.msra.mxu0 %v6106
        %8105 = vmatprep.subr.bf16.mxu0 %v6099
        %8106 = vmatpush1.bf16.msra.mxu0 %v6098
        %8107 = vmatprep.subr.bf16.mxu0 %v6091
        %8108 = vmatpush1.bf16.msra.mxu0 %v6090
        %8109 = vmatprep.subr.bf16.mxu0 %v6083
        %8110 = vmatpush1.bf16.msra.mxu0 %v6082
        %8111 = vmatprep.subr.bf16.mxu0 %v6075
        %8112 = vmatpush1.bf16.msra.mxu0 %v6074
        %8113 = vmatprep.subr.bf16.mxu0 %v6067
        %8114 = vmatpush1.bf16.msra.mxu0 %v6066
        %8115 = vmatprep.subr.bf16.mxu0 %v6059
        %8116 = vmatpush1.bf16.msra.mxu0 %v6058
        %8117 = vmatprep.subr.bf16.mxu0 %v6051
        %8118 = vmatpush1.bf16.msra.mxu0 %v6050
        %8119 = vmatprep.subr.bf16.mxu0 %v6171
        %8120 = vmatpush2.bf16.msra.mxu0 %v6170
        %8121 = vmatprep.subr.bf16.mxu0 %v6163
        %8122 = vmatpush2.bf16.msra.mxu0 %v6162
        %8123 = vmatprep.subr.bf16.mxu0 %v6155
        %8124 = vmatpush2.bf16.msra.mxu0 %v6154
        %8125 = vmatprep.subr.bf16.mxu0 %v6147
        %8126 = vmatpush2.bf16.msra.mxu0 %v6146
        %8127 = vmatprep.subr.bf16.mxu0 %v6139
        %8128 = vmatpush2.bf16.msra.mxu0 %v6138
        %8129 = vmatprep.subr.bf16.mxu0 %v6131
        %8130 = vmatpush2.bf16.msra.mxu0 %v6130
        %8131 = vmatprep.subr.bf16.mxu0 %v6123
        %8132 = vmatpush2.bf16.msra.mxu0 %v6122
        %8133 = vmatprep.subr.bf16.mxu0 %v6115
        %8134 = vmatpush2.bf16.msra.mxu0 %v6114
        %8135 = vmatprep.mubr.bf16.mxu0 %v1536
        %8136 = vmatmul.mubr.bf16.gmra.mxu0 %v1529
        %v8137 = vpop.f32.mrf.mxu0
        %v8138 = vadd.f32 %v8097, %v8137
        %v8139 = vpop.f32.mrf.mxu0
        %v8140 = vadd.f32 %v8099, %v8139
        %v8141 = vpop.f32.mrf.mxu0
        %v8142 = vpop.f32.mrf.mxu0
        %8143 = vdwg.mxu0
        %8144 = vmatprep.subr.bf16.mxu0 0
        %8145 = vmatpush1.bf16.msra.mxu0 0
        %8146 = vmatprep.subr.bf16.mxu0 0
        %8147 = vmatpush1.bf16.msra.mxu0 0
        %8148 = vmatprep.subr.bf16.mxu0 0
        %8149 = vmatpush1.bf16.msra.mxu0 0
        %8150 = vmatprep.subr.bf16.mxu0 0
        %8151 = vmatpush1.bf16.msra.mxu0 0
        %8152 = vmatprep.subr.bf16.mxu0 0
        %8153 = vmatpush1.bf16.msra.mxu0 0
        %8154 = vmatprep.subr.bf16.mxu0 0
        %8155 = vmatpush1.bf16.msra.mxu0 0
        %8156 = vmatprep.subr.bf16.mxu0 0
        %8157 = vmatpush1.bf16.msra.mxu0 0
        %8158 = vmatprep.subr.bf16.mxu0 %v7351
        %8159 = vmatpush1.bf16.msra.mxu0 %v7348
        %8160 = vmatprep.subr.bf16.mxu0 0
        %8161 = vmatpush2.bf16.msra.mxu0 0
        %8162 = vmatprep.subr.bf16.mxu0 0
        %8163 = vmatpush2.bf16.msra.mxu0 0
        %8164 = vmatprep.subr.bf16.mxu0 0
        %8165 = vmatpush2.bf16.msra.mxu0 0
        %8166 = vmatprep.subr.bf16.mxu0 0
        %8167 = vmatpush2.bf16.msra.mxu0 0
        %8168 = vmatprep.subr.bf16.mxu0 0
        %8169 = vmatpush2.bf16.msra.mxu0 0
        %8170 = vmatprep.subr.bf16.mxu0 0
        %8171 = vmatpush2.bf16.msra.mxu0 0
        %8172 = vmatprep.subr.bf16.mxu0 0
        %8173 = vmatpush2.bf16.msra.mxu0 0
        %8174 = vmatprep.subr.bf16.mxu0 0
        %8175 = vmatpush2.bf16.msra.mxu0 0
        %8176 = vmatprep.mubr.bf16.mxu0 0
        %8177 = vmatmul.mubr.bf16.gmra.mxu0 %v7338
        %v8178 = vpop.f32.mrf.mxu0
        %v8179 = vadd.f32 %v8138, %v8178
        %v8180 = vpop.f32.mrf.mxu0
        %v8181 = vadd.f32 %v8140, %v8180
        %v8182 = vpop.f32.mrf.mxu0
        %v8183 = vpop.f32.mrf.mxu0
        %8184 = vdwg.mxu0
        %8185 = vmatprep.subr.bf16.mxu0 %v5085
        %8186 = vmatpush1.bf16.msra.mxu0 %v5084
        %8187 = vmatprep.subr.bf16.mxu0 %v5077
        %8188 = vmatpush1.bf16.msra.mxu0 %v5076
        %8189 = vmatprep.subr.bf16.mxu0 %v5069
        %8190 = vmatpush1.bf16.msra.mxu0 %v5068
        %8191 = vmatprep.subr.bf16.mxu0 %v5061
        %8192 = vmatpush1.bf16.msra.mxu0 %v5060
        %8193 = vmatprep.subr.bf16.mxu0 %v5053
        %8194 = vmatpush1.bf16.msra.mxu0 %v5052
        %8195 = vmatprep.subr.bf16.mxu0 %v5045
        %8196 = vmatpush1.bf16.msra.mxu0 %v5044
        %8197 = vmatprep.subr.bf16.mxu0 %v5037
        %8198 = vmatpush1.bf16.msra.mxu0 %v5036
        %8199 = vmatprep.subr.bf16.mxu0 %v5029
        %8200 = vmatpush1.bf16.msra.mxu0 %v5028
        %8201 = vmatprep.subr.bf16.mxu0 %v5149
        %8202 = vmatpush2.bf16.msra.mxu0 %v5148
        %8203 = vmatprep.subr.bf16.mxu0 %v5141
        %8204 = vmatpush2.bf16.msra.mxu0 %v5140
        %8205 = vmatprep.subr.bf16.mxu0 %v5133
        %8206 = vmatpush2.bf16.msra.mxu0 %v5132
        %8207 = vmatprep.subr.bf16.mxu0 %v5125
        %8208 = vmatpush2.bf16.msra.mxu0 %v5124
        %8209 = vmatprep.subr.bf16.mxu0 %v5117
        %8210 = vmatpush2.bf16.msra.mxu0 %v5116
        %8211 = vmatprep.subr.bf16.mxu0 %v5109
        %8212 = vmatpush2.bf16.msra.mxu0 %v5108
        %8213 = vmatprep.subr.bf16.mxu0 %v5101
        %8214 = vmatpush2.bf16.msra.mxu0 %v5100
        %8215 = vmatprep.subr.bf16.mxu0 %v5093
        %8216 = vmatpush2.bf16.msra.mxu0 %v5092
        %8217 = vmatprep.mubr.bf16.mxu0 %v1454
        %8218 = vmatmul.mubr.bf16.gmra.mxu0 %v1440
        %v8219 = vpop.f32.mrf.mxu0
        %v8220 = vadd.f32 %v1393, %v8219
        %v8221 = vpop.f32.mrf.mxu0
        %v8222 = vadd.f32 %v1397, %v8221
        %v8223 = vpop.f32.mrf.mxu0
        %v8224 = vpop.f32.mrf.mxu0
        %8225 = vdwg.mxu0
        %8226 = vmatprep.subr.bf16.mxu0 %v5213
        %8227 = vmatpush1.bf16.msra.mxu0 %v5212
        %8228 = vmatprep.subr.bf16.mxu0 %v5205
        %8229 = vmatpush1.bf16.msra.mxu0 %v5204
        %8230 = vmatprep.subr.bf16.mxu0 %v5197
        %8231 = vmatpush1.bf16.msra.mxu0 %v5196
        %8232 = vmatprep.subr.bf16.mxu0 %v5189
        %8233 = vmatpush1.bf16.msra.mxu0 %v5188
        %8234 = vmatprep.subr.bf16.mxu0 %v5181
        %8235 = vmatpush1.bf16.msra.mxu0 %v5180
        %8236 = vmatprep.subr.bf16.mxu0 %v5173
        %8237 = vmatpush1.bf16.msra.mxu0 %v5172
        %8238 = vmatprep.subr.bf16.mxu0 %v5165
        %8239 = vmatpush1.bf16.msra.mxu0 %v5164
        %8240 = vmatprep.subr.bf16.mxu0 %v5157
        %8241 = vmatpush1.bf16.msra.mxu0 %v5156
        %8242 = vmatprep.subr.bf16.mxu0 %v5277
        %8243 = vmatpush2.bf16.msra.mxu0 %v5276
        %8244 = vmatprep.subr.bf16.mxu0 %v5269
        %8245 = vmatpush2.bf16.msra.mxu0 %v5268
        %8246 = vmatprep.subr.bf16.mxu0 %v5261
        %8247 = vmatpush2.bf16.msra.mxu0 %v5260
        %8248 = vmatprep.subr.bf16.mxu0 %v5253
        %8249 = vmatpush2.bf16.msra.mxu0 %v5252
        %8250 = vmatprep.subr.bf16.mxu0 %v5245
        %8251 = vmatpush2.bf16.msra.mxu0 %v5244
        %8252 = vmatprep.subr.bf16.mxu0 %v5237
        %8253 = vmatpush2.bf16.msra.mxu0 %v5236
        %8254 = vmatprep.subr.bf16.mxu0 %v5229
        %8255 = vmatpush2.bf16.msra.mxu0 %v5228
        %8256 = vmatprep.subr.bf16.mxu0 %v5221
        %8257 = vmatpush2.bf16.msra.mxu0 %v5220
        %8258 = vmatprep.mubr.bf16.mxu0 %v1464
        %8259 = vmatmul.mubr.bf16.gmra.mxu0 %v1462
        %v8260 = vpop.f32.mrf.mxu0
        %v8261 = vadd.f32 %v8220, %v8260
        %v8262 = vpop.f32.mrf.mxu0
        %v8263 = vadd.f32 %v8222, %v8262
        %v8264 = vpop.f32.mrf.mxu0
        %v8265 = vpop.f32.mrf.mxu0
        %8266 = vdwg.mxu0
        %8267 = vmatprep.subr.bf16.mxu0 %v5341
        %8268 = vmatpush1.bf16.msra.mxu0 %v5340
        %8269 = vmatprep.subr.bf16.mxu0 %v5333
        %8270 = vmatpush1.bf16.msra.mxu0 %v5332
        %8271 = vmatprep.subr.bf16.mxu0 %v5325
        %8272 = vmatpush1.bf16.msra.mxu0 %v5324
        %8273 = vmatprep.subr.bf16.mxu0 %v5317
        %8274 = vmatpush1.bf16.msra.mxu0 %v5316
        %8275 = vmatprep.subr.bf16.mxu0 %v5309
        %8276 = vmatpush1.bf16.msra.mxu0 %v5308
        %8277 = vmatprep.subr.bf16.mxu0 %v5301
        %8278 = vmatpush1.bf16.msra.mxu0 %v5300
        %8279 = vmatprep.subr.bf16.mxu0 %v5293
        %8280 = vmatpush1.bf16.msra.mxu0 %v5292
        %8281 = vmatprep.subr.bf16.mxu0 %v5285
        %8282 = vmatpush1.bf16.msra.mxu0 %v5284
        %8283 = vmatprep.subr.bf16.mxu0 %v5405
        %8284 = vmatpush2.bf16.msra.mxu0 %v5404
        %8285 = vmatprep.subr.bf16.mxu0 %v5397
        %8286 = vmatpush2.bf16.msra.mxu0 %v5396
        %8287 = vmatprep.subr.bf16.mxu0 %v5389
        %8288 = vmatpush2.bf16.msra.mxu0 %v5388
        %8289 = vmatprep.subr.bf16.mxu0 %v5381
        %8290 = vmatpush2.bf16.msra.mxu0 %v5380
        %8291 = vmatprep.subr.bf16.mxu0 %v5373
        %8292 = vmatpush2.bf16.msra.mxu0 %v5372
        %8293 = vmatprep.subr.bf16.mxu0 %v5365
        %8294 = vmatpush2.bf16.msra.mxu0 %v5364
        %8295 = vmatprep.subr.bf16.mxu0 %v5357
        %8296 = vmatpush2.bf16.msra.mxu0 %v5356
        %8297 = vmatprep.subr.bf16.mxu0 %v5349
        %8298 = vmatpush2.bf16.msra.mxu0 %v5348
        %8299 = vmatprep.mubr.bf16.mxu0 %v1461
        %8300 = vmatmul.mubr.bf16.gmra.mxu0 %v1447
        %v8301 = vpop.f32.mrf.mxu0
        %v8302 = vadd.f32 %v8261, %v8301
        %v8303 = vpop.f32.mrf.mxu0
        %v8304 = vadd.f32 %v8263, %v8303
        %v8305 = vpop.f32.mrf.mxu0
        %v8306 = vpop.f32.mrf.mxu0
        %8307 = vdwg.mxu0
        %8308 = vmatprep.subr.bf16.mxu0 %v5469
        %8309 = vmatpush1.bf16.msra.mxu0 %v5468
        %8310 = vmatprep.subr.bf16.mxu0 %v5461
        %8311 = vmatpush1.bf16.msra.mxu0 %v5460
        %8312 = vmatprep.subr.bf16.mxu0 %v5453
        %8313 = vmatpush1.bf16.msra.mxu0 %v5452
        %8314 = vmatprep.subr.bf16.mxu0 %v5445
        %8315 = vmatpush1.bf16.msra.mxu0 %v5444
        %8316 = vmatprep.subr.bf16.mxu0 %v5437
        %8317 = vmatpush1.bf16.msra.mxu0 %v5436
        %8318 = vmatprep.subr.bf16.mxu0 %v5429
        %8319 = vmatpush1.bf16.msra.mxu0 %v5428
        %8320 = vmatprep.subr.bf16.mxu0 %v5421
        %8321 = vmatpush1.bf16.msra.mxu0 %v5420
        %8322 = vmatprep.subr.bf16.mxu0 %v5413
        %8323 = vmatpush1.bf16.msra.mxu0 %v5412
        %8324 = vmatprep.subr.bf16.mxu0 %v5533
        %8325 = vmatpush2.bf16.msra.mxu0 %v5532
        %8326 = vmatprep.subr.bf16.mxu0 %v5525
        %8327 = vmatpush2.bf16.msra.mxu0 %v5524
        %8328 = vmatprep.subr.bf16.mxu0 %v5517
        %8329 = vmatpush2.bf16.msra.mxu0 %v5516
        %8330 = vmatprep.subr.bf16.mxu0 %v5509
        %8331 = vmatpush2.bf16.msra.mxu0 %v5508
        %8332 = vmatprep.subr.bf16.mxu0 %v5501
        %8333 = vmatpush2.bf16.msra.mxu0 %v5500
        %8334 = vmatprep.subr.bf16.mxu0 %v5493
        %8335 = vmatpush2.bf16.msra.mxu0 %v5492
        %8336 = vmatprep.subr.bf16.mxu0 %v5485
        %8337 = vmatpush2.bf16.msra.mxu0 %v5484
        %8338 = vmatprep.subr.bf16.mxu0 %v5477
        %8339 = vmatpush2.bf16.msra.mxu0 %v5476
        %8340 = vmatprep.mubr.bf16.mxu0 %v1465
        %8341 = vmatmul.mubr.bf16.gmra.mxu0 %v1463
        %v8342 = vpop.f32.mrf.mxu0
        %v8343 = vadd.f32 %v8302, %v8342
        %v8344 = vpop.f32.mrf.mxu0
        %v8345 = vadd.f32 %v8304, %v8344
        %v8346 = vpop.f32.mrf.mxu0
        %v8347 = vpop.f32.mrf.mxu0
        %8348 = vdwg.mxu0
        %8349 = vmatprep.subr.bf16.mxu0 %v5597
        %8350 = vmatpush1.bf16.msra.mxu0 %v5596
        %8351 = vmatprep.subr.bf16.mxu0 %v5589
        %8352 = vmatpush1.bf16.msra.mxu0 %v5588
        %8353 = vmatprep.subr.bf16.mxu0 %v5581
        %8354 = vmatpush1.bf16.msra.mxu0 %v5580
        %8355 = vmatprep.subr.bf16.mxu0 %v5573
        %8356 = vmatpush1.bf16.msra.mxu0 %v5572
        %8357 = vmatprep.subr.bf16.mxu0 %v5565
        %8358 = vmatpush1.bf16.msra.mxu0 %v5564
        %8359 = vmatprep.subr.bf16.mxu0 %v5557
        %8360 = vmatpush1.bf16.msra.mxu0 %v5556
        %8361 = vmatprep.subr.bf16.mxu0 %v5549
        %8362 = vmatpush1.bf16.msra.mxu0 %v5548
        %8363 = vmatprep.subr.bf16.mxu0 %v5541
        %8364 = vmatpush1.bf16.msra.mxu0 %v5540
        %8365 = vmatprep.subr.bf16.mxu0 %v5661
        %8366 = vmatpush2.bf16.msra.mxu0 %v5660
        %8367 = vmatprep.subr.bf16.mxu0 %v5653
        %8368 = vmatpush2.bf16.msra.mxu0 %v5652
        %8369 = vmatprep.subr.bf16.mxu0 %v5645
        %8370 = vmatpush2.bf16.msra.mxu0 %v5644
        %8371 = vmatprep.subr.bf16.mxu0 %v5637
        %8372 = vmatpush2.bf16.msra.mxu0 %v5636
        %8373 = vmatprep.subr.bf16.mxu0 %v5629
        %8374 = vmatpush2.bf16.msra.mxu0 %v5628
        %8375 = vmatprep.subr.bf16.mxu0 %v5621
        %8376 = vmatpush2.bf16.msra.mxu0 %v5620
        %8377 = vmatprep.subr.bf16.mxu0 %v5613
        %8378 = vmatpush2.bf16.msra.mxu0 %v5612
        %8379 = vmatprep.subr.bf16.mxu0 %v5605
        %8380 = vmatpush2.bf16.msra.mxu0 %v5604
        %8381 = vmatprep.mubr.bf16.mxu0 %v1503
        %8382 = vmatmul.mubr.bf16.gmra.mxu0 %v1489
        %v8383 = vpop.f32.mrf.mxu0
        %v8384 = vadd.f32 %v8343, %v8383
        %v8385 = vpop.f32.mrf.mxu0
        %v8386 = vadd.f32 %v8345, %v8385
        %v8387 = vpop.f32.mrf.mxu0
        %v8388 = vpop.f32.mrf.mxu0
        %8389 = vdwg.mxu0
        %8390 = vmatprep.subr.bf16.mxu0 %v5725
        %8391 = vmatpush1.bf16.msra.mxu0 %v5724
        %8392 = vmatprep.subr.bf16.mxu0 %v5717
        %8393 = vmatpush1.bf16.msra.mxu0 %v5716
        %8394 = vmatprep.subr.bf16.mxu0 %v5709
        %8395 = vmatpush1.bf16.msra.mxu0 %v5708
        %8396 = vmatprep.subr.bf16.mxu0 %v5701
        %8397 = vmatpush1.bf16.msra.mxu0 %v5700
        %8398 = vmatprep.subr.bf16.mxu0 %v5693
        %8399 = vmatpush1.bf16.msra.mxu0 %v5692
        %8400 = vmatprep.subr.bf16.mxu0 %v5685
        %8401 = vmatpush1.bf16.msra.mxu0 %v5684
        %8402 = vmatprep.subr.bf16.mxu0 %v5677
        %8403 = vmatpush1.bf16.msra.mxu0 %v5676
        %8404 = vmatprep.subr.bf16.mxu0 %v5669
        %8405 = vmatpush1.bf16.msra.mxu0 %v5668
        %8406 = vmatprep.subr.bf16.mxu0 %v5789
        %8407 = vmatpush2.bf16.msra.mxu0 %v5788
        %8408 = vmatprep.subr.bf16.mxu0 %v5781
        %8409 = vmatpush2.bf16.msra.mxu0 %v5780
        %8410 = vmatprep.subr.bf16.mxu0 %v5773
        %8411 = vmatpush2.bf16.msra.mxu0 %v5772
        %8412 = vmatprep.subr.bf16.mxu0 %v5765
        %8413 = vmatpush2.bf16.msra.mxu0 %v5764
        %8414 = vmatprep.subr.bf16.mxu0 %v5757
        %8415 = vmatpush2.bf16.msra.mxu0 %v5756
        %8416 = vmatprep.subr.bf16.mxu0 %v5749
        %8417 = vmatpush2.bf16.msra.mxu0 %v5748
        %8418 = vmatprep.subr.bf16.mxu0 %v5741
        %8419 = vmatpush2.bf16.msra.mxu0 %v5740
        %8420 = vmatprep.subr.bf16.mxu0 %v5733
        %8421 = vmatpush2.bf16.msra.mxu0 %v5732
        %8422 = vmatprep.mubr.bf16.mxu0 %v1513
        %8423 = vmatmul.mubr.bf16.gmra.mxu0 %v1511
        %v8424 = vpop.f32.mrf.mxu0
        %v8425 = vadd.f32 %v8384, %v8424
        %v8426 = vpop.f32.mrf.mxu0
        %v8427 = vadd.f32 %v8386, %v8426
        %v8428 = vpop.f32.mrf.mxu0
        %v8429 = vpop.f32.mrf.mxu0
        %8430 = vdwg.mxu0
        %8431 = vmatprep.subr.bf16.mxu0 %v5853
        %8432 = vmatpush1.bf16.msra.mxu0 %v5852
        %8433 = vmatprep.subr.bf16.mxu0 %v5845
        %8434 = vmatpush1.bf16.msra.mxu0 %v5844
        %8435 = vmatprep.subr.bf16.mxu0 %v5837
        %8436 = vmatpush1.bf16.msra.mxu0 %v5836
        %8437 = vmatprep.subr.bf16.mxu0 %v5829
        %8438 = vmatpush1.bf16.msra.mxu0 %v5828
        %8439 = vmatprep.subr.bf16.mxu0 %v5821
        %8440 = vmatpush1.bf16.msra.mxu0 %v5820
        %8441 = vmatprep.subr.bf16.mxu0 %v5813
        %8442 = vmatpush1.bf16.msra.mxu0 %v5812
        %8443 = vmatprep.subr.bf16.mxu0 %v5805
        %8444 = vmatpush1.bf16.msra.mxu0 %v5804
        %8445 = vmatprep.subr.bf16.mxu0 %v5797
        %8446 = vmatpush1.bf16.msra.mxu0 %v5796
        %8447 = vmatprep.subr.bf16.mxu0 %v5917
        %8448 = vmatpush2.bf16.msra.mxu0 %v5916
        %8449 = vmatprep.subr.bf16.mxu0 %v5909
        %8450 = vmatpush2.bf16.msra.mxu0 %v5908
        %8451 = vmatprep.subr.bf16.mxu0 %v5901
        %8452 = vmatpush2.bf16.msra.mxu0 %v5900
        %8453 = vmatprep.subr.bf16.mxu0 %v5893
        %8454 = vmatpush2.bf16.msra.mxu0 %v5892
        %8455 = vmatprep.subr.bf16.mxu0 %v5885
        %8456 = vmatpush2.bf16.msra.mxu0 %v5884
        %8457 = vmatprep.subr.bf16.mxu0 %v5877
        %8458 = vmatpush2.bf16.msra.mxu0 %v5876
        %8459 = vmatprep.subr.bf16.mxu0 %v5869
        %8460 = vmatpush2.bf16.msra.mxu0 %v5868
        %8461 = vmatprep.subr.bf16.mxu0 %v5861
        %8462 = vmatpush2.bf16.msra.mxu0 %v5860
        %8463 = vmatprep.mubr.bf16.mxu0 %v1510
        %8464 = vmatmul.mubr.bf16.gmra.mxu0 %v1496
        %v8465 = vpop.f32.mrf.mxu0
        %v8466 = vadd.f32 %v8425, %v8465
        %v8467 = vpop.f32.mrf.mxu0
        %v8468 = vadd.f32 %v8427, %v8467
        %v8469 = vpop.f32.mrf.mxu0
        %v8470 = vpop.f32.mrf.mxu0
        %8471 = vdwg.mxu0
        %8472 = vmatprep.subr.bf16.mxu0 %v5981
        %8473 = vmatpush1.bf16.msra.mxu0 %v5980
        %8474 = vmatprep.subr.bf16.mxu0 %v5973
        %8475 = vmatpush1.bf16.msra.mxu0 %v5972
        %8476 = vmatprep.subr.bf16.mxu0 %v5965
        %8477 = vmatpush1.bf16.msra.mxu0 %v5964
        %8478 = vmatprep.subr.bf16.mxu0 %v5957
        %8479 = vmatpush1.bf16.msra.mxu0 %v5956
        %8480 = vmatprep.subr.bf16.mxu0 %v5949
        %8481 = vmatpush1.bf16.msra.mxu0 %v5948
        %8482 = vmatprep.subr.bf16.mxu0 %v5941
        %8483 = vmatpush1.bf16.msra.mxu0 %v5940
        %8484 = vmatprep.subr.bf16.mxu0 %v5933
        %8485 = vmatpush1.bf16.msra.mxu0 %v5932
        %8486 = vmatprep.subr.bf16.mxu0 %v5925
        %8487 = vmatpush1.bf16.msra.mxu0 %v5924
        %8488 = vmatprep.subr.bf16.mxu0 %v6045
        %8489 = vmatpush2.bf16.msra.mxu0 %v6044
        %8490 = vmatprep.subr.bf16.mxu0 %v6037
        %8491 = vmatpush2.bf16.msra.mxu0 %v6036
        %8492 = vmatprep.subr.bf16.mxu0 %v6029
        %8493 = vmatpush2.bf16.msra.mxu0 %v6028
        %8494 = vmatprep.subr.bf16.mxu0 %v6021
        %8495 = vmatpush2.bf16.msra.mxu0 %v6020
        %8496 = vmatprep.subr.bf16.mxu0 %v6013
        %8497 = vmatpush2.bf16.msra.mxu0 %v6012
        %8498 = vmatprep.subr.bf16.mxu0 %v6005
        %8499 = vmatpush2.bf16.msra.mxu0 %v6004
        %8500 = vmatprep.subr.bf16.mxu0 %v5997
        %8501 = vmatpush2.bf16.msra.mxu0 %v5996
        %8502 = vmatprep.subr.bf16.mxu0 %v5989
        %8503 = vmatpush2.bf16.msra.mxu0 %v5988
        %8504 = vmatprep.mubr.bf16.mxu0 %v1514
        %8505 = vmatmul.mubr.bf16.gmra.mxu0 %v1512
        %v8506 = vpop.f32.mrf.mxu0
        %v8507 = vadd.f32 %v8466, %v8506
        %v8508 = vpop.f32.mrf.mxu0
        %v8509 = vadd.f32 %v8468, %v8508
        %v8510 = vpop.f32.mrf.mxu0
        %v8511 = vpop.f32.mrf.mxu0
        %8512 = vdwg.mxu0
        %8513 = vmatprep.subr.bf16.mxu0 %v6109
        %8514 = vmatpush1.bf16.msra.mxu0 %v6108
        %8515 = vmatprep.subr.bf16.mxu0 %v6101
        %8516 = vmatpush1.bf16.msra.mxu0 %v6100
        %8517 = vmatprep.subr.bf16.mxu0 %v6093
        %8518 = vmatpush1.bf16.msra.mxu0 %v6092
        %8519 = vmatprep.subr.bf16.mxu0 %v6085
        %8520 = vmatpush1.bf16.msra.mxu0 %v6084
        %8521 = vmatprep.subr.bf16.mxu0 %v6077
        %8522 = vmatpush1.bf16.msra.mxu0 %v6076
        %8523 = vmatprep.subr.bf16.mxu0 %v6069
        %8524 = vmatpush1.bf16.msra.mxu0 %v6068
        %8525 = vmatprep.subr.bf16.mxu0 %v6061
        %8526 = vmatpush1.bf16.msra.mxu0 %v6060
        %8527 = vmatprep.subr.bf16.mxu0 %v6053
        %8528 = vmatpush1.bf16.msra.mxu0 %v6052
        %8529 = vmatprep.subr.bf16.mxu0 %v6173
        %8530 = vmatpush2.bf16.msra.mxu0 %v6172
        %8531 = vmatprep.subr.bf16.mxu0 %v6165
        %8532 = vmatpush2.bf16.msra.mxu0 %v6164
        %8533 = vmatprep.subr.bf16.mxu0 %v6157
        %8534 = vmatpush2.bf16.msra.mxu0 %v6156
        %8535 = vmatprep.subr.bf16.mxu0 %v6149
        %8536 = vmatpush2.bf16.msra.mxu0 %v6148
        %8537 = vmatprep.subr.bf16.mxu0 %v6141
        %8538 = vmatpush2.bf16.msra.mxu0 %v6140
        %8539 = vmatprep.subr.bf16.mxu0 %v6133
        %8540 = vmatpush2.bf16.msra.mxu0 %v6132
        %8541 = vmatprep.subr.bf16.mxu0 %v6125
        %8542 = vmatpush2.bf16.msra.mxu0 %v6124
        %8543 = vmatprep.subr.bf16.mxu0 %v6117
        %8544 = vmatpush2.bf16.msra.mxu0 %v6116
        %8545 = vmatprep.mubr.bf16.mxu0 %v1536
        %8546 = vmatmul.mubr.bf16.gmra.mxu0 %v1529
        %v8547 = vpop.f32.mrf.mxu0
        %v8548 = vadd.f32 %v8507, %v8547
        %v8549 = vpop.f32.mrf.mxu0
        %v8550 = vadd.f32 %v8509, %v8549
        %v8551 = vpop.f32.mrf.mxu0
        %v8552 = vpop.f32.mrf.mxu0
        %8553 = vdwg.mxu0
        %8554 = vmatprep.subr.bf16.mxu0 0
        %8555 = vmatpush1.bf16.msra.mxu0 0
        %8556 = vmatprep.subr.bf16.mxu0 0
        %8557 = vmatpush1.bf16.msra.mxu0 0
        %8558 = vmatprep.subr.bf16.mxu0 0
        %8559 = vmatpush1.bf16.msra.mxu0 0
        %8560 = vmatprep.subr.bf16.mxu0 0
        %8561 = vmatpush1.bf16.msra.mxu0 0
        %8562 = vmatprep.subr.bf16.mxu0 0
        %8563 = vmatpush1.bf16.msra.mxu0 0
        %8564 = vmatprep.subr.bf16.mxu0 0
        %8565 = vmatpush1.bf16.msra.mxu0 0
        %8566 = vmatprep.subr.bf16.mxu0 0
        %8567 = vmatpush1.bf16.msra.mxu0 0
        %8568 = vmatprep.subr.bf16.mxu0 %v7357
        %8569 = vmatpush1.bf16.msra.mxu0 %v7354
        %8570 = vmatprep.subr.bf16.mxu0 0
        %8571 = vmatpush2.bf16.msra.mxu0 0
        %8572 = vmatprep.subr.bf16.mxu0 0
        %8573 = vmatpush2.bf16.msra.mxu0 0
        %8574 = vmatprep.subr.bf16.mxu0 0
        %8575 = vmatpush2.bf16.msra.mxu0 0
        %8576 = vmatprep.subr.bf16.mxu0 0
        %8577 = vmatpush2.bf16.msra.mxu0 0
        %8578 = vmatprep.subr.bf16.mxu0 0
        %8579 = vmatpush2.bf16.msra.mxu0 0
        %8580 = vmatprep.subr.bf16.mxu0 0
        %8581 = vmatpush2.bf16.msra.mxu0 0
        %8582 = vmatprep.subr.bf16.mxu0 0
        %8583 = vmatpush2.bf16.msra.mxu0 0
        %8584 = vmatprep.subr.bf16.mxu0 0
        %8585 = vmatpush2.bf16.msra.mxu0 0
        %8586 = vmatprep.mubr.bf16.mxu0 0
        %8587 = vmatmul.mubr.bf16.gmra.mxu0 %v7338
        %v8588 = vpop.f32.mrf.mxu0
        %v8589 = vadd.f32 %v8548, %v8588
        %v8590 = vpop.f32.mrf.mxu0
        %v8591 = vadd.f32 %v8550, %v8590
        %v8592 = vpop.f32.mrf.mxu0
        %v8593 = vpop.f32.mrf.mxu0
        %8594 = vdwg.mxu0
        %8595 = vmatprep.subr.bf16.mxu0 %v5087
        %8596 = vmatpush1.bf16.msra.mxu0 %v5086
        %8597 = vmatprep.subr.bf16.mxu0 %v5079
        %8598 = vmatpush1.bf16.msra.mxu0 %v5078
        %8599 = vmatprep.subr.bf16.mxu0 %v5071
        %8600 = vmatpush1.bf16.msra.mxu0 %v5070
        %8601 = vmatprep.subr.bf16.mxu0 %v5063
        %8602 = vmatpush1.bf16.msra.mxu0 %v5062
        %8603 = vmatprep.subr.bf16.mxu0 %v5055
        %8604 = vmatpush1.bf16.msra.mxu0 %v5054
        %8605 = vmatprep.subr.bf16.mxu0 %v5047
        %8606 = vmatpush1.bf16.msra.mxu0 %v5046
        %8607 = vmatprep.subr.bf16.mxu0 %v5039
        %8608 = vmatpush1.bf16.msra.mxu0 %v5038
        %8609 = vmatprep.subr.bf16.mxu0 %v5031
        %8610 = vmatpush1.bf16.msra.mxu0 %v5030
        %8611 = vmatprep.subr.bf16.mxu0 %v5151
        %8612 = vmatpush2.bf16.msra.mxu0 %v5150
        %8613 = vmatprep.subr.bf16.mxu0 %v5143
        %8614 = vmatpush2.bf16.msra.mxu0 %v5142
        %8615 = vmatprep.subr.bf16.mxu0 %v5135
        %8616 = vmatpush2.bf16.msra.mxu0 %v5134
        %8617 = vmatprep.subr.bf16.mxu0 %v5127
        %8618 = vmatpush2.bf16.msra.mxu0 %v5126
        %8619 = vmatprep.subr.bf16.mxu0 %v5119
        %8620 = vmatpush2.bf16.msra.mxu0 %v5118
        %8621 = vmatprep.subr.bf16.mxu0 %v5111
        %8622 = vmatpush2.bf16.msra.mxu0 %v5110
        %8623 = vmatprep.subr.bf16.mxu0 %v5103
        %8624 = vmatpush2.bf16.msra.mxu0 %v5102
        %8625 = vmatprep.subr.bf16.mxu0 %v5095
        %8626 = vmatpush2.bf16.msra.mxu0 %v5094
        %8627 = vmatprep.mubr.bf16.mxu0 %v1454
        %8628 = vmatmul.mubr.bf16.gmra.mxu0 %v1440
        %v8629 = vpop.f32.mrf.mxu0
        %v8630 = vadd.f32 %v1401, %v8629
        %v8631 = vpop.f32.mrf.mxu0
        %v8632 = vadd.f32 %v1405, %v8631
        %v8633 = vpop.f32.mrf.mxu0
        %v8634 = vpop.f32.mrf.mxu0
        %8635 = vdwg.mxu0
        %8636 = vmatprep.subr.bf16.mxu0 %v5215
        %8637 = vmatpush1.bf16.msra.mxu0 %v5214
        %8638 = vmatprep.subr.bf16.mxu0 %v5207
        %8639 = vmatpush1.bf16.msra.mxu0 %v5206
        %8640 = vmatprep.subr.bf16.mxu0 %v5199
        %8641 = vmatpush1.bf16.msra.mxu0 %v5198
        %8642 = vmatprep.subr.bf16.mxu0 %v5191
        %8643 = vmatpush1.bf16.msra.mxu0 %v5190
        %8644 = vmatprep.subr.bf16.mxu0 %v5183
        %8645 = vmatpush1.bf16.msra.mxu0 %v5182
        %8646 = vmatprep.subr.bf16.mxu0 %v5175
        %8647 = vmatpush1.bf16.msra.mxu0 %v5174
        %8648 = vmatprep.subr.bf16.mxu0 %v5167
        %8649 = vmatpush1.bf16.msra.mxu0 %v5166
        %8650 = vmatprep.subr.bf16.mxu0 %v5159
        %8651 = vmatpush1.bf16.msra.mxu0 %v5158
        %8652 = vmatprep.subr.bf16.mxu0 %v5279
        %8653 = vmatpush2.bf16.msra.mxu0 %v5278
        %8654 = vmatprep.subr.bf16.mxu0 %v5271
        %8655 = vmatpush2.bf16.msra.mxu0 %v5270
        %8656 = vmatprep.subr.bf16.mxu0 %v5263
        %8657 = vmatpush2.bf16.msra.mxu0 %v5262
        %8658 = vmatprep.subr.bf16.mxu0 %v5255
        %8659 = vmatpush2.bf16.msra.mxu0 %v5254
        %8660 = vmatprep.subr.bf16.mxu0 %v5247
        %8661 = vmatpush2.bf16.msra.mxu0 %v5246
        %8662 = vmatprep.subr.bf16.mxu0 %v5239
        %8663 = vmatpush2.bf16.msra.mxu0 %v5238
        %8664 = vmatprep.subr.bf16.mxu0 %v5231
        %8665 = vmatpush2.bf16.msra.mxu0 %v5230
        %8666 = vmatprep.subr.bf16.mxu0 %v5223
        %8667 = vmatpush2.bf16.msra.mxu0 %v5222
        %8668 = vmatprep.mubr.bf16.mxu0 %v1464
        %8669 = vmatmul.mubr.bf16.gmra.mxu0 %v1462
        %v8670 = vpop.f32.mrf.mxu0
        %v8671 = vadd.f32 %v8630, %v8670
        %v8672 = vpop.f32.mrf.mxu0
        %v8673 = vadd.f32 %v8632, %v8672
        %v8674 = vpop.f32.mrf.mxu0
        %v8675 = vpop.f32.mrf.mxu0
        %8676 = vdwg.mxu0
        %8677 = vmatprep.subr.bf16.mxu0 %v5343
        %8678 = vmatpush1.bf16.msra.mxu0 %v5342
        %8679 = vmatprep.subr.bf16.mxu0 %v5335
        %8680 = vmatpush1.bf16.msra.mxu0 %v5334
        %8681 = vmatprep.subr.bf16.mxu0 %v5327
        %8682 = vmatpush1.bf16.msra.mxu0 %v5326
        %8683 = vmatprep.subr.bf16.mxu0 %v5319
        %8684 = vmatpush1.bf16.msra.mxu0 %v5318
        %8685 = vmatprep.subr.bf16.mxu0 %v5311
        %8686 = vmatpush1.bf16.msra.mxu0 %v5310
        %8687 = vmatprep.subr.bf16.mxu0 %v5303
        %8688 = vmatpush1.bf16.msra.mxu0 %v5302
        %8689 = vmatprep.subr.bf16.mxu0 %v5295
        %8690 = vmatpush1.bf16.msra.mxu0 %v5294
        %8691 = vmatprep.subr.bf16.mxu0 %v5287
        %8692 = vmatpush1.bf16.msra.mxu0 %v5286
        %8693 = vmatprep.subr.bf16.mxu0 %v5407
        %8694 = vmatpush2.bf16.msra.mxu0 %v5406
        %8695 = vmatprep.subr.bf16.mxu0 %v5399
        %8696 = vmatpush2.bf16.msra.mxu0 %v5398
        %8697 = vmatprep.subr.bf16.mxu0 %v5391
        %8698 = vmatpush2.bf16.msra.mxu0 %v5390
        %8699 = vmatprep.subr.bf16.mxu0 %v5383
        %8700 = vmatpush2.bf16.msra.mxu0 %v5382
        %8701 = vmatprep.subr.bf16.mxu0 %v5375
        %8702 = vmatpush2.bf16.msra.mxu0 %v5374
        %8703 = vmatprep.subr.bf16.mxu0 %v5367
        %8704 = vmatpush2.bf16.msra.mxu0 %v5366
        %8705 = vmatprep.subr.bf16.mxu0 %v5359
        %8706 = vmatpush2.bf16.msra.mxu0 %v5358
        %8707 = vmatprep.subr.bf16.mxu0 %v5351
        %8708 = vmatpush2.bf16.msra.mxu0 %v5350
        %8709 = vmatprep.mubr.bf16.mxu0 %v1461
        %8710 = vmatmul.mubr.bf16.gmra.mxu0 %v1447
        %v8711 = vpop.f32.mrf.mxu0
        %v8712 = vadd.f32 %v8671, %v8711
        %v8713 = vpop.f32.mrf.mxu0
        %v8714 = vadd.f32 %v8673, %v8713
        %v8715 = vpop.f32.mrf.mxu0
        %v8716 = vpop.f32.mrf.mxu0
        %8717 = vdwg.mxu0
        %8718 = vmatprep.subr.bf16.mxu0 %v5471
        %8719 = vmatpush1.bf16.msra.mxu0 %v5470
        %8720 = vmatprep.subr.bf16.mxu0 %v5463
        %8721 = vmatpush1.bf16.msra.mxu0 %v5462
        %8722 = vmatprep.subr.bf16.mxu0 %v5455
        %8723 = vmatpush1.bf16.msra.mxu0 %v5454
        %8724 = vmatprep.subr.bf16.mxu0 %v5447
        %8725 = vmatpush1.bf16.msra.mxu0 %v5446
        %8726 = vmatprep.subr.bf16.mxu0 %v5439
        %8727 = vmatpush1.bf16.msra.mxu0 %v5438
        %8728 = vmatprep.subr.bf16.mxu0 %v5431
        %8729 = vmatpush1.bf16.msra.mxu0 %v5430
        %8730 = vmatprep.subr.bf16.mxu0 %v5423
        %8731 = vmatpush1.bf16.msra.mxu0 %v5422
        %8732 = vmatprep.subr.bf16.mxu0 %v5415
        %8733 = vmatpush1.bf16.msra.mxu0 %v5414
        %8734 = vmatprep.subr.bf16.mxu0 %v5535
        %8735 = vmatpush2.bf16.msra.mxu0 %v5534
        %8736 = vmatprep.subr.bf16.mxu0 %v5527
        %8737 = vmatpush2.bf16.msra.mxu0 %v5526
        %8738 = vmatprep.subr.bf16.mxu0 %v5519
        %8739 = vmatpush2.bf16.msra.mxu0 %v5518
        %8740 = vmatprep.subr.bf16.mxu0 %v5511
        %8741 = vmatpush2.bf16.msra.mxu0 %v5510
        %8742 = vmatprep.subr.bf16.mxu0 %v5503
        %8743 = vmatpush2.bf16.msra.mxu0 %v5502
        %8744 = vmatprep.subr.bf16.mxu0 %v5495
        %8745 = vmatpush2.bf16.msra.mxu0 %v5494
        %8746 = vmatprep.subr.bf16.mxu0 %v5487
        %8747 = vmatpush2.bf16.msra.mxu0 %v5486
        %8748 = vmatprep.subr.bf16.mxu0 %v5479
        %8749 = vmatpush2.bf16.msra.mxu0 %v5478
        %8750 = vmatprep.mubr.bf16.mxu0 %v1465
        %8751 = vmatmul.mubr.bf16.gmra.mxu0 %v1463
        %v8752 = vpop.f32.mrf.mxu0
        %v8753 = vadd.f32 %v8712, %v8752
        %v8754 = vpop.f32.mrf.mxu0
        %v8755 = vadd.f32 %v8714, %v8754
        %v8756 = vpop.f32.mrf.mxu0
        %v8757 = vpop.f32.mrf.mxu0
        %8758 = vdwg.mxu0
        %8759 = vmatprep.subr.bf16.mxu0 %v5599
        %8760 = vmatpush1.bf16.msra.mxu0 %v5598
        %8761 = vmatprep.subr.bf16.mxu0 %v5591
        %8762 = vmatpush1.bf16.msra.mxu0 %v5590
        %8763 = vmatprep.subr.bf16.mxu0 %v5583
        %8764 = vmatpush1.bf16.msra.mxu0 %v5582
        %8765 = vmatprep.subr.bf16.mxu0 %v5575
        %8766 = vmatpush1.bf16.msra.mxu0 %v5574
        %8767 = vmatprep.subr.bf16.mxu0 %v5567
        %8768 = vmatpush1.bf16.msra.mxu0 %v5566
        %8769 = vmatprep.subr.bf16.mxu0 %v5559
        %8770 = vmatpush1.bf16.msra.mxu0 %v5558
        %8771 = vmatprep.subr.bf16.mxu0 %v5551
        %8772 = vmatpush1.bf16.msra.mxu0 %v5550
        %8773 = vmatprep.subr.bf16.mxu0 %v5543
        %8774 = vmatpush1.bf16.msra.mxu0 %v5542
        %8775 = vmatprep.subr.bf16.mxu0 %v5663
        %8776 = vmatpush2.bf16.msra.mxu0 %v5662
        %8777 = vmatprep.subr.bf16.mxu0 %v5655
        %8778 = vmatpush2.bf16.msra.mxu0 %v5654
        %8779 = vmatprep.subr.bf16.mxu0 %v5647
        %8780 = vmatpush2.bf16.msra.mxu0 %v5646
        %8781 = vmatprep.subr.bf16.mxu0 %v5639
        %8782 = vmatpush2.bf16.msra.mxu0 %v5638
        %8783 = vmatprep.subr.bf16.mxu0 %v5631
        %8784 = vmatpush2.bf16.msra.mxu0 %v5630
        %8785 = vmatprep.subr.bf16.mxu0 %v5623
        %8786 = vmatpush2.bf16.msra.mxu0 %v5622
        %8787 = vmatprep.subr.bf16.mxu0 %v5615
        %8788 = vmatpush2.bf16.msra.mxu0 %v5614
        %8789 = vmatprep.subr.bf16.mxu0 %v5607
        %8790 = vmatpush2.bf16.msra.mxu0 %v5606
        %8791 = vmatprep.mubr.bf16.mxu0 %v1503
        %8792 = vmatmul.mubr.bf16.gmra.mxu0 %v1489
        %v8793 = vpop.f32.mrf.mxu0
        %v8794 = vadd.f32 %v8753, %v8793
        %v8795 = vpop.f32.mrf.mxu0
        %v8796 = vadd.f32 %v8755, %v8795
        %v8797 = vpop.f32.mrf.mxu0
        %v8798 = vpop.f32.mrf.mxu0
        %8799 = vdwg.mxu0
        %8800 = vmatprep.subr.bf16.mxu0 %v5727
        %8801 = vmatpush1.bf16.msra.mxu0 %v5726
        %8802 = vmatprep.subr.bf16.mxu0 %v5719
        %8803 = vmatpush1.bf16.msra.mxu0 %v5718
        %8804 = vmatprep.subr.bf16.mxu0 %v5711
        %8805 = vmatpush1.bf16.msra.mxu0 %v5710
        %8806 = vmatprep.subr.bf16.mxu0 %v5703
        %8807 = vmatpush1.bf16.msra.mxu0 %v5702
        %8808 = vmatprep.subr.bf16.mxu0 %v5695
        %8809 = vmatpush1.bf16.msra.mxu0 %v5694
        %8810 = vmatprep.subr.bf16.mxu0 %v5687
        %8811 = vmatpush1.bf16.msra.mxu0 %v5686
        %8812 = vmatprep.subr.bf16.mxu0 %v5679
        %8813 = vmatpush1.bf16.msra.mxu0 %v5678
        %8814 = vmatprep.subr.bf16.mxu0 %v5671
        %8815 = vmatpush1.bf16.msra.mxu0 %v5670
        %8816 = vmatprep.subr.bf16.mxu0 %v5791
        %8817 = vmatpush2.bf16.msra.mxu0 %v5790
        %8818 = vmatprep.subr.bf16.mxu0 %v5783
        %8819 = vmatpush2.bf16.msra.mxu0 %v5782
        %8820 = vmatprep.subr.bf16.mxu0 %v5775
        %8821 = vmatpush2.bf16.msra.mxu0 %v5774
        %8822 = vmatprep.subr.bf16.mxu0 %v5767
        %8823 = vmatpush2.bf16.msra.mxu0 %v5766
        %8824 = vmatprep.subr.bf16.mxu0 %v5759
        %8825 = vmatpush2.bf16.msra.mxu0 %v5758
        %8826 = vmatprep.subr.bf16.mxu0 %v5751
        %8827 = vmatpush2.bf16.msra.mxu0 %v5750
        %8828 = vmatprep.subr.bf16.mxu0 %v5743
        %8829 = vmatpush2.bf16.msra.mxu0 %v5742
        %8830 = vmatprep.subr.bf16.mxu0 %v5735
        %8831 = vmatpush2.bf16.msra.mxu0 %v5734
        %8832 = vmatprep.mubr.bf16.mxu0 %v1513
        %8833 = vmatmul.mubr.bf16.gmra.mxu0 %v1511
        %v8834 = vpop.f32.mrf.mxu0
        %v8835 = vadd.f32 %v8794, %v8834
        %v8836 = vpop.f32.mrf.mxu0
        %v8837 = vadd.f32 %v8796, %v8836
        %v8838 = vpop.f32.mrf.mxu0
        %v8839 = vpop.f32.mrf.mxu0
        %8840 = vdwg.mxu0
        %8841 = vmatprep.subr.bf16.mxu0 %v5855
        %8842 = vmatpush1.bf16.msra.mxu0 %v5854
        %8843 = vmatprep.subr.bf16.mxu0 %v5847
        %8844 = vmatpush1.bf16.msra.mxu0 %v5846
        %8845 = vmatprep.subr.bf16.mxu0 %v5839
        %8846 = vmatpush1.bf16.msra.mxu0 %v5838
        %8847 = vmatprep.subr.bf16.mxu0 %v5831
        %8848 = vmatpush1.bf16.msra.mxu0 %v5830
        %8849 = vmatprep.subr.bf16.mxu0 %v5823
        %8850 = vmatpush1.bf16.msra.mxu0 %v5822
        %8851 = vmatprep.subr.bf16.mxu0 %v5815
        %8852 = vmatpush1.bf16.msra.mxu0 %v5814
        %8853 = vmatprep.subr.bf16.mxu0 %v5807
        %8854 = vmatpush1.bf16.msra.mxu0 %v5806
        %8855 = vmatprep.subr.bf16.mxu0 %v5799
        %8856 = vmatpush1.bf16.msra.mxu0 %v5798
        %8857 = vmatprep.subr.bf16.mxu0 %v5919
        %8858 = vmatpush2.bf16.msra.mxu0 %v5918
        %8859 = vmatprep.subr.bf16.mxu0 %v5911
        %8860 = vmatpush2.bf16.msra.mxu0 %v5910
        %8861 = vmatprep.subr.bf16.mxu0 %v5903
        %8862 = vmatpush2.bf16.msra.mxu0 %v5902
        %8863 = vmatprep.subr.bf16.mxu0 %v5895
        %8864 = vmatpush2.bf16.msra.mxu0 %v5894
        %8865 = vmatprep.subr.bf16.mxu0 %v5887
        %8866 = vmatpush2.bf16.msra.mxu0 %v5886
        %8867 = vmatprep.subr.bf16.mxu0 %v5879
        %8868 = vmatpush2.bf16.msra.mxu0 %v5878
        %8869 = vmatprep.subr.bf16.mxu0 %v5871
        %8870 = vmatpush2.bf16.msra.mxu0 %v5870
        %8871 = vmatprep.subr.bf16.mxu0 %v5863
        %8872 = vmatpush2.bf16.msra.mxu0 %v5862
        %8873 = vmatprep.mubr.bf16.mxu0 %v1510
        %8874 = vmatmul.mubr.bf16.gmra.mxu0 %v1496
        %v8875 = vpop.f32.mrf.mxu0
        %v8876 = vadd.f32 %v8835, %v8875
        %v8877 = vpop.f32.mrf.mxu0
        %v8878 = vadd.f32 %v8837, %v8877
        %v8879 = vpop.f32.mrf.mxu0
        %v8880 = vpop.f32.mrf.mxu0
        %8881 = vdwg.mxu0
        %8882 = vmatprep.subr.bf16.mxu0 %v5983
        %8883 = vmatpush1.bf16.msra.mxu0 %v5982
        %8884 = vmatprep.subr.bf16.mxu0 %v5975
        %8885 = vmatpush1.bf16.msra.mxu0 %v5974
        %8886 = vmatprep.subr.bf16.mxu0 %v5967
        %8887 = vmatpush1.bf16.msra.mxu0 %v5966
        %8888 = vmatprep.subr.bf16.mxu0 %v5959
        %8889 = vmatpush1.bf16.msra.mxu0 %v5958
        %8890 = vmatprep.subr.bf16.mxu0 %v5951
        %8891 = vmatpush1.bf16.msra.mxu0 %v5950
        %8892 = vmatprep.subr.bf16.mxu0 %v5943
        %8893 = vmatpush1.bf16.msra.mxu0 %v5942
        %8894 = vmatprep.subr.bf16.mxu0 %v5935
        %8895 = vmatpush1.bf16.msra.mxu0 %v5934
        %8896 = vmatprep.subr.bf16.mxu0 %v5927
        %8897 = vmatpush1.bf16.msra.mxu0 %v5926
        %8898 = vmatprep.subr.bf16.mxu0 %v6047
        %8899 = vmatpush2.bf16.msra.mxu0 %v6046
        %8900 = vmatprep.subr.bf16.mxu0 %v6039
        %8901 = vmatpush2.bf16.msra.mxu0 %v6038
        %8902 = vmatprep.subr.bf16.mxu0 %v6031
        %8903 = vmatpush2.bf16.msra.mxu0 %v6030
        %8904 = vmatprep.subr.bf16.mxu0 %v6023
        %8905 = vmatpush2.bf16.msra.mxu0 %v6022
        %8906 = vmatprep.subr.bf16.mxu0 %v6015
        %8907 = vmatpush2.bf16.msra.mxu0 %v6014
        %8908 = vmatprep.subr.bf16.mxu0 %v6007
        %8909 = vmatpush2.bf16.msra.mxu0 %v6006
        %8910 = vmatprep.subr.bf16.mxu0 %v5999
        %8911 = vmatpush2.bf16.msra.mxu0 %v5998
        %8912 = vmatprep.subr.bf16.mxu0 %v5991
        %8913 = vmatpush2.bf16.msra.mxu0 %v5990
        %8914 = vmatprep.mubr.bf16.mxu0 %v1514
        %8915 = vmatmul.mubr.bf16.gmra.mxu0 %v1512
        %v8916 = vpop.f32.mrf.mxu0
        %v8917 = vadd.f32 %v8876, %v8916
        %v8918 = vpop.f32.mrf.mxu0
        %v8919 = vadd.f32 %v8878, %v8918
        %v8920 = vpop.f32.mrf.mxu0
        %v8921 = vpop.f32.mrf.mxu0
        %8922 = vdwg.mxu0
        %8923 = vmatprep.subr.bf16.mxu0 %v6111
        %8924 = vmatpush1.bf16.msra.mxu0 %v6110
        %8925 = vmatprep.subr.bf16.mxu0 %v6103
        %8926 = vmatpush1.bf16.msra.mxu0 %v6102
        %8927 = vmatprep.subr.bf16.mxu0 %v6095
        %8928 = vmatpush1.bf16.msra.mxu0 %v6094
        %8929 = vmatprep.subr.bf16.mxu0 %v6087
        %8930 = vmatpush1.bf16.msra.mxu0 %v6086
        %8931 = vmatprep.subr.bf16.mxu0 %v6079
        %8932 = vmatpush1.bf16.msra.mxu0 %v6078
        %8933 = vmatprep.subr.bf16.mxu0 %v6071
        %8934 = vmatpush1.bf16.msra.mxu0 %v6070
        %8935 = vmatprep.subr.bf16.mxu0 %v6063
        %8936 = vmatpush1.bf16.msra.mxu0 %v6062
        %8937 = vmatprep.subr.bf16.mxu0 %v6055
        %8938 = vmatpush1.bf16.msra.mxu0 %v6054
        %8939 = vmatprep.subr.bf16.mxu0 %v6175
        %8940 = vmatpush2.bf16.msra.mxu0 %v6174
        %8941 = vmatprep.subr.bf16.mxu0 %v6167
        %8942 = vmatpush2.bf16.msra.mxu0 %v6166
        %8943 = vmatprep.subr.bf16.mxu0 %v6159
        %8944 = vmatpush2.bf16.msra.mxu0 %v6158
        %8945 = vmatprep.subr.bf16.mxu0 %v6151
        %8946 = vmatpush2.bf16.msra.mxu0 %v6150
        %8947 = vmatprep.subr.bf16.mxu0 %v6143
        %8948 = vmatpush2.bf16.msra.mxu0 %v6142
        %8949 = vmatprep.subr.bf16.mxu0 %v6135
        %8950 = vmatpush2.bf16.msra.mxu0 %v6134
        %8951 = vmatprep.subr.bf16.mxu0 %v6127
        %8952 = vmatpush2.bf16.msra.mxu0 %v6126
        %8953 = vmatprep.subr.bf16.mxu0 %v6119
        %8954 = vmatpush2.bf16.msra.mxu0 %v6118
        %8955 = vmatprep.mubr.bf16.mxu0 %v1536
        %8956 = vmatmul.mubr.bf16.gmra.mxu0 %v1529
        %v8957 = vpop.f32.mrf.mxu0
        %v8958 = vadd.f32 %v8917, %v8957
        %v8959 = vpop.f32.mrf.mxu0
        %v8960 = vadd.f32 %v8919, %v8959
        %v8961 = vpop.f32.mrf.mxu0
        %v8962 = vpop.f32.mrf.mxu0
        %8963 = vdwg.mxu0
        %8964 = vmatprep.subr.bf16.mxu0 0
        %8965 = vmatpush1.bf16.msra.mxu0 0
        %8966 = vmatprep.subr.bf16.mxu0 0
        %8967 = vmatpush1.bf16.msra.mxu0 0
        %8968 = vmatprep.subr.bf16.mxu0 0
        %8969 = vmatpush1.bf16.msra.mxu0 0
        %8970 = vmatprep.subr.bf16.mxu0 0
        %8971 = vmatpush1.bf16.msra.mxu0 0
        %8972 = vmatprep.subr.bf16.mxu0 0
        %8973 = vmatpush1.bf16.msra.mxu0 0
        %8974 = vmatprep.subr.bf16.mxu0 0
        %8975 = vmatpush1.bf16.msra.mxu0 0
        %8976 = vmatprep.subr.bf16.mxu0 0
        %8977 = vmatpush1.bf16.msra.mxu0 0
        %8978 = vmatprep.subr.bf16.mxu0 %v7363
        %8979 = vmatpush1.bf16.msra.mxu0 %v7360
        %8980 = vmatprep.subr.bf16.mxu0 0
        %8981 = vmatpush2.bf16.msra.mxu0 0
        %8982 = vmatprep.subr.bf16.mxu0 0
        %8983 = vmatpush2.bf16.msra.mxu0 0
        %8984 = vmatprep.subr.bf16.mxu0 0
        %8985 = vmatpush2.bf16.msra.mxu0 0
        %8986 = vmatprep.subr.bf16.mxu0 0
        %8987 = vmatpush2.bf16.msra.mxu0 0
        %8988 = vmatprep.subr.bf16.mxu0 0
        %8989 = vmatpush2.bf16.msra.mxu0 0
        %8990 = vmatprep.subr.bf16.mxu0 0
        %8991 = vmatpush2.bf16.msra.mxu0 0
        %8992 = vmatprep.subr.bf16.mxu0 0
        %8993 = vmatpush2.bf16.msra.mxu0 0
        %8994 = vmatprep.subr.bf16.mxu0 0
        %8995 = vmatpush2.bf16.msra.mxu0 0
        %8996 = vmatprep.mubr.bf16.mxu0 0
        %8997 = vmatmul.mubr.bf16.gmra.mxu0 %v7338
        %v8998 = vpop.f32.mrf.mxu0
        %v8999 = vadd.f32 %v8958, %v8998
        %v9000 = vpop.f32.mrf.mxu0
        %v9001 = vadd.f32 %v8960, %v9000
        %v9002 = vpop.f32.mrf.mxu0
        %v9003 = vpop.f32.mrf.mxu0
        %9004 = vdwg.mxu0
        %v9005 = vmul.f32 %v7769, 100.0
        %v9006 = vmul.f32 %v7771, 100.0
        %v9007 = vmul.f32 %v8179, 100.0
        %v9008 = vmul.f32 %v8181, 100.0
        %v9009 = vmul.f32 %v8589, 100.0
        %v9010 = vmul.f32 %v8591, 100.0
        %v9011 = vmul.f32 %v8999, 100.0
        %v9012 = vmul.f32 %v9001, 100.0
        %v9013 = vxor.u32 %v9005, 2147483648
        %v9014 = vxor.u32 %v9006, 2147483648
        %v9015 = vxor.u32 %v9007, 2147483648
        %v9016 = vxor.u32 %v9008, 2147483648
        %v9017 = vxor.u32 %v9009, 2147483648
        %v9018 = vxor.u32 %v9010, 2147483648
        %v9019 = vxor.u32 %v9011, 2147483648
        %v9020 = vxor.u32 %v9012, 2147483648
        %v9021 = vmul.f32 %v9013, 1.442695
        %v9022 = vpow.pop %v9021
        %v9023 = vmul.f32 %v9014, 1.442695
        %v9024 = vpow.pop %v9023
        %v9025 = vmul.f32 %v9015, 1.442695
        %v9026 = vpow.pop %v9025
        %v9027 = vmul.f32 %v9016, 1.442695
        %v9028 = vpow.pop %v9027
        %v9029 = vmul.f32 %v9017, 1.442695
        %v9030 = vpow.pop %v9029
        %v9031 = vmul.f32 %v9018, 1.442695
        %v9032 = vpow.pop %v9031
        %v9033 = vmul.f32 %v9019, 1.442695
        %v9034 = vpow.pop %v9033
        %v9035 = vmul.f32 %v9020, 1.442695
        %v9036 = vpow.pop %v9035
        %v9037 = vadd.f32 %v9022, 1.0
        %v9038 = vadd.f32 %v9024, 1.0
        %v9039 = vadd.f32 %v9026, 1.0
        %v9040 = vadd.f32 %v9028, 1.0
        %v9041 = vadd.f32 %v9030, 1.0
        %v9042 = vadd.f32 %v9032, 1.0
        %v9043 = vadd.f32 %v9034, 1.0
        %v9044 = vadd.f32 %v9036, 1.0
        %v9045 = vrcp.pop %v9037
        %v9046 = vmul.f32 1.0, %v9045
        %v9047 = vrcp.pop %v9038
        %v9048 = vmul.f32 1.0, %v9047
        %v9049 = vrcp.pop %v9039
        %v9050 = vmul.f32 1.0, %v9049
        %v9051 = vrcp.pop %v9040
        %v9052 = vmul.f32 1.0, %v9051
        %v9053 = vrcp.pop %v9041
        %v9054 = vmul.f32 1.0, %v9053
        %v9055 = vrcp.pop %v9042
        %v9056 = vmul.f32 1.0, %v9055
        %v9057 = vrcp.pop %v9043
        %v9058 = vmul.f32 1.0, %v9057
        %v9059 = vrcp.pop %v9044
        %v9060 = vmul.f32 1.0, %v9059
        %v9069 = vcombine.low %v9046, %v9048
        %v9070 = vcombine.low %v9050, %v9052
        %v9072 = vunpack.c.l.s4 1983009808
        %v9073 = vunpack.c.0.s8 %v9072
        %v9074 = vlaneseq
        %v9075 = vshrl.u32 %v9074, 7
        %v9076 = vsub.s32 %v9073, %v9075
        %v9077 = vrot.slane %v9069, %v9076
        %v9079 = vunpack.c.l.s4 1983009808
        %v9080 = vunpack.c.0.s8 %v9079
        %v9081 = vlaneseq
        %v9082 = vshrl.u32 %v9081, 7
        %v9083 = vsub.s32 %v9080, %v9082
        %v9084 = vrot.slane %v9070, %v9083
        %v9085 = vcombine.low %v9077, %v9084
        %v9086 = vcombine.low %v9054, %v9056
        %v9087 = vcombine.low %v9058, %v9060
        %v9089 = vunpack.c.l.s4 1983009808
        %v9090 = vunpack.c.0.s8 %v9089
        %v9091 = vlaneseq
        %v9092 = vshrl.u32 %v9091, 7
        %v9093 = vsub.s32 %v9090, %v9092
        %v9094 = vrot.slane %v9086, %v9093
        %v9096 = vunpack.c.l.s4 1983009808
        %v9097 = vunpack.c.0.s8 %v9096
        %v9098 = vlaneseq
        %v9099 = vshrl.u32 %v9098, 7
        %v9100 = vsub.s32 %v9097, %v9099
        %v9101 = vrot.slane %v9087, %v9100
        %v9102 = vcombine.low %v9094, %v9101
        %9105 = vst [vmem:[%s201] sm:$0xff] %v9085
        %9106 = vst [vmem:[%s201 + $0x8] sm:$0xff] %v9102
        %s9107 = sand.u32 %s97, 1
        %s9108 = scalar_lea.sflag [#allocation4], %s9107
        %s9109 = sand.u32 %s97, 1
        %s9110 = smul.addr %s9109, 16
        %s9111 = scalar_lea.vmem [#allocation7], %s9110
        // Predicated region
        $region41: #{_fused_forward.1} parent=31 // pred_check
          %p9112 = pneg %p107
        $region42: #{_fused_forward.1} parent=31 // pred_check_branch
          %9114 = sbr.rel (%p9112) target = $region44
        $region43: #{_fused_forward.1} parent=31 // pred_region
          %s9115 = smul.u32 8, %s21
          %s9117 = ssub.s32 256, 256
          %9118 = vsyncadd %s9108, %s9117
          %s9119 = smul.addr %s9115, 32
          %s9120 = scalar_lea.hbm %s3, %s9119
          %s9122 = sshll.u32 %s9111, 4
          %s9123 = int_to_ptr.vmem [resolvable:$true] %s9122
          %9125 = dma.vmem_to_hbm [thread:$0]  %s9123, 256, %s9120, %s9108
        $region44: #{_fused_forward.1} parent=31 // pred_fallthru
          _
      $region32: #{_fused_forward.1} parent=5 // pred_fallthru
        _
      %p9126 = scmp.le.s32.totalorder 2, %s16
      // Predicated region
      $region45: #{_fused_forward.1} parent=5 // pred_check
        %p9127 = pneg %p9126
      $region46: #{_fused_forward.1} parent=5 // pred_check_branch
        %9129 = sbr.rel (%p9127) target = $region48
      $region47: #{_fused_forward.1} parent=5 // pred_region
        %s9130 = ssub.s32 %s16, 2
        // Predicated region
        $region49: #{_fused_forward.1} parent=47 // pred_check
          %p9131 = pneg %p113
        $region50: #{_fused_forward.1} parent=47 // pred_check_branch
          %9133 = sbr.rel (%p9131) target = $region52
        $region51: #{_fused_forward.1} parent=47 // pred_region
          %s9134 = sand.u32 %s98, 1
          %s9135 = scalar_lea.sflag [#allocation4], %s9134
          %s9136 = sand.u32 %s98, 1
          %s9137 = smul.addr %s9136, 16
          %s9138 = scalar_lea.vmem [#allocation7], %s9137
          %9139 = dma.done %s9135, 256
        $region52: #{_fused_forward.1} parent=47 // pred_fallthru
          _
      $region48: #{_fused_forward.1} parent=5 // pred_fallthru
        _
    $region6: #{_fused_forward.1} parent=1 // loop_footer
      %s20 = sadd.s32 1, %s16
    $region7: #{_fused_forward.1} parent=1 // loop_footer_branch
      %15 = sbr.rel target = $region3
    $region8: #{_fused_forward.1} parent=1 // loop_exit
      _
    %9140 = vsyncpa [#allocation3], 1
    %s9141 = scalar_lea.sflag [#allocation3], 1
    %9142 = vsyncpa %s9141, 1
    %9143 = vsyncpa [#allocation6], 1
    %s9144 = scalar_lea.sflag [#allocation6], 1
    %9145 = vsyncpa %s9144, 1
    %9146 = vsyncpa [#allocation4], 1
    %s9147 = scalar_lea.sflag [#allocation4], 1
    %9148 = vsyncpa %s9147, 1

</llo_original>
